<compile_context>
chip_gen: v7x
topology: tpu7x:2x2x1
jax: 0.10.0
libtpu: 0.0.40
codegen_flags: <defaults>
</compile_context>

<pallas_src>
import jax
import jax.numpy as jnp
from jax.experimental import pallas as pl
from jax.experimental.pallas import tpu as pltpu


# --------------------------------------------------------------------------- #
# Kernel
# --------------------------------------------------------------------------- #
def _make_penn_kernel(*, ex, n_phi, n_psi, n_alpha, n_rho, negative_slope=0.01):
    """Builds the fused PENN-forward kernel for a fixed layer structure."""

    def kernel(*refs):
        # refs = (*inputs, out_ref, *scratch)
        if ex:
            *ins, out_ref, hphi_acc, hpsi_acc = refs
        else:
            *ins, out_ref, hphi_acc = refs
            hpsi_acc = None

        nf_ref, nfrow_ref, lrow_ref = ins[0], ins[1], ins[2]
        w_start = 3
        if ex:
            lcol_ref = ins[3]
            w_start = 4

        # ---- partition the flat list of resident weight/bias refs (static) ----
        pos = [w_start]

        def take(n):
            r = ins[pos[0]:pos[0] + n]
            pos[0] += n
            return r

        phi_first = take(4)                       # Wsrc, w_e, Wdst, b
        phi_tail = take(2 * (n_phi - 1))
        if ex:
            psi_first = take(5)                   # Wsrc, w_e, w_eT, Wdst, b
            psi_tail = take(2 * (n_psi - 1))
        a_first = take(3)                         # Wnf, Wphi, b
        a_tail = take(2 * (n_alpha - 1))
        r_first = take(4 if ex else 3)            # Wnf, Walpha, (Wpsi), b
        r_tail = take(2 * (n_rho - 1))

        i = pl.program_id(1)
        n_nodes = nf_ref.shape[1]

        def leaky(x):
            return jnp.where(x > 0, x, negative_slope * x)

        def dot(a, b):
            return jnp.dot(a, b, preferred_element_type=jnp.float32,
                           precision=jax.lax.Precision.HIGHEST)

        def tail_mlp(h, tail):
            # layers 1..L-1 of a stage: LeakyReLU after every layer but the last.
            nt = len(tail) // 2
            for li in range(nt):
                h = dot(h, tail[2 * li][...]) + tail[2 * li + 1][...]
                if li < nt - 1:
                    h = leaky(h)
            return h

        nf = nf_ref[0]                            # (N, F)  all node features
        nf_i = nfrow_ref[0, 0]                    # (1, F)  source node i
        l_row = lrow_ref[0, 0]                    # (N, 1)  L[i, j] over j
        l_col = lcol_ref[0, 0] if ex else None    # (N, 1)  L[j, i] over j

        def pairwise_row(first, tail, n_layers, use_lcol):
            if use_lcol:
                wsrc, we1, we2, wdst, b1 = [r[...] for r in first]
            else:
                wsrc, we1, wdst, b1 = [r[...] for r in first]
            # == Linear(concat([nf[i], L[i,j], (L[j,i]), nf[j]])) for all j
            h = dot(nf_i, wsrc) + dot(nf, wdst) + l_row * we1 + b1
            if use_lcol:
                h = h + l_col * we2
            if n_layers > 1:
                h = leaky(h)
            h = tail_mlp(h, tail)                 # (N, D_last)
            # torch: .mean(dim=-2) over destination nodes j
            return jnp.mean(h, axis=0, keepdims=True)   # (1, D_last)

        # ---- phi (and psi) rows for source node i, accumulated in VMEM ----
        hphi_acc[pl.ds(i, 1), :] = pairwise_row(phi_first, phi_tail, n_phi, False)
        if ex:
            hpsi_acc[pl.ds(i, 1), :] = pairwise_row(psi_first, psi_tail, n_psi, True)

        # ---- last source node: alpha MLP + graph mean, then rho MLP ----
        @pl.when(i == n_nodes - 1)
        def _finalize():
            h_phi = hphi_acc[...]                                 # (N, D_phi)
            wnf, wph, ba = [r[...] for r in a_first]
            ha = dot(nf, wnf) + dot(h_phi, wph) + ba              # cat([nf, h_phi]) @ W.T
            if n_alpha > 1:
                ha = leaky(ha)
            ha = tail_mlp(ha, a_tail)                             # (N, D_alpha)
            ha_mean = jnp.mean(ha, axis=0, keepdims=True)         # (1, D_alpha)

            if ex:
                wrn, wra, wrp, br = [r[...] for r in r_first]
                hr = (dot(nf, wrn) + dot(ha_mean, wra)
                      + dot(hpsi_acc[...], wrp) + br)
            else:
                wrn, wra, br = [r[...] for r in r_first]
                hr = dot(nf, wrn) + dot(ha_mean, wra) + br
            if n_rho > 1:
                hr = leaky(hr)
            hr = tail_mlp(hr, r_tail)                             # (N, D_rho)
            out_ref[0] = hr.astype(out_ref.dtype)

    return kernel


# --------------------------------------------------------------------------- #
# Wrapper
# --------------------------------------------------------------------------- #
def penn_forward(node_feat, liab, params, *, ex):
    """Pallas implementation of PENN.forward.

    node_feat : (B, N, F) float32
    liab      : (B, N, N) float32  (liab_matrix_tensor)
    params    : dict with 'psi' (if ex), 'phi', 'alpha', 'rho' ->
                list of (W (Dout, Din), b (Dout,)) as in nn.Linear
    returns   : (B, N, D_rho) float32
    """
    node_feat = jnp.asarray(node_feat, jnp.float32)
    liab = jnp.asarray(liab, jnp.float32)
    B, N, F = node_feat.shape

    phi, alpha, rho = params["phi"], params["alpha"], params["rho"]
    psi = params["psi"] if ex else []
    d_phi = phi[-1][0].shape[0]
    d_alpha = alpha[-1][0].shape[0]
    d_rho = rho[-1][0].shape[0]
    d_psi = psi[-1][0].shape[0] if ex else 0

    # Data inputs: per-graph node features (resident per b), the i-th node row,
    # and the i-th row / column of the liability matrix, all selected by the
    # BlockSpec index_maps (no padding, no in-kernel dynamic slicing).
    flat_inputs = [node_feat,
                   node_feat.reshape(B, N, 1, F),
                   liab[..., None]]
    in_specs = [
        pl.BlockSpec((1, N, F), lambda b, i: (b, 0, 0)),
        pl.BlockSpec((1, 1, 1, F), lambda b, i: (b, i, 0, 0)),
        pl.BlockSpec((1, 1, N, 1), lambda b, i: (b, i, 0, 0)),
    ]
    if ex:
        flat_inputs.append(jnp.swapaxes(liab, 1, 2)[..., None])
        in_specs.append(pl.BlockSpec((1, 1, N, 1), lambda b, i: (b, i, 0, 0)))

    def add_resident(arr):
        arr = jnp.asarray(arr, jnp.float32)
        flat_inputs.append(arr)
        in_specs.append(pl.BlockSpec(arr.shape, lambda b, i: (0,) * arr.ndim))

    def add_plain_layers(layers):
        for (W, bb) in layers:
            add_resident(W.T)                    # pre-transposed: (Din, Dout)
            add_resident(bb.reshape(1, -1))

    # phi: first layer split into [src | edge | dst] column groups.
    W1, b1 = phi[0]
    add_resident(W1[:, :F].T)
    add_resident(W1[:, F:F + 1].T)
    add_resident(W1[:, F + 1:].T)
    add_resident(b1.reshape(1, -1))
    add_plain_layers(phi[1:])
    # psi (ex only): [src | edge | edge^T | dst]
    if ex:
        W1, b1 = psi[0]
        add_resident(W1[:, :F].T)
        add_resident(W1[:, F:F + 1].T)
        add_resident(W1[:, F + 1:F + 2].T)
        add_resident(W1[:, F + 2:].T)
        add_resident(b1.reshape(1, -1))
        add_plain_layers(psi[1:])
    # alpha: first layer split into [node_feat | pooled phi]
    W1, b1 = alpha[0]
    add_resident(W1[:, :F].T)
    add_resident(W1[:, F:].T)
    add_resident(b1.reshape(1, -1))
    add_plain_layers(alpha[1:])
    # rho: first layer split into [node_feat | pooled alpha | (pooled psi)]
    W1, b1 = rho[0]
    add_resident(W1[:, :F].T)
    add_resident(W1[:, F:F + d_alpha].T)
    if ex:
        add_resident(W1[:, F + d_alpha:].T)
    add_resident(b1.reshape(1, -1))
    add_plain_layers(rho[1:])

    scratch = [pltpu.VMEM((N, d_phi), jnp.float32)]
    if ex:
        scratch.append(pltpu.VMEM((N, d_psi), jnp.float32))

    kernel = _make_penn_kernel(ex=ex, n_phi=len(phi), n_psi=len(psi),
                               n_alpha=len(alpha), n_rho=len(rho))

    return pl.pallas_call(
        kernel,
        out_shape=jax.ShapeDtypeStruct((B, N, d_rho), jnp.float32),
        grid_spec=pltpu.PrefetchScalarGridSpec(
            num_scalar_prefetch=0,
            grid=(B, N),
            in_specs=in_specs,
            out_specs=pl.BlockSpec((1, N, d_rho), lambda b, i: (b, 0, 0)),
            scratch_shapes=scratch,
        ),
        compiler_params=pltpu.CompilerParams(
            dimension_semantics=("parallel", "arbitrary")),
    )(*flat_inputs)


# --------------------------------------------------------------------------- #
# Pure-JAX reference (mirrors the PyTorch forward exactly)
# --------------------------------------------------------------------------- #
def _leaky_ref(x):
    return jnp.where(x > 0, x, 0.01 * x)


def _mlp_ref(x, layers):
    for li, (W, b) in enumerate(layers):
        x = jnp.dot(x, W.T, precision=jax.lax.Precision.HIGHEST) + b
        if li < len(layers) - 1:
            x = _leaky_ref(x)
    return x


def penn_forward_ref(node_feat, liab, params, *, ex):
    B, N, F = node_feat.shape
    src = jnp.broadcast_to(node_feat[:, :, None, :], (B, N, N, F))
    dst = jnp.broadcast_to(node_feat[:, None, :, :], (B, N, N, F))
    h = jnp.concatenate([src, liab[..., None], dst], axis=-1)
    if ex:
        h_psi = jnp.concatenate(
            [src, liab[..., None], jnp.swapaxes(liab, -1, -2)[..., None], dst],
            axis=-1)
        h_psi = _mlp_ref(h_psi, params["psi"]).mean(axis=-2)
    h = _mlp_ref(h, params["phi"]).mean(axis=-2)
    h = jnp.concatenate([node_feat, h], axis=-1)
    h = _mlp_ref(h, params["alpha"])
    h = jnp.broadcast_to(h.mean(axis=-2, keepdims=True), (B, N, h.shape[-1]))
    if ex:
        h = jnp.concatenate([node_feat, h, h_psi], axis=-1)
    else:
        h = jnp.concatenate([node_feat, h], axis=-1)
    return _mlp_ref(h, params["rho"])


# --------------------------------------------------------------------------- #
# Demo / self-check
# --------------------------------------------------------------------------- #
if __name__ == "__main__":
    # PENN(n_node_feat=3, n_edge_feat=1, layer_size_list=[psi, phi, alpha, rho],
    #      ex=True, id=False); input like predict():
    #   node_feat (n_graphs, n_nodes, n_node_feat) = (2, 8, 3)
    #   liab_matrix_tensor (n_graphs, n_nodes, n_nodes) = (2, 8, 8)
    n_node_feat = 3
    ex = True
    layer_size_list = [[16, 8], [16, 8], [16, 8], [8, 1]]  # [psi, phi, alpha, rho]
    B, N = 2, 8
    F = n_node_feat

    key = jax.random.PRNGKey(0)
    key, kx, kl = jax.random.split(key, 3)
    node_feat = jax.random.normal(kx, (B, N, F), jnp.float32)
    liab = jax.random.uniform(kl, (B, N, N), jnp.float32)

    def init_linear(k, fan_in, fan_out):
        kw, kb = jax.random.split(k)
        bound = 1.0 / (fan_in ** 0.5)
        W = jax.random.uniform(kw, (fan_out, fan_in), jnp.float32, -bound, bound)
        b = jax.random.uniform(kb, (fan_out,), jnp.float32, -bound, bound)
        return W, b

    def init_stage(k, fan_in, sizes):
        layers = []
        for s in sizes:
            k, sub = jax.random.split(k)
            layers.append(init_linear(sub, fan_in, s))
            fan_in = s
        return k, layers

    params = {}
    key, params["psi"] = init_stage(key, 2 * F + 2, layer_size_list[0])
    key, params["phi"] = init_stage(key, 2 * F + 1, layer_size_list[1])
    key, params["alpha"] = init_stage(key, F + layer_size_list[1][-1],
                                      layer_size_list[2])
    rho_in = F + layer_size_list[2][-1] + (layer_size_list[0][-1] if ex else 0)
    key, params["rho"] = init_stage(key, rho_in, layer_size_list[3])

    out = penn_forward(node_feat, liab, params, ex=ex)
    out = jax.block_until_ready(out)

    ref = penn_forward_ref(node_feat, liab, params, ex=ex)
    assert out.shape == (B, N, layer_size_list[3][-1])
    max_err = float(jnp.max(jnp.abs(out - ref)))
    assert jnp.allclose(out, ref, atol=2e-2, rtol=2e-2), max_err

    print("KERNEL_OK")
</pallas_src>

<mosaic_0001>
module attributes {stable_mosaic.version = 11 : i64} {
  func.func @kernel(%arg0: i32, %arg1: i32, %arg2: memref<1x8x3xf32, #tpu.memory_space<vmem>>, %arg3: memref<1x1x1x3xf32, #tpu.memory_space<vmem>>, %arg4: memref<1x1x8x1xf32, #tpu.memory_space<vmem>>, %arg5: memref<1x1x8x1xf32, #tpu.memory_space<vmem>>, %arg6: memref<3x16xf32, #tpu.memory_space<vmem>>, %arg7: memref<1x16xf32, #tpu.memory_space<vmem>>, %arg8: memref<3x16xf32, #tpu.memory_space<vmem>>, %arg9: memref<1x16xf32, #tpu.memory_space<vmem>>, %arg10: memref<16x8xf32, #tpu.memory_space<vmem>>, %arg11: memref<1x8xf32, #tpu.memory_space<vmem>>, %arg12: memref<3x16xf32, #tpu.memory_space<vmem>>, %arg13: memref<1x16xf32, #tpu.memory_space<vmem>>, %arg14: memref<1x16xf32, #tpu.memory_space<vmem>>, %arg15: memref<3x16xf32, #tpu.memory_space<vmem>>, %arg16: memref<1x16xf32, #tpu.memory_space<vmem>>, %arg17: memref<16x8xf32, #tpu.memory_space<vmem>>, %arg18: memref<1x8xf32, #tpu.memory_space<vmem>>, %arg19: memref<3x16xf32, #tpu.memory_space<vmem>>, %arg20: memref<8x16xf32, #tpu.memory_space<vmem>>, %arg21: memref<1x16xf32, #tpu.memory_space<vmem>>, %arg22: memref<16x8xf32, #tpu.memory_space<vmem>>, %arg23: memref<1x8xf32, #tpu.memory_space<vmem>>, %arg24: memref<3x8xf32, #tpu.memory_space<vmem>>, %arg25: memref<8x8xf32, #tpu.memory_space<vmem>>, %arg26: memref<8x8xf32, #tpu.memory_space<vmem>>, %arg27: memref<1x8xf32, #tpu.memory_space<vmem>>, %arg28: memref<8x1xf32, #tpu.memory_space<vmem>>, %arg29: memref<1x1xf32, #tpu.memory_space<vmem>>, %arg30: memref<1x8x1xf32, #tpu.memory_space<vmem>>, %arg31: memref<8x8xf32, #tpu.memory_space<vmem>>, %arg32: memref<8x8xf32, #tpu.memory_space<vmem>>) attributes {dimension_semantics = [#tpu.dimension_semantics<parallel>, #tpu.dimension_semantics<arbitrary>], iteration_bounds = array<i64: 2, 8>, scalar_prefetch = 0 : i64, scratch_operands = 2 : i64, tpu.core_type = #tpu.core_type<tc>, window_params = [{transform_indices = @transform_0, window_bounds = array<i64: 1, 8, 3>}, {transform_indices = @transform_1, window_bounds = array<i64: 1, 1, 1, 3>}, {transform_indices = @transform_2, window_bounds = array<i64: 1, 1, 8, 1>}, {transform_indices = @transform_3, window_bounds = array<i64: 1, 1, 8, 1>}, {pipeline_mode = #tpu.pipeline_mode<synchronous>, transform_indices = @transform_4, window_bounds = array<i64: 3, 16>}, {pipeline_mode = #tpu.pipeline_mode<synchronous>, transform_indices = @transform_5, window_bounds = array<i64: 1, 16>}, {pipeline_mode = #tpu.pipeline_mode<synchronous>, transform_indices = @transform_6, window_bounds = array<i64: 3, 16>}, {pipeline_mode = #tpu.pipeline_mode<synchronous>, transform_indices = @transform_7, window_bounds = array<i64: 1, 16>}, {pipeline_mode = #tpu.pipeline_mode<synchronous>, transform_indices = @transform_8, window_bounds = array<i64: 16, 8>}, {pipeline_mode = #tpu.pipeline_mode<synchronous>, transform_indices = @transform_9, window_bounds = array<i64: 1, 8>}, {pipeline_mode = #tpu.pipeline_mode<synchronous>, transform_indices = @transform_10, window_bounds = array<i64: 3, 16>}, {pipeline_mode = #tpu.pipeline_mode<synchronous>, transform_indices = @transform_11, window_bounds = array<i64: 1, 16>}, {pipeline_mode = #tpu.pipeline_mode<synchronous>, transform_indices = @transform_12, window_bounds = array<i64: 1, 16>}, {pipeline_mode = #tpu.pipeline_mode<synchronous>, transform_indices = @transform_13, window_bounds = array<i64: 3, 16>}, {pipeline_mode = #tpu.pipeline_mode<synchronous>, transform_indices = @transform_14, window_bounds = array<i64: 1, 16>}, {pipeline_mode = #tpu.pipeline_mode<synchronous>, transform_indices = @transform_15, window_bounds = array<i64: 16, 8>}, {pipeline_mode = #tpu.pipeline_mode<synchronous>, transform_indices = @transform_16, window_bounds = array<i64: 1, 8>}, {pipeline_mode = #tpu.pipeline_mode<synchronous>, transform_indices = @transform_17, window_bounds = array<i64: 3, 16>}, {pipeline_mode = #tpu.pipeline_mode<synchronous>, transform_indices = @transform_18, window_bounds = array<i64: 8, 16>}, {pipeline_mode = #tpu.pipeline_mode<synchronous>, transform_indices = @transform_19, window_bounds = array<i64: 1, 16>}, {pipeline_mode = #tpu.pipeline_mode<synchronous>, transform_indices = @transform_20, window_bounds = array<i64: 16, 8>}, {pipeline_mode = #tpu.pipeline_mode<synchronous>, transform_indices = @transform_21, window_bounds = array<i64: 1, 8>}, {pipeline_mode = #tpu.pipeline_mode<synchronous>, transform_indices = @transform_22, window_bounds = array<i64: 3, 8>}, {pipeline_mode = #tpu.pipeline_mode<synchronous>, transform_indices = @transform_23, window_bounds = array<i64: 8, 8>}, {pipeline_mode = #tpu.pipeline_mode<synchronous>, transform_indices = @transform_24, window_bounds = array<i64: 8, 8>}, {pipeline_mode = #tpu.pipeline_mode<synchronous>, transform_indices = @transform_25, window_bounds = array<i64: 1, 8>}, {pipeline_mode = #tpu.pipeline_mode<synchronous>, transform_indices = @transform_26, window_bounds = array<i64: 8, 1>}, {pipeline_mode = #tpu.pipeline_mode<synchronous>, transform_indices = @transform_27, window_bounds = array<i64: 1, 1>}, {transform_indices = @transform_28, window_bounds = array<i64: 1, 8, 1>}]} {
    %c0 = arith.constant 0 : index
    %c0_0 = arith.constant 0 : index
    %c0_1 = arith.constant 0 : index
    %0 = vector.load %arg2[%c0, %c0_0, %c0_1] : memref<1x8x3xf32, #tpu.memory_space<vmem>>, vector<1x8x3xf32>
    %1 = vector.shape_cast %0 : vector<1x8x3xf32> to vector<8x3xf32>
    %c0_2 = arith.constant 0 : index
    %c0_3 = arith.constant 0 : index
    %c0_4 = arith.constant 0 : index
    %c0_5 = arith.constant 0 : index
    %2 = vector.load %arg3[%c0_2, %c0_3, %c0_4, %c0_5] : memref<1x1x1x3xf32, #tpu.memory_space<vmem>>, vector<1x1x1x3xf32>
    %3 = vector.shape_cast %2 : vector<1x1x1x3xf32> to vector<1x3xf32>
    %c0_6 = arith.constant 0 : index
    %c0_7 = arith.constant 0 : index
    %c0_8 = arith.constant 0 : index
    %c0_9 = arith.constant 0 : index
    %4 = vector.load %arg4[%c0_6, %c0_7, %c0_8, %c0_9] : memref<1x1x8x1xf32, #tpu.memory_space<vmem>>, vector<1x1x8x1xf32>
    %5 = vector.shape_cast %4 : vector<1x1x8x1xf32> to vector<8x1xf32>
    %c0_10 = arith.constant 0 : index
    %c0_11 = arith.constant 0 : index
    %c0_12 = arith.constant 0 : index
    %c0_13 = arith.constant 0 : index
    %6 = vector.load %arg5[%c0_10, %c0_11, %c0_12, %c0_13] : memref<1x1x8x1xf32, #tpu.memory_space<vmem>>, vector<1x1x8x1xf32>
    %7 = vector.shape_cast %6 : vector<1x1x8x1xf32> to vector<8x1xf32>
    %c0_14 = arith.constant 0 : index
    %c0_15 = arith.constant 0 : index
    %8 = vector.load %arg6[%c0_14, %c0_15] : memref<3x16xf32, #tpu.memory_space<vmem>>, vector<3x16xf32>
    %c0_16 = arith.constant 0 : index
    %c0_17 = arith.constant 0 : index
    %9 = vector.load %arg7[%c0_16, %c0_17] : memref<1x16xf32, #tpu.memory_space<vmem>>, vector<1x16xf32>
    %c0_18 = arith.constant 0 : index
    %c0_19 = arith.constant 0 : index
    %10 = vector.load %arg8[%c0_18, %c0_19] : memref<3x16xf32, #tpu.memory_space<vmem>>, vector<3x16xf32>
    %c0_20 = arith.constant 0 : index
    %c0_21 = arith.constant 0 : index
    %11 = vector.load %arg9[%c0_20, %c0_21] : memref<1x16xf32, #tpu.memory_space<vmem>>, vector<1x16xf32>
    %cst = arith.constant dense<0.000000e+00> : vector<1x16xf32>
    %12 = tpu.matmul %3, %8, %cst {dimension_numbers = #tpu.dot_dimension_numbers<[1], [0], [0], [1], [0, 0, 1, 1], [], []>, precision = #tpu.contract_precision<fp32>} : vector<1x3xf32>, vector<3x16xf32>, vector<1x16xf32> -> vector<1x16xf32>
    %cst_22 = arith.constant dense<0.000000e+00> : vector<8x16xf32>
    %13 = tpu.matmul %1, %10, %cst_22 {dimension_numbers = #tpu.dot_dimension_numbers<[1], [0], [0], [1], [0, 0, 1, 1], [], []>, precision = #tpu.contract_precision<fp32>} : vector<8x3xf32>, vector<3x16xf32>, vector<8x16xf32> -> vector<8x16xf32>
    %14 = vector.broadcast %12 : vector<1x16xf32> to vector<8x16xf32>
    %15 = arith.addf %14, %13 : vector<8x16xf32>
    %16 = vector.broadcast %5 : vector<8x1xf32> to vector<8x16xf32>
    %17 = vector.broadcast %9 : vector<1x16xf32> to vector<8x16xf32>
    %18 = arith.mulf %16, %17 : vector<8x16xf32>
    %19 = arith.addf %15, %18 : vector<8x16xf32>
    %20 = vector.broadcast %11 : vector<1x16xf32> to vector<8x16xf32>
    %21 = arith.addf %19, %20 : vector<8x16xf32>
    %cst_23 = arith.constant 0.000000e+00 : f32
    %22 = vector.broadcast %cst_23 : f32 to vector<8x16xf32>
    %23 = arith.cmpf ogt, %21, %22 : vector<8x16xf32>
    %cst_24 = arith.constant 0.00999999977 : f32
    %24 = vector.broadcast %cst_24 : f32 to vector<8x16xf32>
    %25 = arith.mulf %24, %21 : vector<8x16xf32>
    %26 = arith.select %23, %21, %25 : vector<8x16xi1>, vector<8x16xf32>
    %c0_25 = arith.constant 0 : index
    %c0_26 = arith.constant 0 : index
    %27 = vector.load %arg10[%c0_25, %c0_26] : memref<16x8xf32, #tpu.memory_space<vmem>>, vector<16x8xf32>
    %cst_27 = arith.constant dense<0.000000e+00> : vector<8x8xf32>
    %28 = tpu.matmul %26, %27, %cst_27 {dimension_numbers = #tpu.dot_dimension_numbers<[1], [0], [0], [1], [0, 0, 1, 1], [], []>, precision = #tpu.contract_precision<fp32>} : vector<8x16xf32>, vector<16x8xf32>, vector<8x8xf32> -> vector<8x8xf32>
    %c0_28 = arith.constant 0 : index
    %c0_29 = arith.constant 0 : index
    %29 = vector.load %arg11[%c0_28, %c0_29] : memref<1x8xf32, #tpu.memory_space<vmem>>, vector<1x8xf32>
    %30 = vector.broadcast %29 : vector<1x8xf32> to vector<8x8xf32>
    %31 = arith.addf %28, %30 : vector<8x8xf32>
    %cst_30 = arith.constant dense<0.000000e+00> : vector<8xf32>
    %32 = vector.multi_reduction <add>, %31, %cst_30 [0] : vector<8x8xf32> to vector<8xf32>
    %33 = vector.shape_cast %32 : vector<8xf32> to vector<1x8xf32>
    %cst_31 = arith.constant 8.000000e+00 : f32
    %34 = vector.broadcast %cst_31 : f32 to vector<1x8xf32>
    %35 = arith.divf %33, %34 : vector<1x8xf32>
    %36 = arith.index_cast %arg1 : i32 to index
    %c0_32 = arith.constant 0 : index
    %37 = vector.load %arg31[%36, %c0_32] : memref<8x8xf32, #tpu.memory_space<vmem>>, vector<1x8xf32>
    tpu.vector_store %arg31[%36, %c0_32], %35 {strides = array<i32>} : memref<8x8xf32, #tpu.memory_space<vmem>>, vector<1x8xf32>,
    %c0_33 = arith.constant 0 : index
    %c0_34 = arith.constant 0 : index
    %38 = vector.load %arg12[%c0_33, %c0_34] : memref<3x16xf32, #tpu.memory_space<vmem>>, vector<3x16xf32>
    %c0_35 = arith.constant 0 : index
    %c0_36 = arith.constant 0 : index
    %39 = vector.load %arg13[%c0_35, %c0_36] : memref<1x16xf32, #tpu.memory_space<vmem>>, vector<1x16xf32>
    %c0_37 = arith.constant 0 : index
    %c0_38 = arith.constant 0 : index
    %40 = vector.load %arg14[%c0_37, %c0_38] : memref<1x16xf32, #tpu.memory_space<vmem>>, vector<1x16xf32>
    %c0_39 = arith.constant 0 : index
    %c0_40 = arith.constant 0 : index
    %41 = vector.load %arg15[%c0_39, %c0_40] : memref<3x16xf32, #tpu.memory_space<vmem>>, vector<3x16xf32>
    %c0_41 = arith.constant 0 : index
    %c0_42 = arith.constant 0 : index
    %42 = vector.load %arg16[%c0_41, %c0_42] : memref<1x16xf32, #tpu.memory_space<vmem>>, vector<1x16xf32>
    %cst_43 = arith.constant dense<0.000000e+00> : vector<1x16xf32>
    %43 = tpu.matmul %3, %38, %cst_43 {dimension_numbers = #tpu.dot_dimension_numbers<[1], [0], [0], [1], [0, 0, 1, 1], [], []>, precision = #tpu.contract_precision<fp32>} : vector<1x3xf32>, vector<3x16xf32>, vector<1x16xf32> -> vector<1x16xf32>
    %cst_44 = arith.constant dense<0.000000e+00> : vector<8x16xf32>
    %44 = tpu.matmul %1, %41, %cst_44 {dimension_numbers = #tpu.dot_dimension_numbers<[1], [0], [0], [1], [0, 0, 1, 1], [], []>, precision = #tpu.contract_precision<fp32>} : vector<8x3xf32>, vector<3x16xf32>, vector<8x16xf32> -> vector<8x16xf32>
    %45 = vector.broadcast %43 : vector<1x16xf32> to vector<8x16xf32>
    %46 = arith.addf %45, %44 : vector<8x16xf32>
    %47 = vector.broadcast %5 : vector<8x1xf32> to vector<8x16xf32>
    %48 = vector.broadcast %39 : vector<1x16xf32> to vector<8x16xf32>
    %49 = arith.mulf %47, %48 : vector<8x16xf32>
    %50 = arith.addf %46, %49 : vector<8x16xf32>
    %51 = vector.broadcast %42 : vector<1x16xf32> to vector<8x16xf32>
    %52 = arith.addf %50, %51 : vector<8x16xf32>
    %53 = vector.broadcast %7 : vector<8x1xf32> to vector<8x16xf32>
    %54 = vector.broadcast %40 : vector<1x16xf32> to vector<8x16xf32>
    %55 = arith.mulf %53, %54 : vector<8x16xf32>
    %56 = arith.addf %52, %55 : vector<8x16xf32>
    %cst_45 = arith.constant 0.000000e+00 : f32
    %57 = vector.broadcast %cst_45 : f32 to vector<8x16xf32>
    %58 = arith.cmpf ogt, %56, %57 : vector<8x16xf32>
    %cst_46 = arith.constant 0.00999999977 : f32
    %59 = vector.broadcast %cst_46 : f32 to vector<8x16xf32>
    %60 = arith.mulf %59, %56 : vector<8x16xf32>
    %61 = arith.select %58, %56, %60 : vector<8x16xi1>, vector<8x16xf32>
    %c0_47 = arith.constant 0 : index
    %c0_48 = arith.constant 0 : index
    %62 = vector.load %arg17[%c0_47, %c0_48] : memref<16x8xf32, #tpu.memory_space<vmem>>, vector<16x8xf32>
    %cst_49 = arith.constant dense<0.000000e+00> : vector<8x8xf32>
    %63 = tpu.matmul %61, %62, %cst_49 {dimension_numbers = #tpu.dot_dimension_numbers<[1], [0], [0], [1], [0, 0, 1, 1], [], []>, precision = #tpu.contract_precision<fp32>} : vector<8x16xf32>, vector<16x8xf32>, vector<8x8xf32> -> vector<8x8xf32>
    %c0_50 = arith.constant 0 : index
    %c0_51 = arith.constant 0 : index
    %64 = vector.load %arg18[%c0_50, %c0_51] : memref<1x8xf32, #tpu.memory_space<vmem>>, vector<1x8xf32>
    %65 = vector.broadcast %64 : vector<1x8xf32> to vector<8x8xf32>
    %66 = arith.addf %63, %65 : vector<8x8xf32>
    %cst_52 = arith.constant dense<0.000000e+00> : vector<8xf32>
    %67 = vector.multi_reduction <add>, %66, %cst_52 [0] : vector<8x8xf32> to vector<8xf32>
    %68 = vector.shape_cast %67 : vector<8xf32> to vector<1x8xf32>
    %cst_53 = arith.constant 8.000000e+00 : f32
    %69 = vector.broadcast %cst_53 : f32 to vector<1x8xf32>
    %70 = arith.divf %68, %69 : vector<1x8xf32>
    %71 = arith.index_cast %arg1 : i32 to index
    %c0_54 = arith.constant 0 : index
    %72 = vector.load %arg32[%71, %c0_54] : memref<8x8xf32, #tpu.memory_space<vmem>>, vector<1x8xf32>
    tpu.vector_store %arg32[%71, %c0_54], %70 {strides = array<i32>} : memref<8x8xf32, #tpu.memory_space<vmem>>, vector<1x8xf32>,
    %c7_i32 = arith.constant 7 : i32
    %73 = arith.cmpi eq, %arg1, %c7_i32 : i32
    %74 = arith.extui %73 : i1 to i32
    %c0_i32 = arith.constant 0 : i32
    %75 = arith.cmpi ne, %74, %c0_i32 : i32
    scf.if %75 {
      %c0_55 = arith.constant 0 : index
      %c0_56 = arith.constant 0 : index
      %76 = vector.load %arg31[%c0_55, %c0_56] : memref<8x8xf32, #tpu.memory_space<vmem>>, vector<8x8xf32>
      %c0_57 = arith.constant 0 : index
      %c0_58 = arith.constant 0 : index
      %77 = vector.load %arg19[%c0_57, %c0_58] : memref<3x16xf32, #tpu.memory_space<vmem>>, vector<3x16xf32>
      %c0_59 = arith.constant 0 : index
      %c0_60 = arith.constant 0 : index
      %78 = vector.load %arg20[%c0_59, %c0_60] : memref<8x16xf32, #tpu.memory_space<vmem>>, vector<8x16xf32>
      %c0_61 = arith.constant 0 : index
      %c0_62 = arith.constant 0 : index
      %79 = vector.load %arg21[%c0_61, %c0_62] : memref<1x16xf32, #tpu.memory_space<vmem>>, vector<1x16xf32>
      %cst_63 = arith.constant dense<0.000000e+00> : vector<8x16xf32>
      %80 = tpu.matmul %1, %77, %cst_63 {dimension_numbers = #tpu.dot_dimension_numbers<[1], [0], [0], [1], [0, 0, 1, 1], [], []>, precision = #tpu.contract_precision<fp32>} : vector<8x3xf32>, vector<3x16xf32>, vector<8x16xf32> -> vector<8x16xf32>
      %cst_64 = arith.constant dense<0.000000e+00> : vector<8x16xf32>
      %81 = tpu.matmul %76, %78, %cst_64 {dimension_numbers = #tpu.dot_dimension_numbers<[1], [0], [0], [1], [0, 0, 1, 1], [], []>, precision = #tpu.contract_precision<fp32>} : vector<8x8xf32>, vector<8x16xf32>, vector<8x16xf32> -> vector<8x16xf32>
      %82 = arith.addf %80, %81 : vector<8x16xf32>
      %83 = vector.broadcast %79 : vector<1x16xf32> to vector<8x16xf32>
      %84 = arith.addf %82, %83 : vector<8x16xf32>
      %cst_65 = arith.constant 0.000000e+00 : f32
      %85 = vector.broadcast %cst_65 : f32 to vector<8x16xf32>
      %86 = arith.cmpf ogt, %84, %85 : vector<8x16xf32>
      %cst_66 = arith.constant 0.00999999977 : f32
      %87 = vector.broadcast %cst_66 : f32 to vector<8x16xf32>
      %88 = arith.mulf %87, %84 : vector<8x16xf32>
      %89 = arith.select %86, %84, %88 : vector<8x16xi1>, vector<8x16xf32>
      %c0_67 = arith.constant 0 : index
      %c0_68 = arith.constant 0 : index
      %90 = vector.load %arg22[%c0_67, %c0_68] : memref<16x8xf32, #tpu.memory_space<vmem>>, vector<16x8xf32>
      %cst_69 = arith.constant dense<0.000000e+00> : vector<8x8xf32>
      %91 = tpu.matmul %89, %90, %cst_69 {dimension_numbers = #tpu.dot_dimension_numbers<[1], [0], [0], [1], [0, 0, 1, 1], [], []>, precision = #tpu.contract_precision<fp32>} : vector<8x16xf32>, vector<16x8xf32>, vector<8x8xf32> -> vector<8x8xf32>
      %c0_70 = arith.constant 0 : index
      %c0_71 = arith.constant 0 : index
      %92 = vector.load %arg23[%c0_70, %c0_71] : memref<1x8xf32, #tpu.memory_space<vmem>>, vector<1x8xf32>
      %93 = vector.broadcast %92 : vector<1x8xf32> to vector<8x8xf32>
      %94 = arith.addf %91, %93 : vector<8x8xf32>
      %cst_72 = arith.constant dense<0.000000e+00> : vector<8xf32>
      %95 = vector.multi_reduction <add>, %94, %cst_72 [0] : vector<8x8xf32> to vector<8xf32>
      %96 = vector.shape_cast %95 : vector<8xf32> to vector<1x8xf32>
      %cst_73 = arith.constant 8.000000e+00 : f32
      %97 = vector.broadcast %cst_73 : f32 to vector<1x8xf32>
      %98 = arith.divf %96, %97 : vector<1x8xf32>
      %c0_74 = arith.constant 0 : index
      %c0_75 = arith.constant 0 : index
      %99 = vector.load %arg24[%c0_74, %c0_75] : memref<3x8xf32, #tpu.memory_space<vmem>>, vector<3x8xf32>
      %c0_76 = arith.constant 0 : index
      %c0_77 = arith.constant 0 : index
      %100 = vector.load %arg25[%c0_76, %c0_77] : memref<8x8xf32, #tpu.memory_space<vmem>>, vector<8x8xf32>
      %c0_78 = arith.constant 0 : index
      %c0_79 = arith.constant 0 : index
      %101 = vector.load %arg26[%c0_78, %c0_79] : memref<8x8xf32, #tpu.memory_space<vmem>>, vector<8x8xf32>
      %c0_80 = arith.constant 0 : index
      %c0_81 = arith.constant 0 : index
      %102 = vector.load %arg27[%c0_80, %c0_81] : memref<1x8xf32, #tpu.memory_space<vmem>>, vector<1x8xf32>
      %cst_82 = arith.constant dense<0.000000e+00> : vector<8x8xf32>
      %103 = tpu.matmul %1, %99, %cst_82 {dimension_numbers = #tpu.dot_dimension_numbers<[1], [0], [0], [1], [0, 0, 1, 1], [], []>, precision = #tpu.contract_precision<fp32>} : vector<8x3xf32>, vector<3x8xf32>, vector<8x8xf32> -> vector<8x8xf32>
      %cst_83 = arith.constant dense<0.000000e+00> : vector<1x8xf32>
      %104 = tpu.matmul %98, %100, %cst_83 {dimension_numbers = #tpu.dot_dimension_numbers<[1], [0], [0], [1], [0, 0, 1, 1], [], []>, precision = #tpu.contract_precision<fp32>} : vector<1x8xf32>, vector<8x8xf32>, vector<1x8xf32> -> vector<1x8xf32>
      %105 = vector.broadcast %104 : vector<1x8xf32> to vector<8x8xf32>
      %106 = arith.addf %103, %105 : vector<8x8xf32>
      %c0_84 = arith.constant 0 : index
      %c0_85 = arith.constant 0 : index
      %107 = vector.load %arg32[%c0_84, %c0_85] : memref<8x8xf32, #tpu.memory_space<vmem>>, vector<8x8xf32>
      %cst_86 = arith.constant dense<0.000000e+00> : vector<8x8xf32>
      %108 = tpu.matmul %107, %101, %cst_86 {dimension_numbers = #tpu.dot_dimension_numbers<[1], [0], [0], [1], [0, 0, 1, 1], [], []>, precision = #tpu.contract_precision<fp32>} : vector<8x8xf32>, vector<8x8xf32>, vector<8x8xf32> -> vector<8x8xf32>
      %109 = arith.addf %106, %108 : vector<8x8xf32>
      %110 = vector.broadcast %102 : vector<1x8xf32> to vector<8x8xf32>
      %111 = arith.addf %109, %110 : vector<8x8xf32>
      %cst_87 = arith.constant 0.000000e+00 : f32
      %112 = vector.broadcast %cst_87 : f32 to vector<8x8xf32>
      %113 = arith.cmpf ogt, %111, %112 : vector<8x8xf32>
      %cst_88 = arith.constant 0.00999999977 : f32
      %114 = vector.broadcast %cst_88 : f32 to vector<8x8xf32>
      %115 = arith.mulf %114, %111 : vector<8x8xf32>
      %116 = arith.select %113, %111, %115 : vector<8x8xi1>, vector<8x8xf32>
      %c0_89 = arith.constant 0 : index
      %c0_90 = arith.constant 0 : index
      %117 = vector.load %arg28[%c0_89, %c0_90] : memref<8x1xf32, #tpu.memory_space<vmem>>, vector<8x1xf32>
      %cst_91 = arith.constant dense<0.000000e+00> : vector<8x1xf32>
      %118 = tpu.matmul %116, %117, %cst_91 {dimension_numbers = #tpu.dot_dimension_numbers<[1], [0], [0], [1], [0, 0, 1, 1], [], []>, precision = #tpu.contract_precision<fp32>} : vector<8x8xf32>, vector<8x1xf32>, vector<8x1xf32> -> vector<8x1xf32>
      %c0_92 = arith.constant 0 : index
      %c0_93 = arith.constant 0 : index
      %119 = vector.load %arg29[%c0_92, %c0_93] : memref<1x1xf32, #tpu.memory_space<vmem>>, vector<1x1xf32>
      %120 = vector.broadcast %119 : vector<1x1xf32> to vector<8x1xf32>
      %121 = arith.addf %118, %120 : vector<8x1xf32>
      %c0_94 = arith.constant 0 : index
      %c0_95 = arith.constant 0 : index
      %c0_96 = arith.constant 0 : index
      %122 = vector.load %arg30[%c0_94, %c0_95, %c0_96] : memref<1x8x1xf32, #tpu.memory_space<vmem>>, vector<1x8x1xf32>
      %123 = vector.shape_cast %122 : vector<1x8x1xf32> to vector<8x1xf32>
      %124 = vector.shape_cast %121 : vector<8x1xf32> to vector<1x8x1xf32>
      tpu.vector_store %arg30[%c0_94, %c0_95, %c0_96], %124 {strides = array<i32>} : memref<1x8x1xf32, #tpu.memory_space<vmem>>, vector<1x8x1xf32>,
    } else {
    }
    return
  }
  func.func @transform_0(%arg0: i32, %arg1: i32) -> (i32, i32, i32) {
    %c0_i32 = arith.constant 0 : i32
    %c0_i32_0 = arith.constant 0 : i32
    %c0_i32_1 = arith.constant 0 : i32
    return %arg0, %c0_i32, %c0_i32_0 : i32, i32, i32
  }
  func.func @transform_1(%arg0: i32, %arg1: i32) -> (i32, i32, i32, i32) {
    %c0_i32 = arith.constant 0 : i32
    %c0_i32_0 = arith.constant 0 : i32
    %c0_i32_1 = arith.constant 0 : i32
    return %arg0, %arg1, %c0_i32, %c0_i32_0 : i32, i32, i32, i32
  }
  func.func @transform_2(%arg0: i32, %arg1: i32) -> (i32, i32, i32, i32) {
    %c0_i32 = arith.constant 0 : i32
    %c0_i32_0 = arith.constant 0 : i32
    %c0_i32_1 = arith.constant 0 : i32
    return %arg0, %arg1, %c0_i32, %c0_i32_0 : i32, i32, i32, i32
  }
  func.func @transform_3(%arg0: i32, %arg1: i32) -> (i32, i32, i32, i32) {
    %c0_i32 = arith.constant 0 : i32
    %c0_i32_0 = arith.constant 0 : i32
    %c0_i32_1 = arith.constant 0 : i32
    return %arg0, %arg1, %c0_i32, %c0_i32_0 : i32, i32, i32, i32
  }
  func.func @transform_4(%arg0: i32, %arg1: i32) -> (i32, i32) {
    %c0_i32 = arith.constant 0 : i32
    %c0_i32_0 = arith.constant 0 : i32
    %c0_i32_1 = arith.constant 0 : i32
    return %c0_i32, %c0_i32_0 : i32, i32
  }
  func.func @transform_5(%arg0: i32, %arg1: i32) -> (i32, i32) {
    %c0_i32 = arith.constant 0 : i32
    %c0_i32_0 = arith.constant 0 : i32
    %c0_i32_1 = arith.constant 0 : i32
    return %c0_i32, %c0_i32_0 : i32, i32
  }
  func.func @transform_6(%arg0: i32, %arg1: i32) -> (i32, i32) {
    %c0_i32 = arith.constant 0 : i32
    %c0_i32_0 = arith.constant 0 : i32
    %c0_i32_1 = arith.constant 0 : i32
    return %c0_i32, %c0_i32_0 : i32, i32
  }
  func.func @transform_7(%arg0: i32, %arg1: i32) -> (i32, i32) {
    %c0_i32 = arith.constant 0 : i32
    %c0_i32_0 = arith.constant 0 : i32
    %c0_i32_1 = arith.constant 0 : i32
    return %c0_i32, %c0_i32_0 : i32, i32
  }
  func.func @transform_8(%arg0: i32, %arg1: i32) -> (i32, i32) {
    %c0_i32 = arith.constant 0 : i32
    %c0_i32_0 = arith.constant 0 : i32
    %c0_i32_1 = arith.constant 0 : i32
    return %c0_i32, %c0_i32_0 : i32, i32
  }
  func.func @transform_9(%arg0: i32, %arg1: i32) -> (i32, i32) {
    %c0_i32 = arith.constant 0 : i32
    %c0_i32_0 = arith.constant 0 : i32
    %c0_i32_1 = arith.constant 0 : i32
    return %c0_i32, %c0_i32_0 : i32, i32
  }
  func.func @transform_10(%arg0: i32, %arg1: i32) -> (i32, i32) {
    %c0_i32 = arith.constant 0 : i32
    %c0_i32_0 = arith.constant 0 : i32
    %c0_i32_1 = arith.constant 0 : i32
    return %c0_i32, %c0_i32_0 : i32, i32
  }
  func.func @transform_11(%arg0: i32, %arg1: i32) -> (i32, i32) {
    %c0_i32 = arith.constant 0 : i32
    %c0_i32_0 = arith.constant 0 : i32
    %c0_i32_1 = arith.constant 0 : i32
    return %c0_i32, %c0_i32_0 : i32, i32
  }
  func.func @transform_12(%arg0: i32, %arg1: i32) -> (i32, i32) {
    %c0_i32 = arith.constant 0 : i32
    %c0_i32_0 = arith.constant 0 : i32
    %c0_i32_1 = arith.constant 0 : i32
    return %c0_i32, %c0_i32_0 : i32, i32
  }
  func.func @transform_13(%arg0: i32, %arg1: i32) -> (i32, i32) {
    %c0_i32 = arith.constant 0 : i32
    %c0_i32_0 = arith.constant 0 : i32
    %c0_i32_1 = arith.constant 0 : i32
    return %c0_i32, %c0_i32_0 : i32, i32
  }
  func.func @transform_14(%arg0: i32, %arg1: i32) -> (i32, i32) {
    %c0_i32 = arith.constant 0 : i32
    %c0_i32_0 = arith.constant 0 : i32
    %c0_i32_1 = arith.constant 0 : i32
    return %c0_i32, %c0_i32_0 : i32, i32
  }
  func.func @transform_15(%arg0: i32, %arg1: i32) -> (i32, i32) {
    %c0_i32 = arith.constant 0 : i32
    %c0_i32_0 = arith.constant 0 : i32
    %c0_i32_1 = arith.constant 0 : i32
    return %c0_i32, %c0_i32_0 : i32, i32
  }
  func.func @transform_16(%arg0: i32, %arg1: i32) -> (i32, i32) {
    %c0_i32 = arith.constant 0 : i32
    %c0_i32_0 = arith.constant 0 : i32
    %c0_i32_1 = arith.constant 0 : i32
    return %c0_i32, %c0_i32_0 : i32, i32
  }
  func.func @transform_17(%arg0: i32, %arg1: i32) -> (i32, i32) {
    %c0_i32 = arith.constant 0 : i32
    %c0_i32_0 = arith.constant 0 : i32
    %c0_i32_1 = arith.constant 0 : i32
    return %c0_i32, %c0_i32_0 : i32, i32
  }
  func.func @transform_18(%arg0: i32, %arg1: i32) -> (i32, i32) {
    %c0_i32 = arith.constant 0 : i32
    %c0_i32_0 = arith.constant 0 : i32
    %c0_i32_1 = arith.constant 0 : i32
    return %c0_i32, %c0_i32_0 : i32, i32
  }
  func.func @transform_19(%arg0: i32, %arg1: i32) -> (i32, i32) {
    %c0_i32 = arith.constant 0 : i32
    %c0_i32_0 = arith.constant 0 : i32
    %c0_i32_1 = arith.constant 0 : i32
    return %c0_i32, %c0_i32_0 : i32, i32
  }
  func.func @transform_20(%arg0: i32, %arg1: i32) -> (i32, i32) {
    %c0_i32 = arith.constant 0 : i32
    %c0_i32_0 = arith.constant 0 : i32
    %c0_i32_1 = arith.constant 0 : i32
    return %c0_i32, %c0_i32_0 : i32, i32
  }
  func.func @transform_21(%arg0: i32, %arg1: i32) -> (i32, i32) {
    %c0_i32 = arith.constant 0 : i32
    %c0_i32_0 = arith.constant 0 : i32
    %c0_i32_1 = arith.constant 0 : i32
    return %c0_i32, %c0_i32_0 : i32, i32
  }
  func.func @transform_22(%arg0: i32, %arg1: i32) -> (i32, i32) {
    %c0_i32 = arith.constant 0 : i32
    %c0_i32_0 = arith.constant 0 : i32
    %c0_i32_1 = arith.constant 0 : i32
    return %c0_i32, %c0_i32_0 : i32, i32
  }
  func.func @transform_23(%arg0: i32, %arg1: i32) -> (i32, i32) {
    %c0_i32 = arith.constant 0 : i32
    %c0_i32_0 = arith.constant 0 : i32
    %c0_i32_1 = arith.constant 0 : i32
    return %c0_i32, %c0_i32_0 : i32, i32
  }
  func.func @transform_24(%arg0: i32, %arg1: i32) -> (i32, i32) {
    %c0_i32 = arith.constant 0 : i32
    %c0_i32_0 = arith.constant 0 : i32
    %c0_i32_1 = arith.constant 0 : i32
    return %c0_i32, %c0_i32_0 : i32, i32
  }
  func.func @transform_25(%arg0: i32, %arg1: i32) -> (i32, i32) {
    %c0_i32 = arith.constant 0 : i32
    %c0_i32_0 = arith.constant 0 : i32
    %c0_i32_1 = arith.constant 0 : i32
    return %c0_i32, %c0_i32_0 : i32, i32
  }
  func.func @transform_26(%arg0: i32, %arg1: i32) -> (i32, i32) {
    %c0_i32 = arith.constant 0 : i32
    %c0_i32_0 = arith.constant 0 : i32
    %c0_i32_1 = arith.constant 0 : i32
    return %c0_i32, %c0_i32_0 : i32, i32
  }
  func.func @transform_27(%arg0: i32, %arg1: i32) -> (i32, i32) {
    %c0_i32 = arith.constant 0 : i32
    %c0_i32_0 = arith.constant 0 : i32
    %c0_i32_1 = arith.constant 0 : i32
    return %c0_i32, %c0_i32_0 : i32, i32
  }
  func.func @transform_28(%arg0: i32, %arg1: i32) -> (i32, i32, i32) {
    %c0_i32 = arith.constant 0 : i32
    %c0_i32_0 = arith.constant 0 : i32
    %c0_i32_1 = arith.constant 0 : i32
    return %arg0, %c0_i32, %c0_i32_0 : i32, i32, i32
  }
}

</mosaic_0001>

<llo_original>
// kernel: tpu_custom_call.1
$region0: #{tpu_custom_call.1}
  #allocation0 [shape = 'u32[]', space=smem, size = 0x4, offset = 0x4, fixed_abs, tag = 'smem constant byte address 0x4 - core index']
  #allocation1 [shape = 'u32[144,128]{1,0:T(1,128)}', space=vmem, size = 0x12000, scoped, tag = 'internal scratch']
  #allocation2 [shape = 'f32[8,8]{1,0:T(8,128)}', space=vmem, size = 0x1000, scoped, tag = 'scratch operand']
  #allocation3 [shape = 'f32[8,8]{1,0:T(8,128)}', space=vmem, size = 0x1000, scoped, tag = 'scratch operand']
  #allocation4 [shape = 'f32[1,1]{1,0:T(1,128)S(1)}', space=vmem, size = 0x200, scoped, tag = 'scoped memory for tpu_custom_call.1']
  %s0 = inlined_call_operand.vmem [shape: f32[2,8,3], index: 0, kind: input, shape index: {}]
  %s1 = inlined_call_operand.vmem [shape: f32[2,8,1,3], index: 1, kind: input, shape index: {}]
  %s2 = inlined_call_operand.vmem [shape: f32[2,8,8,1], index: 2, kind: input, shape index: {}]
  %s3 = inlined_call_operand.vmem [shape: f32[2,8,8,1], index: 3, kind: input, shape index: {}]
  %s4 = inlined_call_operand.vmem [shape: f32[3,16], index: 4, kind: input, shape index: {}]
  %s5 = inlined_call_operand.vmem [shape: f32[1,16], index: 5, kind: input, shape index: {}]
  %s6 = inlined_call_operand.vmem [shape: f32[3,16], index: 6, kind: input, shape index: {}]
  %s7 = inlined_call_operand.vmem [shape: f32[1,16], index: 7, kind: input, shape index: {}]
  %s8 = inlined_call_operand.vmem [shape: f32[16,8], index: 8, kind: input, shape index: {}]
  %s9 = inlined_call_operand.vmem [shape: f32[1,8], index: 9, kind: input, shape index: {}]
  %s10 = inlined_call_operand.vmem [shape: f32[3,16], index: 10, kind: input, shape index: {}]
  %s11 = inlined_call_operand.vmem [shape: f32[1,16], index: 11, kind: input, shape index: {}]
  %s12 = inlined_call_operand.vmem [shape: f32[1,16], index: 12, kind: input, shape index: {}]
  %s13 = inlined_call_operand.vmem [shape: f32[3,16], index: 13, kind: input, shape index: {}]
  %s14 = inlined_call_operand.vmem [shape: f32[1,16], index: 14, kind: input, shape index: {}]
  %s15 = inlined_call_operand.vmem [shape: f32[16,8], index: 15, kind: input, shape index: {}]
  %s16 = inlined_call_operand.vmem [shape: f32[1,8], index: 16, kind: input, shape index: {}]
  %s17 = inlined_call_operand.vmem [shape: f32[3,16], index: 17, kind: input, shape index: {}]
  %s18 = inlined_call_operand.vmem [shape: f32[8,16], index: 18, kind: input, shape index: {}]
  %s19 = inlined_call_operand.vmem [shape: f32[1,16], index: 19, kind: input, shape index: {}]
  %s20 = inlined_call_operand.vmem [shape: f32[16,8], index: 20, kind: input, shape index: {}]
  %s21 = inlined_call_operand.vmem [shape: f32[1,8], index: 21, kind: input, shape index: {}]
  %s22 = inlined_call_operand.vmem [shape: f32[3,8], index: 22, kind: input, shape index: {}]
  %s23 = inlined_call_operand.vmem [shape: f32[8,8], index: 23, kind: input, shape index: {}]
  %s24 = inlined_call_operand.vmem [shape: f32[8,8], index: 24, kind: input, shape index: {}]
  %s25 = inlined_call_operand.vmem [shape: f32[1,8], index: 25, kind: input, shape index: {}]
  %s26 = inlined_call_operand.vmem [shape: f32[8,1], index: 26, kind: input, shape index: {}]
  %s27 = inlined_call_operand.<no memory space> [shape: f32[1,1], index: 27, kind: input, shape index: {}]
  %s28 = inlined_call_operand.vmem [shape: f32[2,8,1], index: 28, kind: output, shape index: {}]
  %s29 = sld [smem:[#allocation0]]
  $region149: #{tpu_custom_call.1} parent=0
    _
  %s31 = ssub.s32 1, %s29
  %s32 = scalar_select 0, %s31, %s29
  %v33 = vstv %s27
  %34 = vst [vmem:[#allocation4] sm:$0x1] %v33
  loop: start=0, step=1, limit=18
  $region2: #{tpu_custom_call.1} parent=0 // loop_pre_header
    _
  $region3: #{tpu_custom_call.1} parent=0 // loop_header
    %s36 = sphi 0, %s40
    %p37 = scmp.ge.s32.totalorder %s36, 18
    %s43 = sphi 0, %s55
    %s44 = sphi 0, %s51
    %s45 = sphi 0, %s43
    %s46 = sphi 0, %s44
    %s47 = sphi 0, %s45
    %s48 = sphi 0, %s46
    %s58 = sphi 0, %s60
    %s61 = sphi 0, %s58
    %s62 = sphi 0, %s61
    %s78 = sphi 0, %s62
    %s86 = sphi 0, %s88
    %s89 = sphi 0, %s86
    %s90 = sphi 0, %s89
    %s106 = sphi 0, %s90
    %s114 = sphi 0, %s116
    %s117 = sphi 0, %s114
    %s118 = sphi 0, %s117
    %s134 = sphi 0, %s118
    %s142 = sphi 0, %s144
    %s145 = sphi 0, %s142
    %s146 = sphi 0, %s145
    %s162 = sphi 0, %s146
    %s166 = sphi 0, %s166
    %s168 = sphi 0, %s166
    %s169 = sphi 0, %s168
    %s183 = sphi 0, %s169
    %s187 = sphi 0, %s187
    %s189 = sphi 0, %s187
    %s190 = sphi 0, %s189
    %s204 = sphi 0, %s190
    %s208 = sphi 0, %s208
    %s210 = sphi 0, %s208
    %s211 = sphi 0, %s210
    %s225 = sphi 0, %s211
    %s229 = sphi 0, %s229
    %s231 = sphi 0, %s229
    %s232 = sphi 0, %s231
    %s246 = sphi 0, %s232
    %s250 = sphi 0, %s250
    %s252 = sphi 0, %s250
    %s253 = sphi 0, %s252
    %s267 = sphi 0, %s253
    %s271 = sphi 0, %s271
    %s273 = sphi 0, %s271
    %s274 = sphi 0, %s273
    %s288 = sphi 0, %s274
    %s292 = sphi 0, %s292
    %s294 = sphi 0, %s292
    %s295 = sphi 0, %s294
    %s309 = sphi 0, %s295
    %s313 = sphi 0, %s313
    %s315 = sphi 0, %s313
    %s316 = sphi 0, %s315
    %s330 = sphi 0, %s316
    %s334 = sphi 0, %s334
    %s336 = sphi 0, %s334
    %s337 = sphi 0, %s336
    %s351 = sphi 0, %s337
    %s355 = sphi 0, %s355
    %s357 = sphi 0, %s355
    %s358 = sphi 0, %s357
    %s372 = sphi 0, %s358
    %s376 = sphi 0, %s376
    %s378 = sphi 0, %s376
    %s379 = sphi 0, %s378
    %s393 = sphi 0, %s379
    %s397 = sphi 0, %s397
    %s399 = sphi 0, %s397
    %s400 = sphi 0, %s399
    %s414 = sphi 0, %s400
    %s418 = sphi 0, %s418
    %s420 = sphi 0, %s418
    %s421 = sphi 0, %s420
    %s435 = sphi 0, %s421
    %s439 = sphi 0, %s439
    %s441 = sphi 0, %s439
    %s442 = sphi 0, %s441
    %s456 = sphi 0, %s442
    %s460 = sphi 0, %s460
    %s462 = sphi 0, %s460
    %s463 = sphi 0, %s462
    %s477 = sphi 0, %s463
    %s481 = sphi 0, %s481
    %s483 = sphi 0, %s481
    %s484 = sphi 0, %s483
    %s498 = sphi 0, %s484
    %s502 = sphi 0, %s502
    %s504 = sphi 0, %s502
    %s505 = sphi 0, %s504
    %s519 = sphi 0, %s505
    %s523 = sphi 0, %s523
    %s525 = sphi 0, %s523
    %s526 = sphi 0, %s525
    %s540 = sphi 0, %s526
    %s544 = sphi 0, %s544
    %s546 = sphi 0, %s544
    %s547 = sphi 0, %s546
    %s561 = sphi 0, %s547
    %s565 = sphi 0, %s565
    %s567 = sphi 0, %s565
    %s568 = sphi 0, %s567
    %s582 = sphi 0, %s568
    %s586 = sphi 0, %s586
    %s588 = sphi 0, %s586
    %s589 = sphi 0, %s588
    %s603 = sphi 0, %s589
    %s607 = sphi 0, %s607
    %s609 = sphi 0, %s607
    %s610 = sphi 0, %s609
    %s624 = sphi 0, %s610
    %s628 = sphi 0, %s628
    %s630 = sphi 0, %s628
    %s631 = sphi 0, %s630
    %s645 = sphi 0, %s631
    %s649 = sphi 0, %s649
    %s651 = sphi 0, %s649
    %s652 = sphi 0, %s651
    %s666 = sphi 0, %s652
    %s672 = sphi 0, %s674
    %s675 = sphi 0, %s672
    %s676 = sphi 0, %s675
    %s692 = sphi 0, %s676
  $region4: #{tpu_custom_call.1} parent=0 // loop_header_branch
    %39 = sbr.rel (%p37) target = $region8
  $region5: #{tpu_custom_call.1} parent=0 // loop_body
    %s41 = ssub.s32 %s36, 1
    %s42 = ssub.s32 %s36, 2
    %s49 = sadd.s32 1, %s44
    %p50 = scmp.ge.s32.totalorder %s49, 8
    %s51 = scalar_select %p50, 0, %s49
    %s52 = sadd.s32 1, %s43
    %s53 = scalar_select %p50, %s52, %s43
    %p54 = scmp.ge.s32.totalorder %s53, 2
    %s55 = scalar_select %p54, 0, %s53
    %s56 = ssub.s32 %s43, %s55
    %p57 = scmp.eq.s32.totalorder %s56, 0
    %s59 = sadd.s32 %s58, 1
    %s60 = scalar_select %p57, %s58, %s59
    %p63 = pneg %p57
    %p64 = scmp.eq.s32.totalorder %s36, 15
    %p65 = por %p63, %p64
    %p66 = scmp.ne.s32.totalorder %s58, %s61
    %p67 = scmp.eq.s32.totalorder %s36, 0
    %p68 = por %p66, %p67
    %p69 = scmp.ne.s32.totalorder %s58, %s61
    %p70 = scmp.eq.s32.totalorder %s41, 15
    %p71 = por %p69, %p70
    %p72 = scmp.ne.s32.totalorder %s61, %s62
    %p73 = scmp.eq.s32.totalorder %s41, 0
    %p74 = por %p72, %p73
    %p75 = scmp.ne.s32.totalorder %s61, %s62
    %p76 = scmp.eq.s32.totalorder %s42, 15
    %p77 = por %p75, %p76
    %p79 = scmp.ne.s32.totalorder %s62, %s78
    %p80 = scmp.eq.s32.totalorder %s42, 0
    %p81 = por %p79, %p80
    %s82 = ssub.s32 %s43, %s55
    %s83 = ssub.s32 %s44, %s51
    %s84 = sor.u32 %s82, %s83
    %p85 = scmp.eq.s32.totalorder %s84, 0
    %s87 = sadd.s32 %s86, 1
    %s88 = scalar_select %p85, %s86, %s87
    %p91 = pneg %p85
    %p92 = scmp.eq.s32.totalorder %s36, 15
    %p93 = por %p91, %p92
    %p94 = scmp.ne.s32.totalorder %s86, %s89
    %p95 = scmp.eq.s32.totalorder %s36, 0
    %p96 = por %p94, %p95
    %p97 = scmp.ne.s32.totalorder %s86, %s89
    %p98 = scmp.eq.s32.totalorder %s41, 15
    %p99 = por %p97, %p98
    %p100 = scmp.ne.s32.totalorder %s89, %s90
    %p101 = scmp.eq.s32.totalorder %s41, 0
    %p102 = por %p100, %p101
    %p103 = scmp.ne.s32.totalorder %s89, %s90
    %p104 = scmp.eq.s32.totalorder %s42, 15
    %p105 = por %p103, %p104
    %p107 = scmp.ne.s32.totalorder %s90, %s106
    %p108 = scmp.eq.s32.totalorder %s42, 0
    %p109 = por %p107, %p108
    %s110 = ssub.s32 %s43, %s55
    %s111 = ssub.s32 %s44, %s51
    %s112 = sor.u32 %s110, %s111
    %p113 = scmp.eq.s32.totalorder %s112, 0
    %s115 = sadd.s32 %s114, 1
    %s116 = scalar_select %p113, %s114, %s115
    %p119 = pneg %p113
    %p120 = scmp.eq.s32.totalorder %s36, 15
    %p121 = por %p119, %p120
    %p122 = scmp.ne.s32.totalorder %s114, %s117
    %p123 = scmp.eq.s32.totalorder %s36, 0
    %p124 = por %p122, %p123
    %p125 = scmp.ne.s32.totalorder %s114, %s117
    %p126 = scmp.eq.s32.totalorder %s41, 15
    %p127 = por %p125, %p126
    %p128 = scmp.ne.s32.totalorder %s117, %s118
    %p129 = scmp.eq.s32.totalorder %s41, 0
    %p130 = por %p128, %p129
    %p131 = scmp.ne.s32.totalorder %s117, %s118
    %p132 = scmp.eq.s32.totalorder %s42, 15
    %p133 = por %p131, %p132
    %p135 = scmp.ne.s32.totalorder %s118, %s134
    %p136 = scmp.eq.s32.totalorder %s42, 0
    %p137 = por %p135, %p136
    %s138 = ssub.s32 %s43, %s55
    %s139 = ssub.s32 %s44, %s51
    %s140 = sor.u32 %s138, %s139
    %p141 = scmp.eq.s32.totalorder %s140, 0
    %s143 = sadd.s32 %s142, 1
    %s144 = scalar_select %p141, %s142, %s143
    %p147 = pneg %p141
    %p148 = scmp.eq.s32.totalorder %s36, 15
    %p149 = por %p147, %p148
    %p150 = scmp.ne.s32.totalorder %s142, %s145
    %p151 = scmp.eq.s32.totalorder %s36, 0
    %p152 = por %p150, %p151
    %p153 = scmp.ne.s32.totalorder %s142, %s145
    %p154 = scmp.eq.s32.totalorder %s41, 15
    %p155 = por %p153, %p154
    %p156 = scmp.ne.s32.totalorder %s145, %s146
    %p157 = scmp.eq.s32.totalorder %s41, 0
    %p158 = por %p156, %p157
    %p159 = scmp.ne.s32.totalorder %s145, %s146
    %p160 = scmp.eq.s32.totalorder %s42, 15
    %p161 = por %p159, %p160
    %p163 = scmp.ne.s32.totalorder %s146, %s162
    %p164 = scmp.eq.s32.totalorder %s42, 0
    %p165 = por %p163, %p164
    %s167 = sadd.s32 %s166, 1
    %p170 = scmp.eq.s32.totalorder %s36, 15
    %p171 = scmp.ne.s32.totalorder %s166, %s168
    %p172 = scmp.eq.s32.totalorder %s36, 0
    %p173 = por %p171, %p172
    %p174 = scmp.ne.s32.totalorder %s166, %s168
    %p175 = scmp.eq.s32.totalorder %s41, 15
    %p176 = por %p174, %p175
    %p177 = scmp.ne.s32.totalorder %s168, %s169
    %p178 = scmp.eq.s32.totalorder %s41, 0
    %p179 = por %p177, %p178
    %p180 = scmp.ne.s32.totalorder %s168, %s169
    %p181 = scmp.eq.s32.totalorder %s42, 15
    %p182 = por %p180, %p181
    %p184 = scmp.ne.s32.totalorder %s169, %s183
    %p185 = scmp.eq.s32.totalorder %s42, 0
    %p186 = por %p184, %p185
    %s188 = sadd.s32 %s187, 1
    %p191 = scmp.eq.s32.totalorder %s36, 15
    %p192 = scmp.ne.s32.totalorder %s187, %s189
    %p193 = scmp.eq.s32.totalorder %s36, 0
    %p194 = por %p192, %p193
    %p195 = scmp.ne.s32.totalorder %s187, %s189
    %p196 = scmp.eq.s32.totalorder %s41, 15
    %p197 = por %p195, %p196
    %p198 = scmp.ne.s32.totalorder %s189, %s190
    %p199 = scmp.eq.s32.totalorder %s41, 0
    %p200 = por %p198, %p199
    %p201 = scmp.ne.s32.totalorder %s189, %s190
    %p202 = scmp.eq.s32.totalorder %s42, 15
    %p203 = por %p201, %p202
    %p205 = scmp.ne.s32.totalorder %s190, %s204
    %p206 = scmp.eq.s32.totalorder %s42, 0
    %p207 = por %p205, %p206
    %s209 = sadd.s32 %s208, 1
    %p212 = scmp.eq.s32.totalorder %s36, 15
    %p213 = scmp.ne.s32.totalorder %s208, %s210
    %p214 = scmp.eq.s32.totalorder %s36, 0
    %p215 = por %p213, %p214
    %p216 = scmp.ne.s32.totalorder %s208, %s210
    %p217 = scmp.eq.s32.totalorder %s41, 15
    %p218 = por %p216, %p217
    %p219 = scmp.ne.s32.totalorder %s210, %s211
    %p220 = scmp.eq.s32.totalorder %s41, 0
    %p221 = por %p219, %p220
    %p222 = scmp.ne.s32.totalorder %s210, %s211
    %p223 = scmp.eq.s32.totalorder %s42, 15
    %p224 = por %p222, %p223
    %p226 = scmp.ne.s32.totalorder %s211, %s225
    %p227 = scmp.eq.s32.totalorder %s42, 0
    %p228 = por %p226, %p227
    %s230 = sadd.s32 %s229, 1
    %p233 = scmp.eq.s32.totalorder %s36, 15
    %p234 = scmp.ne.s32.totalorder %s229, %s231
    %p235 = scmp.eq.s32.totalorder %s36, 0
    %p236 = por %p234, %p235
    %p237 = scmp.ne.s32.totalorder %s229, %s231
    %p238 = scmp.eq.s32.totalorder %s41, 15
    %p239 = por %p237, %p238
    %p240 = scmp.ne.s32.totalorder %s231, %s232
    %p241 = scmp.eq.s32.totalorder %s41, 0
    %p242 = por %p240, %p241
    %p243 = scmp.ne.s32.totalorder %s231, %s232
    %p244 = scmp.eq.s32.totalorder %s42, 15
    %p245 = por %p243, %p244
    %p247 = scmp.ne.s32.totalorder %s232, %s246
    %p248 = scmp.eq.s32.totalorder %s42, 0
    %p249 = por %p247, %p248
    %s251 = sadd.s32 %s250, 1
    %p254 = scmp.eq.s32.totalorder %s36, 15
    %p255 = scmp.ne.s32.totalorder %s250, %s252
    %p256 = scmp.eq.s32.totalorder %s36, 0
    %p257 = por %p255, %p256
    %p258 = scmp.ne.s32.totalorder %s250, %s252
    %p259 = scmp.eq.s32.totalorder %s41, 15
    %p260 = por %p258, %p259
    %p261 = scmp.ne.s32.totalorder %s252, %s253
    %p262 = scmp.eq.s32.totalorder %s41, 0
    %p263 = por %p261, %p262
    %p264 = scmp.ne.s32.totalorder %s252, %s253
    %p265 = scmp.eq.s32.totalorder %s42, 15
    %p266 = por %p264, %p265
    %p268 = scmp.ne.s32.totalorder %s253, %s267
    %p269 = scmp.eq.s32.totalorder %s42, 0
    %p270 = por %p268, %p269
    %s272 = sadd.s32 %s271, 1
    %p275 = scmp.eq.s32.totalorder %s36, 15
    %p276 = scmp.ne.s32.totalorder %s271, %s273
    %p277 = scmp.eq.s32.totalorder %s36, 0
    %p278 = por %p276, %p277
    %p279 = scmp.ne.s32.totalorder %s271, %s273
    %p280 = scmp.eq.s32.totalorder %s41, 15
    %p281 = por %p279, %p280
    %p282 = scmp.ne.s32.totalorder %s273, %s274
    %p283 = scmp.eq.s32.totalorder %s41, 0
    %p284 = por %p282, %p283
    %p285 = scmp.ne.s32.totalorder %s273, %s274
    %p286 = scmp.eq.s32.totalorder %s42, 15
    %p287 = por %p285, %p286
    %p289 = scmp.ne.s32.totalorder %s274, %s288
    %p290 = scmp.eq.s32.totalorder %s42, 0
    %p291 = por %p289, %p290
    %s293 = sadd.s32 %s292, 1
    %p296 = scmp.eq.s32.totalorder %s36, 15
    %p297 = scmp.ne.s32.totalorder %s292, %s294
    %p298 = scmp.eq.s32.totalorder %s36, 0
    %p299 = por %p297, %p298
    %p300 = scmp.ne.s32.totalorder %s292, %s294
    %p301 = scmp.eq.s32.totalorder %s41, 15
    %p302 = por %p300, %p301
    %p303 = scmp.ne.s32.totalorder %s294, %s295
    %p304 = scmp.eq.s32.totalorder %s41, 0
    %p305 = por %p303, %p304
    %p306 = scmp.ne.s32.totalorder %s294, %s295
    %p307 = scmp.eq.s32.totalorder %s42, 15
    %p308 = por %p306, %p307
    %p310 = scmp.ne.s32.totalorder %s295, %s309
    %p311 = scmp.eq.s32.totalorder %s42, 0
    %p312 = por %p310, %p311
    %s314 = sadd.s32 %s313, 1
    %p317 = scmp.eq.s32.totalorder %s36, 15
    %p318 = scmp.ne.s32.totalorder %s313, %s315
    %p319 = scmp.eq.s32.totalorder %s36, 0
    %p320 = por %p318, %p319
    %p321 = scmp.ne.s32.totalorder %s313, %s315
    %p322 = scmp.eq.s32.totalorder %s41, 15
    %p323 = por %p321, %p322
    %p324 = scmp.ne.s32.totalorder %s315, %s316
    %p325 = scmp.eq.s32.totalorder %s41, 0
    %p326 = por %p324, %p325
    %p327 = scmp.ne.s32.totalorder %s315, %s316
    %p328 = scmp.eq.s32.totalorder %s42, 15
    %p329 = por %p327, %p328
    %p331 = scmp.ne.s32.totalorder %s316, %s330
    %p332 = scmp.eq.s32.totalorder %s42, 0
    %p333 = por %p331, %p332
    %s335 = sadd.s32 %s334, 1
    %p338 = scmp.eq.s32.totalorder %s36, 15
    %p339 = scmp.ne.s32.totalorder %s334, %s336
    %p340 = scmp.eq.s32.totalorder %s36, 0
    %p341 = por %p339, %p340
    %p342 = scmp.ne.s32.totalorder %s334, %s336
    %p343 = scmp.eq.s32.totalorder %s41, 15
    %p344 = por %p342, %p343
    %p345 = scmp.ne.s32.totalorder %s336, %s337
    %p346 = scmp.eq.s32.totalorder %s41, 0
    %p347 = por %p345, %p346
    %p348 = scmp.ne.s32.totalorder %s336, %s337
    %p349 = scmp.eq.s32.totalorder %s42, 15
    %p350 = por %p348, %p349
    %p352 = scmp.ne.s32.totalorder %s337, %s351
    %p353 = scmp.eq.s32.totalorder %s42, 0
    %p354 = por %p352, %p353
    %s356 = sadd.s32 %s355, 1
    %p359 = scmp.eq.s32.totalorder %s36, 15
    %p360 = scmp.ne.s32.totalorder %s355, %s357
    %p361 = scmp.eq.s32.totalorder %s36, 0
    %p362 = por %p360, %p361
    %p363 = scmp.ne.s32.totalorder %s355, %s357
    %p364 = scmp.eq.s32.totalorder %s41, 15
    %p365 = por %p363, %p364
    %p366 = scmp.ne.s32.totalorder %s357, %s358
    %p367 = scmp.eq.s32.totalorder %s41, 0
    %p368 = por %p366, %p367
    %p369 = scmp.ne.s32.totalorder %s357, %s358
    %p370 = scmp.eq.s32.totalorder %s42, 15
    %p371 = por %p369, %p370
    %p373 = scmp.ne.s32.totalorder %s358, %s372
    %p374 = scmp.eq.s32.totalorder %s42, 0
    %p375 = por %p373, %p374
    %s377 = sadd.s32 %s376, 1
    %p380 = scmp.eq.s32.totalorder %s36, 15
    %p381 = scmp.ne.s32.totalorder %s376, %s378
    %p382 = scmp.eq.s32.totalorder %s36, 0
    %p383 = por %p381, %p382
    %p384 = scmp.ne.s32.totalorder %s376, %s378
    %p385 = scmp.eq.s32.totalorder %s41, 15
    %p386 = por %p384, %p385
    %p387 = scmp.ne.s32.totalorder %s378, %s379
    %p388 = scmp.eq.s32.totalorder %s41, 0
    %p389 = por %p387, %p388
    %p390 = scmp.ne.s32.totalorder %s378, %s379
    %p391 = scmp.eq.s32.totalorder %s42, 15
    %p392 = por %p390, %p391
    %p394 = scmp.ne.s32.totalorder %s379, %s393
    %p395 = scmp.eq.s32.totalorder %s42, 0
    %p396 = por %p394, %p395
    %s398 = sadd.s32 %s397, 1
    %p401 = scmp.eq.s32.totalorder %s36, 15
    %p402 = scmp.ne.s32.totalorder %s397, %s399
    %p403 = scmp.eq.s32.totalorder %s36, 0
    %p404 = por %p402, %p403
    %p405 = scmp.ne.s32.totalorder %s397, %s399
    %p406 = scmp.eq.s32.totalorder %s41, 15
    %p407 = por %p405, %p406
    %p408 = scmp.ne.s32.totalorder %s399, %s400
    %p409 = scmp.eq.s32.totalorder %s41, 0
    %p410 = por %p408, %p409
    %p411 = scmp.ne.s32.totalorder %s399, %s400
    %p412 = scmp.eq.s32.totalorder %s42, 15
    %p413 = por %p411, %p412
    %p415 = scmp.ne.s32.totalorder %s400, %s414
    %p416 = scmp.eq.s32.totalorder %s42, 0
    %p417 = por %p415, %p416
    %s419 = sadd.s32 %s418, 1
    %p422 = scmp.eq.s32.totalorder %s36, 15
    %p423 = scmp.ne.s32.totalorder %s418, %s420
    %p424 = scmp.eq.s32.totalorder %s36, 0
    %p425 = por %p423, %p424
    %p426 = scmp.ne.s32.totalorder %s418, %s420
    %p427 = scmp.eq.s32.totalorder %s41, 15
    %p428 = por %p426, %p427
    %p429 = scmp.ne.s32.totalorder %s420, %s421
    %p430 = scmp.eq.s32.totalorder %s41, 0
    %p431 = por %p429, %p430
    %p432 = scmp.ne.s32.totalorder %s420, %s421
    %p433 = scmp.eq.s32.totalorder %s42, 15
    %p434 = por %p432, %p433
    %p436 = scmp.ne.s32.totalorder %s421, %s435
    %p437 = scmp.eq.s32.totalorder %s42, 0
    %p438 = por %p436, %p437
    %s440 = sadd.s32 %s439, 1
    %p443 = scmp.eq.s32.totalorder %s36, 15
    %p444 = scmp.ne.s32.totalorder %s439, %s441
    %p445 = scmp.eq.s32.totalorder %s36, 0
    %p446 = por %p444, %p445
    %p447 = scmp.ne.s32.totalorder %s439, %s441
    %p448 = scmp.eq.s32.totalorder %s41, 15
    %p449 = por %p447, %p448
    %p450 = scmp.ne.s32.totalorder %s441, %s442
    %p451 = scmp.eq.s32.totalorder %s41, 0
    %p452 = por %p450, %p451
    %p453 = scmp.ne.s32.totalorder %s441, %s442
    %p454 = scmp.eq.s32.totalorder %s42, 15
    %p455 = por %p453, %p454
    %p457 = scmp.ne.s32.totalorder %s442, %s456
    %p458 = scmp.eq.s32.totalorder %s42, 0
    %p459 = por %p457, %p458
    %s461 = sadd.s32 %s460, 1
    %p464 = scmp.eq.s32.totalorder %s36, 15
    %p465 = scmp.ne.s32.totalorder %s460, %s462
    %p466 = scmp.eq.s32.totalorder %s36, 0
    %p467 = por %p465, %p466
    %p468 = scmp.ne.s32.totalorder %s460, %s462
    %p469 = scmp.eq.s32.totalorder %s41, 15
    %p470 = por %p468, %p469
    %p471 = scmp.ne.s32.totalorder %s462, %s463
    %p472 = scmp.eq.s32.totalorder %s41, 0
    %p473 = por %p471, %p472
    %p474 = scmp.ne.s32.totalorder %s462, %s463
    %p475 = scmp.eq.s32.totalorder %s42, 15
    %p476 = por %p474, %p475
    %p478 = scmp.ne.s32.totalorder %s463, %s477
    %p479 = scmp.eq.s32.totalorder %s42, 0
    %p480 = por %p478, %p479
    %s482 = sadd.s32 %s481, 1
    %p485 = scmp.eq.s32.totalorder %s36, 15
    %p486 = scmp.ne.s32.totalorder %s481, %s483
    %p487 = scmp.eq.s32.totalorder %s36, 0
    %p488 = por %p486, %p487
    %p489 = scmp.ne.s32.totalorder %s481, %s483
    %p490 = scmp.eq.s32.totalorder %s41, 15
    %p491 = por %p489, %p490
    %p492 = scmp.ne.s32.totalorder %s483, %s484
    %p493 = scmp.eq.s32.totalorder %s41, 0
    %p494 = por %p492, %p493
    %p495 = scmp.ne.s32.totalorder %s483, %s484
    %p496 = scmp.eq.s32.totalorder %s42, 15
    %p497 = por %p495, %p496
    %p499 = scmp.ne.s32.totalorder %s484, %s498
    %p500 = scmp.eq.s32.totalorder %s42, 0
    %p501 = por %p499, %p500
    %s503 = sadd.s32 %s502, 1
    %p506 = scmp.eq.s32.totalorder %s36, 15
    %p507 = scmp.ne.s32.totalorder %s502, %s504
    %p508 = scmp.eq.s32.totalorder %s36, 0
    %p509 = por %p507, %p508
    %p510 = scmp.ne.s32.totalorder %s502, %s504
    %p511 = scmp.eq.s32.totalorder %s41, 15
    %p512 = por %p510, %p511
    %p513 = scmp.ne.s32.totalorder %s504, %s505
    %p514 = scmp.eq.s32.totalorder %s41, 0
    %p515 = por %p513, %p514
    %p516 = scmp.ne.s32.totalorder %s504, %s505
    %p517 = scmp.eq.s32.totalorder %s42, 15
    %p518 = por %p516, %p517
    %p520 = scmp.ne.s32.totalorder %s505, %s519
    %p521 = scmp.eq.s32.totalorder %s42, 0
    %p522 = por %p520, %p521
    %s524 = sadd.s32 %s523, 1
    %p527 = scmp.eq.s32.totalorder %s36, 15
    %p528 = scmp.ne.s32.totalorder %s523, %s525
    %p529 = scmp.eq.s32.totalorder %s36, 0
    %p530 = por %p528, %p529
    %p531 = scmp.ne.s32.totalorder %s523, %s525
    %p532 = scmp.eq.s32.totalorder %s41, 15
    %p533 = por %p531, %p532
    %p534 = scmp.ne.s32.totalorder %s525, %s526
    %p535 = scmp.eq.s32.totalorder %s41, 0
    %p536 = por %p534, %p535
    %p537 = scmp.ne.s32.totalorder %s525, %s526
    %p538 = scmp.eq.s32.totalorder %s42, 15
    %p539 = por %p537, %p538
    %p541 = scmp.ne.s32.totalorder %s526, %s540
    %p542 = scmp.eq.s32.totalorder %s42, 0
    %p543 = por %p541, %p542
    %s545 = sadd.s32 %s544, 1
    %p548 = scmp.eq.s32.totalorder %s36, 15
    %p549 = scmp.ne.s32.totalorder %s544, %s546
    %p550 = scmp.eq.s32.totalorder %s36, 0
    %p551 = por %p549, %p550
    %p552 = scmp.ne.s32.totalorder %s544, %s546
    %p553 = scmp.eq.s32.totalorder %s41, 15
    %p554 = por %p552, %p553
    %p555 = scmp.ne.s32.totalorder %s546, %s547
    %p556 = scmp.eq.s32.totalorder %s41, 0
    %p557 = por %p555, %p556
    %p558 = scmp.ne.s32.totalorder %s546, %s547
    %p559 = scmp.eq.s32.totalorder %s42, 15
    %p560 = por %p558, %p559
    %p562 = scmp.ne.s32.totalorder %s547, %s561
    %p563 = scmp.eq.s32.totalorder %s42, 0
    %p564 = por %p562, %p563
    %s566 = sadd.s32 %s565, 1
    %p569 = scmp.eq.s32.totalorder %s36, 15
    %p570 = scmp.ne.s32.totalorder %s565, %s567
    %p571 = scmp.eq.s32.totalorder %s36, 0
    %p572 = por %p570, %p571
    %p573 = scmp.ne.s32.totalorder %s565, %s567
    %p574 = scmp.eq.s32.totalorder %s41, 15
    %p575 = por %p573, %p574
    %p576 = scmp.ne.s32.totalorder %s567, %s568
    %p577 = scmp.eq.s32.totalorder %s41, 0
    %p578 = por %p576, %p577
    %p579 = scmp.ne.s32.totalorder %s567, %s568
    %p580 = scmp.eq.s32.totalorder %s42, 15
    %p581 = por %p579, %p580
    %p583 = scmp.ne.s32.totalorder %s568, %s582
    %p584 = scmp.eq.s32.totalorder %s42, 0
    %p585 = por %p583, %p584
    %s587 = sadd.s32 %s586, 1
    %p590 = scmp.eq.s32.totalorder %s36, 15
    %p591 = scmp.ne.s32.totalorder %s586, %s588
    %p592 = scmp.eq.s32.totalorder %s36, 0
    %p593 = por %p591, %p592
    %p594 = scmp.ne.s32.totalorder %s586, %s588
    %p595 = scmp.eq.s32.totalorder %s41, 15
    %p596 = por %p594, %p595
    %p597 = scmp.ne.s32.totalorder %s588, %s589
    %p598 = scmp.eq.s32.totalorder %s41, 0
    %p599 = por %p597, %p598
    %p600 = scmp.ne.s32.totalorder %s588, %s589
    %p601 = scmp.eq.s32.totalorder %s42, 15
    %p602 = por %p600, %p601
    %p604 = scmp.ne.s32.totalorder %s589, %s603
    %p605 = scmp.eq.s32.totalorder %s42, 0
    %p606 = por %p604, %p605
    %s608 = sadd.s32 %s607, 1
    %p611 = scmp.eq.s32.totalorder %s36, 15
    %p612 = scmp.ne.s32.totalorder %s607, %s609
    %p613 = scmp.eq.s32.totalorder %s36, 0
    %p614 = por %p612, %p613
    %p615 = scmp.ne.s32.totalorder %s607, %s609
    %p616 = scmp.eq.s32.totalorder %s41, 15
    %p617 = por %p615, %p616
    %p618 = scmp.ne.s32.totalorder %s609, %s610
    %p619 = scmp.eq.s32.totalorder %s41, 0
    %p620 = por %p618, %p619
    %p621 = scmp.ne.s32.totalorder %s609, %s610
    %p622 = scmp.eq.s32.totalorder %s42, 15
    %p623 = por %p621, %p622
    %p625 = scmp.ne.s32.totalorder %s610, %s624
    %p626 = scmp.eq.s32.totalorder %s42, 0
    %p627 = por %p625, %p626
    %s629 = sadd.s32 %s628, 1
    %p632 = scmp.eq.s32.totalorder %s36, 15
    %p633 = scmp.ne.s32.totalorder %s628, %s630
    %p634 = scmp.eq.s32.totalorder %s36, 0
    %p635 = por %p633, %p634
    %p636 = scmp.ne.s32.totalorder %s628, %s630
    %p637 = scmp.eq.s32.totalorder %s41, 15
    %p638 = por %p636, %p637
    %p639 = scmp.ne.s32.totalorder %s630, %s631
    %p640 = scmp.eq.s32.totalorder %s41, 0
    %p641 = por %p639, %p640
    %p642 = scmp.ne.s32.totalorder %s630, %s631
    %p643 = scmp.eq.s32.totalorder %s42, 15
    %p644 = por %p642, %p643
    %p646 = scmp.ne.s32.totalorder %s631, %s645
    %p647 = scmp.eq.s32.totalorder %s42, 0
    %p648 = por %p646, %p647
    %s650 = sadd.s32 %s649, 1
    %p653 = scmp.eq.s32.totalorder %s36, 15
    %p654 = scmp.ne.s32.totalorder %s649, %s651
    %p655 = scmp.eq.s32.totalorder %s36, 0
    %p656 = por %p654, %p655
    %p657 = scmp.ne.s32.totalorder %s649, %s651
    %p658 = scmp.eq.s32.totalorder %s41, 15
    %p659 = por %p657, %p658
    %p660 = scmp.ne.s32.totalorder %s651, %s652
    %p661 = scmp.eq.s32.totalorder %s41, 0
    %p662 = por %p660, %p661
    %p663 = scmp.ne.s32.totalorder %s651, %s652
    %p664 = scmp.eq.s32.totalorder %s42, 15
    %p665 = por %p663, %p664
    %p667 = scmp.ne.s32.totalorder %s652, %s666
    %p668 = scmp.eq.s32.totalorder %s42, 0
    %p669 = por %p667, %p668
    %s670 = ssub.s32 %s43, %s55
    %p671 = scmp.eq.s32.totalorder %s670, 0
    %s673 = sadd.s32 %s672, 1
    %s674 = scalar_select %p671, %s672, %s673
    %p677 = pneg %p671
    %p678 = scmp.eq.s32.totalorder %s36, 15
    %p679 = por %p677, %p678
    %p680 = scmp.ne.s32.totalorder %s672, %s675
    %p681 = scmp.eq.s32.totalorder %s36, 0
    %p682 = por %p680, %p681
    %p683 = scmp.ne.s32.totalorder %s672, %s675
    %p684 = scmp.eq.s32.totalorder %s41, 15
    %p685 = por %p683, %p684
    %p686 = scmp.ne.s32.totalorder %s675, %s676
    %p687 = scmp.eq.s32.totalorder %s41, 0
    %p688 = por %p686, %p687
    %p689 = scmp.ne.s32.totalorder %s675, %s676
    %p690 = scmp.eq.s32.totalorder %s42, 15
    %p691 = por %p689, %p690
    %p693 = scmp.ne.s32.totalorder %s676, %s692
    %p694 = scmp.eq.s32.totalorder %s42, 0
    %p695 = por %p693, %p694
    %p696 = scmp.le.s32.totalorder 1, %s36
    %p697 = scmp.lt.s32.totalorder %s36, 17
    %p698 = pnand %p696, %p697
    %p699 = pneg %p698
    // Predicated region
    $region9: #{tpu_custom_call.1} parent=5 // pred_check
      _
    $region10: #{tpu_custom_call.1} parent=5 // pred_check_branch
      %701 = sbr.rel (%p698) target = $region12
    $region11: #{tpu_custom_call.1} parent=5 // pred_region
      %s702 = ssub.s32 %s36, 1
      // Predicated region
      $region13: #{tpu_custom_call.1} parent=11 // pred_check
        %p703 = pneg %p179
      $region14: #{tpu_custom_call.1} parent=11 // pred_check_branch
        %705 = sbr.rel (%p703) target = $region16
      $region15: #{tpu_custom_call.1} parent=11 // pred_region
        _
      $region16: #{tpu_custom_call.1} parent=11 // pred_fallthru
        _
      // Predicated region
      $region17: #{tpu_custom_call.1} parent=11 // pred_check
        %p706 = pneg %p200
      $region18: #{tpu_custom_call.1} parent=11 // pred_check_branch
        %708 = sbr.rel (%p706) target = $region20
      $region19: #{tpu_custom_call.1} parent=11 // pred_region
        _
      $region20: #{tpu_custom_call.1} parent=11 // pred_fallthru
        _
      // Predicated region
      $region21: #{tpu_custom_call.1} parent=11 // pred_check
        %p709 = pneg %p221
      $region22: #{tpu_custom_call.1} parent=11 // pred_check_branch
        %711 = sbr.rel (%p709) target = $region24
      $region23: #{tpu_custom_call.1} parent=11 // pred_region
        _
      $region24: #{tpu_custom_call.1} parent=11 // pred_fallthru
        _
      // Predicated region
      $region25: #{tpu_custom_call.1} parent=11 // pred_check
        %p712 = pneg %p242
      $region26: #{tpu_custom_call.1} parent=11 // pred_check_branch
        %714 = sbr.rel (%p712) target = $region28
      $region27: #{tpu_custom_call.1} parent=11 // pred_region
        _
      $region28: #{tpu_custom_call.1} parent=11 // pred_fallthru
        _
      // Predicated region
      $region29: #{tpu_custom_call.1} parent=11 // pred_check
        %p715 = pneg %p263
      $region30: #{tpu_custom_call.1} parent=11 // pred_check_branch
        %717 = sbr.rel (%p715) target = $region32
      $region31: #{tpu_custom_call.1} parent=11 // pred_region
        _
      $region32: #{tpu_custom_call.1} parent=11 // pred_fallthru
        _
      // Predicated region
      $region33: #{tpu_custom_call.1} parent=11 // pred_check
        %p718 = pneg %p284
      $region34: #{tpu_custom_call.1} parent=11 // pred_check_branch
        %720 = sbr.rel (%p718) target = $region36
      $region35: #{tpu_custom_call.1} parent=11 // pred_region
        _
      $region36: #{tpu_custom_call.1} parent=11 // pred_fallthru
        _
      // Predicated region
      $region37: #{tpu_custom_call.1} parent=11 // pred_check
        %p721 = pneg %p305
      $region38: #{tpu_custom_call.1} parent=11 // pred_check_branch
        %723 = sbr.rel (%p721) target = $region40
      $region39: #{tpu_custom_call.1} parent=11 // pred_region
        _
      $region40: #{tpu_custom_call.1} parent=11 // pred_fallthru
        _
      // Predicated region
      $region41: #{tpu_custom_call.1} parent=11 // pred_check
        %p724 = pneg %p326
      $region42: #{tpu_custom_call.1} parent=11 // pred_check_branch
        %726 = sbr.rel (%p724) target = $region44
      $region43: #{tpu_custom_call.1} parent=11 // pred_region
        _
      $region44: #{tpu_custom_call.1} parent=11 // pred_fallthru
        _
      // Predicated region
      $region45: #{tpu_custom_call.1} parent=11 // pred_check
        %p727 = pneg %p347
      $region46: #{tpu_custom_call.1} parent=11 // pred_check_branch
        %729 = sbr.rel (%p727) target = $region48
      $region47: #{tpu_custom_call.1} parent=11 // pred_region
        _
      $region48: #{tpu_custom_call.1} parent=11 // pred_fallthru
        _
      // Predicated region
      $region49: #{tpu_custom_call.1} parent=11 // pred_check
        %p730 = pneg %p368
      $region50: #{tpu_custom_call.1} parent=11 // pred_check_branch
        %732 = sbr.rel (%p730) target = $region52
      $region51: #{tpu_custom_call.1} parent=11 // pred_region
        _
      $region52: #{tpu_custom_call.1} parent=11 // pred_fallthru
        _
      // Predicated region
      $region53: #{tpu_custom_call.1} parent=11 // pred_check
        %p733 = pneg %p389
      $region54: #{tpu_custom_call.1} parent=11 // pred_check_branch
        %735 = sbr.rel (%p733) target = $region56
      $region55: #{tpu_custom_call.1} parent=11 // pred_region
        _
      $region56: #{tpu_custom_call.1} parent=11 // pred_fallthru
        _
      // Predicated region
      $region57: #{tpu_custom_call.1} parent=11 // pred_check
        %p736 = pneg %p410
      $region58: #{tpu_custom_call.1} parent=11 // pred_check_branch
        %738 = sbr.rel (%p736) target = $region60
      $region59: #{tpu_custom_call.1} parent=11 // pred_region
        _
      $region60: #{tpu_custom_call.1} parent=11 // pred_fallthru
        _
      // Predicated region
      $region61: #{tpu_custom_call.1} parent=11 // pred_check
        %p739 = pneg %p431
      $region62: #{tpu_custom_call.1} parent=11 // pred_check_branch
        %741 = sbr.rel (%p739) target = $region64
      $region63: #{tpu_custom_call.1} parent=11 // pred_region
        _
      $region64: #{tpu_custom_call.1} parent=11 // pred_fallthru
        _
      // Predicated region
      $region65: #{tpu_custom_call.1} parent=11 // pred_check
        %p742 = pneg %p452
      $region66: #{tpu_custom_call.1} parent=11 // pred_check_branch
        %744 = sbr.rel (%p742) target = $region68
      $region67: #{tpu_custom_call.1} parent=11 // pred_region
        _
      $region68: #{tpu_custom_call.1} parent=11 // pred_fallthru
        _
      // Predicated region
      $region69: #{tpu_custom_call.1} parent=11 // pred_check
        %p745 = pneg %p473
      $region70: #{tpu_custom_call.1} parent=11 // pred_check_branch
        %747 = sbr.rel (%p745) target = $region72
      $region71: #{tpu_custom_call.1} parent=11 // pred_region
        _
      $region72: #{tpu_custom_call.1} parent=11 // pred_fallthru
        _
      // Predicated region
      $region73: #{tpu_custom_call.1} parent=11 // pred_check
        %p748 = pneg %p494
      $region74: #{tpu_custom_call.1} parent=11 // pred_check_branch
        %750 = sbr.rel (%p748) target = $region76
      $region75: #{tpu_custom_call.1} parent=11 // pred_region
        _
      $region76: #{tpu_custom_call.1} parent=11 // pred_fallthru
        _
      // Predicated region
      $region77: #{tpu_custom_call.1} parent=11 // pred_check
        %p751 = pneg %p515
      $region78: #{tpu_custom_call.1} parent=11 // pred_check_branch
        %753 = sbr.rel (%p751) target = $region80
      $region79: #{tpu_custom_call.1} parent=11 // pred_region
        _
      $region80: #{tpu_custom_call.1} parent=11 // pred_fallthru
        _
      // Predicated region
      $region81: #{tpu_custom_call.1} parent=11 // pred_check
        %p754 = pneg %p536
      $region82: #{tpu_custom_call.1} parent=11 // pred_check_branch
        %756 = sbr.rel (%p754) target = $region84
      $region83: #{tpu_custom_call.1} parent=11 // pred_region
        _
      $region84: #{tpu_custom_call.1} parent=11 // pred_fallthru
        _
      // Predicated region
      $region85: #{tpu_custom_call.1} parent=11 // pred_check
        %p757 = pneg %p557
      $region86: #{tpu_custom_call.1} parent=11 // pred_check_branch
        %759 = sbr.rel (%p757) target = $region88
      $region87: #{tpu_custom_call.1} parent=11 // pred_region
        _
      $region88: #{tpu_custom_call.1} parent=11 // pred_fallthru
        _
      // Predicated region
      $region89: #{tpu_custom_call.1} parent=11 // pred_check
        %p760 = pneg %p578
      $region90: #{tpu_custom_call.1} parent=11 // pred_check_branch
        %762 = sbr.rel (%p760) target = $region92
      $region91: #{tpu_custom_call.1} parent=11 // pred_region
        _
      $region92: #{tpu_custom_call.1} parent=11 // pred_fallthru
        _
      // Predicated region
      $region93: #{tpu_custom_call.1} parent=11 // pred_check
        %p763 = pneg %p599
      $region94: #{tpu_custom_call.1} parent=11 // pred_check_branch
        %765 = sbr.rel (%p763) target = $region96
      $region95: #{tpu_custom_call.1} parent=11 // pred_region
        _
      $region96: #{tpu_custom_call.1} parent=11 // pred_fallthru
        _
      // Predicated region
      $region97: #{tpu_custom_call.1} parent=11 // pred_check
        %p766 = pneg %p620
      $region98: #{tpu_custom_call.1} parent=11 // pred_check_branch
        %768 = sbr.rel (%p766) target = $region100
      $region99: #{tpu_custom_call.1} parent=11 // pred_region
        _
      $region100: #{tpu_custom_call.1} parent=11 // pred_fallthru
        _
      // Predicated region
      $region101: #{tpu_custom_call.1} parent=11 // pred_check
        %p769 = pneg %p641
      $region102: #{tpu_custom_call.1} parent=11 // pred_check_branch
        %771 = sbr.rel (%p769) target = $region104
      $region103: #{tpu_custom_call.1} parent=11 // pred_region
        _
      $region104: #{tpu_custom_call.1} parent=11 // pred_fallthru
        _
      // Predicated region
      $region105: #{tpu_custom_call.1} parent=11 // pred_check
        %p772 = pneg %p662
      $region106: #{tpu_custom_call.1} parent=11 // pred_check_branch
        %774 = sbr.rel (%p772) target = $region108
      $region107: #{tpu_custom_call.1} parent=11 // pred_region
        _
      $region108: #{tpu_custom_call.1} parent=11 // pred_fallthru
        _
    $region12: #{tpu_custom_call.1} parent=5 // pred_fallthru
      _
    %p775 = scmp.lt.s32.totalorder %s36, 16
    // Predicated region
    $region109: #{tpu_custom_call.1} parent=5 // pred_check
      %p776 = pneg %p775
    $region110: #{tpu_custom_call.1} parent=5 // pred_check_branch
      %778 = sbr.rel (%p776) target = $region112
    $region111: #{tpu_custom_call.1} parent=5 // pred_region
      // Predicated region
      $region113: #{tpu_custom_call.1} parent=111 // pred_check
        %p779 = pneg %p68
      $region114: #{tpu_custom_call.1} parent=111 // pred_check_branch
        %781 = sbr.rel (%p779) target = $region116
      $region115: #{tpu_custom_call.1} parent=111 // pred_region
        %p782 = scmp.lt.s32.totalorder %s43, 1
        %s783 = scalar_select %p782, %s43, 1
        %s784 = smul.addr %s783, 8
        %s785 = scalar_lea.vmem %s0, %s784
      $region116: #{tpu_custom_call.1} parent=111 // pred_fallthru
        _
      // Predicated region
      $region117: #{tpu_custom_call.1} parent=111 // pred_check
        %p786 = pneg %p96
      $region118: #{tpu_custom_call.1} parent=111 // pred_check_branch
        %788 = sbr.rel (%p786) target = $region120
      $region119: #{tpu_custom_call.1} parent=111 // pred_region
        %p789 = scmp.lt.s32.totalorder %s43, 1
        %s790 = scalar_select %p789, %s43, 1
        %p791 = scmp.lt.s32.totalorder %s44, 7
        %s792 = scalar_select %p791, %s44, 7
        %s793 = smul.addr %s790, 8
        %s794 = sadd.s32 %s792, %s793
        %s795 = scalar_lea.vmem %s1, %s794
      $region120: #{tpu_custom_call.1} parent=111 // pred_fallthru
        _
      // Predicated region
      $region121: #{tpu_custom_call.1} parent=111 // pred_check
        %p796 = pneg %p124
      $region122: #{tpu_custom_call.1} parent=111 // pred_check_branch
        %798 = sbr.rel (%p796) target = $region124
      $region123: #{tpu_custom_call.1} parent=111 // pred_region
        %p799 = scmp.lt.s32.totalorder %s43, 1
        %s800 = scalar_select %p799, %s43, 1
        %p801 = scmp.lt.s32.totalorder %s44, 7
        %s802 = scalar_select %p801, %s44, 7
        %s803 = smul.addr %s800, 8
        %s804 = sadd.s32 %s802, %s803
        %s805 = smul.addr %s804, 8
        %s806 = scalar_lea.vmem %s2, %s805
      $region124: #{tpu_custom_call.1} parent=111 // pred_fallthru
        _
      // Predicated region
      $region125: #{tpu_custom_call.1} parent=111 // pred_check
        %p807 = pneg %p152
      $region126: #{tpu_custom_call.1} parent=111 // pred_check_branch
        %809 = sbr.rel (%p807) target = $region128
      $region127: #{tpu_custom_call.1} parent=111 // pred_region
        %p810 = scmp.lt.s32.totalorder %s43, 1
        %s811 = scalar_select %p810, %s43, 1
        %p812 = scmp.lt.s32.totalorder %s44, 7
        %s813 = scalar_select %p812, %s44, 7
        %s814 = smul.addr %s811, 8
        %s815 = sadd.s32 %s813, %s814
        %s816 = smul.addr %s815, 8
        %s817 = scalar_lea.vmem %s3, %s816
      $region128: #{tpu_custom_call.1} parent=111 // pred_fallthru
        _
    $region112: #{tpu_custom_call.1} parent=5 // pred_fallthru
      _
    %p818 = scmp.le.s32.totalorder 1, %s36
    %p819 = scmp.lt.s32.totalorder %s36, 17
    %p820 = pnand %p818, %p819
    %p821 = pneg %p820
    // Predicated region
    $region129: #{tpu_custom_call.1} parent=5 // pred_check
      _
    $region130: #{tpu_custom_call.1} parent=5 // pred_check_branch
      %823 = sbr.rel (%p820) target = $region132
    $region131: #{tpu_custom_call.1} parent=5 // pred_region
      %s824 = ssub.s32 %s36, 1
      %p825 = scmp.lt.s32.totalorder %s45, 1
      %s826 = scalar_select %p825, %s45, 1
      %s827 = smul.addr %s826, 8
      %s828 = scalar_lea.vmem %s0, %s827
      %p829 = pneg %p74
      %p830 = pneg %p71
      %p831 = scmp.lt.s32.totalorder %s45, 1
      %s832 = scalar_select %p831, %s45, 1
      %p833 = scmp.lt.s32.totalorder %s46, 7
      %s834 = scalar_select %p833, %s46, 7
      %s835 = smul.addr %s832, 8
      %s836 = sadd.s32 %s834, %s835
      %s837 = scalar_lea.vmem %s1, %s836
      %p838 = pneg %p102
      %p839 = pneg %p99
      %p840 = scmp.lt.s32.totalorder %s45, 1
      %s841 = scalar_select %p840, %s45, 1
      %p842 = scmp.lt.s32.totalorder %s46, 7
      %s843 = scalar_select %p842, %s46, 7
      %s844 = smul.addr %s841, 8
      %s845 = sadd.s32 %s843, %s844
      %s846 = smul.addr %s845, 8
      %s847 = scalar_lea.vmem %s2, %s846
      %p848 = pneg %p130
      %p849 = pneg %p127
      %p850 = scmp.lt.s32.totalorder %s45, 1
      %s851 = scalar_select %p850, %s45, 1
      %p852 = scmp.lt.s32.totalorder %s46, 7
      %s853 = scalar_select %p852, %s46, 7
      %s854 = smul.addr %s851, 8
      %s855 = sadd.s32 %s853, %s854
      %s856 = smul.addr %s855, 8
      %s857 = scalar_lea.vmem %s3, %s856
      %p858 = pneg %p158
      %p859 = pneg %p155
      %p860 = pneg %p179
      %p861 = pneg %p176
      %p862 = pneg %p200
      %p863 = pneg %p197
      %p864 = pneg %p221
      %p865 = pneg %p218
      %p866 = pneg %p242
      %p867 = pneg %p239
      %p868 = pneg %p263
      %p869 = pneg %p260
      %p870 = pneg %p284
      %p871 = pneg %p281
      %p872 = pneg %p305
      %p873 = pneg %p302
      %p874 = pneg %p326
      %p875 = pneg %p323
      %p876 = pneg %p347
      %p877 = pneg %p344
      %p878 = pneg %p368
      %p879 = pneg %p365
      %p880 = pneg %p389
      %p881 = pneg %p386
      %p882 = pneg %p410
      %p883 = pneg %p407
      %p884 = pneg %p431
      %p885 = pneg %p428
      %p886 = pneg %p452
      %p887 = pneg %p449
      %p888 = pneg %p473
      %p889 = pneg %p470
      %p890 = pneg %p494
      %p891 = pneg %p491
      %p892 = pneg %p515
      %p893 = pneg %p512
      %p894 = pneg %p536
      %p895 = pneg %p533
      %p896 = pneg %p557
      %p897 = pneg %p554
      %p898 = pneg %p578
      %p899 = pneg %p575
      %p900 = pneg %p599
      %p901 = pneg %p596
      %p902 = pneg %p620
      %p903 = pneg %p617
      %p904 = pneg %p641
      %p905 = pneg %p638
      %p906 = pneg %p662
      %p907 = pneg %p659
      %p908 = pneg %p688
      %p909 = pneg %p685
      %p910 = scmp.lt.s32.totalorder %s45, 1
      %s911 = scalar_select %p910, %s45, 1
      %s912 = smul.addr %s911, 8
      %s913 = scalar_lea.vmem %s28, %s912
      %p914 = scmp.lt.s32.totalorder %s45, 1
      %s915 = scalar_select %p914, %s45, 1
      %s916 = smul.addr %s915, 8
      %s917 = scalar_lea.vmem %s0, %s916
      %p918 = scmp.lt.s32.totalorder %s45, 1
      %s919 = scalar_select %p918, %s45, 1
      %p920 = scmp.lt.s32.totalorder %s46, 7
      %s921 = scalar_select %p920, %s46, 7
      %s922 = smul.addr %s919, 8
      %s923 = sadd.s32 %s921, %s922
      %s924 = scalar_lea.vmem %s1, %s923
      %p925 = scmp.lt.s32.totalorder %s45, 1
      %s926 = scalar_select %p925, %s45, 1
      %p927 = scmp.lt.s32.totalorder %s46, 7
      %s928 = scalar_select %p927, %s46, 7
      %s929 = smul.addr %s926, 8
      %s930 = sadd.s32 %s928, %s929
      %s931 = smul.addr %s930, 8
      %s932 = scalar_lea.vmem %s2, %s931
      %p933 = scmp.lt.s32.totalorder %s45, 1
      %s934 = scalar_select %p933, %s45, 1
      %p935 = scmp.lt.s32.totalorder %s46, 7
      %s936 = scalar_select %p935, %s46, 7
      %s937 = smul.addr %s934, 8
      %s938 = sadd.s32 %s936, %s937
      %s939 = smul.addr %s938, 8
      %s940 = scalar_lea.vmem %s3, %s939
      %p941 = scmp.lt.s32.totalorder %s45, 1
      %s942 = scalar_select %p941, %s45, 1
      %s943 = smul.addr %s942, 8
      %s944 = scalar_lea.vmem %s28, %s943
      %v945 = vld [vmem:[%s917] sm:$0xff]
      %v946 = vld [vmem:[%s924] sm:$0x1]
      %v947 = vld [vmem:[%s932] sm:$0xff]
      %v948 = vld [vmem:[%s940] sm:$0xff]
      %v949 = vld [vmem:[%s4] sm:$0x7]
      %v950 = vld [vmem:[%s5] sm:$0x1]
      %v951 = vld [vmem:[%s6] sm:$0x7]
      %v952 = vld [vmem:[%s7] sm:$0x1]
      %vm953 = vcmask 23552
      %v955 = vsel %vm953, %v946, 0
      %vm957 = vcmask 1042432
      %v959 = vsel %vm957, %v949, 0
      %961 = vmatprep.subr.mxu0 0.0
      %v962 = vand.u32 %v959, 4294901760
      %963 = vmatpush1.msra.mxu0 %v962
      %964 = vmatprep.subr.mxu0 0.0
      %965 = vmatpush1.msra.mxu0 0.0
      %966 = vmatprep.subr.mxu0 0.0
      %967 = vmatpush1.msra.mxu0 0.0
      %968 = vmatprep.subr.mxu0 0.0
      %969 = vmatpush1.msra.mxu0 0.0
      %970 = vmatprep.subr.mxu0 0.0
      %971 = vmatpush1.msra.mxu0 0.0
      %972 = vmatprep.subr.mxu0 0.0
      %973 = vmatpush1.msra.mxu0 0.0
      %974 = vmatprep.subr.mxu0 0.0
      %975 = vmatpush1.msra.mxu0 0.0
      %976 = vmatprep.subr.mxu0 0.0
      %977 = vmatpush1.msra.mxu0 0.0
      %978 = vmatprep.subr.mxu0 0.0
      %979 = vmatpush1.msra.mxu0 0.0
      %980 = vmatprep.subr.mxu0 0.0
      %981 = vmatpush1.msra.mxu0 0.0
      %982 = vmatprep.subr.mxu0 0.0
      %983 = vmatpush1.msra.mxu0 0.0
      %984 = vmatprep.subr.mxu0 0.0
      %985 = vmatpush1.msra.mxu0 0.0
      %986 = vmatprep.subr.mxu0 0.0
      %987 = vmatpush1.msra.mxu0 0.0
      %988 = vmatprep.subr.mxu0 0.0
      %989 = vmatpush1.msra.mxu0 0.0
      %990 = vmatprep.subr.mxu0 0.0
      %991 = vmatpush1.msra.mxu0 0.0
      %992 = vmatprep.subr.mxu0 0.0
      %993 = vmatpush1.msra.mxu0 0.0
      %994 = vmatprep.subr.mxu0 0.0
      %995 = vmatpush1.msra.mxu0 0.0
      %996 = vmatprep.subr.mxu0 0.0
      %997 = vmatpush1.msra.mxu0 0.0
      %998 = vmatprep.subr.mxu0 0.0
      %999 = vmatpush1.msra.mxu0 0.0
      %1000 = vmatprep.subr.mxu0 0.0
      %1001 = vmatpush1.msra.mxu0 0.0
      %1002 = vmatprep.subr.mxu0 0.0
      %1003 = vmatpush1.msra.mxu0 0.0
      %1004 = vmatprep.subr.mxu0 0.0
      %1005 = vmatpush1.msra.mxu0 0.0
      %1006 = vmatprep.subr.mxu0 0.0
      %1007 = vmatpush1.msra.mxu0 0.0
      %1008 = vmatprep.subr.mxu0 0.0
      %1009 = vmatpush1.msra.mxu0 0.0
      %1010 = vmatprep.subr.mxu0 0.0
      %1011 = vmatpush1.msra.mxu0 0.0
      %1012 = vmatprep.subr.mxu0 0.0
      %1013 = vmatpush1.msra.mxu0 0.0
      %1014 = vmatprep.subr.mxu0 0.0
      %1015 = vmatpush1.msra.mxu0 0.0
      %1016 = vmatprep.subr.mxu0 0.0
      %1017 = vmatpush1.msra.mxu0 0.0
      %1018 = vmatprep.subr.mxu0 0.0
      %1019 = vmatpush1.msra.mxu0 0.0
      %1020 = vmatprep.subr.mxu0 0.0
      %1021 = vmatpush1.msra.mxu0 0.0
      %1022 = vmatprep.subr.mxu0 0.0
      %1023 = vmatpush1.msra.mxu0 0.0
      %1024 = vmatprep.subr.mxu0 0.0
      %1025 = vmatpush1.msra.mxu0 0.0
      %1026 = vmatprep.mubr.f32.mxu0 0.0
      %v1027 = vand.u32 %v955, 4294901760
      %v1028 = vsub.f32 %v955, %v1027
      %v1029 = vand.u32 %v1028, 4294901760
      %v1030 = vsub.f32 %v1028, %v1029
      %v1031 = vand.u32 %v1030, 4294901760
      %1032 = vmatmul.mubr.f32.gmra.mrb[0].mxu0 %v1031
      %v1033 = vpop.f32.mrb[0].mxu0
      %v1034 = vadd.f32 0.0, %v1033
      %v1035 = vpop.f32.mrb[0].mxu0
      %1036 = vdwg.mxu0
      %1037 = vmatprep.subr.mxu0 0.0
      %v1038 = vand.u32 %v959, 4294901760
      %v1039 = vsub.f32 %v959, %v1038
      %v1040 = vand.u32 %v1039, 4294901760
      %v1041 = vsub.f32 %v1039, %v1040
      %v1042 = vand.u32 %v1041, 4294901760
      %1043 = vmatpush1.msra.mxu0 %v1042
      %1044 = vmatprep.subr.mxu0 0.0
      %1045 = vmatpush1.msra.mxu0 0.0
      %1046 = vmatprep.subr.mxu0 0.0
      %1047 = vmatpush1.msra.mxu0 0.0
      %1048 = vmatprep.subr.mxu0 0.0
      %1049 = vmatpush1.msra.mxu0 0.0
      %1050 = vmatprep.subr.mxu0 0.0
      %1051 = vmatpush1.msra.mxu0 0.0
      %1052 = vmatprep.subr.mxu0 0.0
      %1053 = vmatpush1.msra.mxu0 0.0
      %1054 = vmatprep.subr.mxu0 0.0
      %1055 = vmatpush1.msra.mxu0 0.0
      %1056 = vmatprep.subr.mxu0 0.0
      %1057 = vmatpush1.msra.mxu0 0.0
      %1058 = vmatprep.subr.mxu0 0.0
      %1059 = vmatpush1.msra.mxu0 0.0
      %1060 = vmatprep.subr.mxu0 0.0
      %1061 = vmatpush1.msra.mxu0 0.0
      %1062 = vmatprep.subr.mxu0 0.0
      %1063 = vmatpush1.msra.mxu0 0.0
      %1064 = vmatprep.subr.mxu0 0.0
      %1065 = vmatpush1.msra.mxu0 0.0
      %1066 = vmatprep.subr.mxu0 0.0
      %1067 = vmatpush1.msra.mxu0 0.0
      %1068 = vmatprep.subr.mxu0 0.0
      %1069 = vmatpush1.msra.mxu0 0.0
      %1070 = vmatprep.subr.mxu0 0.0
      %1071 = vmatpush1.msra.mxu0 0.0
      %1072 = vmatprep.subr.mxu0 0.0
      %1073 = vmatpush1.msra.mxu0 0.0
      %1074 = vmatprep.subr.mxu0 0.0
      %1075 = vmatpush1.msra.mxu0 0.0
      %1076 = vmatprep.subr.mxu0 0.0
      %1077 = vmatpush1.msra.mxu0 0.0
      %1078 = vmatprep.subr.mxu0 0.0
      %1079 = vmatpush1.msra.mxu0 0.0
      %1080 = vmatprep.subr.mxu0 0.0
      %1081 = vmatpush1.msra.mxu0 0.0
      %1082 = vmatprep.subr.mxu0 0.0
      %1083 = vmatpush1.msra.mxu0 0.0
      %1084 = vmatprep.subr.mxu0 0.0
      %1085 = vmatpush1.msra.mxu0 0.0
      %1086 = vmatprep.subr.mxu0 0.0
      %1087 = vmatpush1.msra.mxu0 0.0
      %1088 = vmatprep.subr.mxu0 0.0
      %1089 = vmatpush1.msra.mxu0 0.0
      %1090 = vmatprep.subr.mxu0 0.0
      %1091 = vmatpush1.msra.mxu0 0.0
      %1092 = vmatprep.subr.mxu0 0.0
      %1093 = vmatpush1.msra.mxu0 0.0
      %1094 = vmatprep.subr.mxu0 0.0
      %1095 = vmatpush1.msra.mxu0 0.0
      %1096 = vmatprep.subr.mxu0 0.0
      %1097 = vmatpush1.msra.mxu0 0.0
      %1098 = vmatprep.subr.mxu0 0.0
      %1099 = vmatpush1.msra.mxu0 0.0
      %1100 = vmatprep.subr.mxu0 0.0
      %1101 = vmatpush1.msra.mxu0 0.0
      %1102 = vmatprep.subr.mxu0 0.0
      %1103 = vmatpush1.msra.mxu0 0.0
      %1104 = vmatprep.subr.mxu0 0.0
      %1105 = vmatpush1.msra.mxu0 0.0
      %1106 = vmatprep.mubr.f32.mxu0 0.0
      %v1107 = vand.u32 %v955, 4294901760
      %1108 = vmatmul.mubr.f32.gmra.mrb[0].mxu0 %v1107
      %v1109 = vpop.f32.mrb[0].mxu0
      %v1110 = vadd.f32 %v1034, %v1109
      %v1111 = vpop.f32.mrb[0].mxu0
      %1112 = vdwg.mxu0
      %1113 = vmatprep.subr.mxu0 0.0
      %v1114 = vand.u32 %v959, 4294901760
      %v1115 = vsub.f32 %v959, %v1114
      %1116 = vmatpush1.msra.mxu0 %v1115
      %1117 = vmatprep.subr.mxu0 0.0
      %1118 = vmatpush1.msra.mxu0 0.0
      %1119 = vmatprep.subr.mxu0 0.0
      %1120 = vmatpush1.msra.mxu0 0.0
      %1121 = vmatprep.subr.mxu0 0.0
      %1122 = vmatpush1.msra.mxu0 0.0
      %1123 = vmatprep.subr.mxu0 0.0
      %1124 = vmatpush1.msra.mxu0 0.0
      %1125 = vmatprep.subr.mxu0 0.0
      %1126 = vmatpush1.msra.mxu0 0.0
      %1127 = vmatprep.subr.mxu0 0.0
      %1128 = vmatpush1.msra.mxu0 0.0
      %1129 = vmatprep.subr.mxu0 0.0
      %1130 = vmatpush1.msra.mxu0 0.0
      %1131 = vmatprep.subr.mxu0 0.0
      %1132 = vmatpush1.msra.mxu0 0.0
      %1133 = vmatprep.subr.mxu0 0.0
      %1134 = vmatpush1.msra.mxu0 0.0
      %1135 = vmatprep.subr.mxu0 0.0
      %1136 = vmatpush1.msra.mxu0 0.0
      %1137 = vmatprep.subr.mxu0 0.0
      %1138 = vmatpush1.msra.mxu0 0.0
      %1139 = vmatprep.subr.mxu0 0.0
      %1140 = vmatpush1.msra.mxu0 0.0
      %1141 = vmatprep.subr.mxu0 0.0
      %1142 = vmatpush1.msra.mxu0 0.0
      %1143 = vmatprep.subr.mxu0 0.0
      %1144 = vmatpush1.msra.mxu0 0.0
      %1145 = vmatprep.subr.mxu0 0.0
      %1146 = vmatpush1.msra.mxu0 0.0
      %1147 = vmatprep.subr.mxu0 0.0
      %1148 = vmatpush1.msra.mxu0 0.0
      %1149 = vmatprep.subr.mxu0 0.0
      %1150 = vmatpush1.msra.mxu0 0.0
      %1151 = vmatprep.subr.mxu0 0.0
      %1152 = vmatpush1.msra.mxu0 0.0
      %1153 = vmatprep.subr.mxu0 0.0
      %1154 = vmatpush1.msra.mxu0 0.0
      %1155 = vmatprep.subr.mxu0 0.0
      %1156 = vmatpush1.msra.mxu0 0.0
      %1157 = vmatprep.subr.mxu0 0.0
      %1158 = vmatpush1.msra.mxu0 0.0
      %1159 = vmatprep.subr.mxu0 0.0
      %1160 = vmatpush1.msra.mxu0 0.0
      %1161 = vmatprep.subr.mxu0 0.0
      %1162 = vmatpush1.msra.mxu0 0.0
      %1163 = vmatprep.subr.mxu0 0.0
      %1164 = vmatpush1.msra.mxu0 0.0
      %1165 = vmatprep.subr.mxu0 0.0
      %1166 = vmatpush1.msra.mxu0 0.0
      %1167 = vmatprep.subr.mxu0 0.0
      %1168 = vmatpush1.msra.mxu0 0.0
      %1169 = vmatprep.subr.mxu0 0.0
      %1170 = vmatpush1.msra.mxu0 0.0
      %1171 = vmatprep.subr.mxu0 0.0
      %1172 = vmatpush1.msra.mxu0 0.0
      %1173 = vmatprep.subr.mxu0 0.0
      %1174 = vmatpush1.msra.mxu0 0.0
      %1175 = vmatprep.subr.mxu0 0.0
      %1176 = vmatpush1.msra.mxu0 0.0
      %1177 = vmatprep.subr.mxu0 0.0
      %1178 = vmatpush1.msra.mxu0 0.0
      %1179 = vmatprep.mubr.f32.mxu0 0.0
      %v1180 = vand.u32 %v955, 4294901760
      %v1181 = vsub.f32 %v955, %v1180
      %1182 = vmatmul.mubr.f32.gmra.mrb[0].mxu0 %v1181
      %v1183 = vpop.f32.mrb[0].mxu0
      %v1184 = vadd.f32 %v1110, %v1183
      %v1185 = vpop.f32.mrb[0].mxu0
      %1186 = vdwg.mxu0
      %1187 = vmatprep.subr.mxu0 0.0
      %v1188 = vand.u32 %v959, 4294901760
      %1189 = vmatpush1.msra.mxu0 %v1188
      %1190 = vmatprep.subr.mxu0 0.0
      %1191 = vmatpush1.msra.mxu0 0.0
      %1192 = vmatprep.subr.mxu0 0.0
      %1193 = vmatpush1.msra.mxu0 0.0
      %1194 = vmatprep.subr.mxu0 0.0
      %1195 = vmatpush1.msra.mxu0 0.0
      %1196 = vmatprep.subr.mxu0 0.0
      %1197 = vmatpush1.msra.mxu0 0.0
      %1198 = vmatprep.subr.mxu0 0.0
      %1199 = vmatpush1.msra.mxu0 0.0
      %1200 = vmatprep.subr.mxu0 0.0
      %1201 = vmatpush1.msra.mxu0 0.0
      %1202 = vmatprep.subr.mxu0 0.0
      %1203 = vmatpush1.msra.mxu0 0.0
      %1204 = vmatprep.subr.mxu0 0.0
      %1205 = vmatpush1.msra.mxu0 0.0
      %1206 = vmatprep.subr.mxu0 0.0
      %1207 = vmatpush1.msra.mxu0 0.0
      %1208 = vmatprep.subr.mxu0 0.0
      %1209 = vmatpush1.msra.mxu0 0.0
      %1210 = vmatprep.subr.mxu0 0.0
      %1211 = vmatpush1.msra.mxu0 0.0
      %1212 = vmatprep.subr.mxu0 0.0
      %1213 = vmatpush1.msra.mxu0 0.0
      %1214 = vmatprep.subr.mxu0 0.0
      %1215 = vmatpush1.msra.mxu0 0.0
      %1216 = vmatprep.subr.mxu0 0.0
      %1217 = vmatpush1.msra.mxu0 0.0
      %1218 = vmatprep.subr.mxu0 0.0
      %1219 = vmatpush1.msra.mxu0 0.0
      %1220 = vmatprep.subr.mxu0 0.0
      %1221 = vmatpush1.msra.mxu0 0.0
      %1222 = vmatprep.subr.mxu0 0.0
      %1223 = vmatpush1.msra.mxu0 0.0
      %1224 = vmatprep.subr.mxu0 0.0
      %1225 = vmatpush1.msra.mxu0 0.0
      %1226 = vmatprep.subr.mxu0 0.0
      %1227 = vmatpush1.msra.mxu0 0.0
      %1228 = vmatprep.subr.mxu0 0.0
      %1229 = vmatpush1.msra.mxu0 0.0
      %1230 = vmatprep.subr.mxu0 0.0
      %1231 = vmatpush1.msra.mxu0 0.0
      %1232 = vmatprep.subr.mxu0 0.0
      %1233 = vmatpush1.msra.mxu0 0.0
      %1234 = vmatprep.subr.mxu0 0.0
      %1235 = vmatpush1.msra.mxu0 0.0
      %1236 = vmatprep.subr.mxu0 0.0
      %1237 = vmatpush1.msra.mxu0 0.0
      %1238 = vmatprep.subr.mxu0 0.0
      %1239 = vmatpush1.msra.mxu0 0.0
      %1240 = vmatprep.subr.mxu0 0.0
      %1241 = vmatpush1.msra.mxu0 0.0
      %1242 = vmatprep.subr.mxu0 0.0
      %1243 = vmatpush1.msra.mxu0 0.0
      %1244 = vmatprep.subr.mxu0 0.0
      %1245 = vmatpush1.msra.mxu0 0.0
      %1246 = vmatprep.subr.mxu0 0.0
      %1247 = vmatpush1.msra.mxu0 0.0
      %1248 = vmatprep.subr.mxu0 0.0
      %1249 = vmatpush1.msra.mxu0 0.0
      %1250 = vmatprep.subr.mxu0 0.0
      %1251 = vmatpush1.msra.mxu0 0.0
      %1252 = vmatprep.mubr.f32.mxu0 0.0
      %v1253 = vand.u32 %v955, 4294901760
      %v1254 = vsub.f32 %v955, %v1253
      %v1255 = vand.u32 %v1254, 4294901760
      %1256 = vmatmul.mubr.f32.gmra.mrb[0].mxu0 %v1255
      %v1257 = vpop.f32.mrb[0].mxu0
      %v1258 = vadd.f32 %v1184, %v1257
      %v1259 = vpop.f32.mrb[0].mxu0
      %1260 = vdwg.mxu0
      %1261 = vmatprep.subr.mxu0 0.0
      %v1262 = vand.u32 %v959, 4294901760
      %v1263 = vsub.f32 %v959, %v1262
      %v1264 = vand.u32 %v1263, 4294901760
      %1265 = vmatpush1.msra.mxu0 %v1264
      %1266 = vmatprep.subr.mxu0 0.0
      %1267 = vmatpush1.msra.mxu0 0.0
      %1268 = vmatprep.subr.mxu0 0.0
      %1269 = vmatpush1.msra.mxu0 0.0
      %1270 = vmatprep.subr.mxu0 0.0
      %1271 = vmatpush1.msra.mxu0 0.0
      %1272 = vmatprep.subr.mxu0 0.0
      %1273 = vmatpush1.msra.mxu0 0.0
      %1274 = vmatprep.subr.mxu0 0.0
      %1275 = vmatpush1.msra.mxu0 0.0
      %1276 = vmatprep.subr.mxu0 0.0
      %1277 = vmatpush1.msra.mxu0 0.0
      %1278 = vmatprep.subr.mxu0 0.0
      %1279 = vmatpush1.msra.mxu0 0.0
      %1280 = vmatprep.subr.mxu0 0.0
      %1281 = vmatpush1.msra.mxu0 0.0
      %1282 = vmatprep.subr.mxu0 0.0
      %1283 = vmatpush1.msra.mxu0 0.0
      %1284 = vmatprep.subr.mxu0 0.0
      %1285 = vmatpush1.msra.mxu0 0.0
      %1286 = vmatprep.subr.mxu0 0.0
      %1287 = vmatpush1.msra.mxu0 0.0
      %1288 = vmatprep.subr.mxu0 0.0
      %1289 = vmatpush1.msra.mxu0 0.0
      %1290 = vmatprep.subr.mxu0 0.0
      %1291 = vmatpush1.msra.mxu0 0.0
      %1292 = vmatprep.subr.mxu0 0.0
      %1293 = vmatpush1.msra.mxu0 0.0
      %1294 = vmatprep.subr.mxu0 0.0
      %1295 = vmatpush1.msra.mxu0 0.0
      %1296 = vmatprep.subr.mxu0 0.0
      %1297 = vmatpush1.msra.mxu0 0.0
      %1298 = vmatprep.subr.mxu0 0.0
      %1299 = vmatpush1.msra.mxu0 0.0
      %1300 = vmatprep.subr.mxu0 0.0
      %1301 = vmatpush1.msra.mxu0 0.0
      %1302 = vmatprep.subr.mxu0 0.0
      %1303 = vmatpush1.msra.mxu0 0.0
      %1304 = vmatprep.subr.mxu0 0.0
      %1305 = vmatpush1.msra.mxu0 0.0
      %1306 = vmatprep.subr.mxu0 0.0
      %1307 = vmatpush1.msra.mxu0 0.0
      %1308 = vmatprep.subr.mxu0 0.0
      %1309 = vmatpush1.msra.mxu0 0.0
      %1310 = vmatprep.subr.mxu0 0.0
      %1311 = vmatpush1.msra.mxu0 0.0
      %1312 = vmatprep.subr.mxu0 0.0
      %1313 = vmatpush1.msra.mxu0 0.0
      %1314 = vmatprep.subr.mxu0 0.0
      %1315 = vmatpush1.msra.mxu0 0.0
      %1316 = vmatprep.subr.mxu0 0.0
      %1317 = vmatpush1.msra.mxu0 0.0
      %1318 = vmatprep.subr.mxu0 0.0
      %1319 = vmatpush1.msra.mxu0 0.0
      %1320 = vmatprep.subr.mxu0 0.0
      %1321 = vmatpush1.msra.mxu0 0.0
      %1322 = vmatprep.subr.mxu0 0.0
      %1323 = vmatpush1.msra.mxu0 0.0
      %1324 = vmatprep.subr.mxu0 0.0
      %1325 = vmatpush1.msra.mxu0 0.0
      %1326 = vmatprep.subr.mxu0 0.0
      %1327 = vmatpush1.msra.mxu0 0.0
      %1328 = vmatprep.mubr.f32.mxu0 0.0
      %v1329 = vand.u32 %v955, 4294901760
      %1330 = vmatmul.mubr.f32.gmra.mrb[0].mxu0 %v1329
      %v1331 = vpop.f32.mrb[0].mxu0
      %v1332 = vadd.f32 %v1258, %v1331
      %v1333 = vpop.f32.mrb[0].mxu0
      %1334 = vdwg.mxu0
      %1335 = vmatprep.subr.mxu0 0.0
      %v1336 = vand.u32 %v959, 4294901760
      %1337 = vmatpush1.msra.mxu0 %v1336
      %1338 = vmatprep.subr.mxu0 0.0
      %1339 = vmatpush1.msra.mxu0 0.0
      %1340 = vmatprep.subr.mxu0 0.0
      %1341 = vmatpush1.msra.mxu0 0.0
      %1342 = vmatprep.subr.mxu0 0.0
      %1343 = vmatpush1.msra.mxu0 0.0
      %1344 = vmatprep.subr.mxu0 0.0
      %1345 = vmatpush1.msra.mxu0 0.0
      %1346 = vmatprep.subr.mxu0 0.0
      %1347 = vmatpush1.msra.mxu0 0.0
      %1348 = vmatprep.subr.mxu0 0.0
      %1349 = vmatpush1.msra.mxu0 0.0
      %1350 = vmatprep.subr.mxu0 0.0
      %1351 = vmatpush1.msra.mxu0 0.0
      %1352 = vmatprep.subr.mxu0 0.0
      %1353 = vmatpush1.msra.mxu0 0.0
      %1354 = vmatprep.subr.mxu0 0.0
      %1355 = vmatpush1.msra.mxu0 0.0
      %1356 = vmatprep.subr.mxu0 0.0
      %1357 = vmatpush1.msra.mxu0 0.0
      %1358 = vmatprep.subr.mxu0 0.0
      %1359 = vmatpush1.msra.mxu0 0.0
      %1360 = vmatprep.subr.mxu0 0.0
      %1361 = vmatpush1.msra.mxu0 0.0
      %1362 = vmatprep.subr.mxu0 0.0
      %1363 = vmatpush1.msra.mxu0 0.0
      %1364 = vmatprep.subr.mxu0 0.0
      %1365 = vmatpush1.msra.mxu0 0.0
      %1366 = vmatprep.subr.mxu0 0.0
      %1367 = vmatpush1.msra.mxu0 0.0
      %1368 = vmatprep.subr.mxu0 0.0
      %1369 = vmatpush1.msra.mxu0 0.0
      %1370 = vmatprep.subr.mxu0 0.0
      %1371 = vmatpush1.msra.mxu0 0.0
      %1372 = vmatprep.subr.mxu0 0.0
      %1373 = vmatpush1.msra.mxu0 0.0
      %1374 = vmatprep.subr.mxu0 0.0
      %1375 = vmatpush1.msra.mxu0 0.0
      %1376 = vmatprep.subr.mxu0 0.0
      %1377 = vmatpush1.msra.mxu0 0.0
      %1378 = vmatprep.subr.mxu0 0.0
      %1379 = vmatpush1.msra.mxu0 0.0
      %1380 = vmatprep.subr.mxu0 0.0
      %1381 = vmatpush1.msra.mxu0 0.0
      %1382 = vmatprep.subr.mxu0 0.0
      %1383 = vmatpush1.msra.mxu0 0.0
      %1384 = vmatprep.subr.mxu0 0.0
      %1385 = vmatpush1.msra.mxu0 0.0
      %1386 = vmatprep.subr.mxu0 0.0
      %1387 = vmatpush1.msra.mxu0 0.0
      %1388 = vmatprep.subr.mxu0 0.0
      %1389 = vmatpush1.msra.mxu0 0.0
      %1390 = vmatprep.subr.mxu0 0.0
      %1391 = vmatpush1.msra.mxu0 0.0
      %1392 = vmatprep.subr.mxu0 0.0
      %1393 = vmatpush1.msra.mxu0 0.0
      %1394 = vmatprep.subr.mxu0 0.0
      %1395 = vmatpush1.msra.mxu0 0.0
      %1396 = vmatprep.subr.mxu0 0.0
      %1397 = vmatpush1.msra.mxu0 0.0
      %1398 = vmatprep.subr.mxu0 0.0
      %1399 = vmatpush1.msra.mxu0 0.0
      %1400 = vmatprep.mubr.f32.mxu0 0.0
      %v1401 = vand.u32 %v955, 4294901760
      %1402 = vmatmul.mubr.f32.gmra.mrb[0].mxu0 %v1401
      %v1403 = vpop.f32.mrb[0].mxu0
      %v1404 = vadd.f32 %v1332, %v1403
      %v1405 = vpop.f32.mrb[0].mxu0
      %1406 = vdwg.mxu0
      %v1408 = vsel %vm953, %v945, 0
      %v1411 = vsel %vm957, %v951, 0
      %1413 = vmatprep.subr.mxu0 0.0
      %v1414 = vand.u32 %v1411, 4294901760
      %1415 = vmatpush1.msra.mxu0 %v1414
      %1416 = vmatprep.subr.mxu0 0.0
      %1417 = vmatpush1.msra.mxu0 0.0
      %1418 = vmatprep.subr.mxu0 0.0
      %1419 = vmatpush1.msra.mxu0 0.0
      %1420 = vmatprep.subr.mxu0 0.0
      %1421 = vmatpush1.msra.mxu0 0.0
      %1422 = vmatprep.subr.mxu0 0.0
      %1423 = vmatpush1.msra.mxu0 0.0
      %1424 = vmatprep.subr.mxu0 0.0
      %1425 = vmatpush1.msra.mxu0 0.0
      %1426 = vmatprep.subr.mxu0 0.0
      %1427 = vmatpush1.msra.mxu0 0.0
      %1428 = vmatprep.subr.mxu0 0.0
      %1429 = vmatpush1.msra.mxu0 0.0
      %1430 = vmatprep.subr.mxu0 0.0
      %1431 = vmatpush1.msra.mxu0 0.0
      %1432 = vmatprep.subr.mxu0 0.0
      %1433 = vmatpush1.msra.mxu0 0.0
      %1434 = vmatprep.subr.mxu0 0.0
      %1435 = vmatpush1.msra.mxu0 0.0
      %1436 = vmatprep.subr.mxu0 0.0
      %1437 = vmatpush1.msra.mxu0 0.0
      %1438 = vmatprep.subr.mxu0 0.0
      %1439 = vmatpush1.msra.mxu0 0.0
      %1440 = vmatprep.subr.mxu0 0.0
      %1441 = vmatpush1.msra.mxu0 0.0
      %1442 = vmatprep.subr.mxu0 0.0
      %1443 = vmatpush1.msra.mxu0 0.0
      %1444 = vmatprep.subr.mxu0 0.0
      %1445 = vmatpush1.msra.mxu0 0.0
      %1446 = vmatprep.subr.mxu0 0.0
      %1447 = vmatpush1.msra.mxu0 0.0
      %1448 = vmatprep.subr.mxu0 0.0
      %1449 = vmatpush1.msra.mxu0 0.0
      %1450 = vmatprep.subr.mxu0 0.0
      %1451 = vmatpush1.msra.mxu0 0.0
      %1452 = vmatprep.subr.mxu0 0.0
      %1453 = vmatpush1.msra.mxu0 0.0
      %1454 = vmatprep.subr.mxu0 0.0
      %1455 = vmatpush1.msra.mxu0 0.0
      %1456 = vmatprep.subr.mxu0 0.0
      %1457 = vmatpush1.msra.mxu0 0.0
      %1458 = vmatprep.subr.mxu0 0.0
      %1459 = vmatpush1.msra.mxu0 0.0
      %1460 = vmatprep.subr.mxu0 0.0
      %1461 = vmatpush1.msra.mxu0 0.0
      %1462 = vmatprep.subr.mxu0 0.0
      %1463 = vmatpush1.msra.mxu0 0.0
      %1464 = vmatprep.subr.mxu0 0.0
      %1465 = vmatpush1.msra.mxu0 0.0
      %1466 = vmatprep.subr.mxu0 0.0
      %1467 = vmatpush1.msra.mxu0 0.0
      %1468 = vmatprep.subr.mxu0 0.0
      %1469 = vmatpush1.msra.mxu0 0.0
      %1470 = vmatprep.subr.mxu0 0.0
      %1471 = vmatpush1.msra.mxu0 0.0
      %1472 = vmatprep.subr.mxu0 0.0
      %1473 = vmatpush1.msra.mxu0 0.0
      %1474 = vmatprep.subr.mxu0 0.0
      %1475 = vmatpush1.msra.mxu0 0.0
      %1476 = vmatprep.subr.mxu0 0.0
      %1477 = vmatpush1.msra.mxu0 0.0
      %1478 = vmatprep.mubr.f32.mxu0 0.0
      %v1479 = vand.u32 %v1408, 4294901760
      %v1480 = vsub.f32 %v1408, %v1479
      %v1481 = vand.u32 %v1480, 4294901760
      %v1482 = vsub.f32 %v1480, %v1481
      %v1483 = vand.u32 %v1482, 4294901760
      %1484 = vmatmul.mubr.f32.gmra.mrb[0].mxu0 %v1483
      %v1485 = vpop.f32.mrb[0].mxu0
      %v1486 = vadd.f32 0.0, %v1485
      %v1487 = vpop.f32.mrb[0].mxu0
      %1488 = vdwg.mxu0
      %1489 = vmatprep.subr.mxu0 0.0
      %v1490 = vand.u32 %v1411, 4294901760
      %v1491 = vsub.f32 %v1411, %v1490
      %v1492 = vand.u32 %v1491, 4294901760
      %v1493 = vsub.f32 %v1491, %v1492
      %v1494 = vand.u32 %v1493, 4294901760
      %1495 = vmatpush1.msra.mxu0 %v1494
      %1496 = vmatprep.subr.mxu0 0.0
      %1497 = vmatpush1.msra.mxu0 0.0
      %1498 = vmatprep.subr.mxu0 0.0
      %1499 = vmatpush1.msra.mxu0 0.0
      %1500 = vmatprep.subr.mxu0 0.0
      %1501 = vmatpush1.msra.mxu0 0.0
      %1502 = vmatprep.subr.mxu0 0.0
      %1503 = vmatpush1.msra.mxu0 0.0
      %1504 = vmatprep.subr.mxu0 0.0
      %1505 = vmatpush1.msra.mxu0 0.0
      %1506 = vmatprep.subr.mxu0 0.0
      %1507 = vmatpush1.msra.mxu0 0.0
      %1508 = vmatprep.subr.mxu0 0.0
      %1509 = vmatpush1.msra.mxu0 0.0
      %1510 = vmatprep.subr.mxu0 0.0
      %1511 = vmatpush1.msra.mxu0 0.0
      %1512 = vmatprep.subr.mxu0 0.0
      %1513 = vmatpush1.msra.mxu0 0.0
      %1514 = vmatprep.subr.mxu0 0.0
      %1515 = vmatpush1.msra.mxu0 0.0
      %1516 = vmatprep.subr.mxu0 0.0
      %1517 = vmatpush1.msra.mxu0 0.0
      %1518 = vmatprep.subr.mxu0 0.0
      %1519 = vmatpush1.msra.mxu0 0.0
      %1520 = vmatprep.subr.mxu0 0.0
      %1521 = vmatpush1.msra.mxu0 0.0
      %1522 = vmatprep.subr.mxu0 0.0
      %1523 = vmatpush1.msra.mxu0 0.0
      %1524 = vmatprep.subr.mxu0 0.0
      %1525 = vmatpush1.msra.mxu0 0.0
      %1526 = vmatprep.subr.mxu0 0.0
      %1527 = vmatpush1.msra.mxu0 0.0
      %1528 = vmatprep.subr.mxu0 0.0
      %1529 = vmatpush1.msra.mxu0 0.0
      %1530 = vmatprep.subr.mxu0 0.0
      %1531 = vmatpush1.msra.mxu0 0.0
      %1532 = vmatprep.subr.mxu0 0.0
      %1533 = vmatpush1.msra.mxu0 0.0
      %1534 = vmatprep.subr.mxu0 0.0
      %1535 = vmatpush1.msra.mxu0 0.0
      %1536 = vmatprep.subr.mxu0 0.0
      %1537 = vmatpush1.msra.mxu0 0.0
      %1538 = vmatprep.subr.mxu0 0.0
      %1539 = vmatpush1.msra.mxu0 0.0
      %1540 = vmatprep.subr.mxu0 0.0
      %1541 = vmatpush1.msra.mxu0 0.0
      %1542 = vmatprep.subr.mxu0 0.0
      %1543 = vmatpush1.msra.mxu0 0.0
      %1544 = vmatprep.subr.mxu0 0.0
      %1545 = vmatpush1.msra.mxu0 0.0
      %1546 = vmatprep.subr.mxu0 0.0
      %1547 = vmatpush1.msra.mxu0 0.0
      %1548 = vmatprep.subr.mxu0 0.0
      %1549 = vmatpush1.msra.mxu0 0.0
      %1550 = vmatprep.subr.mxu0 0.0
      %1551 = vmatpush1.msra.mxu0 0.0
      %1552 = vmatprep.subr.mxu0 0.0
      %1553 = vmatpush1.msra.mxu0 0.0
      %1554 = vmatprep.subr.mxu0 0.0
      %1555 = vmatpush1.msra.mxu0 0.0
      %1556 = vmatprep.subr.mxu0 0.0
      %1557 = vmatpush1.msra.mxu0 0.0
      %1558 = vmatprep.mubr.f32.mxu0 0.0
      %v1559 = vand.u32 %v1408, 4294901760
      %1560 = vmatmul.mubr.f32.gmra.mrb[0].mxu0 %v1559
      %v1561 = vpop.f32.mrb[0].mxu0
      %v1562 = vadd.f32 %v1486, %v1561
      %v1563 = vpop.f32.mrb[0].mxu0
      %1564 = vdwg.mxu0
      %1565 = vmatprep.subr.mxu0 0.0
      %v1566 = vand.u32 %v1411, 4294901760
      %v1567 = vsub.f32 %v1411, %v1566
      %1568 = vmatpush1.msra.mxu0 %v1567
      %1569 = vmatprep.subr.mxu0 0.0
      %1570 = vmatpush1.msra.mxu0 0.0
      %1571 = vmatprep.subr.mxu0 0.0
      %1572 = vmatpush1.msra.mxu0 0.0
      %1573 = vmatprep.subr.mxu0 0.0
      %1574 = vmatpush1.msra.mxu0 0.0
      %1575 = vmatprep.subr.mxu0 0.0
      %1576 = vmatpush1.msra.mxu0 0.0
      %1577 = vmatprep.subr.mxu0 0.0
      %1578 = vmatpush1.msra.mxu0 0.0
      %1579 = vmatprep.subr.mxu0 0.0
      %1580 = vmatpush1.msra.mxu0 0.0
      %1581 = vmatprep.subr.mxu0 0.0
      %1582 = vmatpush1.msra.mxu0 0.0
      %1583 = vmatprep.subr.mxu0 0.0
      %1584 = vmatpush1.msra.mxu0 0.0
      %1585 = vmatprep.subr.mxu0 0.0
      %1586 = vmatpush1.msra.mxu0 0.0
      %1587 = vmatprep.subr.mxu0 0.0
      %1588 = vmatpush1.msra.mxu0 0.0
      %1589 = vmatprep.subr.mxu0 0.0
      %1590 = vmatpush1.msra.mxu0 0.0
      %1591 = vmatprep.subr.mxu0 0.0
      %1592 = vmatpush1.msra.mxu0 0.0
      %1593 = vmatprep.subr.mxu0 0.0
      %1594 = vmatpush1.msra.mxu0 0.0
      %1595 = vmatprep.subr.mxu0 0.0
      %1596 = vmatpush1.msra.mxu0 0.0
      %1597 = vmatprep.subr.mxu0 0.0
      %1598 = vmatpush1.msra.mxu0 0.0
      %1599 = vmatprep.subr.mxu0 0.0
      %1600 = vmatpush1.msra.mxu0 0.0
      %1601 = vmatprep.subr.mxu0 0.0
      %1602 = vmatpush1.msra.mxu0 0.0
      %1603 = vmatprep.subr.mxu0 0.0
      %1604 = vmatpush1.msra.mxu0 0.0
      %1605 = vmatprep.subr.mxu0 0.0
      %1606 = vmatpush1.msra.mxu0 0.0
      %1607 = vmatprep.subr.mxu0 0.0
      %1608 = vmatpush1.msra.mxu0 0.0
      %1609 = vmatprep.subr.mxu0 0.0
      %1610 = vmatpush1.msra.mxu0 0.0
      %1611 = vmatprep.subr.mxu0 0.0
      %1612 = vmatpush1.msra.mxu0 0.0
      %1613 = vmatprep.subr.mxu0 0.0
      %1614 = vmatpush1.msra.mxu0 0.0
      %1615 = vmatprep.subr.mxu0 0.0
      %1616 = vmatpush1.msra.mxu0 0.0
      %1617 = vmatprep.subr.mxu0 0.0
      %1618 = vmatpush1.msra.mxu0 0.0
      %1619 = vmatprep.subr.mxu0 0.0
      %1620 = vmatpush1.msra.mxu0 0.0
      %1621 = vmatprep.subr.mxu0 0.0
      %1622 = vmatpush1.msra.mxu0 0.0
      %1623 = vmatprep.subr.mxu0 0.0
      %1624 = vmatpush1.msra.mxu0 0.0
      %1625 = vmatprep.subr.mxu0 0.0
      %1626 = vmatpush1.msra.mxu0 0.0
      %1627 = vmatprep.subr.mxu0 0.0
      %1628 = vmatpush1.msra.mxu0 0.0
      %1629 = vmatprep.subr.mxu0 0.0
      %1630 = vmatpush1.msra.mxu0 0.0
      %1631 = vmatprep.mubr.f32.mxu0 0.0
      %v1632 = vand.u32 %v1408, 4294901760
      %v1633 = vsub.f32 %v1408, %v1632
      %1634 = vmatmul.mubr.f32.gmra.mrb[0].mxu0 %v1633
      %v1635 = vpop.f32.mrb[0].mxu0
      %v1636 = vadd.f32 %v1562, %v1635
      %v1637 = vpop.f32.mrb[0].mxu0
      %1638 = vdwg.mxu0
      %1639 = vmatprep.subr.mxu0 0.0
      %v1640 = vand.u32 %v1411, 4294901760
      %1641 = vmatpush1.msra.mxu0 %v1640
      %1642 = vmatprep.subr.mxu0 0.0
      %1643 = vmatpush1.msra.mxu0 0.0
      %1644 = vmatprep.subr.mxu0 0.0
      %1645 = vmatpush1.msra.mxu0 0.0
      %1646 = vmatprep.subr.mxu0 0.0
      %1647 = vmatpush1.msra.mxu0 0.0
      %1648 = vmatprep.subr.mxu0 0.0
      %1649 = vmatpush1.msra.mxu0 0.0
      %1650 = vmatprep.subr.mxu0 0.0
      %1651 = vmatpush1.msra.mxu0 0.0
      %1652 = vmatprep.subr.mxu0 0.0
      %1653 = vmatpush1.msra.mxu0 0.0
      %1654 = vmatprep.subr.mxu0 0.0
      %1655 = vmatpush1.msra.mxu0 0.0
      %1656 = vmatprep.subr.mxu0 0.0
      %1657 = vmatpush1.msra.mxu0 0.0
      %1658 = vmatprep.subr.mxu0 0.0
      %1659 = vmatpush1.msra.mxu0 0.0
      %1660 = vmatprep.subr.mxu0 0.0
      %1661 = vmatpush1.msra.mxu0 0.0
      %1662 = vmatprep.subr.mxu0 0.0
      %1663 = vmatpush1.msra.mxu0 0.0
      %1664 = vmatprep.subr.mxu0 0.0
      %1665 = vmatpush1.msra.mxu0 0.0
      %1666 = vmatprep.subr.mxu0 0.0
      %1667 = vmatpush1.msra.mxu0 0.0
      %1668 = vmatprep.subr.mxu0 0.0
      %1669 = vmatpush1.msra.mxu0 0.0
      %1670 = vmatprep.subr.mxu0 0.0
      %1671 = vmatpush1.msra.mxu0 0.0
      %1672 = vmatprep.subr.mxu0 0.0
      %1673 = vmatpush1.msra.mxu0 0.0
      %1674 = vmatprep.subr.mxu0 0.0
      %1675 = vmatpush1.msra.mxu0 0.0
      %1676 = vmatprep.subr.mxu0 0.0
      %1677 = vmatpush1.msra.mxu0 0.0
      %1678 = vmatprep.subr.mxu0 0.0
      %1679 = vmatpush1.msra.mxu0 0.0
      %1680 = vmatprep.subr.mxu0 0.0
      %1681 = vmatpush1.msra.mxu0 0.0
      %1682 = vmatprep.subr.mxu0 0.0
      %1683 = vmatpush1.msra.mxu0 0.0
      %1684 = vmatprep.subr.mxu0 0.0
      %1685 = vmatpush1.msra.mxu0 0.0
      %1686 = vmatprep.subr.mxu0 0.0
      %1687 = vmatpush1.msra.mxu0 0.0
      %1688 = vmatprep.subr.mxu0 0.0
      %1689 = vmatpush1.msra.mxu0 0.0
      %1690 = vmatprep.subr.mxu0 0.0
      %1691 = vmatpush1.msra.mxu0 0.0
      %1692 = vmatprep.subr.mxu0 0.0
      %1693 = vmatpush1.msra.mxu0 0.0
      %1694 = vmatprep.subr.mxu0 0.0
      %1695 = vmatpush1.msra.mxu0 0.0
      %1696 = vmatprep.subr.mxu0 0.0
      %1697 = vmatpush1.msra.mxu0 0.0
      %1698 = vmatprep.subr.mxu0 0.0
      %1699 = vmatpush1.msra.mxu0 0.0
      %1700 = vmatprep.subr.mxu0 0.0
      %1701 = vmatpush1.msra.mxu0 0.0
      %1702 = vmatprep.subr.mxu0 0.0
      %1703 = vmatpush1.msra.mxu0 0.0
      %1704 = vmatprep.mubr.f32.mxu0 0.0
      %v1705 = vand.u32 %v1408, 4294901760
      %v1706 = vsub.f32 %v1408, %v1705
      %v1707 = vand.u32 %v1706, 4294901760
      %1708 = vmatmul.mubr.f32.gmra.mrb[0].mxu0 %v1707
      %v1709 = vpop.f32.mrb[0].mxu0
      %v1710 = vadd.f32 %v1636, %v1709
      %v1711 = vpop.f32.mrb[0].mxu0
      %1712 = vdwg.mxu0
      %1713 = vmatprep.subr.mxu0 0.0
      %v1714 = vand.u32 %v1411, 4294901760
      %v1715 = vsub.f32 %v1411, %v1714
      %v1716 = vand.u32 %v1715, 4294901760
      %1717 = vmatpush1.msra.mxu0 %v1716
      %1718 = vmatprep.subr.mxu0 0.0
      %1719 = vmatpush1.msra.mxu0 0.0
      %1720 = vmatprep.subr.mxu0 0.0
      %1721 = vmatpush1.msra.mxu0 0.0
      %1722 = vmatprep.subr.mxu0 0.0
      %1723 = vmatpush1.msra.mxu0 0.0
      %1724 = vmatprep.subr.mxu0 0.0
      %1725 = vmatpush1.msra.mxu0 0.0
      %1726 = vmatprep.subr.mxu0 0.0
      %1727 = vmatpush1.msra.mxu0 0.0
      %1728 = vmatprep.subr.mxu0 0.0
      %1729 = vmatpush1.msra.mxu0 0.0
      %1730 = vmatprep.subr.mxu0 0.0
      %1731 = vmatpush1.msra.mxu0 0.0
      %1732 = vmatprep.subr.mxu0 0.0
      %1733 = vmatpush1.msra.mxu0 0.0
      %1734 = vmatprep.subr.mxu0 0.0
      %1735 = vmatpush1.msra.mxu0 0.0
      %1736 = vmatprep.subr.mxu0 0.0
      %1737 = vmatpush1.msra.mxu0 0.0
      %1738 = vmatprep.subr.mxu0 0.0
      %1739 = vmatpush1.msra.mxu0 0.0
      %1740 = vmatprep.subr.mxu0 0.0
      %1741 = vmatpush1.msra.mxu0 0.0
      %1742 = vmatprep.subr.mxu0 0.0
      %1743 = vmatpush1.msra.mxu0 0.0
      %1744 = vmatprep.subr.mxu0 0.0
      %1745 = vmatpush1.msra.mxu0 0.0
      %1746 = vmatprep.subr.mxu0 0.0
      %1747 = vmatpush1.msra.mxu0 0.0
      %1748 = vmatprep.subr.mxu0 0.0
      %1749 = vmatpush1.msra.mxu0 0.0
      %1750 = vmatprep.subr.mxu0 0.0
      %1751 = vmatpush1.msra.mxu0 0.0
      %1752 = vmatprep.subr.mxu0 0.0
      %1753 = vmatpush1.msra.mxu0 0.0
      %1754 = vmatprep.subr.mxu0 0.0
      %1755 = vmatpush1.msra.mxu0 0.0
      %1756 = vmatprep.subr.mxu0 0.0
      %1757 = vmatpush1.msra.mxu0 0.0
      %1758 = vmatprep.subr.mxu0 0.0
      %1759 = vmatpush1.msra.mxu0 0.0
      %1760 = vmatprep.subr.mxu0 0.0
      %1761 = vmatpush1.msra.mxu0 0.0
      %1762 = vmatprep.subr.mxu0 0.0
      %1763 = vmatpush1.msra.mxu0 0.0
      %1764 = vmatprep.subr.mxu0 0.0
      %1765 = vmatpush1.msra.mxu0 0.0
      %1766 = vmatprep.subr.mxu0 0.0
      %1767 = vmatpush1.msra.mxu0 0.0
      %1768 = vmatprep.subr.mxu0 0.0
      %1769 = vmatpush1.msra.mxu0 0.0
      %1770 = vmatprep.subr.mxu0 0.0
      %1771 = vmatpush1.msra.mxu0 0.0
      %1772 = vmatprep.subr.mxu0 0.0
      %1773 = vmatpush1.msra.mxu0 0.0
      %1774 = vmatprep.subr.mxu0 0.0
      %1775 = vmatpush1.msra.mxu0 0.0
      %1776 = vmatprep.subr.mxu0 0.0
      %1777 = vmatpush1.msra.mxu0 0.0
      %1778 = vmatprep.subr.mxu0 0.0
      %1779 = vmatpush1.msra.mxu0 0.0
      %1780 = vmatprep.mubr.f32.mxu0 0.0
      %v1781 = vand.u32 %v1408, 4294901760
      %1782 = vmatmul.mubr.f32.gmra.mrb[0].mxu0 %v1781
      %v1783 = vpop.f32.mrb[0].mxu0
      %v1784 = vadd.f32 %v1710, %v1783
      %v1785 = vpop.f32.mrb[0].mxu0
      %1786 = vdwg.mxu0
      %1787 = vmatprep.subr.mxu0 0.0
      %v1788 = vand.u32 %v1411, 4294901760
      %1789 = vmatpush1.msra.mxu0 %v1788
      %1790 = vmatprep.subr.mxu0 0.0
      %1791 = vmatpush1.msra.mxu0 0.0
      %1792 = vmatprep.subr.mxu0 0.0
      %1793 = vmatpush1.msra.mxu0 0.0
      %1794 = vmatprep.subr.mxu0 0.0
      %1795 = vmatpush1.msra.mxu0 0.0
      %1796 = vmatprep.subr.mxu0 0.0
      %1797 = vmatpush1.msra.mxu0 0.0
      %1798 = vmatprep.subr.mxu0 0.0
      %1799 = vmatpush1.msra.mxu0 0.0
      %1800 = vmatprep.subr.mxu0 0.0
      %1801 = vmatpush1.msra.mxu0 0.0
      %1802 = vmatprep.subr.mxu0 0.0
      %1803 = vmatpush1.msra.mxu0 0.0
      %1804 = vmatprep.subr.mxu0 0.0
      %1805 = vmatpush1.msra.mxu0 0.0
      %1806 = vmatprep.subr.mxu0 0.0
      %1807 = vmatpush1.msra.mxu0 0.0
      %1808 = vmatprep.subr.mxu0 0.0
      %1809 = vmatpush1.msra.mxu0 0.0
      %1810 = vmatprep.subr.mxu0 0.0
      %1811 = vmatpush1.msra.mxu0 0.0
      %1812 = vmatprep.subr.mxu0 0.0
      %1813 = vmatpush1.msra.mxu0 0.0
      %1814 = vmatprep.subr.mxu0 0.0
      %1815 = vmatpush1.msra.mxu0 0.0
      %1816 = vmatprep.subr.mxu0 0.0
      %1817 = vmatpush1.msra.mxu0 0.0
      %1818 = vmatprep.subr.mxu0 0.0
      %1819 = vmatpush1.msra.mxu0 0.0
      %1820 = vmatprep.subr.mxu0 0.0
      %1821 = vmatpush1.msra.mxu0 0.0
      %1822 = vmatprep.subr.mxu0 0.0
      %1823 = vmatpush1.msra.mxu0 0.0
      %1824 = vmatprep.subr.mxu0 0.0
      %1825 = vmatpush1.msra.mxu0 0.0
      %1826 = vmatprep.subr.mxu0 0.0
      %1827 = vmatpush1.msra.mxu0 0.0
      %1828 = vmatprep.subr.mxu0 0.0
      %1829 = vmatpush1.msra.mxu0 0.0
      %1830 = vmatprep.subr.mxu0 0.0
      %1831 = vmatpush1.msra.mxu0 0.0
      %1832 = vmatprep.subr.mxu0 0.0
      %1833 = vmatpush1.msra.mxu0 0.0
      %1834 = vmatprep.subr.mxu0 0.0
      %1835 = vmatpush1.msra.mxu0 0.0
      %1836 = vmatprep.subr.mxu0 0.0
      %1837 = vmatpush1.msra.mxu0 0.0
      %1838 = vmatprep.subr.mxu0 0.0
      %1839 = vmatpush1.msra.mxu0 0.0
      %1840 = vmatprep.subr.mxu0 0.0
      %1841 = vmatpush1.msra.mxu0 0.0
      %1842 = vmatprep.subr.mxu0 0.0
      %1843 = vmatpush1.msra.mxu0 0.0
      %1844 = vmatprep.subr.mxu0 0.0
      %1845 = vmatpush1.msra.mxu0 0.0
      %1846 = vmatprep.subr.mxu0 0.0
      %1847 = vmatpush1.msra.mxu0 0.0
      %1848 = vmatprep.subr.mxu0 0.0
      %1849 = vmatpush1.msra.mxu0 0.0
      %1850 = vmatprep.subr.mxu0 0.0
      %1851 = vmatpush1.msra.mxu0 0.0
      %1852 = vmatprep.mubr.f32.mxu0 0.0
      %v1853 = vand.u32 %v1408, 4294901760
      %1854 = vmatmul.mubr.f32.gmra.mrb[0].mxu0 %v1853
      %v1855 = vpop.f32.mrb[0].mxu0
      %v1856 = vadd.f32 %v1784, %v1855
      %v1857 = vpop.f32.mrb[0].mxu0
      %1858 = vdwg.mxu0
      %v1859 = vlaneseq
      %v1860 = vshrl.u32 %v1859, 7
      %v1861 = vsub.s32 0, %v1860
      %v1862 = vrot.slane %v1404, %v1861
      %v1863 = vadd.f32 %v1862, %v1856
      %1865 = vset.pattern.permute.xlu0 0
      %1866 = vperm.xlu0 %1865, %v947
      %v1867 = vpop.permute.xlu0 %1866
      %v1870 = vlaneseq
      %v1871 = vshrl.u32 %v1870, 7
      %v1872 = vsub.s32 0, %v1871
      %v1873 = vrot.slane %v950, %v1872
      %v1875 = vmul.f32 %v1867, %v1873
      %v1876 = vadd.f32 %v1863, %v1875
      %v1878 = vlaneseq
      %v1879 = vshrl.u32 %v1878, 7
      %v1880 = vsub.s32 0, %v1879
      %v1881 = vrot.slane %v952, %v1880
      %v1883 = vadd.f32 %v1876, %v1881
      %vm1884 = vcmp.gt.f32.partialorder %v1883, 0.0
      %v1885 = vmul.f32 %v1883, 0.01
      %v1886 = vsel %vm1884, %v1883, %v1885
      %v1887 = vld [vmem:[%s8] sm:$0xff]
      %v1888 = vld [vmem:[%s8 + $0x8] sm:$0xff]
      %v1889 = vld [vmem:[%s9] sm:$0x1]
      %v1891 = vlaneseq
      %v1892 = vshrl.u32 %v1891, 7
      %v1893 = vsub.s32 0, %v1892
      %v1894 = vrot.slane %v1889, %v1893
      %vm1896 = vcmask 130048
      %v1898 = vsel %vm1896, %v1886, 0
      %1900 = vmatprep.subr.mxu0 0.0
      %v1901 = vand.u32 %v1887, 4294901760
      %1902 = vmatpush1.msra.mxu0 %v1901
      %1903 = vmatprep.subr.mxu0 0.0
      %v1904 = vand.u32 %v1888, 4294901760
      %1905 = vmatpush1.msra.mxu0 %v1904
      %1906 = vmatprep.subr.mxu0 0.0
      %1907 = vmatpush1.msra.mxu0 0.0
      %1908 = vmatprep.subr.mxu0 0.0
      %1909 = vmatpush1.msra.mxu0 0.0
      %1910 = vmatprep.subr.mxu0 0.0
      %1911 = vmatpush1.msra.mxu0 0.0
      %1912 = vmatprep.subr.mxu0 0.0
      %1913 = vmatpush1.msra.mxu0 0.0
      %1914 = vmatprep.subr.mxu0 0.0
      %1915 = vmatpush1.msra.mxu0 0.0
      %1916 = vmatprep.subr.mxu0 0.0
      %1917 = vmatpush1.msra.mxu0 0.0
      %1918 = vmatprep.subr.mxu0 0.0
      %1919 = vmatpush1.msra.mxu0 0.0
      %1920 = vmatprep.subr.mxu0 0.0
      %1921 = vmatpush1.msra.mxu0 0.0
      %1922 = vmatprep.subr.mxu0 0.0
      %1923 = vmatpush1.msra.mxu0 0.0
      %1924 = vmatprep.subr.mxu0 0.0
      %1925 = vmatpush1.msra.mxu0 0.0
      %1926 = vmatprep.subr.mxu0 0.0
      %1927 = vmatpush1.msra.mxu0 0.0
      %1928 = vmatprep.subr.mxu0 0.0
      %1929 = vmatpush1.msra.mxu0 0.0
      %1930 = vmatprep.subr.mxu0 0.0
      %1931 = vmatpush1.msra.mxu0 0.0
      %1932 = vmatprep.subr.mxu0 0.0
      %1933 = vmatpush1.msra.mxu0 0.0
      %1934 = vmatprep.subr.mxu0 0.0
      %1935 = vmatpush1.msra.mxu0 0.0
      %1936 = vmatprep.subr.mxu0 0.0
      %1937 = vmatpush1.msra.mxu0 0.0
      %1938 = vmatprep.subr.mxu0 0.0
      %1939 = vmatpush1.msra.mxu0 0.0
      %1940 = vmatprep.subr.mxu0 0.0
      %1941 = vmatpush1.msra.mxu0 0.0
      %1942 = vmatprep.subr.mxu0 0.0
      %1943 = vmatpush1.msra.mxu0 0.0
      %1944 = vmatprep.subr.mxu0 0.0
      %1945 = vmatpush1.msra.mxu0 0.0
      %1946 = vmatprep.subr.mxu0 0.0
      %1947 = vmatpush1.msra.mxu0 0.0
      %1948 = vmatprep.subr.mxu0 0.0
      %1949 = vmatpush1.msra.mxu0 0.0
      %1950 = vmatprep.subr.mxu0 0.0
      %1951 = vmatpush1.msra.mxu0 0.0
      %1952 = vmatprep.subr.mxu0 0.0
      %1953 = vmatpush1.msra.mxu0 0.0
      %1954 = vmatprep.subr.mxu0 0.0
      %1955 = vmatpush1.msra.mxu0 0.0
      %1956 = vmatprep.subr.mxu0 0.0
      %1957 = vmatpush1.msra.mxu0 0.0
      %1958 = vmatprep.subr.mxu0 0.0
      %1959 = vmatpush1.msra.mxu0 0.0
      %1960 = vmatprep.subr.mxu0 0.0
      %1961 = vmatpush1.msra.mxu0 0.0
      %1962 = vmatprep.subr.mxu0 0.0
      %1963 = vmatpush1.msra.mxu0 0.0
      %1964 = vmatprep.subr.mxu0 0.0
      %1965 = vmatpush1.msra.mxu0 0.0
      %1966 = vmatprep.mubr.f32.mxu0 0.0
      %v1967 = vand.u32 %v1898, 4294901760
      %v1968 = vsub.f32 %v1898, %v1967
      %v1969 = vand.u32 %v1968, 4294901760
      %v1970 = vsub.f32 %v1968, %v1969
      %v1971 = vand.u32 %v1970, 4294901760
      %1972 = vmatmul.mubr.f32.gmra.mrb[0].mxu0 %v1971
      %v1973 = vpop.f32.mrb[0].mxu0
      %v1974 = vadd.f32 %v1894, %v1973
      %v1975 = vpop.f32.mrb[0].mxu0
      %1976 = vdwg.mxu0
      %1977 = vmatprep.subr.mxu0 0.0
      %v1978 = vand.u32 %v1887, 4294901760
      %v1979 = vsub.f32 %v1887, %v1978
      %v1980 = vand.u32 %v1979, 4294901760
      %v1981 = vsub.f32 %v1979, %v1980
      %v1982 = vand.u32 %v1981, 4294901760
      %1983 = vmatpush1.msra.mxu0 %v1982
      %1984 = vmatprep.subr.mxu0 0.0
      %v1985 = vand.u32 %v1888, 4294901760
      %v1986 = vsub.f32 %v1888, %v1985
      %v1987 = vand.u32 %v1986, 4294901760
      %v1988 = vsub.f32 %v1986, %v1987
      %v1989 = vand.u32 %v1988, 4294901760
      %1990 = vmatpush1.msra.mxu0 %v1989
      %1991 = vmatprep.subr.mxu0 0.0
      %1992 = vmatpush1.msra.mxu0 0.0
      %1993 = vmatprep.subr.mxu0 0.0
      %1994 = vmatpush1.msra.mxu0 0.0
      %1995 = vmatprep.subr.mxu0 0.0
      %1996 = vmatpush1.msra.mxu0 0.0
      %1997 = vmatprep.subr.mxu0 0.0
      %1998 = vmatpush1.msra.mxu0 0.0
      %1999 = vmatprep.subr.mxu0 0.0
      %2000 = vmatpush1.msra.mxu0 0.0
      %2001 = vmatprep.subr.mxu0 0.0
      %2002 = vmatpush1.msra.mxu0 0.0
      %2003 = vmatprep.subr.mxu0 0.0
      %2004 = vmatpush1.msra.mxu0 0.0
      %2005 = vmatprep.subr.mxu0 0.0
      %2006 = vmatpush1.msra.mxu0 0.0
      %2007 = vmatprep.subr.mxu0 0.0
      %2008 = vmatpush1.msra.mxu0 0.0
      %2009 = vmatprep.subr.mxu0 0.0
      %2010 = vmatpush1.msra.mxu0 0.0
      %2011 = vmatprep.subr.mxu0 0.0
      %2012 = vmatpush1.msra.mxu0 0.0
      %2013 = vmatprep.subr.mxu0 0.0
      %2014 = vmatpush1.msra.mxu0 0.0
      %2015 = vmatprep.subr.mxu0 0.0
      %2016 = vmatpush1.msra.mxu0 0.0
      %2017 = vmatprep.subr.mxu0 0.0
      %2018 = vmatpush1.msra.mxu0 0.0
      %2019 = vmatprep.subr.mxu0 0.0
      %2020 = vmatpush1.msra.mxu0 0.0
      %2021 = vmatprep.subr.mxu0 0.0
      %2022 = vmatpush1.msra.mxu0 0.0
      %2023 = vmatprep.subr.mxu0 0.0
      %2024 = vmatpush1.msra.mxu0 0.0
      %2025 = vmatprep.subr.mxu0 0.0
      %2026 = vmatpush1.msra.mxu0 0.0
      %2027 = vmatprep.subr.mxu0 0.0
      %2028 = vmatpush1.msra.mxu0 0.0
      %2029 = vmatprep.subr.mxu0 0.0
      %2030 = vmatpush1.msra.mxu0 0.0
      %2031 = vmatprep.subr.mxu0 0.0
      %2032 = vmatpush1.msra.mxu0 0.0
      %2033 = vmatprep.subr.mxu0 0.0
      %2034 = vmatpush1.msra.mxu0 0.0
      %2035 = vmatprep.subr.mxu0 0.0
      %2036 = vmatpush1.msra.mxu0 0.0
      %2037 = vmatprep.subr.mxu0 0.0
      %2038 = vmatpush1.msra.mxu0 0.0
      %2039 = vmatprep.subr.mxu0 0.0
      %2040 = vmatpush1.msra.mxu0 0.0
      %2041 = vmatprep.subr.mxu0 0.0
      %2042 = vmatpush1.msra.mxu0 0.0
      %2043 = vmatprep.subr.mxu0 0.0
      %2044 = vmatpush1.msra.mxu0 0.0
      %2045 = vmatprep.subr.mxu0 0.0
      %2046 = vmatpush1.msra.mxu0 0.0
      %2047 = vmatprep.subr.mxu0 0.0
      %2048 = vmatpush1.msra.mxu0 0.0
      %2049 = vmatprep.subr.mxu0 0.0
      %2050 = vmatpush1.msra.mxu0 0.0
      %2051 = vmatprep.mubr.f32.mxu0 0.0
      %v2052 = vand.u32 %v1898, 4294901760
      %2053 = vmatmul.mubr.f32.gmra.mrb[0].mxu0 %v2052
      %v2054 = vpop.f32.mrb[0].mxu0
      %v2055 = vadd.f32 %v1974, %v2054
      %v2056 = vpop.f32.mrb[0].mxu0
      %2057 = vdwg.mxu0
      %2058 = vmatprep.subr.mxu0 0.0
      %v2059 = vand.u32 %v1887, 4294901760
      %v2060 = vsub.f32 %v1887, %v2059
      %2061 = vmatpush1.msra.mxu0 %v2060
      %2062 = vmatprep.subr.mxu0 0.0
      %v2063 = vand.u32 %v1888, 4294901760
      %v2064 = vsub.f32 %v1888, %v2063
      %2065 = vmatpush1.msra.mxu0 %v2064
      %2066 = vmatprep.subr.mxu0 0.0
      %2067 = vmatpush1.msra.mxu0 0.0
      %2068 = vmatprep.subr.mxu0 0.0
      %2069 = vmatpush1.msra.mxu0 0.0
      %2070 = vmatprep.subr.mxu0 0.0
      %2071 = vmatpush1.msra.mxu0 0.0
      %2072 = vmatprep.subr.mxu0 0.0
      %2073 = vmatpush1.msra.mxu0 0.0
      %2074 = vmatprep.subr.mxu0 0.0
      %2075 = vmatpush1.msra.mxu0 0.0
      %2076 = vmatprep.subr.mxu0 0.0
      %2077 = vmatpush1.msra.mxu0 0.0
      %2078 = vmatprep.subr.mxu0 0.0
      %2079 = vmatpush1.msra.mxu0 0.0
      %2080 = vmatprep.subr.mxu0 0.0
      %2081 = vmatpush1.msra.mxu0 0.0
      %2082 = vmatprep.subr.mxu0 0.0
      %2083 = vmatpush1.msra.mxu0 0.0
      %2084 = vmatprep.subr.mxu0 0.0
      %2085 = vmatpush1.msra.mxu0 0.0
      %2086 = vmatprep.subr.mxu0 0.0
      %2087 = vmatpush1.msra.mxu0 0.0
      %2088 = vmatprep.subr.mxu0 0.0
      %2089 = vmatpush1.msra.mxu0 0.0
      %2090 = vmatprep.subr.mxu0 0.0
      %2091 = vmatpush1.msra.mxu0 0.0
      %2092 = vmatprep.subr.mxu0 0.0
      %2093 = vmatpush1.msra.mxu0 0.0
      %2094 = vmatprep.subr.mxu0 0.0
      %2095 = vmatpush1.msra.mxu0 0.0
      %2096 = vmatprep.subr.mxu0 0.0
      %2097 = vmatpush1.msra.mxu0 0.0
      %2098 = vmatprep.subr.mxu0 0.0
      %2099 = vmatpush1.msra.mxu0 0.0
      %2100 = vmatprep.subr.mxu0 0.0
      %2101 = vmatpush1.msra.mxu0 0.0
      %2102 = vmatprep.subr.mxu0 0.0
      %2103 = vmatpush1.msra.mxu0 0.0
      %2104 = vmatprep.subr.mxu0 0.0
      %2105 = vmatpush1.msra.mxu0 0.0
      %2106 = vmatprep.subr.mxu0 0.0
      %2107 = vmatpush1.msra.mxu0 0.0
      %2108 = vmatprep.subr.mxu0 0.0
      %2109 = vmatpush1.msra.mxu0 0.0
      %2110 = vmatprep.subr.mxu0 0.0
      %2111 = vmatpush1.msra.mxu0 0.0
      %2112 = vmatprep.subr.mxu0 0.0
      %2113 = vmatpush1.msra.mxu0 0.0
      %2114 = vmatprep.subr.mxu0 0.0
      %2115 = vmatpush1.msra.mxu0 0.0
      %2116 = vmatprep.subr.mxu0 0.0
      %2117 = vmatpush1.msra.mxu0 0.0
      %2118 = vmatprep.subr.mxu0 0.0
      %2119 = vmatpush1.msra.mxu0 0.0
      %2120 = vmatprep.subr.mxu0 0.0
      %2121 = vmatpush1.msra.mxu0 0.0
      %2122 = vmatprep.subr.mxu0 0.0
      %2123 = vmatpush1.msra.mxu0 0.0
      %2124 = vmatprep.subr.mxu0 0.0
      %2125 = vmatpush1.msra.mxu0 0.0
      %2126 = vmatprep.mubr.f32.mxu0 0.0
      %v2127 = vand.u32 %v1898, 4294901760
      %v2128 = vsub.f32 %v1898, %v2127
      %2129 = vmatmul.mubr.f32.gmra.mrb[0].mxu0 %v2128
      %v2130 = vpop.f32.mrb[0].mxu0
      %v2131 = vadd.f32 %v2055, %v2130
      %v2132 = vpop.f32.mrb[0].mxu0
      %2133 = vdwg.mxu0
      %2134 = vmatprep.subr.mxu0 0.0
      %v2135 = vand.u32 %v1887, 4294901760
      %2136 = vmatpush1.msra.mxu0 %v2135
      %2137 = vmatprep.subr.mxu0 0.0
      %v2138 = vand.u32 %v1888, 4294901760
      %2139 = vmatpush1.msra.mxu0 %v2138
      %2140 = vmatprep.subr.mxu0 0.0
      %2141 = vmatpush1.msra.mxu0 0.0
      %2142 = vmatprep.subr.mxu0 0.0
      %2143 = vmatpush1.msra.mxu0 0.0
      %2144 = vmatprep.subr.mxu0 0.0
      %2145 = vmatpush1.msra.mxu0 0.0
      %2146 = vmatprep.subr.mxu0 0.0
      %2147 = vmatpush1.msra.mxu0 0.0
      %2148 = vmatprep.subr.mxu0 0.0
      %2149 = vmatpush1.msra.mxu0 0.0
      %2150 = vmatprep.subr.mxu0 0.0
      %2151 = vmatpush1.msra.mxu0 0.0
      %2152 = vmatprep.subr.mxu0 0.0
      %2153 = vmatpush1.msra.mxu0 0.0
      %2154 = vmatprep.subr.mxu0 0.0
      %2155 = vmatpush1.msra.mxu0 0.0
      %2156 = vmatprep.subr.mxu0 0.0
      %2157 = vmatpush1.msra.mxu0 0.0
      %2158 = vmatprep.subr.mxu0 0.0
      %2159 = vmatpush1.msra.mxu0 0.0
      %2160 = vmatprep.subr.mxu0 0.0
      %2161 = vmatpush1.msra.mxu0 0.0
      %2162 = vmatprep.subr.mxu0 0.0
      %2163 = vmatpush1.msra.mxu0 0.0
      %2164 = vmatprep.subr.mxu0 0.0
      %2165 = vmatpush1.msra.mxu0 0.0
      %2166 = vmatprep.subr.mxu0 0.0
      %2167 = vmatpush1.msra.mxu0 0.0
      %2168 = vmatprep.subr.mxu0 0.0
      %2169 = vmatpush1.msra.mxu0 0.0
      %2170 = vmatprep.subr.mxu0 0.0
      %2171 = vmatpush1.msra.mxu0 0.0
      %2172 = vmatprep.subr.mxu0 0.0
      %2173 = vmatpush1.msra.mxu0 0.0
      %2174 = vmatprep.subr.mxu0 0.0
      %2175 = vmatpush1.msra.mxu0 0.0
      %2176 = vmatprep.subr.mxu0 0.0
      %2177 = vmatpush1.msra.mxu0 0.0
      %2178 = vmatprep.subr.mxu0 0.0
      %2179 = vmatpush1.msra.mxu0 0.0
      %2180 = vmatprep.subr.mxu0 0.0
      %2181 = vmatpush1.msra.mxu0 0.0
      %2182 = vmatprep.subr.mxu0 0.0
      %2183 = vmatpush1.msra.mxu0 0.0
      %2184 = vmatprep.subr.mxu0 0.0
      %2185 = vmatpush1.msra.mxu0 0.0
      %2186 = vmatprep.subr.mxu0 0.0
      %2187 = vmatpush1.msra.mxu0 0.0
      %2188 = vmatprep.subr.mxu0 0.0
      %2189 = vmatpush1.msra.mxu0 0.0
      %2190 = vmatprep.subr.mxu0 0.0
      %2191 = vmatpush1.msra.mxu0 0.0
      %2192 = vmatprep.subr.mxu0 0.0
      %2193 = vmatpush1.msra.mxu0 0.0
      %2194 = vmatprep.subr.mxu0 0.0
      %2195 = vmatpush1.msra.mxu0 0.0
      %2196 = vmatprep.subr.mxu0 0.0
      %2197 = vmatpush1.msra.mxu0 0.0
      %2198 = vmatprep.subr.mxu0 0.0
      %2199 = vmatpush1.msra.mxu0 0.0
      %2200 = vmatprep.mubr.f32.mxu0 0.0
      %v2201 = vand.u32 %v1898, 4294901760
      %v2202 = vsub.f32 %v1898, %v2201
      %v2203 = vand.u32 %v2202, 4294901760
      %2204 = vmatmul.mubr.f32.gmra.mrb[0].mxu0 %v2203
      %v2205 = vpop.f32.mrb[0].mxu0
      %v2206 = vadd.f32 %v2131, %v2205
      %v2207 = vpop.f32.mrb[0].mxu0
      %2208 = vdwg.mxu0
      %2209 = vmatprep.subr.mxu0 0.0
      %v2210 = vand.u32 %v1887, 4294901760
      %v2211 = vsub.f32 %v1887, %v2210
      %v2212 = vand.u32 %v2211, 4294901760
      %2213 = vmatpush1.msra.mxu0 %v2212
      %2214 = vmatprep.subr.mxu0 0.0
      %v2215 = vand.u32 %v1888, 4294901760
      %v2216 = vsub.f32 %v1888, %v2215
      %v2217 = vand.u32 %v2216, 4294901760
      %2218 = vmatpush1.msra.mxu0 %v2217
      %2219 = vmatprep.subr.mxu0 0.0
      %2220 = vmatpush1.msra.mxu0 0.0
      %2221 = vmatprep.subr.mxu0 0.0
      %2222 = vmatpush1.msra.mxu0 0.0
      %2223 = vmatprep.subr.mxu0 0.0
      %2224 = vmatpush1.msra.mxu0 0.0
      %2225 = vmatprep.subr.mxu0 0.0
      %2226 = vmatpush1.msra.mxu0 0.0
      %2227 = vmatprep.subr.mxu0 0.0
      %2228 = vmatpush1.msra.mxu0 0.0
      %2229 = vmatprep.subr.mxu0 0.0
      %2230 = vmatpush1.msra.mxu0 0.0
      %2231 = vmatprep.subr.mxu0 0.0
      %2232 = vmatpush1.msra.mxu0 0.0
      %2233 = vmatprep.subr.mxu0 0.0
      %2234 = vmatpush1.msra.mxu0 0.0
      %2235 = vmatprep.subr.mxu0 0.0
      %2236 = vmatpush1.msra.mxu0 0.0
      %2237 = vmatprep.subr.mxu0 0.0
      %2238 = vmatpush1.msra.mxu0 0.0
      %2239 = vmatprep.subr.mxu0 0.0
      %2240 = vmatpush1.msra.mxu0 0.0
      %2241 = vmatprep.subr.mxu0 0.0
      %2242 = vmatpush1.msra.mxu0 0.0
      %2243 = vmatprep.subr.mxu0 0.0
      %2244 = vmatpush1.msra.mxu0 0.0
      %2245 = vmatprep.subr.mxu0 0.0
      %2246 = vmatpush1.msra.mxu0 0.0
      %2247 = vmatprep.subr.mxu0 0.0
      %2248 = vmatpush1.msra.mxu0 0.0
      %2249 = vmatprep.subr.mxu0 0.0
      %2250 = vmatpush1.msra.mxu0 0.0
      %2251 = vmatprep.subr.mxu0 0.0
      %2252 = vmatpush1.msra.mxu0 0.0
      %2253 = vmatprep.subr.mxu0 0.0
      %2254 = vmatpush1.msra.mxu0 0.0
      %2255 = vmatprep.subr.mxu0 0.0
      %2256 = vmatpush1.msra.mxu0 0.0
      %2257 = vmatprep.subr.mxu0 0.0
      %2258 = vmatpush1.msra.mxu0 0.0
      %2259 = vmatprep.subr.mxu0 0.0
      %2260 = vmatpush1.msra.mxu0 0.0
      %2261 = vmatprep.subr.mxu0 0.0
      %2262 = vmatpush1.msra.mxu0 0.0
      %2263 = vmatprep.subr.mxu0 0.0
      %2264 = vmatpush1.msra.mxu0 0.0
      %2265 = vmatprep.subr.mxu0 0.0
      %2266 = vmatpush1.msra.mxu0 0.0
      %2267 = vmatprep.subr.mxu0 0.0
      %2268 = vmatpush1.msra.mxu0 0.0
      %2269 = vmatprep.subr.mxu0 0.0
      %2270 = vmatpush1.msra.mxu0 0.0
      %2271 = vmatprep.subr.mxu0 0.0
      %2272 = vmatpush1.msra.mxu0 0.0
      %2273 = vmatprep.subr.mxu0 0.0
      %2274 = vmatpush1.msra.mxu0 0.0
      %2275 = vmatprep.subr.mxu0 0.0
      %2276 = vmatpush1.msra.mxu0 0.0
      %2277 = vmatprep.subr.mxu0 0.0
      %2278 = vmatpush1.msra.mxu0 0.0
      %2279 = vmatprep.mubr.f32.mxu0 0.0
      %v2280 = vand.u32 %v1898, 4294901760
      %2281 = vmatmul.mubr.f32.gmra.mrb[0].mxu0 %v2280
      %v2282 = vpop.f32.mrb[0].mxu0
      %v2283 = vadd.f32 %v2206, %v2282
      %v2284 = vpop.f32.mrb[0].mxu0
      %2285 = vdwg.mxu0
      %2286 = vmatprep.subr.mxu0 0.0
      %v2287 = vand.u32 %v1887, 4294901760
      %2288 = vmatpush1.msra.mxu0 %v2287
      %2289 = vmatprep.subr.mxu0 0.0
      %v2290 = vand.u32 %v1888, 4294901760
      %2291 = vmatpush1.msra.mxu0 %v2290
      %2292 = vmatprep.subr.mxu0 0.0
      %2293 = vmatpush1.msra.mxu0 0.0
      %2294 = vmatprep.subr.mxu0 0.0
      %2295 = vmatpush1.msra.mxu0 0.0
      %2296 = vmatprep.subr.mxu0 0.0
      %2297 = vmatpush1.msra.mxu0 0.0
      %2298 = vmatprep.subr.mxu0 0.0
      %2299 = vmatpush1.msra.mxu0 0.0
      %2300 = vmatprep.subr.mxu0 0.0
      %2301 = vmatpush1.msra.mxu0 0.0
      %2302 = vmatprep.subr.mxu0 0.0
      %2303 = vmatpush1.msra.mxu0 0.0
      %2304 = vmatprep.subr.mxu0 0.0
      %2305 = vmatpush1.msra.mxu0 0.0
      %2306 = vmatprep.subr.mxu0 0.0
      %2307 = vmatpush1.msra.mxu0 0.0
      %2308 = vmatprep.subr.mxu0 0.0
      %2309 = vmatpush1.msra.mxu0 0.0
      %2310 = vmatprep.subr.mxu0 0.0
      %2311 = vmatpush1.msra.mxu0 0.0
      %2312 = vmatprep.subr.mxu0 0.0
      %2313 = vmatpush1.msra.mxu0 0.0
      %2314 = vmatprep.subr.mxu0 0.0
      %2315 = vmatpush1.msra.mxu0 0.0
      %2316 = vmatprep.subr.mxu0 0.0
      %2317 = vmatpush1.msra.mxu0 0.0
      %2318 = vmatprep.subr.mxu0 0.0
      %2319 = vmatpush1.msra.mxu0 0.0
      %2320 = vmatprep.subr.mxu0 0.0
      %2321 = vmatpush1.msra.mxu0 0.0
      %2322 = vmatprep.subr.mxu0 0.0
      %2323 = vmatpush1.msra.mxu0 0.0
      %2324 = vmatprep.subr.mxu0 0.0
      %2325 = vmatpush1.msra.mxu0 0.0
      %2326 = vmatprep.subr.mxu0 0.0
      %2327 = vmatpush1.msra.mxu0 0.0
      %2328 = vmatprep.subr.mxu0 0.0
      %2329 = vmatpush1.msra.mxu0 0.0
      %2330 = vmatprep.subr.mxu0 0.0
      %2331 = vmatpush1.msra.mxu0 0.0
      %2332 = vmatprep.subr.mxu0 0.0
      %2333 = vmatpush1.msra.mxu0 0.0
      %2334 = vmatprep.subr.mxu0 0.0
      %2335 = vmatpush1.msra.mxu0 0.0
      %2336 = vmatprep.subr.mxu0 0.0
      %2337 = vmatpush1.msra.mxu0 0.0
      %2338 = vmatprep.subr.mxu0 0.0
      %2339 = vmatpush1.msra.mxu0 0.0
      %2340 = vmatprep.subr.mxu0 0.0
      %2341 = vmatpush1.msra.mxu0 0.0
      %2342 = vmatprep.subr.mxu0 0.0
      %2343 = vmatpush1.msra.mxu0 0.0
      %2344 = vmatprep.subr.mxu0 0.0
      %2345 = vmatpush1.msra.mxu0 0.0
      %2346 = vmatprep.subr.mxu0 0.0
      %2347 = vmatpush1.msra.mxu0 0.0
      %2348 = vmatprep.subr.mxu0 0.0
      %2349 = vmatpush1.msra.mxu0 0.0
      %2350 = vmatprep.subr.mxu0 0.0
      %2351 = vmatpush1.msra.mxu0 0.0
      %2352 = vmatprep.mubr.f32.mxu0 0.0
      %v2353 = vand.u32 %v1898, 4294901760
      %2354 = vmatmul.mubr.f32.gmra.mrb[0].mxu0 %v2353
      %v2355 = vpop.f32.mrb[0].mxu0
      %v2356 = vadd.f32 %v2283, %v2355
      %v2357 = vpop.f32.mrb[0].mxu0
      %2358 = vdwg.mxu0
      %vm2359 = vcmask 64512
      %v2360 = vsel %vm2359, %v2356, 0.0
      %v2361 = vrot.slane %v2360, 4
      %v2362 = vadd.f32 %v2360, %v2361
      %v2363 = vrot.slane %v2362, 2
      %v2364 = vadd.f32 %v2362, %v2363
      %v2365 = vrot.slane %v2364, 1
      %v2366 = vadd.f32 %v2364, %v2365
      %v2367 = vrcp.pop 8.0
      %v2368 = vmul.f32 %v2366, %v2367
      %s2369 = scalar_lea.vmem [#allocation2], %s46
      %vm2370 = vcmask 57344
      %2371 = vst.msk [vmem:[%s2369] sm:$0x1] %vm2370, %v2368
      %v2372 = vld [vmem:[%s10] sm:$0x7]
      %v2373 = vld [vmem:[%s11] sm:$0x1]
      %v2374 = vld [vmem:[%s12] sm:$0x1]
      %v2375 = vld [vmem:[%s13] sm:$0x7]
      %v2376 = vld [vmem:[%s14] sm:$0x1]
      %v2378 = vsel %vm957, %v2372, 0
      %2380 = vmatprep.subr.mxu0 0.0
      %v2381 = vand.u32 %v2378, 4294901760
      %2382 = vmatpush1.msra.mxu0 %v2381
      %2383 = vmatprep.subr.mxu0 0.0
      %2384 = vmatpush1.msra.mxu0 0.0
      %2385 = vmatprep.subr.mxu0 0.0
      %2386 = vmatpush1.msra.mxu0 0.0
      %2387 = vmatprep.subr.mxu0 0.0
      %2388 = vmatpush1.msra.mxu0 0.0
      %2389 = vmatprep.subr.mxu0 0.0
      %2390 = vmatpush1.msra.mxu0 0.0
      %2391 = vmatprep.subr.mxu0 0.0
      %2392 = vmatpush1.msra.mxu0 0.0
      %2393 = vmatprep.subr.mxu0 0.0
      %2394 = vmatpush1.msra.mxu0 0.0
      %2395 = vmatprep.subr.mxu0 0.0
      %2396 = vmatpush1.msra.mxu0 0.0
      %2397 = vmatprep.subr.mxu0 0.0
      %2398 = vmatpush1.msra.mxu0 0.0
      %2399 = vmatprep.subr.mxu0 0.0
      %2400 = vmatpush1.msra.mxu0 0.0
      %2401 = vmatprep.subr.mxu0 0.0
      %2402 = vmatpush1.msra.mxu0 0.0
      %2403 = vmatprep.subr.mxu0 0.0
      %2404 = vmatpush1.msra.mxu0 0.0
      %2405 = vmatprep.subr.mxu0 0.0
      %2406 = vmatpush1.msra.mxu0 0.0
      %2407 = vmatprep.subr.mxu0 0.0
      %2408 = vmatpush1.msra.mxu0 0.0
      %2409 = vmatprep.subr.mxu0 0.0
      %2410 = vmatpush1.msra.mxu0 0.0
      %2411 = vmatprep.subr.mxu0 0.0
      %2412 = vmatpush1.msra.mxu0 0.0
      %2413 = vmatprep.subr.mxu0 0.0
      %2414 = vmatpush1.msra.mxu0 0.0
      %2415 = vmatprep.subr.mxu0 0.0
      %2416 = vmatpush1.msra.mxu0 0.0
      %2417 = vmatprep.subr.mxu0 0.0
      %2418 = vmatpush1.msra.mxu0 0.0
      %2419 = vmatprep.subr.mxu0 0.0
      %2420 = vmatpush1.msra.mxu0 0.0
      %2421 = vmatprep.subr.mxu0 0.0
      %2422 = vmatpush1.msra.mxu0 0.0
      %2423 = vmatprep.subr.mxu0 0.0
      %2424 = vmatpush1.msra.mxu0 0.0
      %2425 = vmatprep.subr.mxu0 0.0
      %2426 = vmatpush1.msra.mxu0 0.0
      %2427 = vmatprep.subr.mxu0 0.0
      %2428 = vmatpush1.msra.mxu0 0.0
      %2429 = vmatprep.subr.mxu0 0.0
      %2430 = vmatpush1.msra.mxu0 0.0
      %2431 = vmatprep.subr.mxu0 0.0
      %2432 = vmatpush1.msra.mxu0 0.0
      %2433 = vmatprep.subr.mxu0 0.0
      %2434 = vmatpush1.msra.mxu0 0.0
      %2435 = vmatprep.subr.mxu0 0.0
      %2436 = vmatpush1.msra.mxu0 0.0
      %2437 = vmatprep.subr.mxu0 0.0
      %2438 = vmatpush1.msra.mxu0 0.0
      %2439 = vmatprep.subr.mxu0 0.0
      %2440 = vmatpush1.msra.mxu0 0.0
      %2441 = vmatprep.subr.mxu0 0.0
      %2442 = vmatpush1.msra.mxu0 0.0
      %2443 = vmatprep.subr.mxu0 0.0
      %2444 = vmatpush1.msra.mxu0 0.0
      %2445 = vmatprep.mubr.f32.mxu0 0.0
      %v2446 = vand.u32 %v955, 4294901760
      %v2447 = vsub.f32 %v955, %v2446
      %v2448 = vand.u32 %v2447, 4294901760
      %v2449 = vsub.f32 %v2447, %v2448
      %v2450 = vand.u32 %v2449, 4294901760
      %2451 = vmatmul.mubr.f32.gmra.mrb[0].mxu0 %v2450
      %v2452 = vpop.f32.mrb[0].mxu0
      %v2453 = vadd.f32 0.0, %v2452
      %v2454 = vpop.f32.mrb[0].mxu0
      %2455 = vdwg.mxu0
      %2456 = vmatprep.subr.mxu0 0.0
      %v2457 = vand.u32 %v2378, 4294901760
      %v2458 = vsub.f32 %v2378, %v2457
      %v2459 = vand.u32 %v2458, 4294901760
      %v2460 = vsub.f32 %v2458, %v2459
      %v2461 = vand.u32 %v2460, 4294901760
      %2462 = vmatpush1.msra.mxu0 %v2461
      %2463 = vmatprep.subr.mxu0 0.0
      %2464 = vmatpush1.msra.mxu0 0.0
      %2465 = vmatprep.subr.mxu0 0.0
      %2466 = vmatpush1.msra.mxu0 0.0
      %2467 = vmatprep.subr.mxu0 0.0
      %2468 = vmatpush1.msra.mxu0 0.0
      %2469 = vmatprep.subr.mxu0 0.0
      %2470 = vmatpush1.msra.mxu0 0.0
      %2471 = vmatprep.subr.mxu0 0.0
      %2472 = vmatpush1.msra.mxu0 0.0
      %2473 = vmatprep.subr.mxu0 0.0
      %2474 = vmatpush1.msra.mxu0 0.0
      %2475 = vmatprep.subr.mxu0 0.0
      %2476 = vmatpush1.msra.mxu0 0.0
      %2477 = vmatprep.subr.mxu0 0.0
      %2478 = vmatpush1.msra.mxu0 0.0
      %2479 = vmatprep.subr.mxu0 0.0
      %2480 = vmatpush1.msra.mxu0 0.0
      %2481 = vmatprep.subr.mxu0 0.0
      %2482 = vmatpush1.msra.mxu0 0.0
      %2483 = vmatprep.subr.mxu0 0.0
      %2484 = vmatpush1.msra.mxu0 0.0
      %2485 = vmatprep.subr.mxu0 0.0
      %2486 = vmatpush1.msra.mxu0 0.0
      %2487 = vmatprep.subr.mxu0 0.0
      %2488 = vmatpush1.msra.mxu0 0.0
      %2489 = vmatprep.subr.mxu0 0.0
      %2490 = vmatpush1.msra.mxu0 0.0
      %2491 = vmatprep.subr.mxu0 0.0
      %2492 = vmatpush1.msra.mxu0 0.0
      %2493 = vmatprep.subr.mxu0 0.0
      %2494 = vmatpush1.msra.mxu0 0.0
      %2495 = vmatprep.subr.mxu0 0.0
      %2496 = vmatpush1.msra.mxu0 0.0
      %2497 = vmatprep.subr.mxu0 0.0
      %2498 = vmatpush1.msra.mxu0 0.0
      %2499 = vmatprep.subr.mxu0 0.0
      %2500 = vmatpush1.msra.mxu0 0.0
      %2501 = vmatprep.subr.mxu0 0.0
      %2502 = vmatpush1.msra.mxu0 0.0
      %2503 = vmatprep.subr.mxu0 0.0
      %2504 = vmatpush1.msra.mxu0 0.0
      %2505 = vmatprep.subr.mxu0 0.0
      %2506 = vmatpush1.msra.mxu0 0.0
      %2507 = vmatprep.subr.mxu0 0.0
      %2508 = vmatpush1.msra.mxu0 0.0
      %2509 = vmatprep.subr.mxu0 0.0
      %2510 = vmatpush1.msra.mxu0 0.0
      %2511 = vmatprep.subr.mxu0 0.0
      %2512 = vmatpush1.msra.mxu0 0.0
      %2513 = vmatprep.subr.mxu0 0.0
      %2514 = vmatpush1.msra.mxu0 0.0
      %2515 = vmatprep.subr.mxu0 0.0
      %2516 = vmatpush1.msra.mxu0 0.0
      %2517 = vmatprep.subr.mxu0 0.0
      %2518 = vmatpush1.msra.mxu0 0.0
      %2519 = vmatprep.subr.mxu0 0.0
      %2520 = vmatpush1.msra.mxu0 0.0
      %2521 = vmatprep.subr.mxu0 0.0
      %2522 = vmatpush1.msra.mxu0 0.0
      %2523 = vmatprep.subr.mxu0 0.0
      %2524 = vmatpush1.msra.mxu0 0.0
      %2525 = vmatprep.mubr.f32.mxu0 0.0
      %v2526 = vand.u32 %v955, 4294901760
      %2527 = vmatmul.mubr.f32.gmra.mrb[0].mxu0 %v2526
      %v2528 = vpop.f32.mrb[0].mxu0
      %v2529 = vadd.f32 %v2453, %v2528
      %v2530 = vpop.f32.mrb[0].mxu0
      %2531 = vdwg.mxu0
      %2532 = vmatprep.subr.mxu0 0.0
      %v2533 = vand.u32 %v2378, 4294901760
      %v2534 = vsub.f32 %v2378, %v2533
      %2535 = vmatpush1.msra.mxu0 %v2534
      %2536 = vmatprep.subr.mxu0 0.0
      %2537 = vmatpush1.msra.mxu0 0.0
      %2538 = vmatprep.subr.mxu0 0.0
      %2539 = vmatpush1.msra.mxu0 0.0
      %2540 = vmatprep.subr.mxu0 0.0
      %2541 = vmatpush1.msra.mxu0 0.0
      %2542 = vmatprep.subr.mxu0 0.0
      %2543 = vmatpush1.msra.mxu0 0.0
      %2544 = vmatprep.subr.mxu0 0.0
      %2545 = vmatpush1.msra.mxu0 0.0
      %2546 = vmatprep.subr.mxu0 0.0
      %2547 = vmatpush1.msra.mxu0 0.0
      %2548 = vmatprep.subr.mxu0 0.0
      %2549 = vmatpush1.msra.mxu0 0.0
      %2550 = vmatprep.subr.mxu0 0.0
      %2551 = vmatpush1.msra.mxu0 0.0
      %2552 = vmatprep.subr.mxu0 0.0
      %2553 = vmatpush1.msra.mxu0 0.0
      %2554 = vmatprep.subr.mxu0 0.0
      %2555 = vmatpush1.msra.mxu0 0.0
      %2556 = vmatprep.subr.mxu0 0.0
      %2557 = vmatpush1.msra.mxu0 0.0
      %2558 = vmatprep.subr.mxu0 0.0
      %2559 = vmatpush1.msra.mxu0 0.0
      %2560 = vmatprep.subr.mxu0 0.0
      %2561 = vmatpush1.msra.mxu0 0.0
      %2562 = vmatprep.subr.mxu0 0.0
      %2563 = vmatpush1.msra.mxu0 0.0
      %2564 = vmatprep.subr.mxu0 0.0
      %2565 = vmatpush1.msra.mxu0 0.0
      %2566 = vmatprep.subr.mxu0 0.0
      %2567 = vmatpush1.msra.mxu0 0.0
      %2568 = vmatprep.subr.mxu0 0.0
      %2569 = vmatpush1.msra.mxu0 0.0
      %2570 = vmatprep.subr.mxu0 0.0
      %2571 = vmatpush1.msra.mxu0 0.0
      %2572 = vmatprep.subr.mxu0 0.0
      %2573 = vmatpush1.msra.mxu0 0.0
      %2574 = vmatprep.subr.mxu0 0.0
      %2575 = vmatpush1.msra.mxu0 0.0
      %2576 = vmatprep.subr.mxu0 0.0
      %2577 = vmatpush1.msra.mxu0 0.0
      %2578 = vmatprep.subr.mxu0 0.0
      %2579 = vmatpush1.msra.mxu0 0.0
      %2580 = vmatprep.subr.mxu0 0.0
      %2581 = vmatpush1.msra.mxu0 0.0
      %2582 = vmatprep.subr.mxu0 0.0
      %2583 = vmatpush1.msra.mxu0 0.0
      %2584 = vmatprep.subr.mxu0 0.0
      %2585 = vmatpush1.msra.mxu0 0.0
      %2586 = vmatprep.subr.mxu0 0.0
      %2587 = vmatpush1.msra.mxu0 0.0
      %2588 = vmatprep.subr.mxu0 0.0
      %2589 = vmatpush1.msra.mxu0 0.0
      %2590 = vmatprep.subr.mxu0 0.0
      %2591 = vmatpush1.msra.mxu0 0.0
      %2592 = vmatprep.subr.mxu0 0.0
      %2593 = vmatpush1.msra.mxu0 0.0
      %2594 = vmatprep.subr.mxu0 0.0
      %2595 = vmatpush1.msra.mxu0 0.0
      %2596 = vmatprep.subr.mxu0 0.0
      %2597 = vmatpush1.msra.mxu0 0.0
      %2598 = vmatprep.mubr.f32.mxu0 0.0
      %v2599 = vand.u32 %v955, 4294901760
      %v2600 = vsub.f32 %v955, %v2599
      %2601 = vmatmul.mubr.f32.gmra.mrb[0].mxu0 %v2600
      %v2602 = vpop.f32.mrb[0].mxu0
      %v2603 = vadd.f32 %v2529, %v2602
      %v2604 = vpop.f32.mrb[0].mxu0
      %2605 = vdwg.mxu0
      %2606 = vmatprep.subr.mxu0 0.0
      %v2607 = vand.u32 %v2378, 4294901760
      %2608 = vmatpush1.msra.mxu0 %v2607
      %2609 = vmatprep.subr.mxu0 0.0
      %2610 = vmatpush1.msra.mxu0 0.0
      %2611 = vmatprep.subr.mxu0 0.0
      %2612 = vmatpush1.msra.mxu0 0.0
      %2613 = vmatprep.subr.mxu0 0.0
      %2614 = vmatpush1.msra.mxu0 0.0
      %2615 = vmatprep.subr.mxu0 0.0
      %2616 = vmatpush1.msra.mxu0 0.0
      %2617 = vmatprep.subr.mxu0 0.0
      %2618 = vmatpush1.msra.mxu0 0.0
      %2619 = vmatprep.subr.mxu0 0.0
      %2620 = vmatpush1.msra.mxu0 0.0
      %2621 = vmatprep.subr.mxu0 0.0
      %2622 = vmatpush1.msra.mxu0 0.0
      %2623 = vmatprep.subr.mxu0 0.0
      %2624 = vmatpush1.msra.mxu0 0.0
      %2625 = vmatprep.subr.mxu0 0.0
      %2626 = vmatpush1.msra.mxu0 0.0
      %2627 = vmatprep.subr.mxu0 0.0
      %2628 = vmatpush1.msra.mxu0 0.0
      %2629 = vmatprep.subr.mxu0 0.0
      %2630 = vmatpush1.msra.mxu0 0.0
      %2631 = vmatprep.subr.mxu0 0.0
      %2632 = vmatpush1.msra.mxu0 0.0
      %2633 = vmatprep.subr.mxu0 0.0
      %2634 = vmatpush1.msra.mxu0 0.0
      %2635 = vmatprep.subr.mxu0 0.0
      %2636 = vmatpush1.msra.mxu0 0.0
      %2637 = vmatprep.subr.mxu0 0.0
      %2638 = vmatpush1.msra.mxu0 0.0
      %2639 = vmatprep.subr.mxu0 0.0
      %2640 = vmatpush1.msra.mxu0 0.0
      %2641 = vmatprep.subr.mxu0 0.0
      %2642 = vmatpush1.msra.mxu0 0.0
      %2643 = vmatprep.subr.mxu0 0.0
      %2644 = vmatpush1.msra.mxu0 0.0
      %2645 = vmatprep.subr.mxu0 0.0
      %2646 = vmatpush1.msra.mxu0 0.0
      %2647 = vmatprep.subr.mxu0 0.0
      %2648 = vmatpush1.msra.mxu0 0.0
      %2649 = vmatprep.subr.mxu0 0.0
      %2650 = vmatpush1.msra.mxu0 0.0
      %2651 = vmatprep.subr.mxu0 0.0
      %2652 = vmatpush1.msra.mxu0 0.0
      %2653 = vmatprep.subr.mxu0 0.0
      %2654 = vmatpush1.msra.mxu0 0.0
      %2655 = vmatprep.subr.mxu0 0.0
      %2656 = vmatpush1.msra.mxu0 0.0
      %2657 = vmatprep.subr.mxu0 0.0
      %2658 = vmatpush1.msra.mxu0 0.0
      %2659 = vmatprep.subr.mxu0 0.0
      %2660 = vmatpush1.msra.mxu0 0.0
      %2661 = vmatprep.subr.mxu0 0.0
      %2662 = vmatpush1.msra.mxu0 0.0
      %2663 = vmatprep.subr.mxu0 0.0
      %2664 = vmatpush1.msra.mxu0 0.0
      %2665 = vmatprep.subr.mxu0 0.0
      %2666 = vmatpush1.msra.mxu0 0.0
      %2667 = vmatprep.subr.mxu0 0.0
      %2668 = vmatpush1.msra.mxu0 0.0
      %2669 = vmatprep.subr.mxu0 0.0
      %2670 = vmatpush1.msra.mxu0 0.0
      %2671 = vmatprep.mubr.f32.mxu0 0.0
      %v2672 = vand.u32 %v955, 4294901760
      %v2673 = vsub.f32 %v955, %v2672
      %v2674 = vand.u32 %v2673, 4294901760
      %2675 = vmatmul.mubr.f32.gmra.mrb[0].mxu0 %v2674
      %v2676 = vpop.f32.mrb[0].mxu0
      %v2677 = vadd.f32 %v2603, %v2676
      %v2678 = vpop.f32.mrb[0].mxu0
      %2679 = vdwg.mxu0
      %2680 = vmatprep.subr.mxu0 0.0
      %v2681 = vand.u32 %v2378, 4294901760
      %v2682 = vsub.f32 %v2378, %v2681
      %v2683 = vand.u32 %v2682, 4294901760
      %2684 = vmatpush1.msra.mxu0 %v2683
      %2685 = vmatprep.subr.mxu0 0.0
      %2686 = vmatpush1.msra.mxu0 0.0
      %2687 = vmatprep.subr.mxu0 0.0
      %2688 = vmatpush1.msra.mxu0 0.0
      %2689 = vmatprep.subr.mxu0 0.0
      %2690 = vmatpush1.msra.mxu0 0.0
      %2691 = vmatprep.subr.mxu0 0.0
      %2692 = vmatpush1.msra.mxu0 0.0
      %2693 = vmatprep.subr.mxu0 0.0
      %2694 = vmatpush1.msra.mxu0 0.0
      %2695 = vmatprep.subr.mxu0 0.0
      %2696 = vmatpush1.msra.mxu0 0.0
      %2697 = vmatprep.subr.mxu0 0.0
      %2698 = vmatpush1.msra.mxu0 0.0
      %2699 = vmatprep.subr.mxu0 0.0
      %2700 = vmatpush1.msra.mxu0 0.0
      %2701 = vmatprep.subr.mxu0 0.0
      %2702 = vmatpush1.msra.mxu0 0.0
      %2703 = vmatprep.subr.mxu0 0.0
      %2704 = vmatpush1.msra.mxu0 0.0
      %2705 = vmatprep.subr.mxu0 0.0
      %2706 = vmatpush1.msra.mxu0 0.0
      %2707 = vmatprep.subr.mxu0 0.0
      %2708 = vmatpush1.msra.mxu0 0.0
      %2709 = vmatprep.subr.mxu0 0.0
      %2710 = vmatpush1.msra.mxu0 0.0
      %2711 = vmatprep.subr.mxu0 0.0
      %2712 = vmatpush1.msra.mxu0 0.0
      %2713 = vmatprep.subr.mxu0 0.0
      %2714 = vmatpush1.msra.mxu0 0.0
      %2715 = vmatprep.subr.mxu0 0.0
      %2716 = vmatpush1.msra.mxu0 0.0
      %2717 = vmatprep.subr.mxu0 0.0
      %2718 = vmatpush1.msra.mxu0 0.0
      %2719 = vmatprep.subr.mxu0 0.0
      %2720 = vmatpush1.msra.mxu0 0.0
      %2721 = vmatprep.subr.mxu0 0.0
      %2722 = vmatpush1.msra.mxu0 0.0
      %2723 = vmatprep.subr.mxu0 0.0
      %2724 = vmatpush1.msra.mxu0 0.0
      %2725 = vmatprep.subr.mxu0 0.0
      %2726 = vmatpush1.msra.mxu0 0.0
      %2727 = vmatprep.subr.mxu0 0.0
      %2728 = vmatpush1.msra.mxu0 0.0
      %2729 = vmatprep.subr.mxu0 0.0
      %2730 = vmatpush1.msra.mxu0 0.0
      %2731 = vmatprep.subr.mxu0 0.0
      %2732 = vmatpush1.msra.mxu0 0.0
      %2733 = vmatprep.subr.mxu0 0.0
      %2734 = vmatpush1.msra.mxu0 0.0
      %2735 = vmatprep.subr.mxu0 0.0
      %2736 = vmatpush1.msra.mxu0 0.0
      %2737 = vmatprep.subr.mxu0 0.0
      %2738 = vmatpush1.msra.mxu0 0.0
      %2739 = vmatprep.subr.mxu0 0.0
      %2740 = vmatpush1.msra.mxu0 0.0
      %2741 = vmatprep.subr.mxu0 0.0
      %2742 = vmatpush1.msra.mxu0 0.0
      %2743 = vmatprep.subr.mxu0 0.0
      %2744 = vmatpush1.msra.mxu0 0.0
      %2745 = vmatprep.subr.mxu0 0.0
      %2746 = vmatpush1.msra.mxu0 0.0
      %2747 = vmatprep.mubr.f32.mxu0 0.0
      %v2748 = vand.u32 %v955, 4294901760
      %2749 = vmatmul.mubr.f32.gmra.mrb[0].mxu0 %v2748
      %v2750 = vpop.f32.mrb[0].mxu0
      %v2751 = vadd.f32 %v2677, %v2750
      %v2752 = vpop.f32.mrb[0].mxu0
      %2753 = vdwg.mxu0
      %2754 = vmatprep.subr.mxu0 0.0
      %v2755 = vand.u32 %v2378, 4294901760
      %2756 = vmatpush1.msra.mxu0 %v2755
      %2757 = vmatprep.subr.mxu0 0.0
      %2758 = vmatpush1.msra.mxu0 0.0
      %2759 = vmatprep.subr.mxu0 0.0
      %2760 = vmatpush1.msra.mxu0 0.0
      %2761 = vmatprep.subr.mxu0 0.0
      %2762 = vmatpush1.msra.mxu0 0.0
      %2763 = vmatprep.subr.mxu0 0.0
      %2764 = vmatpush1.msra.mxu0 0.0
      %2765 = vmatprep.subr.mxu0 0.0
      %2766 = vmatpush1.msra.mxu0 0.0
      %2767 = vmatprep.subr.mxu0 0.0
      %2768 = vmatpush1.msra.mxu0 0.0
      %2769 = vmatprep.subr.mxu0 0.0
      %2770 = vmatpush1.msra.mxu0 0.0
      %2771 = vmatprep.subr.mxu0 0.0
      %2772 = vmatpush1.msra.mxu0 0.0
      %2773 = vmatprep.subr.mxu0 0.0
      %2774 = vmatpush1.msra.mxu0 0.0
      %2775 = vmatprep.subr.mxu0 0.0
      %2776 = vmatpush1.msra.mxu0 0.0
      %2777 = vmatprep.subr.mxu0 0.0
      %2778 = vmatpush1.msra.mxu0 0.0
      %2779 = vmatprep.subr.mxu0 0.0
      %2780 = vmatpush1.msra.mxu0 0.0
      %2781 = vmatprep.subr.mxu0 0.0
      %2782 = vmatpush1.msra.mxu0 0.0
      %2783 = vmatprep.subr.mxu0 0.0
      %2784 = vmatpush1.msra.mxu0 0.0
      %2785 = vmatprep.subr.mxu0 0.0
      %2786 = vmatpush1.msra.mxu0 0.0
      %2787 = vmatprep.subr.mxu0 0.0
      %2788 = vmatpush1.msra.mxu0 0.0
      %2789 = vmatprep.subr.mxu0 0.0
      %2790 = vmatpush1.msra.mxu0 0.0
      %2791 = vmatprep.subr.mxu0 0.0
      %2792 = vmatpush1.msra.mxu0 0.0
      %2793 = vmatprep.subr.mxu0 0.0
      %2794 = vmatpush1.msra.mxu0 0.0
      %2795 = vmatprep.subr.mxu0 0.0
      %2796 = vmatpush1.msra.mxu0 0.0
      %2797 = vmatprep.subr.mxu0 0.0
      %2798 = vmatpush1.msra.mxu0 0.0
      %2799 = vmatprep.subr.mxu0 0.0
      %2800 = vmatpush1.msra.mxu0 0.0
      %2801 = vmatprep.subr.mxu0 0.0
      %2802 = vmatpush1.msra.mxu0 0.0
      %2803 = vmatprep.subr.mxu0 0.0
      %2804 = vmatpush1.msra.mxu0 0.0
      %2805 = vmatprep.subr.mxu0 0.0
      %2806 = vmatpush1.msra.mxu0 0.0
      %2807 = vmatprep.subr.mxu0 0.0
      %2808 = vmatpush1.msra.mxu0 0.0
      %2809 = vmatprep.subr.mxu0 0.0
      %2810 = vmatpush1.msra.mxu0 0.0
      %2811 = vmatprep.subr.mxu0 0.0
      %2812 = vmatpush1.msra.mxu0 0.0
      %2813 = vmatprep.subr.mxu0 0.0
      %2814 = vmatpush1.msra.mxu0 0.0
      %2815 = vmatprep.subr.mxu0 0.0
      %2816 = vmatpush1.msra.mxu0 0.0
      %2817 = vmatprep.subr.mxu0 0.0
      %2818 = vmatpush1.msra.mxu0 0.0
      %2819 = vmatprep.mubr.f32.mxu0 0.0
      %v2820 = vand.u32 %v955, 4294901760
      %2821 = vmatmul.mubr.f32.gmra.mrb[0].mxu0 %v2820
      %v2822 = vpop.f32.mrb[0].mxu0
      %v2823 = vadd.f32 %v2751, %v2822
      %v2824 = vpop.f32.mrb[0].mxu0
      %2825 = vdwg.mxu0
      %v2827 = vsel %vm957, %v2375, 0
      %2829 = vmatprep.subr.mxu0 0.0
      %v2830 = vand.u32 %v2827, 4294901760
      %2831 = vmatpush1.msra.mxu0 %v2830
      %2832 = vmatprep.subr.mxu0 0.0
      %2833 = vmatpush1.msra.mxu0 0.0
      %2834 = vmatprep.subr.mxu0 0.0
      %2835 = vmatpush1.msra.mxu0 0.0
      %2836 = vmatprep.subr.mxu0 0.0
      %2837 = vmatpush1.msra.mxu0 0.0
      %2838 = vmatprep.subr.mxu0 0.0
      %2839 = vmatpush1.msra.mxu0 0.0
      %2840 = vmatprep.subr.mxu0 0.0
      %2841 = vmatpush1.msra.mxu0 0.0
      %2842 = vmatprep.subr.mxu0 0.0
      %2843 = vmatpush1.msra.mxu0 0.0
      %2844 = vmatprep.subr.mxu0 0.0
      %2845 = vmatpush1.msra.mxu0 0.0
      %2846 = vmatprep.subr.mxu0 0.0
      %2847 = vmatpush1.msra.mxu0 0.0
      %2848 = vmatprep.subr.mxu0 0.0
      %2849 = vmatpush1.msra.mxu0 0.0
      %2850 = vmatprep.subr.mxu0 0.0
      %2851 = vmatpush1.msra.mxu0 0.0
      %2852 = vmatprep.subr.mxu0 0.0
      %2853 = vmatpush1.msra.mxu0 0.0
      %2854 = vmatprep.subr.mxu0 0.0
      %2855 = vmatpush1.msra.mxu0 0.0
      %2856 = vmatprep.subr.mxu0 0.0
      %2857 = vmatpush1.msra.mxu0 0.0
      %2858 = vmatprep.subr.mxu0 0.0
      %2859 = vmatpush1.msra.mxu0 0.0
      %2860 = vmatprep.subr.mxu0 0.0
      %2861 = vmatpush1.msra.mxu0 0.0
      %2862 = vmatprep.subr.mxu0 0.0
      %2863 = vmatpush1.msra.mxu0 0.0
      %2864 = vmatprep.subr.mxu0 0.0
      %2865 = vmatpush1.msra.mxu0 0.0
      %2866 = vmatprep.subr.mxu0 0.0
      %2867 = vmatpush1.msra.mxu0 0.0
      %2868 = vmatprep.subr.mxu0 0.0
      %2869 = vmatpush1.msra.mxu0 0.0
      %2870 = vmatprep.subr.mxu0 0.0
      %2871 = vmatpush1.msra.mxu0 0.0
      %2872 = vmatprep.subr.mxu0 0.0
      %2873 = vmatpush1.msra.mxu0 0.0
      %2874 = vmatprep.subr.mxu0 0.0
      %2875 = vmatpush1.msra.mxu0 0.0
      %2876 = vmatprep.subr.mxu0 0.0
      %2877 = vmatpush1.msra.mxu0 0.0
      %2878 = vmatprep.subr.mxu0 0.0
      %2879 = vmatpush1.msra.mxu0 0.0
      %2880 = vmatprep.subr.mxu0 0.0
      %2881 = vmatpush1.msra.mxu0 0.0
      %2882 = vmatprep.subr.mxu0 0.0
      %2883 = vmatpush1.msra.mxu0 0.0
      %2884 = vmatprep.subr.mxu0 0.0
      %2885 = vmatpush1.msra.mxu0 0.0
      %2886 = vmatprep.subr.mxu0 0.0
      %2887 = vmatpush1.msra.mxu0 0.0
      %2888 = vmatprep.subr.mxu0 0.0
      %2889 = vmatpush1.msra.mxu0 0.0
      %2890 = vmatprep.subr.mxu0 0.0
      %2891 = vmatpush1.msra.mxu0 0.0
      %2892 = vmatprep.subr.mxu0 0.0
      %2893 = vmatpush1.msra.mxu0 0.0
      %2894 = vmatprep.mubr.f32.mxu0 0.0
      %v2895 = vand.u32 %v1408, 4294901760
      %v2896 = vsub.f32 %v1408, %v2895
      %v2897 = vand.u32 %v2896, 4294901760
      %v2898 = vsub.f32 %v2896, %v2897
      %v2899 = vand.u32 %v2898, 4294901760
      %2900 = vmatmul.mubr.f32.gmra.mrb[0].mxu0 %v2899
      %v2901 = vpop.f32.mrb[0].mxu0
      %v2902 = vadd.f32 0.0, %v2901
      %v2903 = vpop.f32.mrb[0].mxu0
      %2904 = vdwg.mxu0
      %2905 = vmatprep.subr.mxu0 0.0
      %v2906 = vand.u32 %v2827, 4294901760
      %v2907 = vsub.f32 %v2827, %v2906
      %v2908 = vand.u32 %v2907, 4294901760
      %v2909 = vsub.f32 %v2907, %v2908
      %v2910 = vand.u32 %v2909, 4294901760
      %2911 = vmatpush1.msra.mxu0 %v2910
      %2912 = vmatprep.subr.mxu0 0.0
      %2913 = vmatpush1.msra.mxu0 0.0
      %2914 = vmatprep.subr.mxu0 0.0
      %2915 = vmatpush1.msra.mxu0 0.0
      %2916 = vmatprep.subr.mxu0 0.0
      %2917 = vmatpush1.msra.mxu0 0.0
      %2918 = vmatprep.subr.mxu0 0.0
      %2919 = vmatpush1.msra.mxu0 0.0
      %2920 = vmatprep.subr.mxu0 0.0
      %2921 = vmatpush1.msra.mxu0 0.0
      %2922 = vmatprep.subr.mxu0 0.0
      %2923 = vmatpush1.msra.mxu0 0.0
      %2924 = vmatprep.subr.mxu0 0.0
      %2925 = vmatpush1.msra.mxu0 0.0
      %2926 = vmatprep.subr.mxu0 0.0
      %2927 = vmatpush1.msra.mxu0 0.0
      %2928 = vmatprep.subr.mxu0 0.0
      %2929 = vmatpush1.msra.mxu0 0.0
      %2930 = vmatprep.subr.mxu0 0.0
      %2931 = vmatpush1.msra.mxu0 0.0
      %2932 = vmatprep.subr.mxu0 0.0
      %2933 = vmatpush1.msra.mxu0 0.0
      %2934 = vmatprep.subr.mxu0 0.0
      %2935 = vmatpush1.msra.mxu0 0.0
      %2936 = vmatprep.subr.mxu0 0.0
      %2937 = vmatpush1.msra.mxu0 0.0
      %2938 = vmatprep.subr.mxu0 0.0
      %2939 = vmatpush1.msra.mxu0 0.0
      %2940 = vmatprep.subr.mxu0 0.0
      %2941 = vmatpush1.msra.mxu0 0.0
      %2942 = vmatprep.subr.mxu0 0.0
      %2943 = vmatpush1.msra.mxu0 0.0
      %2944 = vmatprep.subr.mxu0 0.0
      %2945 = vmatpush1.msra.mxu0 0.0
      %2946 = vmatprep.subr.mxu0 0.0
      %2947 = vmatpush1.msra.mxu0 0.0
      %2948 = vmatprep.subr.mxu0 0.0
      %2949 = vmatpush1.msra.mxu0 0.0
      %2950 = vmatprep.subr.mxu0 0.0
      %2951 = vmatpush1.msra.mxu0 0.0
      %2952 = vmatprep.subr.mxu0 0.0
      %2953 = vmatpush1.msra.mxu0 0.0
      %2954 = vmatprep.subr.mxu0 0.0
      %2955 = vmatpush1.msra.mxu0 0.0
      %2956 = vmatprep.subr.mxu0 0.0
      %2957 = vmatpush1.msra.mxu0 0.0
      %2958 = vmatprep.subr.mxu0 0.0
      %2959 = vmatpush1.msra.mxu0 0.0
      %2960 = vmatprep.subr.mxu0 0.0
      %2961 = vmatpush1.msra.mxu0 0.0
      %2962 = vmatprep.subr.mxu0 0.0
      %2963 = vmatpush1.msra.mxu0 0.0
      %2964 = vmatprep.subr.mxu0 0.0
      %2965 = vmatpush1.msra.mxu0 0.0
      %2966 = vmatprep.subr.mxu0 0.0
      %2967 = vmatpush1.msra.mxu0 0.0
      %2968 = vmatprep.subr.mxu0 0.0
      %2969 = vmatpush1.msra.mxu0 0.0
      %2970 = vmatprep.subr.mxu0 0.0
      %2971 = vmatpush1.msra.mxu0 0.0
      %2972 = vmatprep.subr.mxu0 0.0
      %2973 = vmatpush1.msra.mxu0 0.0
      %2974 = vmatprep.mubr.f32.mxu0 0.0
      %v2975 = vand.u32 %v1408, 4294901760
      %2976 = vmatmul.mubr.f32.gmra.mrb[0].mxu0 %v2975
      %v2977 = vpop.f32.mrb[0].mxu0
      %v2978 = vadd.f32 %v2902, %v2977
      %v2979 = vpop.f32.mrb[0].mxu0
      %2980 = vdwg.mxu0
      %2981 = vmatprep.subr.mxu0 0.0
      %v2982 = vand.u32 %v2827, 4294901760
      %v2983 = vsub.f32 %v2827, %v2982
      %2984 = vmatpush1.msra.mxu0 %v2983
      %2985 = vmatprep.subr.mxu0 0.0
      %2986 = vmatpush1.msra.mxu0 0.0
      %2987 = vmatprep.subr.mxu0 0.0
      %2988 = vmatpush1.msra.mxu0 0.0
      %2989 = vmatprep.subr.mxu0 0.0
      %2990 = vmatpush1.msra.mxu0 0.0
      %2991 = vmatprep.subr.mxu0 0.0
      %2992 = vmatpush1.msra.mxu0 0.0
      %2993 = vmatprep.subr.mxu0 0.0
      %2994 = vmatpush1.msra.mxu0 0.0
      %2995 = vmatprep.subr.mxu0 0.0
      %2996 = vmatpush1.msra.mxu0 0.0
      %2997 = vmatprep.subr.mxu0 0.0
      %2998 = vmatpush1.msra.mxu0 0.0
      %2999 = vmatprep.subr.mxu0 0.0
      %3000 = vmatpush1.msra.mxu0 0.0
      %3001 = vmatprep.subr.mxu0 0.0
      %3002 = vmatpush1.msra.mxu0 0.0
      %3003 = vmatprep.subr.mxu0 0.0
      %3004 = vmatpush1.msra.mxu0 0.0
      %3005 = vmatprep.subr.mxu0 0.0
      %3006 = vmatpush1.msra.mxu0 0.0
      %3007 = vmatprep.subr.mxu0 0.0
      %3008 = vmatpush1.msra.mxu0 0.0
      %3009 = vmatprep.subr.mxu0 0.0
      %3010 = vmatpush1.msra.mxu0 0.0
      %3011 = vmatprep.subr.mxu0 0.0
      %3012 = vmatpush1.msra.mxu0 0.0
      %3013 = vmatprep.subr.mxu0 0.0
      %3014 = vmatpush1.msra.mxu0 0.0
      %3015 = vmatprep.subr.mxu0 0.0
      %3016 = vmatpush1.msra.mxu0 0.0
      %3017 = vmatprep.subr.mxu0 0.0
      %3018 = vmatpush1.msra.mxu0 0.0
      %3019 = vmatprep.subr.mxu0 0.0
      %3020 = vmatpush1.msra.mxu0 0.0
      %3021 = vmatprep.subr.mxu0 0.0
      %3022 = vmatpush1.msra.mxu0 0.0
      %3023 = vmatprep.subr.mxu0 0.0
      %3024 = vmatpush1.msra.mxu0 0.0
      %3025 = vmatprep.subr.mxu0 0.0
      %3026 = vmatpush1.msra.mxu0 0.0
      %3027 = vmatprep.subr.mxu0 0.0
      %3028 = vmatpush1.msra.mxu0 0.0
      %3029 = vmatprep.subr.mxu0 0.0
      %3030 = vmatpush1.msra.mxu0 0.0
      %3031 = vmatprep.subr.mxu0 0.0
      %3032 = vmatpush1.msra.mxu0 0.0
      %3033 = vmatprep.subr.mxu0 0.0
      %3034 = vmatpush1.msra.mxu0 0.0
      %3035 = vmatprep.subr.mxu0 0.0
      %3036 = vmatpush1.msra.mxu0 0.0
      %3037 = vmatprep.subr.mxu0 0.0
      %3038 = vmatpush1.msra.mxu0 0.0
      %3039 = vmatprep.subr.mxu0 0.0
      %3040 = vmatpush1.msra.mxu0 0.0
      %3041 = vmatprep.subr.mxu0 0.0
      %3042 = vmatpush1.msra.mxu0 0.0
      %3043 = vmatprep.subr.mxu0 0.0
      %3044 = vmatpush1.msra.mxu0 0.0
      %3045 = vmatprep.subr.mxu0 0.0
      %3046 = vmatpush1.msra.mxu0 0.0
      %3047 = vmatprep.mubr.f32.mxu0 0.0
      %v3048 = vand.u32 %v1408, 4294901760
      %v3049 = vsub.f32 %v1408, %v3048
      %3050 = vmatmul.mubr.f32.gmra.mrb[0].mxu0 %v3049
      %v3051 = vpop.f32.mrb[0].mxu0
      %v3052 = vadd.f32 %v2978, %v3051
      %v3053 = vpop.f32.mrb[0].mxu0
      %3054 = vdwg.mxu0
      %3055 = vmatprep.subr.mxu0 0.0
      %v3056 = vand.u32 %v2827, 4294901760
      %3057 = vmatpush1.msra.mxu0 %v3056
      %3058 = vmatprep.subr.mxu0 0.0
      %3059 = vmatpush1.msra.mxu0 0.0
      %3060 = vmatprep.subr.mxu0 0.0
      %3061 = vmatpush1.msra.mxu0 0.0
      %3062 = vmatprep.subr.mxu0 0.0
      %3063 = vmatpush1.msra.mxu0 0.0
      %3064 = vmatprep.subr.mxu0 0.0
      %3065 = vmatpush1.msra.mxu0 0.0
      %3066 = vmatprep.subr.mxu0 0.0
      %3067 = vmatpush1.msra.mxu0 0.0
      %3068 = vmatprep.subr.mxu0 0.0
      %3069 = vmatpush1.msra.mxu0 0.0
      %3070 = vmatprep.subr.mxu0 0.0
      %3071 = vmatpush1.msra.mxu0 0.0
      %3072 = vmatprep.subr.mxu0 0.0
      %3073 = vmatpush1.msra.mxu0 0.0
      %3074 = vmatprep.subr.mxu0 0.0
      %3075 = vmatpush1.msra.mxu0 0.0
      %3076 = vmatprep.subr.mxu0 0.0
      %3077 = vmatpush1.msra.mxu0 0.0
      %3078 = vmatprep.subr.mxu0 0.0
      %3079 = vmatpush1.msra.mxu0 0.0
      %3080 = vmatprep.subr.mxu0 0.0
      %3081 = vmatpush1.msra.mxu0 0.0
      %3082 = vmatprep.subr.mxu0 0.0
      %3083 = vmatpush1.msra.mxu0 0.0
      %3084 = vmatprep.subr.mxu0 0.0
      %3085 = vmatpush1.msra.mxu0 0.0
      %3086 = vmatprep.subr.mxu0 0.0
      %3087 = vmatpush1.msra.mxu0 0.0
      %3088 = vmatprep.subr.mxu0 0.0
      %3089 = vmatpush1.msra.mxu0 0.0
      %3090 = vmatprep.subr.mxu0 0.0
      %3091 = vmatpush1.msra.mxu0 0.0
      %3092 = vmatprep.subr.mxu0 0.0
      %3093 = vmatpush1.msra.mxu0 0.0
      %3094 = vmatprep.subr.mxu0 0.0
      %3095 = vmatpush1.msra.mxu0 0.0
      %3096 = vmatprep.subr.mxu0 0.0
      %3097 = vmatpush1.msra.mxu0 0.0
      %3098 = vmatprep.subr.mxu0 0.0
      %3099 = vmatpush1.msra.mxu0 0.0
      %3100 = vmatprep.subr.mxu0 0.0
      %3101 = vmatpush1.msra.mxu0 0.0
      %3102 = vmatprep.subr.mxu0 0.0
      %3103 = vmatpush1.msra.mxu0 0.0
      %3104 = vmatprep.subr.mxu0 0.0
      %3105 = vmatpush1.msra.mxu0 0.0
      %3106 = vmatprep.subr.mxu0 0.0
      %3107 = vmatpush1.msra.mxu0 0.0
      %3108 = vmatprep.subr.mxu0 0.0
      %3109 = vmatpush1.msra.mxu0 0.0
      %3110 = vmatprep.subr.mxu0 0.0
      %3111 = vmatpush1.msra.mxu0 0.0
      %3112 = vmatprep.subr.mxu0 0.0
      %3113 = vmatpush1.msra.mxu0 0.0
      %3114 = vmatprep.subr.mxu0 0.0
      %3115 = vmatpush1.msra.mxu0 0.0
      %3116 = vmatprep.subr.mxu0 0.0
      %3117 = vmatpush1.msra.mxu0 0.0
      %3118 = vmatprep.subr.mxu0 0.0
      %3119 = vmatpush1.msra.mxu0 0.0
      %3120 = vmatprep.mubr.f32.mxu0 0.0
      %v3121 = vand.u32 %v1408, 4294901760
      %v3122 = vsub.f32 %v1408, %v3121
      %v3123 = vand.u32 %v3122, 4294901760
      %3124 = vmatmul.mubr.f32.gmra.mrb[0].mxu0 %v3123
      %v3125 = vpop.f32.mrb[0].mxu0
      %v3126 = vadd.f32 %v3052, %v3125
      %v3127 = vpop.f32.mrb[0].mxu0
      %3128 = vdwg.mxu0
      %3129 = vmatprep.subr.mxu0 0.0
      %v3130 = vand.u32 %v2827, 4294901760
      %v3131 = vsub.f32 %v2827, %v3130
      %v3132 = vand.u32 %v3131, 4294901760
      %3133 = vmatpush1.msra.mxu0 %v3132
      %3134 = vmatprep.subr.mxu0 0.0
      %3135 = vmatpush1.msra.mxu0 0.0
      %3136 = vmatprep.subr.mxu0 0.0
      %3137 = vmatpush1.msra.mxu0 0.0
      %3138 = vmatprep.subr.mxu0 0.0
      %3139 = vmatpush1.msra.mxu0 0.0
      %3140 = vmatprep.subr.mxu0 0.0
      %3141 = vmatpush1.msra.mxu0 0.0
      %3142 = vmatprep.subr.mxu0 0.0
      %3143 = vmatpush1.msra.mxu0 0.0
      %3144 = vmatprep.subr.mxu0 0.0
      %3145 = vmatpush1.msra.mxu0 0.0
      %3146 = vmatprep.subr.mxu0 0.0
      %3147 = vmatpush1.msra.mxu0 0.0
      %3148 = vmatprep.subr.mxu0 0.0
      %3149 = vmatpush1.msra.mxu0 0.0
      %3150 = vmatprep.subr.mxu0 0.0
      %3151 = vmatpush1.msra.mxu0 0.0
      %3152 = vmatprep.subr.mxu0 0.0
      %3153 = vmatpush1.msra.mxu0 0.0
      %3154 = vmatprep.subr.mxu0 0.0
      %3155 = vmatpush1.msra.mxu0 0.0
      %3156 = vmatprep.subr.mxu0 0.0
      %3157 = vmatpush1.msra.mxu0 0.0
      %3158 = vmatprep.subr.mxu0 0.0
      %3159 = vmatpush1.msra.mxu0 0.0
      %3160 = vmatprep.subr.mxu0 0.0
      %3161 = vmatpush1.msra.mxu0 0.0
      %3162 = vmatprep.subr.mxu0 0.0
      %3163 = vmatpush1.msra.mxu0 0.0
      %3164 = vmatprep.subr.mxu0 0.0
      %3165 = vmatpush1.msra.mxu0 0.0
      %3166 = vmatprep.subr.mxu0 0.0
      %3167 = vmatpush1.msra.mxu0 0.0
      %3168 = vmatprep.subr.mxu0 0.0
      %3169 = vmatpush1.msra.mxu0 0.0
      %3170 = vmatprep.subr.mxu0 0.0
      %3171 = vmatpush1.msra.mxu0 0.0
      %3172 = vmatprep.subr.mxu0 0.0
      %3173 = vmatpush1.msra.mxu0 0.0
      %3174 = vmatprep.subr.mxu0 0.0
      %3175 = vmatpush1.msra.mxu0 0.0
      %3176 = vmatprep.subr.mxu0 0.0
      %3177 = vmatpush1.msra.mxu0 0.0
      %3178 = vmatprep.subr.mxu0 0.0
      %3179 = vmatpush1.msra.mxu0 0.0
      %3180 = vmatprep.subr.mxu0 0.0
      %3181 = vmatpush1.msra.mxu0 0.0
      %3182 = vmatprep.subr.mxu0 0.0
      %3183 = vmatpush1.msra.mxu0 0.0
      %3184 = vmatprep.subr.mxu0 0.0
      %3185 = vmatpush1.msra.mxu0 0.0
      %3186 = vmatprep.subr.mxu0 0.0
      %3187 = vmatpush1.msra.mxu0 0.0
      %3188 = vmatprep.subr.mxu0 0.0
      %3189 = vmatpush1.msra.mxu0 0.0
      %3190 = vmatprep.subr.mxu0 0.0
      %3191 = vmatpush1.msra.mxu0 0.0
      %3192 = vmatprep.subr.mxu0 0.0
      %3193 = vmatpush1.msra.mxu0 0.0
      %3194 = vmatprep.subr.mxu0 0.0
      %3195 = vmatpush1.msra.mxu0 0.0
      %3196 = vmatprep.mubr.f32.mxu0 0.0
      %v3197 = vand.u32 %v1408, 4294901760
      %3198 = vmatmul.mubr.f32.gmra.mrb[0].mxu0 %v3197
      %v3199 = vpop.f32.mrb[0].mxu0
      %v3200 = vadd.f32 %v3126, %v3199
      %v3201 = vpop.f32.mrb[0].mxu0
      %3202 = vdwg.mxu0
      %3203 = vmatprep.subr.mxu0 0.0
      %v3204 = vand.u32 %v2827, 4294901760
      %3205 = vmatpush1.msra.mxu0 %v3204
      %3206 = vmatprep.subr.mxu0 0.0
      %3207 = vmatpush1.msra.mxu0 0.0
      %3208 = vmatprep.subr.mxu0 0.0
      %3209 = vmatpush1.msra.mxu0 0.0
      %3210 = vmatprep.subr.mxu0 0.0
      %3211 = vmatpush1.msra.mxu0 0.0
      %3212 = vmatprep.subr.mxu0 0.0
      %3213 = vmatpush1.msra.mxu0 0.0
      %3214 = vmatprep.subr.mxu0 0.0
      %3215 = vmatpush1.msra.mxu0 0.0
      %3216 = vmatprep.subr.mxu0 0.0
      %3217 = vmatpush1.msra.mxu0 0.0
      %3218 = vmatprep.subr.mxu0 0.0
      %3219 = vmatpush1.msra.mxu0 0.0
      %3220 = vmatprep.subr.mxu0 0.0
      %3221 = vmatpush1.msra.mxu0 0.0
      %3222 = vmatprep.subr.mxu0 0.0
      %3223 = vmatpush1.msra.mxu0 0.0
      %3224 = vmatprep.subr.mxu0 0.0
      %3225 = vmatpush1.msra.mxu0 0.0
      %3226 = vmatprep.subr.mxu0 0.0
      %3227 = vmatpush1.msra.mxu0 0.0
      %3228 = vmatprep.subr.mxu0 0.0
      %3229 = vmatpush1.msra.mxu0 0.0
      %3230 = vmatprep.subr.mxu0 0.0
      %3231 = vmatpush1.msra.mxu0 0.0
      %3232 = vmatprep.subr.mxu0 0.0
      %3233 = vmatpush1.msra.mxu0 0.0
      %3234 = vmatprep.subr.mxu0 0.0
      %3235 = vmatpush1.msra.mxu0 0.0
      %3236 = vmatprep.subr.mxu0 0.0
      %3237 = vmatpush1.msra.mxu0 0.0
      %3238 = vmatprep.subr.mxu0 0.0
      %3239 = vmatpush1.msra.mxu0 0.0
      %3240 = vmatprep.subr.mxu0 0.0
      %3241 = vmatpush1.msra.mxu0 0.0
      %3242 = vmatprep.subr.mxu0 0.0
      %3243 = vmatpush1.msra.mxu0 0.0
      %3244 = vmatprep.subr.mxu0 0.0
      %3245 = vmatpush1.msra.mxu0 0.0
      %3246 = vmatprep.subr.mxu0 0.0
      %3247 = vmatpush1.msra.mxu0 0.0
      %3248 = vmatprep.subr.mxu0 0.0
      %3249 = vmatpush1.msra.mxu0 0.0
      %3250 = vmatprep.subr.mxu0 0.0
      %3251 = vmatpush1.msra.mxu0 0.0
      %3252 = vmatprep.subr.mxu0 0.0
      %3253 = vmatpush1.msra.mxu0 0.0
      %3254 = vmatprep.subr.mxu0 0.0
      %3255 = vmatpush1.msra.mxu0 0.0
      %3256 = vmatprep.subr.mxu0 0.0
      %3257 = vmatpush1.msra.mxu0 0.0
      %3258 = vmatprep.subr.mxu0 0.0
      %3259 = vmatpush1.msra.mxu0 0.0
      %3260 = vmatprep.subr.mxu0 0.0
      %3261 = vmatpush1.msra.mxu0 0.0
      %3262 = vmatprep.subr.mxu0 0.0
      %3263 = vmatpush1.msra.mxu0 0.0
      %3264 = vmatprep.subr.mxu0 0.0
      %3265 = vmatpush1.msra.mxu0 0.0
      %3266 = vmatprep.subr.mxu0 0.0
      %3267 = vmatpush1.msra.mxu0 0.0
      %3268 = vmatprep.mubr.f32.mxu0 0.0
      %v3269 = vand.u32 %v1408, 4294901760
      %3270 = vmatmul.mubr.f32.gmra.mrb[0].mxu0 %v3269
      %v3271 = vpop.f32.mrb[0].mxu0
      %v3272 = vadd.f32 %v3200, %v3271
      %v3273 = vpop.f32.mrb[0].mxu0
      %3274 = vdwg.mxu0
      %v3275 = vlaneseq
      %v3276 = vshrl.u32 %v3275, 7
      %v3277 = vsub.s32 0, %v3276
      %v3278 = vrot.slane %v2823, %v3277
      %v3279 = vadd.f32 %v3278, %v3272
      %v3281 = vlaneseq
      %v3282 = vshrl.u32 %v3281, 7
      %v3283 = vsub.s32 0, %v3282
      %v3284 = vrot.slane %v2373, %v3283
      %v3286 = vmul.f32 %v1867, %v3284
      %v3287 = vadd.f32 %v3279, %v3286
      %v3289 = vlaneseq
      %v3290 = vshrl.u32 %v3289, 7
      %v3291 = vsub.s32 0, %v3290
      %v3292 = vrot.slane %v2376, %v3291
      %v3294 = vadd.f32 %v3287, %v3292
      %3296 = vset.pattern.permute.xlu0 0
      %3297 = vperm.xlu0 %3296, %v948
      %v3298 = vpop.permute.xlu0 %3297
      %v3301 = vlaneseq
      %v3302 = vshrl.u32 %v3301, 7
      %v3303 = vsub.s32 0, %v3302
      %v3304 = vrot.slane %v2374, %v3303
      %v3306 = vmul.f32 %v3298, %v3304
      %v3307 = vadd.f32 %v3294, %v3306
      %vm3308 = vcmp.gt.f32.partialorder %v3307, 0.0
      %v3309 = vmul.f32 %v3307, 0.01
      %v3310 = vsel %vm3308, %v3307, %v3309
      %v3311 = vld [vmem:[%s15] sm:$0xff]
      %v3312 = vld [vmem:[%s15 + $0x8] sm:$0xff]
      %v3313 = vld [vmem:[%s16] sm:$0x1]
      %v3315 = vlaneseq
      %v3316 = vshrl.u32 %v3315, 7
      %v3317 = vsub.s32 0, %v3316
      %v3318 = vrot.slane %v3313, %v3317
      %v3321 = vsel %vm1896, %v3310, 0
      %3323 = vmatprep.subr.mxu0 0.0
      %v3324 = vand.u32 %v3311, 4294901760
      %3325 = vmatpush1.msra.mxu0 %v3324
      %3326 = vmatprep.subr.mxu0 0.0
      %v3327 = vand.u32 %v3312, 4294901760
      %3328 = vmatpush1.msra.mxu0 %v3327
      %3329 = vmatprep.subr.mxu0 0.0
      %3330 = vmatpush1.msra.mxu0 0.0
      %3331 = vmatprep.subr.mxu0 0.0
      %3332 = vmatpush1.msra.mxu0 0.0
      %3333 = vmatprep.subr.mxu0 0.0
      %3334 = vmatpush1.msra.mxu0 0.0
      %3335 = vmatprep.subr.mxu0 0.0
      %3336 = vmatpush1.msra.mxu0 0.0
      %3337 = vmatprep.subr.mxu0 0.0
      %3338 = vmatpush1.msra.mxu0 0.0
      %3339 = vmatprep.subr.mxu0 0.0
      %3340 = vmatpush1.msra.mxu0 0.0
      %3341 = vmatprep.subr.mxu0 0.0
      %3342 = vmatpush1.msra.mxu0 0.0
      %3343 = vmatprep.subr.mxu0 0.0
      %3344 = vmatpush1.msra.mxu0 0.0
      %3345 = vmatprep.subr.mxu0 0.0
      %3346 = vmatpush1.msra.mxu0 0.0
      %3347 = vmatprep.subr.mxu0 0.0
      %3348 = vmatpush1.msra.mxu0 0.0
      %3349 = vmatprep.subr.mxu0 0.0
      %3350 = vmatpush1.msra.mxu0 0.0
      %3351 = vmatprep.subr.mxu0 0.0
      %3352 = vmatpush1.msra.mxu0 0.0
      %3353 = vmatprep.subr.mxu0 0.0
      %3354 = vmatpush1.msra.mxu0 0.0
      %3355 = vmatprep.subr.mxu0 0.0
      %3356 = vmatpush1.msra.mxu0 0.0
      %3357 = vmatprep.subr.mxu0 0.0
      %3358 = vmatpush1.msra.mxu0 0.0
      %3359 = vmatprep.subr.mxu0 0.0
      %3360 = vmatpush1.msra.mxu0 0.0
      %3361 = vmatprep.subr.mxu0 0.0
      %3362 = vmatpush1.msra.mxu0 0.0
      %3363 = vmatprep.subr.mxu0 0.0
      %3364 = vmatpush1.msra.mxu0 0.0
      %3365 = vmatprep.subr.mxu0 0.0
      %3366 = vmatpush1.msra.mxu0 0.0
      %3367 = vmatprep.subr.mxu0 0.0
      %3368 = vmatpush1.msra.mxu0 0.0
      %3369 = vmatprep.subr.mxu0 0.0
      %3370 = vmatpush1.msra.mxu0 0.0
      %3371 = vmatprep.subr.mxu0 0.0
      %3372 = vmatpush1.msra.mxu0 0.0
      %3373 = vmatprep.subr.mxu0 0.0
      %3374 = vmatpush1.msra.mxu0 0.0
      %3375 = vmatprep.subr.mxu0 0.0
      %3376 = vmatpush1.msra.mxu0 0.0
      %3377 = vmatprep.subr.mxu0 0.0
      %3378 = vmatpush1.msra.mxu0 0.0
      %3379 = vmatprep.subr.mxu0 0.0
      %3380 = vmatpush1.msra.mxu0 0.0
      %3381 = vmatprep.subr.mxu0 0.0
      %3382 = vmatpush1.msra.mxu0 0.0
      %3383 = vmatprep.subr.mxu0 0.0
      %3384 = vmatpush1.msra.mxu0 0.0
      %3385 = vmatprep.subr.mxu0 0.0
      %3386 = vmatpush1.msra.mxu0 0.0
      %3387 = vmatprep.subr.mxu0 0.0
      %3388 = vmatpush1.msra.mxu0 0.0
      %3389 = vmatprep.mubr.f32.mxu0 0.0
      %v3390 = vand.u32 %v3321, 4294901760
      %v3391 = vsub.f32 %v3321, %v3390
      %v3392 = vand.u32 %v3391, 4294901760
      %v3393 = vsub.f32 %v3391, %v3392
      %v3394 = vand.u32 %v3393, 4294901760
      %3395 = vmatmul.mubr.f32.gmra.mrb[0].mxu0 %v3394
      %v3396 = vpop.f32.mrb[0].mxu0
      %v3397 = vadd.f32 %v3318, %v3396
      %v3398 = vpop.f32.mrb[0].mxu0
      %3399 = vdwg.mxu0
      %3400 = vmatprep.subr.mxu0 0.0
      %v3401 = vand.u32 %v3311, 4294901760
      %v3402 = vsub.f32 %v3311, %v3401
      %v3403 = vand.u32 %v3402, 4294901760
      %v3404 = vsub.f32 %v3402, %v3403
      %v3405 = vand.u32 %v3404, 4294901760
      %3406 = vmatpush1.msra.mxu0 %v3405
      %3407 = vmatprep.subr.mxu0 0.0
      %v3408 = vand.u32 %v3312, 4294901760
      %v3409 = vsub.f32 %v3312, %v3408
      %v3410 = vand.u32 %v3409, 4294901760
      %v3411 = vsub.f32 %v3409, %v3410
      %v3412 = vand.u32 %v3411, 4294901760
      %3413 = vmatpush1.msra.mxu0 %v3412
      %3414 = vmatprep.subr.mxu0 0.0
      %3415 = vmatpush1.msra.mxu0 0.0
      %3416 = vmatprep.subr.mxu0 0.0
      %3417 = vmatpush1.msra.mxu0 0.0
      %3418 = vmatprep.subr.mxu0 0.0
      %3419 = vmatpush1.msra.mxu0 0.0
      %3420 = vmatprep.subr.mxu0 0.0
      %3421 = vmatpush1.msra.mxu0 0.0
      %3422 = vmatprep.subr.mxu0 0.0
      %3423 = vmatpush1.msra.mxu0 0.0
      %3424 = vmatprep.subr.mxu0 0.0
      %3425 = vmatpush1.msra.mxu0 0.0
      %3426 = vmatprep.subr.mxu0 0.0
      %3427 = vmatpush1.msra.mxu0 0.0
      %3428 = vmatprep.subr.mxu0 0.0
      %3429 = vmatpush1.msra.mxu0 0.0
      %3430 = vmatprep.subr.mxu0 0.0
      %3431 = vmatpush1.msra.mxu0 0.0
      %3432 = vmatprep.subr.mxu0 0.0
      %3433 = vmatpush1.msra.mxu0 0.0
      %3434 = vmatprep.subr.mxu0 0.0
      %3435 = vmatpush1.msra.mxu0 0.0
      %3436 = vmatprep.subr.mxu0 0.0
      %3437 = vmatpush1.msra.mxu0 0.0
      %3438 = vmatprep.subr.mxu0 0.0
      %3439 = vmatpush1.msra.mxu0 0.0
      %3440 = vmatprep.subr.mxu0 0.0
      %3441 = vmatpush1.msra.mxu0 0.0
      %3442 = vmatprep.subr.mxu0 0.0
      %3443 = vmatpush1.msra.mxu0 0.0
      %3444 = vmatprep.subr.mxu0 0.0
      %3445 = vmatpush1.msra.mxu0 0.0
      %3446 = vmatprep.subr.mxu0 0.0
      %3447 = vmatpush1.msra.mxu0 0.0
      %3448 = vmatprep.subr.mxu0 0.0
      %3449 = vmatpush1.msra.mxu0 0.0
      %3450 = vmatprep.subr.mxu0 0.0
      %3451 = vmatpush1.msra.mxu0 0.0
      %3452 = vmatprep.subr.mxu0 0.0
      %3453 = vmatpush1.msra.mxu0 0.0
      %3454 = vmatprep.subr.mxu0 0.0
      %3455 = vmatpush1.msra.mxu0 0.0
      %3456 = vmatprep.subr.mxu0 0.0
      %3457 = vmatpush1.msra.mxu0 0.0
      %3458 = vmatprep.subr.mxu0 0.0
      %3459 = vmatpush1.msra.mxu0 0.0
      %3460 = vmatprep.subr.mxu0 0.0
      %3461 = vmatpush1.msra.mxu0 0.0
      %3462 = vmatprep.subr.mxu0 0.0
      %3463 = vmatpush1.msra.mxu0 0.0
      %3464 = vmatprep.subr.mxu0 0.0
      %3465 = vmatpush1.msra.mxu0 0.0
      %3466 = vmatprep.subr.mxu0 0.0
      %3467 = vmatpush1.msra.mxu0 0.0
      %3468 = vmatprep.subr.mxu0 0.0
      %3469 = vmatpush1.msra.mxu0 0.0
      %3470 = vmatprep.subr.mxu0 0.0
      %3471 = vmatpush1.msra.mxu0 0.0
      %3472 = vmatprep.subr.mxu0 0.0
      %3473 = vmatpush1.msra.mxu0 0.0
      %3474 = vmatprep.mubr.f32.mxu0 0.0
      %v3475 = vand.u32 %v3321, 4294901760
      %3476 = vmatmul.mubr.f32.gmra.mrb[0].mxu0 %v3475
      %v3477 = vpop.f32.mrb[0].mxu0
      %v3478 = vadd.f32 %v3397, %v3477
      %v3479 = vpop.f32.mrb[0].mxu0
      %3480 = vdwg.mxu0
      %3481 = vmatprep.subr.mxu0 0.0
      %v3482 = vand.u32 %v3311, 4294901760
      %v3483 = vsub.f32 %v3311, %v3482
      %3484 = vmatpush1.msra.mxu0 %v3483
      %3485 = vmatprep.subr.mxu0 0.0
      %v3486 = vand.u32 %v3312, 4294901760
      %v3487 = vsub.f32 %v3312, %v3486
      %3488 = vmatpush1.msra.mxu0 %v3487
      %3489 = vmatprep.subr.mxu0 0.0
      %3490 = vmatpush1.msra.mxu0 0.0
      %3491 = vmatprep.subr.mxu0 0.0
      %3492 = vmatpush1.msra.mxu0 0.0
      %3493 = vmatprep.subr.mxu0 0.0
      %3494 = vmatpush1.msra.mxu0 0.0
      %3495 = vmatprep.subr.mxu0 0.0
      %3496 = vmatpush1.msra.mxu0 0.0
      %3497 = vmatprep.subr.mxu0 0.0
      %3498 = vmatpush1.msra.mxu0 0.0
      %3499 = vmatprep.subr.mxu0 0.0
      %3500 = vmatpush1.msra.mxu0 0.0
      %3501 = vmatprep.subr.mxu0 0.0
      %3502 = vmatpush1.msra.mxu0 0.0
      %3503 = vmatprep.subr.mxu0 0.0
      %3504 = vmatpush1.msra.mxu0 0.0
      %3505 = vmatprep.subr.mxu0 0.0
      %3506 = vmatpush1.msra.mxu0 0.0
      %3507 = vmatprep.subr.mxu0 0.0
      %3508 = vmatpush1.msra.mxu0 0.0
      %3509 = vmatprep.subr.mxu0 0.0
      %3510 = vmatpush1.msra.mxu0 0.0
      %3511 = vmatprep.subr.mxu0 0.0
      %3512 = vmatpush1.msra.mxu0 0.0
      %3513 = vmatprep.subr.mxu0 0.0
      %3514 = vmatpush1.msra.mxu0 0.0
      %3515 = vmatprep.subr.mxu0 0.0
      %3516 = vmatpush1.msra.mxu0 0.0
      %3517 = vmatprep.subr.mxu0 0.0
      %3518 = vmatpush1.msra.mxu0 0.0
      %3519 = vmatprep.subr.mxu0 0.0
      %3520 = vmatpush1.msra.mxu0 0.0
      %3521 = vmatprep.subr.mxu0 0.0
      %3522 = vmatpush1.msra.mxu0 0.0
      %3523 = vmatprep.subr.mxu0 0.0
      %3524 = vmatpush1.msra.mxu0 0.0
      %3525 = vmatprep.subr.mxu0 0.0
      %3526 = vmatpush1.msra.mxu0 0.0
      %3527 = vmatprep.subr.mxu0 0.0
      %3528 = vmatpush1.msra.mxu0 0.0
      %3529 = vmatprep.subr.mxu0 0.0
      %3530 = vmatpush1.msra.mxu0 0.0
      %3531 = vmatprep.subr.mxu0 0.0
      %3532 = vmatpush1.msra.mxu0 0.0
      %3533 = vmatprep.subr.mxu0 0.0
      %3534 = vmatpush1.msra.mxu0 0.0
      %3535 = vmatprep.subr.mxu0 0.0
      %3536 = vmatpush1.msra.mxu0 0.0
      %3537 = vmatprep.subr.mxu0 0.0
      %3538 = vmatpush1.msra.mxu0 0.0
      %3539 = vmatprep.subr.mxu0 0.0
      %3540 = vmatpush1.msra.mxu0 0.0
      %3541 = vmatprep.subr.mxu0 0.0
      %3542 = vmatpush1.msra.mxu0 0.0
      %3543 = vmatprep.subr.mxu0 0.0
      %3544 = vmatpush1.msra.mxu0 0.0
      %3545 = vmatprep.subr.mxu0 0.0
      %3546 = vmatpush1.msra.mxu0 0.0
      %3547 = vmatprep.subr.mxu0 0.0
      %3548 = vmatpush1.msra.mxu0 0.0
      %3549 = vmatprep.mubr.f32.mxu0 0.0
      %v3550 = vand.u32 %v3321, 4294901760
      %v3551 = vsub.f32 %v3321, %v3550
      %3552 = vmatmul.mubr.f32.gmra.mrb[0].mxu0 %v3551
      %v3553 = vpop.f32.mrb[0].mxu0
      %v3554 = vadd.f32 %v3478, %v3553
      %v3555 = vpop.f32.mrb[0].mxu0
      %3556 = vdwg.mxu0
      %3557 = vmatprep.subr.mxu0 0.0
      %v3558 = vand.u32 %v3311, 4294901760
      %3559 = vmatpush1.msra.mxu0 %v3558
      %3560 = vmatprep.subr.mxu0 0.0
      %v3561 = vand.u32 %v3312, 4294901760
      %3562 = vmatpush1.msra.mxu0 %v3561
      %3563 = vmatprep.subr.mxu0 0.0
      %3564 = vmatpush1.msra.mxu0 0.0
      %3565 = vmatprep.subr.mxu0 0.0
      %3566 = vmatpush1.msra.mxu0 0.0
      %3567 = vmatprep.subr.mxu0 0.0
      %3568 = vmatpush1.msra.mxu0 0.0
      %3569 = vmatprep.subr.mxu0 0.0
      %3570 = vmatpush1.msra.mxu0 0.0
      %3571 = vmatprep.subr.mxu0 0.0
      %3572 = vmatpush1.msra.mxu0 0.0
      %3573 = vmatprep.subr.mxu0 0.0
      %3574 = vmatpush1.msra.mxu0 0.0
      %3575 = vmatprep.subr.mxu0 0.0
      %3576 = vmatpush1.msra.mxu0 0.0
      %3577 = vmatprep.subr.mxu0 0.0
      %3578 = vmatpush1.msra.mxu0 0.0
      %3579 = vmatprep.subr.mxu0 0.0
      %3580 = vmatpush1.msra.mxu0 0.0
      %3581 = vmatprep.subr.mxu0 0.0
      %3582 = vmatpush1.msra.mxu0 0.0
      %3583 = vmatprep.subr.mxu0 0.0
      %3584 = vmatpush1.msra.mxu0 0.0
      %3585 = vmatprep.subr.mxu0 0.0
      %3586 = vmatpush1.msra.mxu0 0.0
      %3587 = vmatprep.subr.mxu0 0.0
      %3588 = vmatpush1.msra.mxu0 0.0
      %3589 = vmatprep.subr.mxu0 0.0
      %3590 = vmatpush1.msra.mxu0 0.0
      %3591 = vmatprep.subr.mxu0 0.0
      %3592 = vmatpush1.msra.mxu0 0.0
      %3593 = vmatprep.subr.mxu0 0.0
      %3594 = vmatpush1.msra.mxu0 0.0
      %3595 = vmatprep.subr.mxu0 0.0
      %3596 = vmatpush1.msra.mxu0 0.0
      %3597 = vmatprep.subr.mxu0 0.0
      %3598 = vmatpush1.msra.mxu0 0.0
      %3599 = vmatprep.subr.mxu0 0.0
      %3600 = vmatpush1.msra.mxu0 0.0
      %3601 = vmatprep.subr.mxu0 0.0
      %3602 = vmatpush1.msra.mxu0 0.0
      %3603 = vmatprep.subr.mxu0 0.0
      %3604 = vmatpush1.msra.mxu0 0.0
      %3605 = vmatprep.subr.mxu0 0.0
      %3606 = vmatpush1.msra.mxu0 0.0
      %3607 = vmatprep.subr.mxu0 0.0
      %3608 = vmatpush1.msra.mxu0 0.0
      %3609 = vmatprep.subr.mxu0 0.0
      %3610 = vmatpush1.msra.mxu0 0.0
      %3611 = vmatprep.subr.mxu0 0.0
      %3612 = vmatpush1.msra.mxu0 0.0
      %3613 = vmatprep.subr.mxu0 0.0
      %3614 = vmatpush1.msra.mxu0 0.0
      %3615 = vmatprep.subr.mxu0 0.0
      %3616 = vmatpush1.msra.mxu0 0.0
      %3617 = vmatprep.subr.mxu0 0.0
      %3618 = vmatpush1.msra.mxu0 0.0
      %3619 = vmatprep.subr.mxu0 0.0
      %3620 = vmatpush1.msra.mxu0 0.0
      %3621 = vmatprep.subr.mxu0 0.0
      %3622 = vmatpush1.msra.mxu0 0.0
      %3623 = vmatprep.mubr.f32.mxu0 0.0
      %v3624 = vand.u32 %v3321, 4294901760
      %v3625 = vsub.f32 %v3321, %v3624
      %v3626 = vand.u32 %v3625, 4294901760
      %3627 = vmatmul.mubr.f32.gmra.mrb[0].mxu0 %v3626
      %v3628 = vpop.f32.mrb[0].mxu0
      %v3629 = vadd.f32 %v3554, %v3628
      %v3630 = vpop.f32.mrb[0].mxu0
      %3631 = vdwg.mxu0
      %3632 = vmatprep.subr.mxu0 0.0
      %v3633 = vand.u32 %v3311, 4294901760
      %v3634 = vsub.f32 %v3311, %v3633
      %v3635 = vand.u32 %v3634, 4294901760
      %3636 = vmatpush1.msra.mxu0 %v3635
      %3637 = vmatprep.subr.mxu0 0.0
      %v3638 = vand.u32 %v3312, 4294901760
      %v3639 = vsub.f32 %v3312, %v3638
      %v3640 = vand.u32 %v3639, 4294901760
      %3641 = vmatpush1.msra.mxu0 %v3640
      %3642 = vmatprep.subr.mxu0 0.0
      %3643 = vmatpush1.msra.mxu0 0.0
      %3644 = vmatprep.subr.mxu0 0.0
      %3645 = vmatpush1.msra.mxu0 0.0
      %3646 = vmatprep.subr.mxu0 0.0
      %3647 = vmatpush1.msra.mxu0 0.0
      %3648 = vmatprep.subr.mxu0 0.0
      %3649 = vmatpush1.msra.mxu0 0.0
      %3650 = vmatprep.subr.mxu0 0.0
      %3651 = vmatpush1.msra.mxu0 0.0
      %3652 = vmatprep.subr.mxu0 0.0
      %3653 = vmatpush1.msra.mxu0 0.0
      %3654 = vmatprep.subr.mxu0 0.0
      %3655 = vmatpush1.msra.mxu0 0.0
      %3656 = vmatprep.subr.mxu0 0.0
      %3657 = vmatpush1.msra.mxu0 0.0
      %3658 = vmatprep.subr.mxu0 0.0
      %3659 = vmatpush1.msra.mxu0 0.0
      %3660 = vmatprep.subr.mxu0 0.0
      %3661 = vmatpush1.msra.mxu0 0.0
      %3662 = vmatprep.subr.mxu0 0.0
      %3663 = vmatpush1.msra.mxu0 0.0
      %3664 = vmatprep.subr.mxu0 0.0
      %3665 = vmatpush1.msra.mxu0 0.0
      %3666 = vmatprep.subr.mxu0 0.0
      %3667 = vmatpush1.msra.mxu0 0.0
      %3668 = vmatprep.subr.mxu0 0.0
      %3669 = vmatpush1.msra.mxu0 0.0
      %3670 = vmatprep.subr.mxu0 0.0
      %3671 = vmatpush1.msra.mxu0 0.0
      %3672 = vmatprep.subr.mxu0 0.0
      %3673 = vmatpush1.msra.mxu0 0.0
      %3674 = vmatprep.subr.mxu0 0.0
      %3675 = vmatpush1.msra.mxu0 0.0
      %3676 = vmatprep.subr.mxu0 0.0
      %3677 = vmatpush1.msra.mxu0 0.0
      %3678 = vmatprep.subr.mxu0 0.0
      %3679 = vmatpush1.msra.mxu0 0.0
      %3680 = vmatprep.subr.mxu0 0.0
      %3681 = vmatpush1.msra.mxu0 0.0
      %3682 = vmatprep.subr.mxu0 0.0
      %3683 = vmatpush1.msra.mxu0 0.0
      %3684 = vmatprep.subr.mxu0 0.0
      %3685 = vmatpush1.msra.mxu0 0.0
      %3686 = vmatprep.subr.mxu0 0.0
      %3687 = vmatpush1.msra.mxu0 0.0
      %3688 = vmatprep.subr.mxu0 0.0
      %3689 = vmatpush1.msra.mxu0 0.0
      %3690 = vmatprep.subr.mxu0 0.0
      %3691 = vmatpush1.msra.mxu0 0.0
      %3692 = vmatprep.subr.mxu0 0.0
      %3693 = vmatpush1.msra.mxu0 0.0
      %3694 = vmatprep.subr.mxu0 0.0
      %3695 = vmatpush1.msra.mxu0 0.0
      %3696 = vmatprep.subr.mxu0 0.0
      %3697 = vmatpush1.msra.mxu0 0.0
      %3698 = vmatprep.subr.mxu0 0.0
      %3699 = vmatpush1.msra.mxu0 0.0
      %3700 = vmatprep.subr.mxu0 0.0
      %3701 = vmatpush1.msra.mxu0 0.0
      %3702 = vmatprep.mubr.f32.mxu0 0.0
      %v3703 = vand.u32 %v3321, 4294901760
      %3704 = vmatmul.mubr.f32.gmra.mrb[0].mxu0 %v3703
      %v3705 = vpop.f32.mrb[0].mxu0
      %v3706 = vadd.f32 %v3629, %v3705
      %v3707 = vpop.f32.mrb[0].mxu0
      %3708 = vdwg.mxu0
      %3709 = vmatprep.subr.mxu0 0.0
      %v3710 = vand.u32 %v3311, 4294901760
      %3711 = vmatpush1.msra.mxu0 %v3710
      %3712 = vmatprep.subr.mxu0 0.0
      %v3713 = vand.u32 %v3312, 4294901760
      %3714 = vmatpush1.msra.mxu0 %v3713
      %3715 = vmatprep.subr.mxu0 0.0
      %3716 = vmatpush1.msra.mxu0 0.0
      %3717 = vmatprep.subr.mxu0 0.0
      %3718 = vmatpush1.msra.mxu0 0.0
      %3719 = vmatprep.subr.mxu0 0.0
      %3720 = vmatpush1.msra.mxu0 0.0
      %3721 = vmatprep.subr.mxu0 0.0
      %3722 = vmatpush1.msra.mxu0 0.0
      %3723 = vmatprep.subr.mxu0 0.0
      %3724 = vmatpush1.msra.mxu0 0.0
      %3725 = vmatprep.subr.mxu0 0.0
      %3726 = vmatpush1.msra.mxu0 0.0
      %3727 = vmatprep.subr.mxu0 0.0
      %3728 = vmatpush1.msra.mxu0 0.0
      %3729 = vmatprep.subr.mxu0 0.0
      %3730 = vmatpush1.msra.mxu0 0.0
      %3731 = vmatprep.subr.mxu0 0.0
      %3732 = vmatpush1.msra.mxu0 0.0
      %3733 = vmatprep.subr.mxu0 0.0
      %3734 = vmatpush1.msra.mxu0 0.0
      %3735 = vmatprep.subr.mxu0 0.0
      %3736 = vmatpush1.msra.mxu0 0.0
      %3737 = vmatprep.subr.mxu0 0.0
      %3738 = vmatpush1.msra.mxu0 0.0
      %3739 = vmatprep.subr.mxu0 0.0
      %3740 = vmatpush1.msra.mxu0 0.0
      %3741 = vmatprep.subr.mxu0 0.0
      %3742 = vmatpush1.msra.mxu0 0.0
      %3743 = vmatprep.subr.mxu0 0.0
      %3744 = vmatpush1.msra.mxu0 0.0
      %3745 = vmatprep.subr.mxu0 0.0
      %3746 = vmatpush1.msra.mxu0 0.0
      %3747 = vmatprep.subr.mxu0 0.0
      %3748 = vmatpush1.msra.mxu0 0.0
      %3749 = vmatprep.subr.mxu0 0.0
      %3750 = vmatpush1.msra.mxu0 0.0
      %3751 = vmatprep.subr.mxu0 0.0
      %3752 = vmatpush1.msra.mxu0 0.0
      %3753 = vmatprep.subr.mxu0 0.0
      %3754 = vmatpush1.msra.mxu0 0.0
      %3755 = vmatprep.subr.mxu0 0.0
      %3756 = vmatpush1.msra.mxu0 0.0
      %3757 = vmatprep.subr.mxu0 0.0
      %3758 = vmatpush1.msra.mxu0 0.0
      %3759 = vmatprep.subr.mxu0 0.0
      %3760 = vmatpush1.msra.mxu0 0.0
      %3761 = vmatprep.subr.mxu0 0.0
      %3762 = vmatpush1.msra.mxu0 0.0
      %3763 = vmatprep.subr.mxu0 0.0
      %3764 = vmatpush1.msra.mxu0 0.0
      %3765 = vmatprep.subr.mxu0 0.0
      %3766 = vmatpush1.msra.mxu0 0.0
      %3767 = vmatprep.subr.mxu0 0.0
      %3768 = vmatpush1.msra.mxu0 0.0
      %3769 = vmatprep.subr.mxu0 0.0
      %3770 = vmatpush1.msra.mxu0 0.0
      %3771 = vmatprep.subr.mxu0 0.0
      %3772 = vmatpush1.msra.mxu0 0.0
      %3773 = vmatprep.subr.mxu0 0.0
      %3774 = vmatpush1.msra.mxu0 0.0
      %3775 = vmatprep.mubr.f32.mxu0 0.0
      %v3776 = vand.u32 %v3321, 4294901760
      %3777 = vmatmul.mubr.f32.gmra.mrb[0].mxu0 %v3776
      %v3778 = vpop.f32.mrb[0].mxu0
      %v3779 = vadd.f32 %v3706, %v3778
      %v3780 = vpop.f32.mrb[0].mxu0
      %3781 = vdwg.mxu0
      %v3782 = vsel %vm2359, %v3779, 0.0
      %v3783 = vrot.slane %v3782, 4
      %v3784 = vadd.f32 %v3782, %v3783
      %v3785 = vrot.slane %v3784, 2
      %v3786 = vadd.f32 %v3784, %v3785
      %v3787 = vrot.slane %v3786, 1
      %v3788 = vadd.f32 %v3786, %v3787
      %v3789 = vmul.f32 %v3788, %v2367
      %s3790 = scalar_lea.vmem [#allocation3], %s46
      %3791 = vst.msk [vmem:[%s3790] sm:$0x1] %vm2370, %v3789
      %p3792 = scmp.eq.s32.totalorder %s46, 7
      // Predicated region
      $region133: #{tpu_custom_call.1} parent=131 // pred_check
        %p3793 = pneg %p3792
      $region134: #{tpu_custom_call.1} parent=131 // pred_check_branch
        %3795 = sbr.rel (%p3793) target = $region136
      $region135: #{tpu_custom_call.1} parent=131 // pred_region
        %v3796 = vld [vmem:[#allocation2] sm:$0xff]
        %v3797 = vld [vmem:[%s17] sm:$0x7]
        %v3798 = vld [vmem:[%s18] sm:$0xff]
        %v3799 = vld [vmem:[%s19] sm:$0x1]
        %v3801 = vsel %vm2359, %v3796, 0
        %3803 = vmatprep.subr.mxu0 0.0
        %v3804 = vand.u32 %v3798, 4294901760
        %3805 = vmatpush1.msra.mxu0 %v3804
        %3806 = vmatprep.subr.mxu0 0.0
        %3807 = vmatpush1.msra.mxu0 0.0
        %3808 = vmatprep.subr.mxu0 0.0
        %3809 = vmatpush1.msra.mxu0 0.0
        %3810 = vmatprep.subr.mxu0 0.0
        %3811 = vmatpush1.msra.mxu0 0.0
        %3812 = vmatprep.subr.mxu0 0.0
        %3813 = vmatpush1.msra.mxu0 0.0
        %3814 = vmatprep.subr.mxu0 0.0
        %3815 = vmatpush1.msra.mxu0 0.0
        %3816 = vmatprep.subr.mxu0 0.0
        %3817 = vmatpush1.msra.mxu0 0.0
        %3818 = vmatprep.subr.mxu0 0.0
        %3819 = vmatpush1.msra.mxu0 0.0
        %3820 = vmatprep.subr.mxu0 0.0
        %3821 = vmatpush1.msra.mxu0 0.0
        %3822 = vmatprep.subr.mxu0 0.0
        %3823 = vmatpush1.msra.mxu0 0.0
        %3824 = vmatprep.subr.mxu0 0.0
        %3825 = vmatpush1.msra.mxu0 0.0
        %3826 = vmatprep.subr.mxu0 0.0
        %3827 = vmatpush1.msra.mxu0 0.0
        %3828 = vmatprep.subr.mxu0 0.0
        %3829 = vmatpush1.msra.mxu0 0.0
        %3830 = vmatprep.subr.mxu0 0.0
        %3831 = vmatpush1.msra.mxu0 0.0
        %3832 = vmatprep.subr.mxu0 0.0
        %3833 = vmatpush1.msra.mxu0 0.0
        %3834 = vmatprep.subr.mxu0 0.0
        %3835 = vmatpush1.msra.mxu0 0.0
        %3836 = vmatprep.subr.mxu0 0.0
        %3837 = vmatpush1.msra.mxu0 0.0
        %3838 = vmatprep.subr.mxu0 0.0
        %3839 = vmatpush1.msra.mxu0 0.0
        %3840 = vmatprep.subr.mxu0 0.0
        %3841 = vmatpush1.msra.mxu0 0.0
        %3842 = vmatprep.subr.mxu0 0.0
        %3843 = vmatpush1.msra.mxu0 0.0
        %3844 = vmatprep.subr.mxu0 0.0
        %3845 = vmatpush1.msra.mxu0 0.0
        %3846 = vmatprep.subr.mxu0 0.0
        %3847 = vmatpush1.msra.mxu0 0.0
        %3848 = vmatprep.subr.mxu0 0.0
        %3849 = vmatpush1.msra.mxu0 0.0
        %3850 = vmatprep.subr.mxu0 0.0
        %3851 = vmatpush1.msra.mxu0 0.0
        %3852 = vmatprep.subr.mxu0 0.0
        %3853 = vmatpush1.msra.mxu0 0.0
        %3854 = vmatprep.subr.mxu0 0.0
        %3855 = vmatpush1.msra.mxu0 0.0
        %3856 = vmatprep.subr.mxu0 0.0
        %3857 = vmatpush1.msra.mxu0 0.0
        %3858 = vmatprep.subr.mxu0 0.0
        %3859 = vmatpush1.msra.mxu0 0.0
        %3860 = vmatprep.subr.mxu0 0.0
        %3861 = vmatpush1.msra.mxu0 0.0
        %3862 = vmatprep.subr.mxu0 0.0
        %3863 = vmatpush1.msra.mxu0 0.0
        %3864 = vmatprep.subr.mxu0 0.0
        %3865 = vmatpush1.msra.mxu0 0.0
        %3866 = vmatprep.subr.mxu0 0.0
        %3867 = vmatpush1.msra.mxu0 0.0
        %3868 = vmatprep.mubr.f32.mxu0 0.0
        %v3869 = vand.u32 %v3801, 4294901760
        %v3870 = vsub.f32 %v3801, %v3869
        %v3871 = vand.u32 %v3870, 4294901760
        %v3872 = vsub.f32 %v3870, %v3871
        %v3873 = vand.u32 %v3872, 4294901760
        %3874 = vmatmul.mubr.f32.gmra.mrb[0].mxu0 %v3873
        %v3875 = vpop.f32.mrb[0].mxu0
        %v3876 = vadd.f32 0.0, %v3875
        %v3877 = vpop.f32.mrb[0].mxu0
        %3878 = vdwg.mxu0
        %3879 = vmatprep.subr.mxu0 0.0
        %v3880 = vand.u32 %v3798, 4294901760
        %v3881 = vsub.f32 %v3798, %v3880
        %v3882 = vand.u32 %v3881, 4294901760
        %v3883 = vsub.f32 %v3881, %v3882
        %v3884 = vand.u32 %v3883, 4294901760
        %3885 = vmatpush1.msra.mxu0 %v3884
        %3886 = vmatprep.subr.mxu0 0.0
        %3887 = vmatpush1.msra.mxu0 0.0
        %3888 = vmatprep.subr.mxu0 0.0
        %3889 = vmatpush1.msra.mxu0 0.0
        %3890 = vmatprep.subr.mxu0 0.0
        %3891 = vmatpush1.msra.mxu0 0.0
        %3892 = vmatprep.subr.mxu0 0.0
        %3893 = vmatpush1.msra.mxu0 0.0
        %3894 = vmatprep.subr.mxu0 0.0
        %3895 = vmatpush1.msra.mxu0 0.0
        %3896 = vmatprep.subr.mxu0 0.0
        %3897 = vmatpush1.msra.mxu0 0.0
        %3898 = vmatprep.subr.mxu0 0.0
        %3899 = vmatpush1.msra.mxu0 0.0
        %3900 = vmatprep.subr.mxu0 0.0
        %3901 = vmatpush1.msra.mxu0 0.0
        %3902 = vmatprep.subr.mxu0 0.0
        %3903 = vmatpush1.msra.mxu0 0.0
        %3904 = vmatprep.subr.mxu0 0.0
        %3905 = vmatpush1.msra.mxu0 0.0
        %3906 = vmatprep.subr.mxu0 0.0
        %3907 = vmatpush1.msra.mxu0 0.0
        %3908 = vmatprep.subr.mxu0 0.0
        %3909 = vmatpush1.msra.mxu0 0.0
        %3910 = vmatprep.subr.mxu0 0.0
        %3911 = vmatpush1.msra.mxu0 0.0
        %3912 = vmatprep.subr.mxu0 0.0
        %3913 = vmatpush1.msra.mxu0 0.0
        %3914 = vmatprep.subr.mxu0 0.0
        %3915 = vmatpush1.msra.mxu0 0.0
        %3916 = vmatprep.subr.mxu0 0.0
        %3917 = vmatpush1.msra.mxu0 0.0
        %3918 = vmatprep.subr.mxu0 0.0
        %3919 = vmatpush1.msra.mxu0 0.0
        %3920 = vmatprep.subr.mxu0 0.0
        %3921 = vmatpush1.msra.mxu0 0.0
        %3922 = vmatprep.subr.mxu0 0.0
        %3923 = vmatpush1.msra.mxu0 0.0
        %3924 = vmatprep.subr.mxu0 0.0
        %3925 = vmatpush1.msra.mxu0 0.0
        %3926 = vmatprep.subr.mxu0 0.0
        %3927 = vmatpush1.msra.mxu0 0.0
        %3928 = vmatprep.subr.mxu0 0.0
        %3929 = vmatpush1.msra.mxu0 0.0
        %3930 = vmatprep.subr.mxu0 0.0
        %3931 = vmatpush1.msra.mxu0 0.0
        %3932 = vmatprep.subr.mxu0 0.0
        %3933 = vmatpush1.msra.mxu0 0.0
        %3934 = vmatprep.subr.mxu0 0.0
        %3935 = vmatpush1.msra.mxu0 0.0
        %3936 = vmatprep.subr.mxu0 0.0
        %3937 = vmatpush1.msra.mxu0 0.0
        %3938 = vmatprep.subr.mxu0 0.0
        %3939 = vmatpush1.msra.mxu0 0.0
        %3940 = vmatprep.subr.mxu0 0.0
        %3941 = vmatpush1.msra.mxu0 0.0
        %3942 = vmatprep.subr.mxu0 0.0
        %3943 = vmatpush1.msra.mxu0 0.0
        %3944 = vmatprep.subr.mxu0 0.0
        %3945 = vmatpush1.msra.mxu0 0.0
        %3946 = vmatprep.subr.mxu0 0.0
        %3947 = vmatpush1.msra.mxu0 0.0
        %3948 = vmatprep.mubr.f32.mxu0 0.0
        %v3949 = vand.u32 %v3801, 4294901760
        %3950 = vmatmul.mubr.f32.gmra.mrb[0].mxu0 %v3949
        %v3951 = vpop.f32.mrb[0].mxu0
        %v3952 = vadd.f32 %v3876, %v3951
        %v3953 = vpop.f32.mrb[0].mxu0
        %3954 = vdwg.mxu0
        %3955 = vmatprep.subr.mxu0 0.0
        %v3956 = vand.u32 %v3798, 4294901760
        %v3957 = vsub.f32 %v3798, %v3956
        %3958 = vmatpush1.msra.mxu0 %v3957
        %3959 = vmatprep.subr.mxu0 0.0
        %3960 = vmatpush1.msra.mxu0 0.0
        %3961 = vmatprep.subr.mxu0 0.0
        %3962 = vmatpush1.msra.mxu0 0.0
        %3963 = vmatprep.subr.mxu0 0.0
        %3964 = vmatpush1.msra.mxu0 0.0
        %3965 = vmatprep.subr.mxu0 0.0
        %3966 = vmatpush1.msra.mxu0 0.0
        %3967 = vmatprep.subr.mxu0 0.0
        %3968 = vmatpush1.msra.mxu0 0.0
        %3969 = vmatprep.subr.mxu0 0.0
        %3970 = vmatpush1.msra.mxu0 0.0
        %3971 = vmatprep.subr.mxu0 0.0
        %3972 = vmatpush1.msra.mxu0 0.0
        %3973 = vmatprep.subr.mxu0 0.0
        %3974 = vmatpush1.msra.mxu0 0.0
        %3975 = vmatprep.subr.mxu0 0.0
        %3976 = vmatpush1.msra.mxu0 0.0
        %3977 = vmatprep.subr.mxu0 0.0
        %3978 = vmatpush1.msra.mxu0 0.0
        %3979 = vmatprep.subr.mxu0 0.0
        %3980 = vmatpush1.msra.mxu0 0.0
        %3981 = vmatprep.subr.mxu0 0.0
        %3982 = vmatpush1.msra.mxu0 0.0
        %3983 = vmatprep.subr.mxu0 0.0
        %3984 = vmatpush1.msra.mxu0 0.0
        %3985 = vmatprep.subr.mxu0 0.0
        %3986 = vmatpush1.msra.mxu0 0.0
        %3987 = vmatprep.subr.mxu0 0.0
        %3988 = vmatpush1.msra.mxu0 0.0
        %3989 = vmatprep.subr.mxu0 0.0
        %3990 = vmatpush1.msra.mxu0 0.0
        %3991 = vmatprep.subr.mxu0 0.0
        %3992 = vmatpush1.msra.mxu0 0.0
        %3993 = vmatprep.subr.mxu0 0.0
        %3994 = vmatpush1.msra.mxu0 0.0
        %3995 = vmatprep.subr.mxu0 0.0
        %3996 = vmatpush1.msra.mxu0 0.0
        %3997 = vmatprep.subr.mxu0 0.0
        %3998 = vmatpush1.msra.mxu0 0.0
        %3999 = vmatprep.subr.mxu0 0.0
        %4000 = vmatpush1.msra.mxu0 0.0
        %4001 = vmatprep.subr.mxu0 0.0
        %4002 = vmatpush1.msra.mxu0 0.0
        %4003 = vmatprep.subr.mxu0 0.0
        %4004 = vmatpush1.msra.mxu0 0.0
        %4005 = vmatprep.subr.mxu0 0.0
        %4006 = vmatpush1.msra.mxu0 0.0
        %4007 = vmatprep.subr.mxu0 0.0
        %4008 = vmatpush1.msra.mxu0 0.0
        %4009 = vmatprep.subr.mxu0 0.0
        %4010 = vmatpush1.msra.mxu0 0.0
        %4011 = vmatprep.subr.mxu0 0.0
        %4012 = vmatpush1.msra.mxu0 0.0
        %4013 = vmatprep.subr.mxu0 0.0
        %4014 = vmatpush1.msra.mxu0 0.0
        %4015 = vmatprep.subr.mxu0 0.0
        %4016 = vmatpush1.msra.mxu0 0.0
        %4017 = vmatprep.subr.mxu0 0.0
        %4018 = vmatpush1.msra.mxu0 0.0
        %4019 = vmatprep.subr.mxu0 0.0
        %4020 = vmatpush1.msra.mxu0 0.0
        %4021 = vmatprep.mubr.f32.mxu0 0.0
        %v4022 = vand.u32 %v3801, 4294901760
        %v4023 = vsub.f32 %v3801, %v4022
        %4024 = vmatmul.mubr.f32.gmra.mrb[0].mxu0 %v4023
        %v4025 = vpop.f32.mrb[0].mxu0
        %v4026 = vadd.f32 %v3952, %v4025
        %v4027 = vpop.f32.mrb[0].mxu0
        %4028 = vdwg.mxu0
        %4029 = vmatprep.subr.mxu0 0.0
        %v4030 = vand.u32 %v3798, 4294901760
        %4031 = vmatpush1.msra.mxu0 %v4030
        %4032 = vmatprep.subr.mxu0 0.0
        %4033 = vmatpush1.msra.mxu0 0.0
        %4034 = vmatprep.subr.mxu0 0.0
        %4035 = vmatpush1.msra.mxu0 0.0
        %4036 = vmatprep.subr.mxu0 0.0
        %4037 = vmatpush1.msra.mxu0 0.0
        %4038 = vmatprep.subr.mxu0 0.0
        %4039 = vmatpush1.msra.mxu0 0.0
        %4040 = vmatprep.subr.mxu0 0.0
        %4041 = vmatpush1.msra.mxu0 0.0
        %4042 = vmatprep.subr.mxu0 0.0
        %4043 = vmatpush1.msra.mxu0 0.0
        %4044 = vmatprep.subr.mxu0 0.0
        %4045 = vmatpush1.msra.mxu0 0.0
        %4046 = vmatprep.subr.mxu0 0.0
        %4047 = vmatpush1.msra.mxu0 0.0
        %4048 = vmatprep.subr.mxu0 0.0
        %4049 = vmatpush1.msra.mxu0 0.0
        %4050 = vmatprep.subr.mxu0 0.0
        %4051 = vmatpush1.msra.mxu0 0.0
        %4052 = vmatprep.subr.mxu0 0.0
        %4053 = vmatpush1.msra.mxu0 0.0
        %4054 = vmatprep.subr.mxu0 0.0
        %4055 = vmatpush1.msra.mxu0 0.0
        %4056 = vmatprep.subr.mxu0 0.0
        %4057 = vmatpush1.msra.mxu0 0.0
        %4058 = vmatprep.subr.mxu0 0.0
        %4059 = vmatpush1.msra.mxu0 0.0
        %4060 = vmatprep.subr.mxu0 0.0
        %4061 = vmatpush1.msra.mxu0 0.0
        %4062 = vmatprep.subr.mxu0 0.0
        %4063 = vmatpush1.msra.mxu0 0.0
        %4064 = vmatprep.subr.mxu0 0.0
        %4065 = vmatpush1.msra.mxu0 0.0
        %4066 = vmatprep.subr.mxu0 0.0
        %4067 = vmatpush1.msra.mxu0 0.0
        %4068 = vmatprep.subr.mxu0 0.0
        %4069 = vmatpush1.msra.mxu0 0.0
        %4070 = vmatprep.subr.mxu0 0.0
        %4071 = vmatpush1.msra.mxu0 0.0
        %4072 = vmatprep.subr.mxu0 0.0
        %4073 = vmatpush1.msra.mxu0 0.0
        %4074 = vmatprep.subr.mxu0 0.0
        %4075 = vmatpush1.msra.mxu0 0.0
        %4076 = vmatprep.subr.mxu0 0.0
        %4077 = vmatpush1.msra.mxu0 0.0
        %4078 = vmatprep.subr.mxu0 0.0
        %4079 = vmatpush1.msra.mxu0 0.0
        %4080 = vmatprep.subr.mxu0 0.0
        %4081 = vmatpush1.msra.mxu0 0.0
        %4082 = vmatprep.subr.mxu0 0.0
        %4083 = vmatpush1.msra.mxu0 0.0
        %4084 = vmatprep.subr.mxu0 0.0
        %4085 = vmatpush1.msra.mxu0 0.0
        %4086 = vmatprep.subr.mxu0 0.0
        %4087 = vmatpush1.msra.mxu0 0.0
        %4088 = vmatprep.subr.mxu0 0.0
        %4089 = vmatpush1.msra.mxu0 0.0
        %4090 = vmatprep.subr.mxu0 0.0
        %4091 = vmatpush1.msra.mxu0 0.0
        %4092 = vmatprep.subr.mxu0 0.0
        %4093 = vmatpush1.msra.mxu0 0.0
        %4094 = vmatprep.mubr.f32.mxu0 0.0
        %v4095 = vand.u32 %v3801, 4294901760
        %v4096 = vsub.f32 %v3801, %v4095
        %v4097 = vand.u32 %v4096, 4294901760
        %4098 = vmatmul.mubr.f32.gmra.mrb[0].mxu0 %v4097
        %v4099 = vpop.f32.mrb[0].mxu0
        %v4100 = vadd.f32 %v4026, %v4099
        %v4101 = vpop.f32.mrb[0].mxu0
        %4102 = vdwg.mxu0
        %4103 = vmatprep.subr.mxu0 0.0
        %v4104 = vand.u32 %v3798, 4294901760
        %v4105 = vsub.f32 %v3798, %v4104
        %v4106 = vand.u32 %v4105, 4294901760
        %4107 = vmatpush1.msra.mxu0 %v4106
        %4108 = vmatprep.subr.mxu0 0.0
        %4109 = vmatpush1.msra.mxu0 0.0
        %4110 = vmatprep.subr.mxu0 0.0
        %4111 = vmatpush1.msra.mxu0 0.0
        %4112 = vmatprep.subr.mxu0 0.0
        %4113 = vmatpush1.msra.mxu0 0.0
        %4114 = vmatprep.subr.mxu0 0.0
        %4115 = vmatpush1.msra.mxu0 0.0
        %4116 = vmatprep.subr.mxu0 0.0
        %4117 = vmatpush1.msra.mxu0 0.0
        %4118 = vmatprep.subr.mxu0 0.0
        %4119 = vmatpush1.msra.mxu0 0.0
        %4120 = vmatprep.subr.mxu0 0.0
        %4121 = vmatpush1.msra.mxu0 0.0
        %4122 = vmatprep.subr.mxu0 0.0
        %4123 = vmatpush1.msra.mxu0 0.0
        %4124 = vmatprep.subr.mxu0 0.0
        %4125 = vmatpush1.msra.mxu0 0.0
        %4126 = vmatprep.subr.mxu0 0.0
        %4127 = vmatpush1.msra.mxu0 0.0
        %4128 = vmatprep.subr.mxu0 0.0
        %4129 = vmatpush1.msra.mxu0 0.0
        %4130 = vmatprep.subr.mxu0 0.0
        %4131 = vmatpush1.msra.mxu0 0.0
        %4132 = vmatprep.subr.mxu0 0.0
        %4133 = vmatpush1.msra.mxu0 0.0
        %4134 = vmatprep.subr.mxu0 0.0
        %4135 = vmatpush1.msra.mxu0 0.0
        %4136 = vmatprep.subr.mxu0 0.0
        %4137 = vmatpush1.msra.mxu0 0.0
        %4138 = vmatprep.subr.mxu0 0.0
        %4139 = vmatpush1.msra.mxu0 0.0
        %4140 = vmatprep.subr.mxu0 0.0
        %4141 = vmatpush1.msra.mxu0 0.0
        %4142 = vmatprep.subr.mxu0 0.0
        %4143 = vmatpush1.msra.mxu0 0.0
        %4144 = vmatprep.subr.mxu0 0.0
        %4145 = vmatpush1.msra.mxu0 0.0
        %4146 = vmatprep.subr.mxu0 0.0
        %4147 = vmatpush1.msra.mxu0 0.0
        %4148 = vmatprep.subr.mxu0 0.0
        %4149 = vmatpush1.msra.mxu0 0.0
        %4150 = vmatprep.subr.mxu0 0.0
        %4151 = vmatpush1.msra.mxu0 0.0
        %4152 = vmatprep.subr.mxu0 0.0
        %4153 = vmatpush1.msra.mxu0 0.0
        %4154 = vmatprep.subr.mxu0 0.0
        %4155 = vmatpush1.msra.mxu0 0.0
        %4156 = vmatprep.subr.mxu0 0.0
        %4157 = vmatpush1.msra.mxu0 0.0
        %4158 = vmatprep.subr.mxu0 0.0
        %4159 = vmatpush1.msra.mxu0 0.0
        %4160 = vmatprep.subr.mxu0 0.0
        %4161 = vmatpush1.msra.mxu0 0.0
        %4162 = vmatprep.subr.mxu0 0.0
        %4163 = vmatpush1.msra.mxu0 0.0
        %4164 = vmatprep.subr.mxu0 0.0
        %4165 = vmatpush1.msra.mxu0 0.0
        %4166 = vmatprep.subr.mxu0 0.0
        %4167 = vmatpush1.msra.mxu0 0.0
        %4168 = vmatprep.subr.mxu0 0.0
        %4169 = vmatpush1.msra.mxu0 0.0
        %4170 = vmatprep.mubr.f32.mxu0 0.0
        %v4171 = vand.u32 %v3801, 4294901760
        %4172 = vmatmul.mubr.f32.gmra.mrb[0].mxu0 %v4171
        %v4173 = vpop.f32.mrb[0].mxu0
        %v4174 = vadd.f32 %v4100, %v4173
        %v4175 = vpop.f32.mrb[0].mxu0
        %4176 = vdwg.mxu0
        %4177 = vmatprep.subr.mxu0 0.0
        %v4178 = vand.u32 %v3798, 4294901760
        %4179 = vmatpush1.msra.mxu0 %v4178
        %4180 = vmatprep.subr.mxu0 0.0
        %4181 = vmatpush1.msra.mxu0 0.0
        %4182 = vmatprep.subr.mxu0 0.0
        %4183 = vmatpush1.msra.mxu0 0.0
        %4184 = vmatprep.subr.mxu0 0.0
        %4185 = vmatpush1.msra.mxu0 0.0
        %4186 = vmatprep.subr.mxu0 0.0
        %4187 = vmatpush1.msra.mxu0 0.0
        %4188 = vmatprep.subr.mxu0 0.0
        %4189 = vmatpush1.msra.mxu0 0.0
        %4190 = vmatprep.subr.mxu0 0.0
        %4191 = vmatpush1.msra.mxu0 0.0
        %4192 = vmatprep.subr.mxu0 0.0
        %4193 = vmatpush1.msra.mxu0 0.0
        %4194 = vmatprep.subr.mxu0 0.0
        %4195 = vmatpush1.msra.mxu0 0.0
        %4196 = vmatprep.subr.mxu0 0.0
        %4197 = vmatpush1.msra.mxu0 0.0
        %4198 = vmatprep.subr.mxu0 0.0
        %4199 = vmatpush1.msra.mxu0 0.0
        %4200 = vmatprep.subr.mxu0 0.0
        %4201 = vmatpush1.msra.mxu0 0.0
        %4202 = vmatprep.subr.mxu0 0.0
        %4203 = vmatpush1.msra.mxu0 0.0
        %4204 = vmatprep.subr.mxu0 0.0
        %4205 = vmatpush1.msra.mxu0 0.0
        %4206 = vmatprep.subr.mxu0 0.0
        %4207 = vmatpush1.msra.mxu0 0.0
        %4208 = vmatprep.subr.mxu0 0.0
        %4209 = vmatpush1.msra.mxu0 0.0
        %4210 = vmatprep.subr.mxu0 0.0
        %4211 = vmatpush1.msra.mxu0 0.0
        %4212 = vmatprep.subr.mxu0 0.0
        %4213 = vmatpush1.msra.mxu0 0.0
        %4214 = vmatprep.subr.mxu0 0.0
        %4215 = vmatpush1.msra.mxu0 0.0
        %4216 = vmatprep.subr.mxu0 0.0
        %4217 = vmatpush1.msra.mxu0 0.0
        %4218 = vmatprep.subr.mxu0 0.0
        %4219 = vmatpush1.msra.mxu0 0.0
        %4220 = vmatprep.subr.mxu0 0.0
        %4221 = vmatpush1.msra.mxu0 0.0
        %4222 = vmatprep.subr.mxu0 0.0
        %4223 = vmatpush1.msra.mxu0 0.0
        %4224 = vmatprep.subr.mxu0 0.0
        %4225 = vmatpush1.msra.mxu0 0.0
        %4226 = vmatprep.subr.mxu0 0.0
        %4227 = vmatpush1.msra.mxu0 0.0
        %4228 = vmatprep.subr.mxu0 0.0
        %4229 = vmatpush1.msra.mxu0 0.0
        %4230 = vmatprep.subr.mxu0 0.0
        %4231 = vmatpush1.msra.mxu0 0.0
        %4232 = vmatprep.subr.mxu0 0.0
        %4233 = vmatpush1.msra.mxu0 0.0
        %4234 = vmatprep.subr.mxu0 0.0
        %4235 = vmatpush1.msra.mxu0 0.0
        %4236 = vmatprep.subr.mxu0 0.0
        %4237 = vmatpush1.msra.mxu0 0.0
        %4238 = vmatprep.subr.mxu0 0.0
        %4239 = vmatpush1.msra.mxu0 0.0
        %4240 = vmatprep.subr.mxu0 0.0
        %4241 = vmatpush1.msra.mxu0 0.0
        %4242 = vmatprep.mubr.f32.mxu0 0.0
        %v4243 = vand.u32 %v3801, 4294901760
        %4244 = vmatmul.mubr.f32.gmra.mrb[0].mxu0 %v4243
        %v4245 = vpop.f32.mrb[0].mxu0
        %v4246 = vadd.f32 %v4174, %v4245
        %v4247 = vpop.f32.mrb[0].mxu0
        %4248 = vdwg.mxu0
        %v4250 = vsel %vm957, %v3797, 0
        %4252 = vmatprep.subr.mxu0 0.0
        %v4253 = vand.u32 %v4250, 4294901760
        %4254 = vmatpush1.msra.mxu0 %v4253
        %4255 = vmatprep.subr.mxu0 0.0
        %4256 = vmatpush1.msra.mxu0 0.0
        %4257 = vmatprep.subr.mxu0 0.0
        %4258 = vmatpush1.msra.mxu0 0.0
        %4259 = vmatprep.subr.mxu0 0.0
        %4260 = vmatpush1.msra.mxu0 0.0
        %4261 = vmatprep.subr.mxu0 0.0
        %4262 = vmatpush1.msra.mxu0 0.0
        %4263 = vmatprep.subr.mxu0 0.0
        %4264 = vmatpush1.msra.mxu0 0.0
        %4265 = vmatprep.subr.mxu0 0.0
        %4266 = vmatpush1.msra.mxu0 0.0
        %4267 = vmatprep.subr.mxu0 0.0
        %4268 = vmatpush1.msra.mxu0 0.0
        %4269 = vmatprep.subr.mxu0 0.0
        %4270 = vmatpush1.msra.mxu0 0.0
        %4271 = vmatprep.subr.mxu0 0.0
        %4272 = vmatpush1.msra.mxu0 0.0
        %4273 = vmatprep.subr.mxu0 0.0
        %4274 = vmatpush1.msra.mxu0 0.0
        %4275 = vmatprep.subr.mxu0 0.0
        %4276 = vmatpush1.msra.mxu0 0.0
        %4277 = vmatprep.subr.mxu0 0.0
        %4278 = vmatpush1.msra.mxu0 0.0
        %4279 = vmatprep.subr.mxu0 0.0
        %4280 = vmatpush1.msra.mxu0 0.0
        %4281 = vmatprep.subr.mxu0 0.0
        %4282 = vmatpush1.msra.mxu0 0.0
        %4283 = vmatprep.subr.mxu0 0.0
        %4284 = vmatpush1.msra.mxu0 0.0
        %4285 = vmatprep.subr.mxu0 0.0
        %4286 = vmatpush1.msra.mxu0 0.0
        %4287 = vmatprep.subr.mxu0 0.0
        %4288 = vmatpush1.msra.mxu0 0.0
        %4289 = vmatprep.subr.mxu0 0.0
        %4290 = vmatpush1.msra.mxu0 0.0
        %4291 = vmatprep.subr.mxu0 0.0
        %4292 = vmatpush1.msra.mxu0 0.0
        %4293 = vmatprep.subr.mxu0 0.0
        %4294 = vmatpush1.msra.mxu0 0.0
        %4295 = vmatprep.subr.mxu0 0.0
        %4296 = vmatpush1.msra.mxu0 0.0
        %4297 = vmatprep.subr.mxu0 0.0
        %4298 = vmatpush1.msra.mxu0 0.0
        %4299 = vmatprep.subr.mxu0 0.0
        %4300 = vmatpush1.msra.mxu0 0.0
        %4301 = vmatprep.subr.mxu0 0.0
        %4302 = vmatpush1.msra.mxu0 0.0
        %4303 = vmatprep.subr.mxu0 0.0
        %4304 = vmatpush1.msra.mxu0 0.0
        %4305 = vmatprep.subr.mxu0 0.0
        %4306 = vmatpush1.msra.mxu0 0.0
        %4307 = vmatprep.subr.mxu0 0.0
        %4308 = vmatpush1.msra.mxu0 0.0
        %4309 = vmatprep.subr.mxu0 0.0
        %4310 = vmatpush1.msra.mxu0 0.0
        %4311 = vmatprep.subr.mxu0 0.0
        %4312 = vmatpush1.msra.mxu0 0.0
        %4313 = vmatprep.subr.mxu0 0.0
        %4314 = vmatpush1.msra.mxu0 0.0
        %4315 = vmatprep.subr.mxu0 0.0
        %4316 = vmatpush1.msra.mxu0 0.0
        %4317 = vmatprep.mubr.f32.mxu0 0.0
        %v4318 = vand.u32 %v1408, 4294901760
        %v4319 = vsub.f32 %v1408, %v4318
        %v4320 = vand.u32 %v4319, 4294901760
        %v4321 = vsub.f32 %v4319, %v4320
        %v4322 = vand.u32 %v4321, 4294901760
        %4323 = vmatmul.mubr.f32.gmra.mrb[0].mxu0 %v4322
        %v4324 = vpop.f32.mrb[0].mxu0
        %v4325 = vadd.f32 %v4246, %v4324
        %v4326 = vpop.f32.mrb[0].mxu0
        %4327 = vdwg.mxu0
        %4328 = vmatprep.subr.mxu0 0.0
        %v4329 = vand.u32 %v4250, 4294901760
        %v4330 = vsub.f32 %v4250, %v4329
        %v4331 = vand.u32 %v4330, 4294901760
        %v4332 = vsub.f32 %v4330, %v4331
        %v4333 = vand.u32 %v4332, 4294901760
        %4334 = vmatpush1.msra.mxu0 %v4333
        %4335 = vmatprep.subr.mxu0 0.0
        %4336 = vmatpush1.msra.mxu0 0.0
        %4337 = vmatprep.subr.mxu0 0.0
        %4338 = vmatpush1.msra.mxu0 0.0
        %4339 = vmatprep.subr.mxu0 0.0
        %4340 = vmatpush1.msra.mxu0 0.0
        %4341 = vmatprep.subr.mxu0 0.0
        %4342 = vmatpush1.msra.mxu0 0.0
        %4343 = vmatprep.subr.mxu0 0.0
        %4344 = vmatpush1.msra.mxu0 0.0
        %4345 = vmatprep.subr.mxu0 0.0
        %4346 = vmatpush1.msra.mxu0 0.0
        %4347 = vmatprep.subr.mxu0 0.0
        %4348 = vmatpush1.msra.mxu0 0.0
        %4349 = vmatprep.subr.mxu0 0.0
        %4350 = vmatpush1.msra.mxu0 0.0
        %4351 = vmatprep.subr.mxu0 0.0
        %4352 = vmatpush1.msra.mxu0 0.0
        %4353 = vmatprep.subr.mxu0 0.0
        %4354 = vmatpush1.msra.mxu0 0.0
        %4355 = vmatprep.subr.mxu0 0.0
        %4356 = vmatpush1.msra.mxu0 0.0
        %4357 = vmatprep.subr.mxu0 0.0
        %4358 = vmatpush1.msra.mxu0 0.0
        %4359 = vmatprep.subr.mxu0 0.0
        %4360 = vmatpush1.msra.mxu0 0.0
        %4361 = vmatprep.subr.mxu0 0.0
        %4362 = vmatpush1.msra.mxu0 0.0
        %4363 = vmatprep.subr.mxu0 0.0
        %4364 = vmatpush1.msra.mxu0 0.0
        %4365 = vmatprep.subr.mxu0 0.0
        %4366 = vmatpush1.msra.mxu0 0.0
        %4367 = vmatprep.subr.mxu0 0.0
        %4368 = vmatpush1.msra.mxu0 0.0
        %4369 = vmatprep.subr.mxu0 0.0
        %4370 = vmatpush1.msra.mxu0 0.0
        %4371 = vmatprep.subr.mxu0 0.0
        %4372 = vmatpush1.msra.mxu0 0.0
        %4373 = vmatprep.subr.mxu0 0.0
        %4374 = vmatpush1.msra.mxu0 0.0
        %4375 = vmatprep.subr.mxu0 0.0
        %4376 = vmatpush1.msra.mxu0 0.0
        %4377 = vmatprep.subr.mxu0 0.0
        %4378 = vmatpush1.msra.mxu0 0.0
        %4379 = vmatprep.subr.mxu0 0.0
        %4380 = vmatpush1.msra.mxu0 0.0
        %4381 = vmatprep.subr.mxu0 0.0
        %4382 = vmatpush1.msra.mxu0 0.0
        %4383 = vmatprep.subr.mxu0 0.0
        %4384 = vmatpush1.msra.mxu0 0.0
        %4385 = vmatprep.subr.mxu0 0.0
        %4386 = vmatpush1.msra.mxu0 0.0
        %4387 = vmatprep.subr.mxu0 0.0
        %4388 = vmatpush1.msra.mxu0 0.0
        %4389 = vmatprep.subr.mxu0 0.0
        %4390 = vmatpush1.msra.mxu0 0.0
        %4391 = vmatprep.subr.mxu0 0.0
        %4392 = vmatpush1.msra.mxu0 0.0
        %4393 = vmatprep.subr.mxu0 0.0
        %4394 = vmatpush1.msra.mxu0 0.0
        %4395 = vmatprep.subr.mxu0 0.0
        %4396 = vmatpush1.msra.mxu0 0.0
        %4397 = vmatprep.mubr.f32.mxu0 0.0
        %v4398 = vand.u32 %v1408, 4294901760
        %4399 = vmatmul.mubr.f32.gmra.mrb[0].mxu0 %v4398
        %v4400 = vpop.f32.mrb[0].mxu0
        %v4401 = vadd.f32 %v4325, %v4400
        %v4402 = vpop.f32.mrb[0].mxu0
        %4403 = vdwg.mxu0
        %4404 = vmatprep.subr.mxu0 0.0
        %v4405 = vand.u32 %v4250, 4294901760
        %v4406 = vsub.f32 %v4250, %v4405
        %4407 = vmatpush1.msra.mxu0 %v4406
        %4408 = vmatprep.subr.mxu0 0.0
        %4409 = vmatpush1.msra.mxu0 0.0
        %4410 = vmatprep.subr.mxu0 0.0
        %4411 = vmatpush1.msra.mxu0 0.0
        %4412 = vmatprep.subr.mxu0 0.0
        %4413 = vmatpush1.msra.mxu0 0.0
        %4414 = vmatprep.subr.mxu0 0.0
        %4415 = vmatpush1.msra.mxu0 0.0
        %4416 = vmatprep.subr.mxu0 0.0
        %4417 = vmatpush1.msra.mxu0 0.0
        %4418 = vmatprep.subr.mxu0 0.0
        %4419 = vmatpush1.msra.mxu0 0.0
        %4420 = vmatprep.subr.mxu0 0.0
        %4421 = vmatpush1.msra.mxu0 0.0
        %4422 = vmatprep.subr.mxu0 0.0
        %4423 = vmatpush1.msra.mxu0 0.0
        %4424 = vmatprep.subr.mxu0 0.0
        %4425 = vmatpush1.msra.mxu0 0.0
        %4426 = vmatprep.subr.mxu0 0.0
        %4427 = vmatpush1.msra.mxu0 0.0
        %4428 = vmatprep.subr.mxu0 0.0
        %4429 = vmatpush1.msra.mxu0 0.0
        %4430 = vmatprep.subr.mxu0 0.0
        %4431 = vmatpush1.msra.mxu0 0.0
        %4432 = vmatprep.subr.mxu0 0.0
        %4433 = vmatpush1.msra.mxu0 0.0
        %4434 = vmatprep.subr.mxu0 0.0
        %4435 = vmatpush1.msra.mxu0 0.0
        %4436 = vmatprep.subr.mxu0 0.0
        %4437 = vmatpush1.msra.mxu0 0.0
        %4438 = vmatprep.subr.mxu0 0.0
        %4439 = vmatpush1.msra.mxu0 0.0
        %4440 = vmatprep.subr.mxu0 0.0
        %4441 = vmatpush1.msra.mxu0 0.0
        %4442 = vmatprep.subr.mxu0 0.0
        %4443 = vmatpush1.msra.mxu0 0.0
        %4444 = vmatprep.subr.mxu0 0.0
        %4445 = vmatpush1.msra.mxu0 0.0
        %4446 = vmatprep.subr.mxu0 0.0
        %4447 = vmatpush1.msra.mxu0 0.0
        %4448 = vmatprep.subr.mxu0 0.0
        %4449 = vmatpush1.msra.mxu0 0.0
        %4450 = vmatprep.subr.mxu0 0.0
        %4451 = vmatpush1.msra.mxu0 0.0
        %4452 = vmatprep.subr.mxu0 0.0
        %4453 = vmatpush1.msra.mxu0 0.0
        %4454 = vmatprep.subr.mxu0 0.0
        %4455 = vmatpush1.msra.mxu0 0.0
        %4456 = vmatprep.subr.mxu0 0.0
        %4457 = vmatpush1.msra.mxu0 0.0
        %4458 = vmatprep.subr.mxu0 0.0
        %4459 = vmatpush1.msra.mxu0 0.0
        %4460 = vmatprep.subr.mxu0 0.0
        %4461 = vmatpush1.msra.mxu0 0.0
        %4462 = vmatprep.subr.mxu0 0.0
        %4463 = vmatpush1.msra.mxu0 0.0
        %4464 = vmatprep.subr.mxu0 0.0
        %4465 = vmatpush1.msra.mxu0 0.0
        %4466 = vmatprep.subr.mxu0 0.0
        %4467 = vmatpush1.msra.mxu0 0.0
        %4468 = vmatprep.subr.mxu0 0.0
        %4469 = vmatpush1.msra.mxu0 0.0
        %4470 = vmatprep.mubr.f32.mxu0 0.0
        %v4471 = vand.u32 %v1408, 4294901760
        %v4472 = vsub.f32 %v1408, %v4471
        %4473 = vmatmul.mubr.f32.gmra.mrb[0].mxu0 %v4472
        %v4474 = vpop.f32.mrb[0].mxu0
        %v4475 = vadd.f32 %v4401, %v4474
        %v4476 = vpop.f32.mrb[0].mxu0
        %4477 = vdwg.mxu0
        %4478 = vmatprep.subr.mxu0 0.0
        %v4479 = vand.u32 %v4250, 4294901760
        %4480 = vmatpush1.msra.mxu0 %v4479
        %4481 = vmatprep.subr.mxu0 0.0
        %4482 = vmatpush1.msra.mxu0 0.0
        %4483 = vmatprep.subr.mxu0 0.0
        %4484 = vmatpush1.msra.mxu0 0.0
        %4485 = vmatprep.subr.mxu0 0.0
        %4486 = vmatpush1.msra.mxu0 0.0
        %4487 = vmatprep.subr.mxu0 0.0
        %4488 = vmatpush1.msra.mxu0 0.0
        %4489 = vmatprep.subr.mxu0 0.0
        %4490 = vmatpush1.msra.mxu0 0.0
        %4491 = vmatprep.subr.mxu0 0.0
        %4492 = vmatpush1.msra.mxu0 0.0
        %4493 = vmatprep.subr.mxu0 0.0
        %4494 = vmatpush1.msra.mxu0 0.0
        %4495 = vmatprep.subr.mxu0 0.0
        %4496 = vmatpush1.msra.mxu0 0.0
        %4497 = vmatprep.subr.mxu0 0.0
        %4498 = vmatpush1.msra.mxu0 0.0
        %4499 = vmatprep.subr.mxu0 0.0
        %4500 = vmatpush1.msra.mxu0 0.0
        %4501 = vmatprep.subr.mxu0 0.0
        %4502 = vmatpush1.msra.mxu0 0.0
        %4503 = vmatprep.subr.mxu0 0.0
        %4504 = vmatpush1.msra.mxu0 0.0
        %4505 = vmatprep.subr.mxu0 0.0
        %4506 = vmatpush1.msra.mxu0 0.0
        %4507 = vmatprep.subr.mxu0 0.0
        %4508 = vmatpush1.msra.mxu0 0.0
        %4509 = vmatprep.subr.mxu0 0.0
        %4510 = vmatpush1.msra.mxu0 0.0
        %4511 = vmatprep.subr.mxu0 0.0
        %4512 = vmatpush1.msra.mxu0 0.0
        %4513 = vmatprep.subr.mxu0 0.0
        %4514 = vmatpush1.msra.mxu0 0.0
        %4515 = vmatprep.subr.mxu0 0.0
        %4516 = vmatpush1.msra.mxu0 0.0
        %4517 = vmatprep.subr.mxu0 0.0
        %4518 = vmatpush1.msra.mxu0 0.0
        %4519 = vmatprep.subr.mxu0 0.0
        %4520 = vmatpush1.msra.mxu0 0.0
        %4521 = vmatprep.subr.mxu0 0.0
        %4522 = vmatpush1.msra.mxu0 0.0
        %4523 = vmatprep.subr.mxu0 0.0
        %4524 = vmatpush1.msra.mxu0 0.0
        %4525 = vmatprep.subr.mxu0 0.0
        %4526 = vmatpush1.msra.mxu0 0.0
        %4527 = vmatprep.subr.mxu0 0.0
        %4528 = vmatpush1.msra.mxu0 0.0
        %4529 = vmatprep.subr.mxu0 0.0
        %4530 = vmatpush1.msra.mxu0 0.0
        %4531 = vmatprep.subr.mxu0 0.0
        %4532 = vmatpush1.msra.mxu0 0.0
        %4533 = vmatprep.subr.mxu0 0.0
        %4534 = vmatpush1.msra.mxu0 0.0
        %4535 = vmatprep.subr.mxu0 0.0
        %4536 = vmatpush1.msra.mxu0 0.0
        %4537 = vmatprep.subr.mxu0 0.0
        %4538 = vmatpush1.msra.mxu0 0.0
        %4539 = vmatprep.subr.mxu0 0.0
        %4540 = vmatpush1.msra.mxu0 0.0
        %4541 = vmatprep.subr.mxu0 0.0
        %4542 = vmatpush1.msra.mxu0 0.0
        %4543 = vmatprep.mubr.f32.mxu0 0.0
        %v4544 = vand.u32 %v1408, 4294901760
        %v4545 = vsub.f32 %v1408, %v4544
        %v4546 = vand.u32 %v4545, 4294901760
        %4547 = vmatmul.mubr.f32.gmra.mrb[0].mxu0 %v4546
        %v4548 = vpop.f32.mrb[0].mxu0
        %v4549 = vadd.f32 %v4475, %v4548
        %v4550 = vpop.f32.mrb[0].mxu0
        %4551 = vdwg.mxu0
        %4552 = vmatprep.subr.mxu0 0.0
        %v4553 = vand.u32 %v4250, 4294901760
        %v4554 = vsub.f32 %v4250, %v4553
        %v4555 = vand.u32 %v4554, 4294901760
        %4556 = vmatpush1.msra.mxu0 %v4555
        %4557 = vmatprep.subr.mxu0 0.0
        %4558 = vmatpush1.msra.mxu0 0.0
        %4559 = vmatprep.subr.mxu0 0.0
        %4560 = vmatpush1.msra.mxu0 0.0
        %4561 = vmatprep.subr.mxu0 0.0
        %4562 = vmatpush1.msra.mxu0 0.0
        %4563 = vmatprep.subr.mxu0 0.0
        %4564 = vmatpush1.msra.mxu0 0.0
        %4565 = vmatprep.subr.mxu0 0.0
        %4566 = vmatpush1.msra.mxu0 0.0
        %4567 = vmatprep.subr.mxu0 0.0
        %4568 = vmatpush1.msra.mxu0 0.0
        %4569 = vmatprep.subr.mxu0 0.0
        %4570 = vmatpush1.msra.mxu0 0.0
        %4571 = vmatprep.subr.mxu0 0.0
        %4572 = vmatpush1.msra.mxu0 0.0
        %4573 = vmatprep.subr.mxu0 0.0
        %4574 = vmatpush1.msra.mxu0 0.0
        %4575 = vmatprep.subr.mxu0 0.0
        %4576 = vmatpush1.msra.mxu0 0.0
        %4577 = vmatprep.subr.mxu0 0.0
        %4578 = vmatpush1.msra.mxu0 0.0
        %4579 = vmatprep.subr.mxu0 0.0
        %4580 = vmatpush1.msra.mxu0 0.0
        %4581 = vmatprep.subr.mxu0 0.0
        %4582 = vmatpush1.msra.mxu0 0.0
        %4583 = vmatprep.subr.mxu0 0.0
        %4584 = vmatpush1.msra.mxu0 0.0
        %4585 = vmatprep.subr.mxu0 0.0
        %4586 = vmatpush1.msra.mxu0 0.0
        %4587 = vmatprep.subr.mxu0 0.0
        %4588 = vmatpush1.msra.mxu0 0.0
        %4589 = vmatprep.subr.mxu0 0.0
        %4590 = vmatpush1.msra.mxu0 0.0
        %4591 = vmatprep.subr.mxu0 0.0
        %4592 = vmatpush1.msra.mxu0 0.0
        %4593 = vmatprep.subr.mxu0 0.0
        %4594 = vmatpush1.msra.mxu0 0.0
        %4595 = vmatprep.subr.mxu0 0.0
        %4596 = vmatpush1.msra.mxu0 0.0
        %4597 = vmatprep.subr.mxu0 0.0
        %4598 = vmatpush1.msra.mxu0 0.0
        %4599 = vmatprep.subr.mxu0 0.0
        %4600 = vmatpush1.msra.mxu0 0.0
        %4601 = vmatprep.subr.mxu0 0.0
        %4602 = vmatpush1.msra.mxu0 0.0
        %4603 = vmatprep.subr.mxu0 0.0
        %4604 = vmatpush1.msra.mxu0 0.0
        %4605 = vmatprep.subr.mxu0 0.0
        %4606 = vmatpush1.msra.mxu0 0.0
        %4607 = vmatprep.subr.mxu0 0.0
        %4608 = vmatpush1.msra.mxu0 0.0
        %4609 = vmatprep.subr.mxu0 0.0
        %4610 = vmatpush1.msra.mxu0 0.0
        %4611 = vmatprep.subr.mxu0 0.0
        %4612 = vmatpush1.msra.mxu0 0.0
        %4613 = vmatprep.subr.mxu0 0.0
        %4614 = vmatpush1.msra.mxu0 0.0
        %4615 = vmatprep.subr.mxu0 0.0
        %4616 = vmatpush1.msra.mxu0 0.0
        %4617 = vmatprep.subr.mxu0 0.0
        %4618 = vmatpush1.msra.mxu0 0.0
        %4619 = vmatprep.mubr.f32.mxu0 0.0
        %v4620 = vand.u32 %v1408, 4294901760
        %4621 = vmatmul.mubr.f32.gmra.mrb[0].mxu0 %v4620
        %v4622 = vpop.f32.mrb[0].mxu0
        %v4623 = vadd.f32 %v4549, %v4622
        %v4624 = vpop.f32.mrb[0].mxu0
        %4625 = vdwg.mxu0
        %4626 = vmatprep.subr.mxu0 0.0
        %v4627 = vand.u32 %v4250, 4294901760
        %4628 = vmatpush1.msra.mxu0 %v4627
        %4629 = vmatprep.subr.mxu0 0.0
        %4630 = vmatpush1.msra.mxu0 0.0
        %4631 = vmatprep.subr.mxu0 0.0
        %4632 = vmatpush1.msra.mxu0 0.0
        %4633 = vmatprep.subr.mxu0 0.0
        %4634 = vmatpush1.msra.mxu0 0.0
        %4635 = vmatprep.subr.mxu0 0.0
        %4636 = vmatpush1.msra.mxu0 0.0
        %4637 = vmatprep.subr.mxu0 0.0
        %4638 = vmatpush1.msra.mxu0 0.0
        %4639 = vmatprep.subr.mxu0 0.0
        %4640 = vmatpush1.msra.mxu0 0.0
        %4641 = vmatprep.subr.mxu0 0.0
        %4642 = vmatpush1.msra.mxu0 0.0
        %4643 = vmatprep.subr.mxu0 0.0
        %4644 = vmatpush1.msra.mxu0 0.0
        %4645 = vmatprep.subr.mxu0 0.0
        %4646 = vmatpush1.msra.mxu0 0.0
        %4647 = vmatprep.subr.mxu0 0.0
        %4648 = vmatpush1.msra.mxu0 0.0
        %4649 = vmatprep.subr.mxu0 0.0
        %4650 = vmatpush1.msra.mxu0 0.0
        %4651 = vmatprep.subr.mxu0 0.0
        %4652 = vmatpush1.msra.mxu0 0.0
        %4653 = vmatprep.subr.mxu0 0.0
        %4654 = vmatpush1.msra.mxu0 0.0
        %4655 = vmatprep.subr.mxu0 0.0
        %4656 = vmatpush1.msra.mxu0 0.0
        %4657 = vmatprep.subr.mxu0 0.0
        %4658 = vmatpush1.msra.mxu0 0.0
        %4659 = vmatprep.subr.mxu0 0.0
        %4660 = vmatpush1.msra.mxu0 0.0
        %4661 = vmatprep.subr.mxu0 0.0
        %4662 = vmatpush1.msra.mxu0 0.0
        %4663 = vmatprep.subr.mxu0 0.0
        %4664 = vmatpush1.msra.mxu0 0.0
        %4665 = vmatprep.subr.mxu0 0.0
        %4666 = vmatpush1.msra.mxu0 0.0
        %4667 = vmatprep.subr.mxu0 0.0
        %4668 = vmatpush1.msra.mxu0 0.0
        %4669 = vmatprep.subr.mxu0 0.0
        %4670 = vmatpush1.msra.mxu0 0.0
        %4671 = vmatprep.subr.mxu0 0.0
        %4672 = vmatpush1.msra.mxu0 0.0
        %4673 = vmatprep.subr.mxu0 0.0
        %4674 = vmatpush1.msra.mxu0 0.0
        %4675 = vmatprep.subr.mxu0 0.0
        %4676 = vmatpush1.msra.mxu0 0.0
        %4677 = vmatprep.subr.mxu0 0.0
        %4678 = vmatpush1.msra.mxu0 0.0
        %4679 = vmatprep.subr.mxu0 0.0
        %4680 = vmatpush1.msra.mxu0 0.0
        %4681 = vmatprep.subr.mxu0 0.0
        %4682 = vmatpush1.msra.mxu0 0.0
        %4683 = vmatprep.subr.mxu0 0.0
        %4684 = vmatpush1.msra.mxu0 0.0
        %4685 = vmatprep.subr.mxu0 0.0
        %4686 = vmatpush1.msra.mxu0 0.0
        %4687 = vmatprep.subr.mxu0 0.0
        %4688 = vmatpush1.msra.mxu0 0.0
        %4689 = vmatprep.subr.mxu0 0.0
        %4690 = vmatpush1.msra.mxu0 0.0
        %4691 = vmatprep.mubr.f32.mxu0 0.0
        %v4692 = vand.u32 %v1408, 4294901760
        %4693 = vmatmul.mubr.f32.gmra.mrb[0].mxu0 %v4692
        %v4694 = vpop.f32.mrb[0].mxu0
        %v4695 = vadd.f32 %v4623, %v4694
        %v4696 = vpop.f32.mrb[0].mxu0
        %4697 = vdwg.mxu0
        %v4699 = vlaneseq
        %v4700 = vshrl.u32 %v4699, 7
        %v4701 = vsub.s32 0, %v4700
        %v4702 = vrot.slane %v3799, %v4701
        %v4704 = vadd.f32 %v4695, %v4702
        %vm4705 = vcmp.gt.f32.partialorder %v4704, 0.0
        %v4706 = vmul.f32 %v4704, 0.01
        %v4707 = vsel %vm4705, %v4704, %v4706
        %v4708 = vld [vmem:[%s20] sm:$0xff]
        %v4709 = vld [vmem:[%s20 + $0x8] sm:$0xff]
        %v4710 = vld [vmem:[%s21] sm:$0x1]
        %v4712 = vlaneseq
        %v4713 = vshrl.u32 %v4712, 7
        %v4714 = vsub.s32 0, %v4713
        %v4715 = vrot.slane %v4710, %v4714
        %v4718 = vsel %vm1896, %v4707, 0
        %4720 = vmatprep.subr.mxu0 0.0
        %v4721 = vand.u32 %v4708, 4294901760
        %4722 = vmatpush1.msra.mxu0 %v4721
        %4723 = vmatprep.subr.mxu0 0.0
        %v4724 = vand.u32 %v4709, 4294901760
        %4725 = vmatpush1.msra.mxu0 %v4724
        %4726 = vmatprep.subr.mxu0 0.0
        %4727 = vmatpush1.msra.mxu0 0.0
        %4728 = vmatprep.subr.mxu0 0.0
        %4729 = vmatpush1.msra.mxu0 0.0
        %4730 = vmatprep.subr.mxu0 0.0
        %4731 = vmatpush1.msra.mxu0 0.0
        %4732 = vmatprep.subr.mxu0 0.0
        %4733 = vmatpush1.msra.mxu0 0.0
        %4734 = vmatprep.subr.mxu0 0.0
        %4735 = vmatpush1.msra.mxu0 0.0
        %4736 = vmatprep.subr.mxu0 0.0
        %4737 = vmatpush1.msra.mxu0 0.0
        %4738 = vmatprep.subr.mxu0 0.0
        %4739 = vmatpush1.msra.mxu0 0.0
        %4740 = vmatprep.subr.mxu0 0.0
        %4741 = vmatpush1.msra.mxu0 0.0
        %4742 = vmatprep.subr.mxu0 0.0
        %4743 = vmatpush1.msra.mxu0 0.0
        %4744 = vmatprep.subr.mxu0 0.0
        %4745 = vmatpush1.msra.mxu0 0.0
        %4746 = vmatprep.subr.mxu0 0.0
        %4747 = vmatpush1.msra.mxu0 0.0
        %4748 = vmatprep.subr.mxu0 0.0
        %4749 = vmatpush1.msra.mxu0 0.0
        %4750 = vmatprep.subr.mxu0 0.0
        %4751 = vmatpush1.msra.mxu0 0.0
        %4752 = vmatprep.subr.mxu0 0.0
        %4753 = vmatpush1.msra.mxu0 0.0
        %4754 = vmatprep.subr.mxu0 0.0
        %4755 = vmatpush1.msra.mxu0 0.0
        %4756 = vmatprep.subr.mxu0 0.0
        %4757 = vmatpush1.msra.mxu0 0.0
        %4758 = vmatprep.subr.mxu0 0.0
        %4759 = vmatpush1.msra.mxu0 0.0
        %4760 = vmatprep.subr.mxu0 0.0
        %4761 = vmatpush1.msra.mxu0 0.0
        %4762 = vmatprep.subr.mxu0 0.0
        %4763 = vmatpush1.msra.mxu0 0.0
        %4764 = vmatprep.subr.mxu0 0.0
        %4765 = vmatpush1.msra.mxu0 0.0
        %4766 = vmatprep.subr.mxu0 0.0
        %4767 = vmatpush1.msra.mxu0 0.0
        %4768 = vmatprep.subr.mxu0 0.0
        %4769 = vmatpush1.msra.mxu0 0.0
        %4770 = vmatprep.subr.mxu0 0.0
        %4771 = vmatpush1.msra.mxu0 0.0
        %4772 = vmatprep.subr.mxu0 0.0
        %4773 = vmatpush1.msra.mxu0 0.0
        %4774 = vmatprep.subr.mxu0 0.0
        %4775 = vmatpush1.msra.mxu0 0.0
        %4776 = vmatprep.subr.mxu0 0.0
        %4777 = vmatpush1.msra.mxu0 0.0
        %4778 = vmatprep.subr.mxu0 0.0
        %4779 = vmatpush1.msra.mxu0 0.0
        %4780 = vmatprep.subr.mxu0 0.0
        %4781 = vmatpush1.msra.mxu0 0.0
        %4782 = vmatprep.subr.mxu0 0.0
        %4783 = vmatpush1.msra.mxu0 0.0
        %4784 = vmatprep.subr.mxu0 0.0
        %4785 = vmatpush1.msra.mxu0 0.0
        %4786 = vmatprep.mubr.f32.mxu0 0.0
        %v4787 = vand.u32 %v4718, 4294901760
        %v4788 = vsub.f32 %v4718, %v4787
        %v4789 = vand.u32 %v4788, 4294901760
        %v4790 = vsub.f32 %v4788, %v4789
        %v4791 = vand.u32 %v4790, 4294901760
        %4792 = vmatmul.mubr.f32.gmra.mrb[0].mxu0 %v4791
        %v4793 = vpop.f32.mrb[0].mxu0
        %v4794 = vadd.f32 %v4715, %v4793
        %v4795 = vpop.f32.mrb[0].mxu0
        %4796 = vdwg.mxu0
        %4797 = vmatprep.subr.mxu0 0.0
        %v4798 = vand.u32 %v4708, 4294901760
        %v4799 = vsub.f32 %v4708, %v4798
        %v4800 = vand.u32 %v4799, 4294901760
        %v4801 = vsub.f32 %v4799, %v4800
        %v4802 = vand.u32 %v4801, 4294901760
        %4803 = vmatpush1.msra.mxu0 %v4802
        %4804 = vmatprep.subr.mxu0 0.0
        %v4805 = vand.u32 %v4709, 4294901760
        %v4806 = vsub.f32 %v4709, %v4805
        %v4807 = vand.u32 %v4806, 4294901760
        %v4808 = vsub.f32 %v4806, %v4807
        %v4809 = vand.u32 %v4808, 4294901760
        %4810 = vmatpush1.msra.mxu0 %v4809
        %4811 = vmatprep.subr.mxu0 0.0
        %4812 = vmatpush1.msra.mxu0 0.0
        %4813 = vmatprep.subr.mxu0 0.0
        %4814 = vmatpush1.msra.mxu0 0.0
        %4815 = vmatprep.subr.mxu0 0.0
        %4816 = vmatpush1.msra.mxu0 0.0
        %4817 = vmatprep.subr.mxu0 0.0
        %4818 = vmatpush1.msra.mxu0 0.0
        %4819 = vmatprep.subr.mxu0 0.0
        %4820 = vmatpush1.msra.mxu0 0.0
        %4821 = vmatprep.subr.mxu0 0.0
        %4822 = vmatpush1.msra.mxu0 0.0
        %4823 = vmatprep.subr.mxu0 0.0
        %4824 = vmatpush1.msra.mxu0 0.0
        %4825 = vmatprep.subr.mxu0 0.0
        %4826 = vmatpush1.msra.mxu0 0.0
        %4827 = vmatprep.subr.mxu0 0.0
        %4828 = vmatpush1.msra.mxu0 0.0
        %4829 = vmatprep.subr.mxu0 0.0
        %4830 = vmatpush1.msra.mxu0 0.0
        %4831 = vmatprep.subr.mxu0 0.0
        %4832 = vmatpush1.msra.mxu0 0.0
        %4833 = vmatprep.subr.mxu0 0.0
        %4834 = vmatpush1.msra.mxu0 0.0
        %4835 = vmatprep.subr.mxu0 0.0
        %4836 = vmatpush1.msra.mxu0 0.0
        %4837 = vmatprep.subr.mxu0 0.0
        %4838 = vmatpush1.msra.mxu0 0.0
        %4839 = vmatprep.subr.mxu0 0.0
        %4840 = vmatpush1.msra.mxu0 0.0
        %4841 = vmatprep.subr.mxu0 0.0
        %4842 = vmatpush1.msra.mxu0 0.0
        %4843 = vmatprep.subr.mxu0 0.0
        %4844 = vmatpush1.msra.mxu0 0.0
        %4845 = vmatprep.subr.mxu0 0.0
        %4846 = vmatpush1.msra.mxu0 0.0
        %4847 = vmatprep.subr.mxu0 0.0
        %4848 = vmatpush1.msra.mxu0 0.0
        %4849 = vmatprep.subr.mxu0 0.0
        %4850 = vmatpush1.msra.mxu0 0.0
        %4851 = vmatprep.subr.mxu0 0.0
        %4852 = vmatpush1.msra.mxu0 0.0
        %4853 = vmatprep.subr.mxu0 0.0
        %4854 = vmatpush1.msra.mxu0 0.0
        %4855 = vmatprep.subr.mxu0 0.0
        %4856 = vmatpush1.msra.mxu0 0.0
        %4857 = vmatprep.subr.mxu0 0.0
        %4858 = vmatpush1.msra.mxu0 0.0
        %4859 = vmatprep.subr.mxu0 0.0
        %4860 = vmatpush1.msra.mxu0 0.0
        %4861 = vmatprep.subr.mxu0 0.0
        %4862 = vmatpush1.msra.mxu0 0.0
        %4863 = vmatprep.subr.mxu0 0.0
        %4864 = vmatpush1.msra.mxu0 0.0
        %4865 = vmatprep.subr.mxu0 0.0
        %4866 = vmatpush1.msra.mxu0 0.0
        %4867 = vmatprep.subr.mxu0 0.0
        %4868 = vmatpush1.msra.mxu0 0.0
        %4869 = vmatprep.subr.mxu0 0.0
        %4870 = vmatpush1.msra.mxu0 0.0
        %4871 = vmatprep.mubr.f32.mxu0 0.0
        %v4872 = vand.u32 %v4718, 4294901760
        %4873 = vmatmul.mubr.f32.gmra.mrb[0].mxu0 %v4872
        %v4874 = vpop.f32.mrb[0].mxu0
        %v4875 = vadd.f32 %v4794, %v4874
        %v4876 = vpop.f32.mrb[0].mxu0
        %4877 = vdwg.mxu0
        %4878 = vmatprep.subr.mxu0 0.0
        %v4879 = vand.u32 %v4708, 4294901760
        %v4880 = vsub.f32 %v4708, %v4879
        %4881 = vmatpush1.msra.mxu0 %v4880
        %4882 = vmatprep.subr.mxu0 0.0
        %v4883 = vand.u32 %v4709, 4294901760
        %v4884 = vsub.f32 %v4709, %v4883
        %4885 = vmatpush1.msra.mxu0 %v4884
        %4886 = vmatprep.subr.mxu0 0.0
        %4887 = vmatpush1.msra.mxu0 0.0
        %4888 = vmatprep.subr.mxu0 0.0
        %4889 = vmatpush1.msra.mxu0 0.0
        %4890 = vmatprep.subr.mxu0 0.0
        %4891 = vmatpush1.msra.mxu0 0.0
        %4892 = vmatprep.subr.mxu0 0.0
        %4893 = vmatpush1.msra.mxu0 0.0
        %4894 = vmatprep.subr.mxu0 0.0
        %4895 = vmatpush1.msra.mxu0 0.0
        %4896 = vmatprep.subr.mxu0 0.0
        %4897 = vmatpush1.msra.mxu0 0.0
        %4898 = vmatprep.subr.mxu0 0.0
        %4899 = vmatpush1.msra.mxu0 0.0
        %4900 = vmatprep.subr.mxu0 0.0
        %4901 = vmatpush1.msra.mxu0 0.0
        %4902 = vmatprep.subr.mxu0 0.0
        %4903 = vmatpush1.msra.mxu0 0.0
        %4904 = vmatprep.subr.mxu0 0.0
        %4905 = vmatpush1.msra.mxu0 0.0
        %4906 = vmatprep.subr.mxu0 0.0
        %4907 = vmatpush1.msra.mxu0 0.0
        %4908 = vmatprep.subr.mxu0 0.0
        %4909 = vmatpush1.msra.mxu0 0.0
        %4910 = vmatprep.subr.mxu0 0.0
        %4911 = vmatpush1.msra.mxu0 0.0
        %4912 = vmatprep.subr.mxu0 0.0
        %4913 = vmatpush1.msra.mxu0 0.0
        %4914 = vmatprep.subr.mxu0 0.0
        %4915 = vmatpush1.msra.mxu0 0.0
        %4916 = vmatprep.subr.mxu0 0.0
        %4917 = vmatpush1.msra.mxu0 0.0
        %4918 = vmatprep.subr.mxu0 0.0
        %4919 = vmatpush1.msra.mxu0 0.0
        %4920 = vmatprep.subr.mxu0 0.0
        %4921 = vmatpush1.msra.mxu0 0.0
        %4922 = vmatprep.subr.mxu0 0.0
        %4923 = vmatpush1.msra.mxu0 0.0
        %4924 = vmatprep.subr.mxu0 0.0
        %4925 = vmatpush1.msra.mxu0 0.0
        %4926 = vmatprep.subr.mxu0 0.0
        %4927 = vmatpush1.msra.mxu0 0.0
        %4928 = vmatprep.subr.mxu0 0.0
        %4929 = vmatpush1.msra.mxu0 0.0
        %4930 = vmatprep.subr.mxu0 0.0
        %4931 = vmatpush1.msra.mxu0 0.0
        %4932 = vmatprep.subr.mxu0 0.0
        %4933 = vmatpush1.msra.mxu0 0.0
        %4934 = vmatprep.subr.mxu0 0.0
        %4935 = vmatpush1.msra.mxu0 0.0
        %4936 = vmatprep.subr.mxu0 0.0
        %4937 = vmatpush1.msra.mxu0 0.0
        %4938 = vmatprep.subr.mxu0 0.0
        %4939 = vmatpush1.msra.mxu0 0.0
        %4940 = vmatprep.subr.mxu0 0.0
        %4941 = vmatpush1.msra.mxu0 0.0
        %4942 = vmatprep.subr.mxu0 0.0
        %4943 = vmatpush1.msra.mxu0 0.0
        %4944 = vmatprep.subr.mxu0 0.0
        %4945 = vmatpush1.msra.mxu0 0.0
        %4946 = vmatprep.mubr.f32.mxu0 0.0
        %v4947 = vand.u32 %v4718, 4294901760
        %v4948 = vsub.f32 %v4718, %v4947
        %4949 = vmatmul.mubr.f32.gmra.mrb[0].mxu0 %v4948
        %v4950 = vpop.f32.mrb[0].mxu0
        %v4951 = vadd.f32 %v4875, %v4950
        %v4952 = vpop.f32.mrb[0].mxu0
        %4953 = vdwg.mxu0
        %4954 = vmatprep.subr.mxu0 0.0
        %v4955 = vand.u32 %v4708, 4294901760
        %4956 = vmatpush1.msra.mxu0 %v4955
        %4957 = vmatprep.subr.mxu0 0.0
        %v4958 = vand.u32 %v4709, 4294901760
        %4959 = vmatpush1.msra.mxu0 %v4958
        %4960 = vmatprep.subr.mxu0 0.0
        %4961 = vmatpush1.msra.mxu0 0.0
        %4962 = vmatprep.subr.mxu0 0.0
        %4963 = vmatpush1.msra.mxu0 0.0
        %4964 = vmatprep.subr.mxu0 0.0
        %4965 = vmatpush1.msra.mxu0 0.0
        %4966 = vmatprep.subr.mxu0 0.0
        %4967 = vmatpush1.msra.mxu0 0.0
        %4968 = vmatprep.subr.mxu0 0.0
        %4969 = vmatpush1.msra.mxu0 0.0
        %4970 = vmatprep.subr.mxu0 0.0
        %4971 = vmatpush1.msra.mxu0 0.0
        %4972 = vmatprep.subr.mxu0 0.0
        %4973 = vmatpush1.msra.mxu0 0.0
        %4974 = vmatprep.subr.mxu0 0.0
        %4975 = vmatpush1.msra.mxu0 0.0
        %4976 = vmatprep.subr.mxu0 0.0
        %4977 = vmatpush1.msra.mxu0 0.0
        %4978 = vmatprep.subr.mxu0 0.0
        %4979 = vmatpush1.msra.mxu0 0.0
        %4980 = vmatprep.subr.mxu0 0.0
        %4981 = vmatpush1.msra.mxu0 0.0
        %4982 = vmatprep.subr.mxu0 0.0
        %4983 = vmatpush1.msra.mxu0 0.0
        %4984 = vmatprep.subr.mxu0 0.0
        %4985 = vmatpush1.msra.mxu0 0.0
        %4986 = vmatprep.subr.mxu0 0.0
        %4987 = vmatpush1.msra.mxu0 0.0
        %4988 = vmatprep.subr.mxu0 0.0
        %4989 = vmatpush1.msra.mxu0 0.0
        %4990 = vmatprep.subr.mxu0 0.0
        %4991 = vmatpush1.msra.mxu0 0.0
        %4992 = vmatprep.subr.mxu0 0.0
        %4993 = vmatpush1.msra.mxu0 0.0
        %4994 = vmatprep.subr.mxu0 0.0
        %4995 = vmatpush1.msra.mxu0 0.0
        %4996 = vmatprep.subr.mxu0 0.0
        %4997 = vmatpush1.msra.mxu0 0.0
        %4998 = vmatprep.subr.mxu0 0.0
        %4999 = vmatpush1.msra.mxu0 0.0
        %5000 = vmatprep.subr.mxu0 0.0
        %5001 = vmatpush1.msra.mxu0 0.0
        %5002 = vmatprep.subr.mxu0 0.0
        %5003 = vmatpush1.msra.mxu0 0.0
        %5004 = vmatprep.subr.mxu0 0.0
        %5005 = vmatpush1.msra.mxu0 0.0
        %5006 = vmatprep.subr.mxu0 0.0
        %5007 = vmatpush1.msra.mxu0 0.0
        %5008 = vmatprep.subr.mxu0 0.0
        %5009 = vmatpush1.msra.mxu0 0.0
        %5010 = vmatprep.subr.mxu0 0.0
        %5011 = vmatpush1.msra.mxu0 0.0
        %5012 = vmatprep.subr.mxu0 0.0
        %5013 = vmatpush1.msra.mxu0 0.0
        %5014 = vmatprep.subr.mxu0 0.0
        %5015 = vmatpush1.msra.mxu0 0.0
        %5016 = vmatprep.subr.mxu0 0.0
        %5017 = vmatpush1.msra.mxu0 0.0
        %5018 = vmatprep.subr.mxu0 0.0
        %5019 = vmatpush1.msra.mxu0 0.0
        %5020 = vmatprep.mubr.f32.mxu0 0.0
        %v5021 = vand.u32 %v4718, 4294901760
        %v5022 = vsub.f32 %v4718, %v5021
        %v5023 = vand.u32 %v5022, 4294901760
        %5024 = vmatmul.mubr.f32.gmra.mrb[0].mxu0 %v5023
        %v5025 = vpop.f32.mrb[0].mxu0
        %v5026 = vadd.f32 %v4951, %v5025
        %v5027 = vpop.f32.mrb[0].mxu0
        %5028 = vdwg.mxu0
        %5029 = vmatprep.subr.mxu0 0.0
        %v5030 = vand.u32 %v4708, 4294901760
        %v5031 = vsub.f32 %v4708, %v5030
        %v5032 = vand.u32 %v5031, 4294901760
        %5033 = vmatpush1.msra.mxu0 %v5032
        %5034 = vmatprep.subr.mxu0 0.0
        %v5035 = vand.u32 %v4709, 4294901760
        %v5036 = vsub.f32 %v4709, %v5035
        %v5037 = vand.u32 %v5036, 4294901760
        %5038 = vmatpush1.msra.mxu0 %v5037
        %5039 = vmatprep.subr.mxu0 0.0
        %5040 = vmatpush1.msra.mxu0 0.0
        %5041 = vmatprep.subr.mxu0 0.0
        %5042 = vmatpush1.msra.mxu0 0.0
        %5043 = vmatprep.subr.mxu0 0.0
        %5044 = vmatpush1.msra.mxu0 0.0
        %5045 = vmatprep.subr.mxu0 0.0
        %5046 = vmatpush1.msra.mxu0 0.0
        %5047 = vmatprep.subr.mxu0 0.0
        %5048 = vmatpush1.msra.mxu0 0.0
        %5049 = vmatprep.subr.mxu0 0.0
        %5050 = vmatpush1.msra.mxu0 0.0
        %5051 = vmatprep.subr.mxu0 0.0
        %5052 = vmatpush1.msra.mxu0 0.0
        %5053 = vmatprep.subr.mxu0 0.0
        %5054 = vmatpush1.msra.mxu0 0.0
        %5055 = vmatprep.subr.mxu0 0.0
        %5056 = vmatpush1.msra.mxu0 0.0
        %5057 = vmatprep.subr.mxu0 0.0
        %5058 = vmatpush1.msra.mxu0 0.0
        %5059 = vmatprep.subr.mxu0 0.0
        %5060 = vmatpush1.msra.mxu0 0.0
        %5061 = vmatprep.subr.mxu0 0.0
        %5062 = vmatpush1.msra.mxu0 0.0
        %5063 = vmatprep.subr.mxu0 0.0
        %5064 = vmatpush1.msra.mxu0 0.0
        %5065 = vmatprep.subr.mxu0 0.0
        %5066 = vmatpush1.msra.mxu0 0.0
        %5067 = vmatprep.subr.mxu0 0.0
        %5068 = vmatpush1.msra.mxu0 0.0
        %5069 = vmatprep.subr.mxu0 0.0
        %5070 = vmatpush1.msra.mxu0 0.0
        %5071 = vmatprep.subr.mxu0 0.0
        %5072 = vmatpush1.msra.mxu0 0.0
        %5073 = vmatprep.subr.mxu0 0.0
        %5074 = vmatpush1.msra.mxu0 0.0
        %5075 = vmatprep.subr.mxu0 0.0
        %5076 = vmatpush1.msra.mxu0 0.0
        %5077 = vmatprep.subr.mxu0 0.0
        %5078 = vmatpush1.msra.mxu0 0.0
        %5079 = vmatprep.subr.mxu0 0.0
        %5080 = vmatpush1.msra.mxu0 0.0
        %5081 = vmatprep.subr.mxu0 0.0
        %5082 = vmatpush1.msra.mxu0 0.0
        %5083 = vmatprep.subr.mxu0 0.0
        %5084 = vmatpush1.msra.mxu0 0.0
        %5085 = vmatprep.subr.mxu0 0.0
        %5086 = vmatpush1.msra.mxu0 0.0
        %5087 = vmatprep.subr.mxu0 0.0
        %5088 = vmatpush1.msra.mxu0 0.0
        %5089 = vmatprep.subr.mxu0 0.0
        %5090 = vmatpush1.msra.mxu0 0.0
        %5091 = vmatprep.subr.mxu0 0.0
        %5092 = vmatpush1.msra.mxu0 0.0
        %5093 = vmatprep.subr.mxu0 0.0
        %5094 = vmatpush1.msra.mxu0 0.0
        %5095 = vmatprep.subr.mxu0 0.0
        %5096 = vmatpush1.msra.mxu0 0.0
        %5097 = vmatprep.subr.mxu0 0.0
        %5098 = vmatpush1.msra.mxu0 0.0
        %5099 = vmatprep.mubr.f32.mxu0 0.0
        %v5100 = vand.u32 %v4718, 4294901760
        %5101 = vmatmul.mubr.f32.gmra.mrb[0].mxu0 %v5100
        %v5102 = vpop.f32.mrb[0].mxu0
        %v5103 = vadd.f32 %v5026, %v5102
        %v5104 = vpop.f32.mrb[0].mxu0
        %5105 = vdwg.mxu0
        %5106 = vmatprep.subr.mxu0 0.0
        %v5107 = vand.u32 %v4708, 4294901760
        %5108 = vmatpush1.msra.mxu0 %v5107
        %5109 = vmatprep.subr.mxu0 0.0
        %v5110 = vand.u32 %v4709, 4294901760
        %5111 = vmatpush1.msra.mxu0 %v5110
        %5112 = vmatprep.subr.mxu0 0.0
        %5113 = vmatpush1.msra.mxu0 0.0
        %5114 = vmatprep.subr.mxu0 0.0
        %5115 = vmatpush1.msra.mxu0 0.0
        %5116 = vmatprep.subr.mxu0 0.0
        %5117 = vmatpush1.msra.mxu0 0.0
        %5118 = vmatprep.subr.mxu0 0.0
        %5119 = vmatpush1.msra.mxu0 0.0
        %5120 = vmatprep.subr.mxu0 0.0
        %5121 = vmatpush1.msra.mxu0 0.0
        %5122 = vmatprep.subr.mxu0 0.0
        %5123 = vmatpush1.msra.mxu0 0.0
        %5124 = vmatprep.subr.mxu0 0.0
        %5125 = vmatpush1.msra.mxu0 0.0
        %5126 = vmatprep.subr.mxu0 0.0
        %5127 = vmatpush1.msra.mxu0 0.0
        %5128 = vmatprep.subr.mxu0 0.0
        %5129 = vmatpush1.msra.mxu0 0.0
        %5130 = vmatprep.subr.mxu0 0.0
        %5131 = vmatpush1.msra.mxu0 0.0
        %5132 = vmatprep.subr.mxu0 0.0
        %5133 = vmatpush1.msra.mxu0 0.0
        %5134 = vmatprep.subr.mxu0 0.0
        %5135 = vmatpush1.msra.mxu0 0.0
        %5136 = vmatprep.subr.mxu0 0.0
        %5137 = vmatpush1.msra.mxu0 0.0
        %5138 = vmatprep.subr.mxu0 0.0
        %5139 = vmatpush1.msra.mxu0 0.0
        %5140 = vmatprep.subr.mxu0 0.0
        %5141 = vmatpush1.msra.mxu0 0.0
        %5142 = vmatprep.subr.mxu0 0.0
        %5143 = vmatpush1.msra.mxu0 0.0
        %5144 = vmatprep.subr.mxu0 0.0
        %5145 = vmatpush1.msra.mxu0 0.0
        %5146 = vmatprep.subr.mxu0 0.0
        %5147 = vmatpush1.msra.mxu0 0.0
        %5148 = vmatprep.subr.mxu0 0.0
        %5149 = vmatpush1.msra.mxu0 0.0
        %5150 = vmatprep.subr.mxu0 0.0
        %5151 = vmatpush1.msra.mxu0 0.0
        %5152 = vmatprep.subr.mxu0 0.0
        %5153 = vmatpush1.msra.mxu0 0.0
        %5154 = vmatprep.subr.mxu0 0.0
        %5155 = vmatpush1.msra.mxu0 0.0
        %5156 = vmatprep.subr.mxu0 0.0
        %5157 = vmatpush1.msra.mxu0 0.0
        %5158 = vmatprep.subr.mxu0 0.0
        %5159 = vmatpush1.msra.mxu0 0.0
        %5160 = vmatprep.subr.mxu0 0.0
        %5161 = vmatpush1.msra.mxu0 0.0
        %5162 = vmatprep.subr.mxu0 0.0
        %5163 = vmatpush1.msra.mxu0 0.0
        %5164 = vmatprep.subr.mxu0 0.0
        %5165 = vmatpush1.msra.mxu0 0.0
        %5166 = vmatprep.subr.mxu0 0.0
        %5167 = vmatpush1.msra.mxu0 0.0
        %5168 = vmatprep.subr.mxu0 0.0
        %5169 = vmatpush1.msra.mxu0 0.0
        %5170 = vmatprep.subr.mxu0 0.0
        %5171 = vmatpush1.msra.mxu0 0.0
        %5172 = vmatprep.mubr.f32.mxu0 0.0
        %v5173 = vand.u32 %v4718, 4294901760
        %5174 = vmatmul.mubr.f32.gmra.mrb[0].mxu0 %v5173
        %v5175 = vpop.f32.mrb[0].mxu0
        %v5176 = vadd.f32 %v5103, %v5175
        %v5177 = vpop.f32.mrb[0].mxu0
        %5178 = vdwg.mxu0
        %v5179 = vsel %vm2359, %v5176, 0.0
        %v5180 = vrot.slane %v5179, 4
        %v5181 = vadd.f32 %v5179, %v5180
        %v5182 = vrot.slane %v5181, 2
        %v5183 = vadd.f32 %v5181, %v5182
        %v5184 = vrot.slane %v5183, 1
        %v5185 = vadd.f32 %v5183, %v5184
        %v5186 = vmul.f32 %v5185, %v2367
        %v5187 = vld [vmem:[%s22] sm:$0x7]
        %v5188 = vld [vmem:[%s23] sm:$0xff]
        %v5189 = vld [vmem:[%s24] sm:$0xff]
        %v5190 = vld [vmem:[%s25] sm:$0x1]
        %v5192 = vsel %vm2359, %v5186, 0
        %5194 = vmatprep.subr.mxu0 0.0
        %v5195 = vand.u32 %v5188, 4294901760
        %5196 = vmatpush1.msra.mxu0 %v5195
        %5197 = vmatprep.subr.mxu0 0.0
        %5198 = vmatpush1.msra.mxu0 0.0
        %5199 = vmatprep.subr.mxu0 0.0
        %5200 = vmatpush1.msra.mxu0 0.0
        %5201 = vmatprep.subr.mxu0 0.0
        %5202 = vmatpush1.msra.mxu0 0.0
        %5203 = vmatprep.subr.mxu0 0.0
        %5204 = vmatpush1.msra.mxu0 0.0
        %5205 = vmatprep.subr.mxu0 0.0
        %5206 = vmatpush1.msra.mxu0 0.0
        %5207 = vmatprep.subr.mxu0 0.0
        %5208 = vmatpush1.msra.mxu0 0.0
        %5209 = vmatprep.subr.mxu0 0.0
        %5210 = vmatpush1.msra.mxu0 0.0
        %5211 = vmatprep.subr.mxu0 0.0
        %5212 = vmatpush1.msra.mxu0 0.0
        %5213 = vmatprep.subr.mxu0 0.0
        %5214 = vmatpush1.msra.mxu0 0.0
        %5215 = vmatprep.subr.mxu0 0.0
        %5216 = vmatpush1.msra.mxu0 0.0
        %5217 = vmatprep.subr.mxu0 0.0
        %5218 = vmatpush1.msra.mxu0 0.0
        %5219 = vmatprep.subr.mxu0 0.0
        %5220 = vmatpush1.msra.mxu0 0.0
        %5221 = vmatprep.subr.mxu0 0.0
        %5222 = vmatpush1.msra.mxu0 0.0
        %5223 = vmatprep.subr.mxu0 0.0
        %5224 = vmatpush1.msra.mxu0 0.0
        %5225 = vmatprep.subr.mxu0 0.0
        %5226 = vmatpush1.msra.mxu0 0.0
        %5227 = vmatprep.subr.mxu0 0.0
        %5228 = vmatpush1.msra.mxu0 0.0
        %5229 = vmatprep.subr.mxu0 0.0
        %5230 = vmatpush1.msra.mxu0 0.0
        %5231 = vmatprep.subr.mxu0 0.0
        %5232 = vmatpush1.msra.mxu0 0.0
        %5233 = vmatprep.subr.mxu0 0.0
        %5234 = vmatpush1.msra.mxu0 0.0
        %5235 = vmatprep.subr.mxu0 0.0
        %5236 = vmatpush1.msra.mxu0 0.0
        %5237 = vmatprep.subr.mxu0 0.0
        %5238 = vmatpush1.msra.mxu0 0.0
        %5239 = vmatprep.subr.mxu0 0.0
        %5240 = vmatpush1.msra.mxu0 0.0
        %5241 = vmatprep.subr.mxu0 0.0
        %5242 = vmatpush1.msra.mxu0 0.0
        %5243 = vmatprep.subr.mxu0 0.0
        %5244 = vmatpush1.msra.mxu0 0.0
        %5245 = vmatprep.subr.mxu0 0.0
        %5246 = vmatpush1.msra.mxu0 0.0
        %5247 = vmatprep.subr.mxu0 0.0
        %5248 = vmatpush1.msra.mxu0 0.0
        %5249 = vmatprep.subr.mxu0 0.0
        %5250 = vmatpush1.msra.mxu0 0.0
        %5251 = vmatprep.subr.mxu0 0.0
        %5252 = vmatpush1.msra.mxu0 0.0
        %5253 = vmatprep.subr.mxu0 0.0
        %5254 = vmatpush1.msra.mxu0 0.0
        %5255 = vmatprep.subr.mxu0 0.0
        %5256 = vmatpush1.msra.mxu0 0.0
        %5257 = vmatprep.subr.mxu0 0.0
        %5258 = vmatpush1.msra.mxu0 0.0
        %5259 = vmatprep.mubr.f32.mxu0 0.0
        %v5260 = vand.u32 %v5192, 4294901760
        %v5261 = vsub.f32 %v5192, %v5260
        %v5262 = vand.u32 %v5261, 4294901760
        %v5263 = vsub.f32 %v5261, %v5262
        %v5264 = vand.u32 %v5263, 4294901760
        %5265 = vmatmul.mubr.f32.gmra.mrb[0].mxu0 %v5264
        %v5266 = vpop.f32.mrb[0].mxu0
        %v5267 = vadd.f32 0.0, %v5266
        %v5268 = vpop.f32.mrb[0].mxu0
        %5269 = vdwg.mxu0
        %5270 = vmatprep.subr.mxu0 0.0
        %v5271 = vand.u32 %v5188, 4294901760
        %v5272 = vsub.f32 %v5188, %v5271
        %v5273 = vand.u32 %v5272, 4294901760
        %v5274 = vsub.f32 %v5272, %v5273
        %v5275 = vand.u32 %v5274, 4294901760
        %5276 = vmatpush1.msra.mxu0 %v5275
        %5277 = vmatprep.subr.mxu0 0.0
        %5278 = vmatpush1.msra.mxu0 0.0
        %5279 = vmatprep.subr.mxu0 0.0
        %5280 = vmatpush1.msra.mxu0 0.0
        %5281 = vmatprep.subr.mxu0 0.0
        %5282 = vmatpush1.msra.mxu0 0.0
        %5283 = vmatprep.subr.mxu0 0.0
        %5284 = vmatpush1.msra.mxu0 0.0
        %5285 = vmatprep.subr.mxu0 0.0
        %5286 = vmatpush1.msra.mxu0 0.0
        %5287 = vmatprep.subr.mxu0 0.0
        %5288 = vmatpush1.msra.mxu0 0.0
        %5289 = vmatprep.subr.mxu0 0.0
        %5290 = vmatpush1.msra.mxu0 0.0
        %5291 = vmatprep.subr.mxu0 0.0
        %5292 = vmatpush1.msra.mxu0 0.0
        %5293 = vmatprep.subr.mxu0 0.0
        %5294 = vmatpush1.msra.mxu0 0.0
        %5295 = vmatprep.subr.mxu0 0.0
        %5296 = vmatpush1.msra.mxu0 0.0
        %5297 = vmatprep.subr.mxu0 0.0
        %5298 = vmatpush1.msra.mxu0 0.0
        %5299 = vmatprep.subr.mxu0 0.0
        %5300 = vmatpush1.msra.mxu0 0.0
        %5301 = vmatprep.subr.mxu0 0.0
        %5302 = vmatpush1.msra.mxu0 0.0
        %5303 = vmatprep.subr.mxu0 0.0
        %5304 = vmatpush1.msra.mxu0 0.0
        %5305 = vmatprep.subr.mxu0 0.0
        %5306 = vmatpush1.msra.mxu0 0.0
        %5307 = vmatprep.subr.mxu0 0.0
        %5308 = vmatpush1.msra.mxu0 0.0
        %5309 = vmatprep.subr.mxu0 0.0
        %5310 = vmatpush1.msra.mxu0 0.0
        %5311 = vmatprep.subr.mxu0 0.0
        %5312 = vmatpush1.msra.mxu0 0.0
        %5313 = vmatprep.subr.mxu0 0.0
        %5314 = vmatpush1.msra.mxu0 0.0
        %5315 = vmatprep.subr.mxu0 0.0
        %5316 = vmatpush1.msra.mxu0 0.0
        %5317 = vmatprep.subr.mxu0 0.0
        %5318 = vmatpush1.msra.mxu0 0.0
        %5319 = vmatprep.subr.mxu0 0.0
        %5320 = vmatpush1.msra.mxu0 0.0
        %5321 = vmatprep.subr.mxu0 0.0
        %5322 = vmatpush1.msra.mxu0 0.0
        %5323 = vmatprep.subr.mxu0 0.0
        %5324 = vmatpush1.msra.mxu0 0.0
        %5325 = vmatprep.subr.mxu0 0.0
        %5326 = vmatpush1.msra.mxu0 0.0
        %5327 = vmatprep.subr.mxu0 0.0
        %5328 = vmatpush1.msra.mxu0 0.0
        %5329 = vmatprep.subr.mxu0 0.0
        %5330 = vmatpush1.msra.mxu0 0.0
        %5331 = vmatprep.subr.mxu0 0.0
        %5332 = vmatpush1.msra.mxu0 0.0
        %5333 = vmatprep.subr.mxu0 0.0
        %5334 = vmatpush1.msra.mxu0 0.0
        %5335 = vmatprep.subr.mxu0 0.0
        %5336 = vmatpush1.msra.mxu0 0.0
        %5337 = vmatprep.subr.mxu0 0.0
        %5338 = vmatpush1.msra.mxu0 0.0
        %5339 = vmatprep.mubr.f32.mxu0 0.0
        %v5340 = vand.u32 %v5192, 4294901760
        %5341 = vmatmul.mubr.f32.gmra.mrb[0].mxu0 %v5340
        %v5342 = vpop.f32.mrb[0].mxu0
        %v5343 = vadd.f32 %v5267, %v5342
        %v5344 = vpop.f32.mrb[0].mxu0
        %5345 = vdwg.mxu0
        %5346 = vmatprep.subr.mxu0 0.0
        %v5347 = vand.u32 %v5188, 4294901760
        %v5348 = vsub.f32 %v5188, %v5347
        %5349 = vmatpush1.msra.mxu0 %v5348
        %5350 = vmatprep.subr.mxu0 0.0
        %5351 = vmatpush1.msra.mxu0 0.0
        %5352 = vmatprep.subr.mxu0 0.0
        %5353 = vmatpush1.msra.mxu0 0.0
        %5354 = vmatprep.subr.mxu0 0.0
        %5355 = vmatpush1.msra.mxu0 0.0
        %5356 = vmatprep.subr.mxu0 0.0
        %5357 = vmatpush1.msra.mxu0 0.0
        %5358 = vmatprep.subr.mxu0 0.0
        %5359 = vmatpush1.msra.mxu0 0.0
        %5360 = vmatprep.subr.mxu0 0.0
        %5361 = vmatpush1.msra.mxu0 0.0
        %5362 = vmatprep.subr.mxu0 0.0
        %5363 = vmatpush1.msra.mxu0 0.0
        %5364 = vmatprep.subr.mxu0 0.0
        %5365 = vmatpush1.msra.mxu0 0.0
        %5366 = vmatprep.subr.mxu0 0.0
        %5367 = vmatpush1.msra.mxu0 0.0
        %5368 = vmatprep.subr.mxu0 0.0
        %5369 = vmatpush1.msra.mxu0 0.0
        %5370 = vmatprep.subr.mxu0 0.0
        %5371 = vmatpush1.msra.mxu0 0.0
        %5372 = vmatprep.subr.mxu0 0.0
        %5373 = vmatpush1.msra.mxu0 0.0
        %5374 = vmatprep.subr.mxu0 0.0
        %5375 = vmatpush1.msra.mxu0 0.0
        %5376 = vmatprep.subr.mxu0 0.0
        %5377 = vmatpush1.msra.mxu0 0.0
        %5378 = vmatprep.subr.mxu0 0.0
        %5379 = vmatpush1.msra.mxu0 0.0
        %5380 = vmatprep.subr.mxu0 0.0
        %5381 = vmatpush1.msra.mxu0 0.0
        %5382 = vmatprep.subr.mxu0 0.0
        %5383 = vmatpush1.msra.mxu0 0.0
        %5384 = vmatprep.subr.mxu0 0.0
        %5385 = vmatpush1.msra.mxu0 0.0
        %5386 = vmatprep.subr.mxu0 0.0
        %5387 = vmatpush1.msra.mxu0 0.0
        %5388 = vmatprep.subr.mxu0 0.0
        %5389 = vmatpush1.msra.mxu0 0.0
        %5390 = vmatprep.subr.mxu0 0.0
        %5391 = vmatpush1.msra.mxu0 0.0
        %5392 = vmatprep.subr.mxu0 0.0
        %5393 = vmatpush1.msra.mxu0 0.0
        %5394 = vmatprep.subr.mxu0 0.0
        %5395 = vmatpush1.msra.mxu0 0.0
        %5396 = vmatprep.subr.mxu0 0.0
        %5397 = vmatpush1.msra.mxu0 0.0
        %5398 = vmatprep.subr.mxu0 0.0
        %5399 = vmatpush1.msra.mxu0 0.0
        %5400 = vmatprep.subr.mxu0 0.0
        %5401 = vmatpush1.msra.mxu0 0.0
        %5402 = vmatprep.subr.mxu0 0.0
        %5403 = vmatpush1.msra.mxu0 0.0
        %5404 = vmatprep.subr.mxu0 0.0
        %5405 = vmatpush1.msra.mxu0 0.0
        %5406 = vmatprep.subr.mxu0 0.0
        %5407 = vmatpush1.msra.mxu0 0.0
        %5408 = vmatprep.subr.mxu0 0.0
        %5409 = vmatpush1.msra.mxu0 0.0
        %5410 = vmatprep.subr.mxu0 0.0
        %5411 = vmatpush1.msra.mxu0 0.0
        %5412 = vmatprep.mubr.f32.mxu0 0.0
        %v5413 = vand.u32 %v5192, 4294901760
        %v5414 = vsub.f32 %v5192, %v5413
        %5415 = vmatmul.mubr.f32.gmra.mrb[0].mxu0 %v5414
        %v5416 = vpop.f32.mrb[0].mxu0
        %v5417 = vadd.f32 %v5343, %v5416
        %v5418 = vpop.f32.mrb[0].mxu0
        %5419 = vdwg.mxu0
        %5420 = vmatprep.subr.mxu0 0.0
        %v5421 = vand.u32 %v5188, 4294901760
        %5422 = vmatpush1.msra.mxu0 %v5421
        %5423 = vmatprep.subr.mxu0 0.0
        %5424 = vmatpush1.msra.mxu0 0.0
        %5425 = vmatprep.subr.mxu0 0.0
        %5426 = vmatpush1.msra.mxu0 0.0
        %5427 = vmatprep.subr.mxu0 0.0
        %5428 = vmatpush1.msra.mxu0 0.0
        %5429 = vmatprep.subr.mxu0 0.0
        %5430 = vmatpush1.msra.mxu0 0.0
        %5431 = vmatprep.subr.mxu0 0.0
        %5432 = vmatpush1.msra.mxu0 0.0
        %5433 = vmatprep.subr.mxu0 0.0
        %5434 = vmatpush1.msra.mxu0 0.0
        %5435 = vmatprep.subr.mxu0 0.0
        %5436 = vmatpush1.msra.mxu0 0.0
        %5437 = vmatprep.subr.mxu0 0.0
        %5438 = vmatpush1.msra.mxu0 0.0
        %5439 = vmatprep.subr.mxu0 0.0
        %5440 = vmatpush1.msra.mxu0 0.0
        %5441 = vmatprep.subr.mxu0 0.0
        %5442 = vmatpush1.msra.mxu0 0.0
        %5443 = vmatprep.subr.mxu0 0.0
        %5444 = vmatpush1.msra.mxu0 0.0
        %5445 = vmatprep.subr.mxu0 0.0
        %5446 = vmatpush1.msra.mxu0 0.0
        %5447 = vmatprep.subr.mxu0 0.0
        %5448 = vmatpush1.msra.mxu0 0.0
        %5449 = vmatprep.subr.mxu0 0.0
        %5450 = vmatpush1.msra.mxu0 0.0
        %5451 = vmatprep.subr.mxu0 0.0
        %5452 = vmatpush1.msra.mxu0 0.0
        %5453 = vmatprep.subr.mxu0 0.0
        %5454 = vmatpush1.msra.mxu0 0.0
        %5455 = vmatprep.subr.mxu0 0.0
        %5456 = vmatpush1.msra.mxu0 0.0
        %5457 = vmatprep.subr.mxu0 0.0
        %5458 = vmatpush1.msra.mxu0 0.0
        %5459 = vmatprep.subr.mxu0 0.0
        %5460 = vmatpush1.msra.mxu0 0.0
        %5461 = vmatprep.subr.mxu0 0.0
        %5462 = vmatpush1.msra.mxu0 0.0
        %5463 = vmatprep.subr.mxu0 0.0
        %5464 = vmatpush1.msra.mxu0 0.0
        %5465 = vmatprep.subr.mxu0 0.0
        %5466 = vmatpush1.msra.mxu0 0.0
        %5467 = vmatprep.subr.mxu0 0.0
        %5468 = vmatpush1.msra.mxu0 0.0
        %5469 = vmatprep.subr.mxu0 0.0
        %5470 = vmatpush1.msra.mxu0 0.0
        %5471 = vmatprep.subr.mxu0 0.0
        %5472 = vmatpush1.msra.mxu0 0.0
        %5473 = vmatprep.subr.mxu0 0.0
        %5474 = vmatpush1.msra.mxu0 0.0
        %5475 = vmatprep.subr.mxu0 0.0
        %5476 = vmatpush1.msra.mxu0 0.0
        %5477 = vmatprep.subr.mxu0 0.0
        %5478 = vmatpush1.msra.mxu0 0.0
        %5479 = vmatprep.subr.mxu0 0.0
        %5480 = vmatpush1.msra.mxu0 0.0
        %5481 = vmatprep.subr.mxu0 0.0
        %5482 = vmatpush1.msra.mxu0 0.0
        %5483 = vmatprep.subr.mxu0 0.0
        %5484 = vmatpush1.msra.mxu0 0.0
        %5485 = vmatprep.mubr.f32.mxu0 0.0
        %v5486 = vand.u32 %v5192, 4294901760
        %v5487 = vsub.f32 %v5192, %v5486
        %v5488 = vand.u32 %v5487, 4294901760
        %5489 = vmatmul.mubr.f32.gmra.mrb[0].mxu0 %v5488
        %v5490 = vpop.f32.mrb[0].mxu0
        %v5491 = vadd.f32 %v5417, %v5490
        %v5492 = vpop.f32.mrb[0].mxu0
        %5493 = vdwg.mxu0
        %5494 = vmatprep.subr.mxu0 0.0
        %v5495 = vand.u32 %v5188, 4294901760
        %v5496 = vsub.f32 %v5188, %v5495
        %v5497 = vand.u32 %v5496, 4294901760
        %5498 = vmatpush1.msra.mxu0 %v5497
        %5499 = vmatprep.subr.mxu0 0.0
        %5500 = vmatpush1.msra.mxu0 0.0
        %5501 = vmatprep.subr.mxu0 0.0
        %5502 = vmatpush1.msra.mxu0 0.0
        %5503 = vmatprep.subr.mxu0 0.0
        %5504 = vmatpush1.msra.mxu0 0.0
        %5505 = vmatprep.subr.mxu0 0.0
        %5506 = vmatpush1.msra.mxu0 0.0
        %5507 = vmatprep.subr.mxu0 0.0
        %5508 = vmatpush1.msra.mxu0 0.0
        %5509 = vmatprep.subr.mxu0 0.0
        %5510 = vmatpush1.msra.mxu0 0.0
        %5511 = vmatprep.subr.mxu0 0.0
        %5512 = vmatpush1.msra.mxu0 0.0
        %5513 = vmatprep.subr.mxu0 0.0
        %5514 = vmatpush1.msra.mxu0 0.0
        %5515 = vmatprep.subr.mxu0 0.0
        %5516 = vmatpush1.msra.mxu0 0.0
        %5517 = vmatprep.subr.mxu0 0.0
        %5518 = vmatpush1.msra.mxu0 0.0
        %5519 = vmatprep.subr.mxu0 0.0
        %5520 = vmatpush1.msra.mxu0 0.0
        %5521 = vmatprep.subr.mxu0 0.0
        %5522 = vmatpush1.msra.mxu0 0.0
        %5523 = vmatprep.subr.mxu0 0.0
        %5524 = vmatpush1.msra.mxu0 0.0
        %5525 = vmatprep.subr.mxu0 0.0
        %5526 = vmatpush1.msra.mxu0 0.0
        %5527 = vmatprep.subr.mxu0 0.0
        %5528 = vmatpush1.msra.mxu0 0.0
        %5529 = vmatprep.subr.mxu0 0.0
        %5530 = vmatpush1.msra.mxu0 0.0
        %5531 = vmatprep.subr.mxu0 0.0
        %5532 = vmatpush1.msra.mxu0 0.0
        %5533 = vmatprep.subr.mxu0 0.0
        %5534 = vmatpush1.msra.mxu0 0.0
        %5535 = vmatprep.subr.mxu0 0.0
        %5536 = vmatpush1.msra.mxu0 0.0
        %5537 = vmatprep.subr.mxu0 0.0
        %5538 = vmatpush1.msra.mxu0 0.0
        %5539 = vmatprep.subr.mxu0 0.0
        %5540 = vmatpush1.msra.mxu0 0.0
        %5541 = vmatprep.subr.mxu0 0.0
        %5542 = vmatpush1.msra.mxu0 0.0
        %5543 = vmatprep.subr.mxu0 0.0
        %5544 = vmatpush1.msra.mxu0 0.0
        %5545 = vmatprep.subr.mxu0 0.0
        %5546 = vmatpush1.msra.mxu0 0.0
        %5547 = vmatprep.subr.mxu0 0.0
        %5548 = vmatpush1.msra.mxu0 0.0
        %5549 = vmatprep.subr.mxu0 0.0
        %5550 = vmatpush1.msra.mxu0 0.0
        %5551 = vmatprep.subr.mxu0 0.0
        %5552 = vmatpush1.msra.mxu0 0.0
        %5553 = vmatprep.subr.mxu0 0.0
        %5554 = vmatpush1.msra.mxu0 0.0
        %5555 = vmatprep.subr.mxu0 0.0
        %5556 = vmatpush1.msra.mxu0 0.0
        %5557 = vmatprep.subr.mxu0 0.0
        %5558 = vmatpush1.msra.mxu0 0.0
        %5559 = vmatprep.subr.mxu0 0.0
        %5560 = vmatpush1.msra.mxu0 0.0
        %5561 = vmatprep.mubr.f32.mxu0 0.0
        %v5562 = vand.u32 %v5192, 4294901760
        %5563 = vmatmul.mubr.f32.gmra.mrb[0].mxu0 %v5562
        %v5564 = vpop.f32.mrb[0].mxu0
        %v5565 = vadd.f32 %v5491, %v5564
        %v5566 = vpop.f32.mrb[0].mxu0
        %5567 = vdwg.mxu0
        %5568 = vmatprep.subr.mxu0 0.0
        %v5569 = vand.u32 %v5188, 4294901760
        %5570 = vmatpush1.msra.mxu0 %v5569
        %5571 = vmatprep.subr.mxu0 0.0
        %5572 = vmatpush1.msra.mxu0 0.0
        %5573 = vmatprep.subr.mxu0 0.0
        %5574 = vmatpush1.msra.mxu0 0.0
        %5575 = vmatprep.subr.mxu0 0.0
        %5576 = vmatpush1.msra.mxu0 0.0
        %5577 = vmatprep.subr.mxu0 0.0
        %5578 = vmatpush1.msra.mxu0 0.0
        %5579 = vmatprep.subr.mxu0 0.0
        %5580 = vmatpush1.msra.mxu0 0.0
        %5581 = vmatprep.subr.mxu0 0.0
        %5582 = vmatpush1.msra.mxu0 0.0
        %5583 = vmatprep.subr.mxu0 0.0
        %5584 = vmatpush1.msra.mxu0 0.0
        %5585 = vmatprep.subr.mxu0 0.0
        %5586 = vmatpush1.msra.mxu0 0.0
        %5587 = vmatprep.subr.mxu0 0.0
        %5588 = vmatpush1.msra.mxu0 0.0
        %5589 = vmatprep.subr.mxu0 0.0
        %5590 = vmatpush1.msra.mxu0 0.0
        %5591 = vmatprep.subr.mxu0 0.0
        %5592 = vmatpush1.msra.mxu0 0.0
        %5593 = vmatprep.subr.mxu0 0.0
        %5594 = vmatpush1.msra.mxu0 0.0
        %5595 = vmatprep.subr.mxu0 0.0
        %5596 = vmatpush1.msra.mxu0 0.0
        %5597 = vmatprep.subr.mxu0 0.0
        %5598 = vmatpush1.msra.mxu0 0.0
        %5599 = vmatprep.subr.mxu0 0.0
        %5600 = vmatpush1.msra.mxu0 0.0
        %5601 = vmatprep.subr.mxu0 0.0
        %5602 = vmatpush1.msra.mxu0 0.0
        %5603 = vmatprep.subr.mxu0 0.0
        %5604 = vmatpush1.msra.mxu0 0.0
        %5605 = vmatprep.subr.mxu0 0.0
        %5606 = vmatpush1.msra.mxu0 0.0
        %5607 = vmatprep.subr.mxu0 0.0
        %5608 = vmatpush1.msra.mxu0 0.0
        %5609 = vmatprep.subr.mxu0 0.0
        %5610 = vmatpush1.msra.mxu0 0.0
        %5611 = vmatprep.subr.mxu0 0.0
        %5612 = vmatpush1.msra.mxu0 0.0
        %5613 = vmatprep.subr.mxu0 0.0
        %5614 = vmatpush1.msra.mxu0 0.0
        %5615 = vmatprep.subr.mxu0 0.0
        %5616 = vmatpush1.msra.mxu0 0.0
        %5617 = vmatprep.subr.mxu0 0.0
        %5618 = vmatpush1.msra.mxu0 0.0
        %5619 = vmatprep.subr.mxu0 0.0
        %5620 = vmatpush1.msra.mxu0 0.0
        %5621 = vmatprep.subr.mxu0 0.0
        %5622 = vmatpush1.msra.mxu0 0.0
        %5623 = vmatprep.subr.mxu0 0.0
        %5624 = vmatpush1.msra.mxu0 0.0
        %5625 = vmatprep.subr.mxu0 0.0
        %5626 = vmatpush1.msra.mxu0 0.0
        %5627 = vmatprep.subr.mxu0 0.0
        %5628 = vmatpush1.msra.mxu0 0.0
        %5629 = vmatprep.subr.mxu0 0.0
        %5630 = vmatpush1.msra.mxu0 0.0
        %5631 = vmatprep.subr.mxu0 0.0
        %5632 = vmatpush1.msra.mxu0 0.0
        %5633 = vmatprep.mubr.f32.mxu0 0.0
        %v5634 = vand.u32 %v5192, 4294901760
        %5635 = vmatmul.mubr.f32.gmra.mrb[0].mxu0 %v5634
        %v5636 = vpop.f32.mrb[0].mxu0
        %v5637 = vadd.f32 %v5565, %v5636
        %v5638 = vpop.f32.mrb[0].mxu0
        %5639 = vdwg.mxu0
        %v5640 = vlaneseq
        %v5641 = vshrl.u32 %v5640, 7
        %v5642 = vsub.s32 0, %v5641
        %v5643 = vrot.slane %v5637, %v5642
        %v5645 = vsel %vm957, %v5187, 0
        %5647 = vmatprep.subr.mxu0 0.0
        %v5648 = vand.u32 %v5645, 4294901760
        %5649 = vmatpush1.msra.mxu0 %v5648
        %5650 = vmatprep.subr.mxu0 0.0
        %5651 = vmatpush1.msra.mxu0 0.0
        %5652 = vmatprep.subr.mxu0 0.0
        %5653 = vmatpush1.msra.mxu0 0.0
        %5654 = vmatprep.subr.mxu0 0.0
        %5655 = vmatpush1.msra.mxu0 0.0
        %5656 = vmatprep.subr.mxu0 0.0
        %5657 = vmatpush1.msra.mxu0 0.0
        %5658 = vmatprep.subr.mxu0 0.0
        %5659 = vmatpush1.msra.mxu0 0.0
        %5660 = vmatprep.subr.mxu0 0.0
        %5661 = vmatpush1.msra.mxu0 0.0
        %5662 = vmatprep.subr.mxu0 0.0
        %5663 = vmatpush1.msra.mxu0 0.0
        %5664 = vmatprep.subr.mxu0 0.0
        %5665 = vmatpush1.msra.mxu0 0.0
        %5666 = vmatprep.subr.mxu0 0.0
        %5667 = vmatpush1.msra.mxu0 0.0
        %5668 = vmatprep.subr.mxu0 0.0
        %5669 = vmatpush1.msra.mxu0 0.0
        %5670 = vmatprep.subr.mxu0 0.0
        %5671 = vmatpush1.msra.mxu0 0.0
        %5672 = vmatprep.subr.mxu0 0.0
        %5673 = vmatpush1.msra.mxu0 0.0
        %5674 = vmatprep.subr.mxu0 0.0
        %5675 = vmatpush1.msra.mxu0 0.0
        %5676 = vmatprep.subr.mxu0 0.0
        %5677 = vmatpush1.msra.mxu0 0.0
        %5678 = vmatprep.subr.mxu0 0.0
        %5679 = vmatpush1.msra.mxu0 0.0
        %5680 = vmatprep.subr.mxu0 0.0
        %5681 = vmatpush1.msra.mxu0 0.0
        %5682 = vmatprep.subr.mxu0 0.0
        %5683 = vmatpush1.msra.mxu0 0.0
        %5684 = vmatprep.subr.mxu0 0.0
        %5685 = vmatpush1.msra.mxu0 0.0
        %5686 = vmatprep.subr.mxu0 0.0
        %5687 = vmatpush1.msra.mxu0 0.0
        %5688 = vmatprep.subr.mxu0 0.0
        %5689 = vmatpush1.msra.mxu0 0.0
        %5690 = vmatprep.subr.mxu0 0.0
        %5691 = vmatpush1.msra.mxu0 0.0
        %5692 = vmatprep.subr.mxu0 0.0
        %5693 = vmatpush1.msra.mxu0 0.0
        %5694 = vmatprep.subr.mxu0 0.0
        %5695 = vmatpush1.msra.mxu0 0.0
        %5696 = vmatprep.subr.mxu0 0.0
        %5697 = vmatpush1.msra.mxu0 0.0
        %5698 = vmatprep.subr.mxu0 0.0
        %5699 = vmatpush1.msra.mxu0 0.0
        %5700 = vmatprep.subr.mxu0 0.0
        %5701 = vmatpush1.msra.mxu0 0.0
        %5702 = vmatprep.subr.mxu0 0.0
        %5703 = vmatpush1.msra.mxu0 0.0
        %5704 = vmatprep.subr.mxu0 0.0
        %5705 = vmatpush1.msra.mxu0 0.0
        %5706 = vmatprep.subr.mxu0 0.0
        %5707 = vmatpush1.msra.mxu0 0.0
        %5708 = vmatprep.subr.mxu0 0.0
        %5709 = vmatpush1.msra.mxu0 0.0
        %5710 = vmatprep.subr.mxu0 0.0
        %5711 = vmatpush1.msra.mxu0 0.0
        %5712 = vmatprep.mubr.f32.mxu0 0.0
        %v5713 = vand.u32 %v1408, 4294901760
        %v5714 = vsub.f32 %v1408, %v5713
        %v5715 = vand.u32 %v5714, 4294901760
        %v5716 = vsub.f32 %v5714, %v5715
        %v5717 = vand.u32 %v5716, 4294901760
        %5718 = vmatmul.mubr.f32.gmra.mrb[0].mxu0 %v5717
        %v5719 = vpop.f32.mrb[0].mxu0
        %v5720 = vadd.f32 %v5643, %v5719
        %v5721 = vpop.f32.mrb[0].mxu0
        %5722 = vdwg.mxu0
        %5723 = vmatprep.subr.mxu0 0.0
        %v5724 = vand.u32 %v5645, 4294901760
        %v5725 = vsub.f32 %v5645, %v5724
        %v5726 = vand.u32 %v5725, 4294901760
        %v5727 = vsub.f32 %v5725, %v5726
        %v5728 = vand.u32 %v5727, 4294901760
        %5729 = vmatpush1.msra.mxu0 %v5728
        %5730 = vmatprep.subr.mxu0 0.0
        %5731 = vmatpush1.msra.mxu0 0.0
        %5732 = vmatprep.subr.mxu0 0.0
        %5733 = vmatpush1.msra.mxu0 0.0
        %5734 = vmatprep.subr.mxu0 0.0
        %5735 = vmatpush1.msra.mxu0 0.0
        %5736 = vmatprep.subr.mxu0 0.0
        %5737 = vmatpush1.msra.mxu0 0.0
        %5738 = vmatprep.subr.mxu0 0.0
        %5739 = vmatpush1.msra.mxu0 0.0
        %5740 = vmatprep.subr.mxu0 0.0
        %5741 = vmatpush1.msra.mxu0 0.0
        %5742 = vmatprep.subr.mxu0 0.0
        %5743 = vmatpush1.msra.mxu0 0.0
        %5744 = vmatprep.subr.mxu0 0.0
        %5745 = vmatpush1.msra.mxu0 0.0
        %5746 = vmatprep.subr.mxu0 0.0
        %5747 = vmatpush1.msra.mxu0 0.0
        %5748 = vmatprep.subr.mxu0 0.0
        %5749 = vmatpush1.msra.mxu0 0.0
        %5750 = vmatprep.subr.mxu0 0.0
        %5751 = vmatpush1.msra.mxu0 0.0
        %5752 = vmatprep.subr.mxu0 0.0
        %5753 = vmatpush1.msra.mxu0 0.0
        %5754 = vmatprep.subr.mxu0 0.0
        %5755 = vmatpush1.msra.mxu0 0.0
        %5756 = vmatprep.subr.mxu0 0.0
        %5757 = vmatpush1.msra.mxu0 0.0
        %5758 = vmatprep.subr.mxu0 0.0
        %5759 = vmatpush1.msra.mxu0 0.0
        %5760 = vmatprep.subr.mxu0 0.0
        %5761 = vmatpush1.msra.mxu0 0.0
        %5762 = vmatprep.subr.mxu0 0.0
        %5763 = vmatpush1.msra.mxu0 0.0
        %5764 = vmatprep.subr.mxu0 0.0
        %5765 = vmatpush1.msra.mxu0 0.0
        %5766 = vmatprep.subr.mxu0 0.0
        %5767 = vmatpush1.msra.mxu0 0.0
        %5768 = vmatprep.subr.mxu0 0.0
        %5769 = vmatpush1.msra.mxu0 0.0
        %5770 = vmatprep.subr.mxu0 0.0
        %5771 = vmatpush1.msra.mxu0 0.0
        %5772 = vmatprep.subr.mxu0 0.0
        %5773 = vmatpush1.msra.mxu0 0.0
        %5774 = vmatprep.subr.mxu0 0.0
        %5775 = vmatpush1.msra.mxu0 0.0
        %5776 = vmatprep.subr.mxu0 0.0
        %5777 = vmatpush1.msra.mxu0 0.0
        %5778 = vmatprep.subr.mxu0 0.0
        %5779 = vmatpush1.msra.mxu0 0.0
        %5780 = vmatprep.subr.mxu0 0.0
        %5781 = vmatpush1.msra.mxu0 0.0
        %5782 = vmatprep.subr.mxu0 0.0
        %5783 = vmatpush1.msra.mxu0 0.0
        %5784 = vmatprep.subr.mxu0 0.0
        %5785 = vmatpush1.msra.mxu0 0.0
        %5786 = vmatprep.subr.mxu0 0.0
        %5787 = vmatpush1.msra.mxu0 0.0
        %5788 = vmatprep.subr.mxu0 0.0
        %5789 = vmatpush1.msra.mxu0 0.0
        %5790 = vmatprep.subr.mxu0 0.0
        %5791 = vmatpush1.msra.mxu0 0.0
        %5792 = vmatprep.mubr.f32.mxu0 0.0
        %v5793 = vand.u32 %v1408, 4294901760
        %5794 = vmatmul.mubr.f32.gmra.mrb[0].mxu0 %v5793
        %v5795 = vpop.f32.mrb[0].mxu0
        %v5796 = vadd.f32 %v5720, %v5795
        %v5797 = vpop.f32.mrb[0].mxu0
        %5798 = vdwg.mxu0
        %5799 = vmatprep.subr.mxu0 0.0
        %v5800 = vand.u32 %v5645, 4294901760
        %v5801 = vsub.f32 %v5645, %v5800
        %5802 = vmatpush1.msra.mxu0 %v5801
        %5803 = vmatprep.subr.mxu0 0.0
        %5804 = vmatpush1.msra.mxu0 0.0
        %5805 = vmatprep.subr.mxu0 0.0
        %5806 = vmatpush1.msra.mxu0 0.0
        %5807 = vmatprep.subr.mxu0 0.0
        %5808 = vmatpush1.msra.mxu0 0.0
        %5809 = vmatprep.subr.mxu0 0.0
        %5810 = vmatpush1.msra.mxu0 0.0
        %5811 = vmatprep.subr.mxu0 0.0
        %5812 = vmatpush1.msra.mxu0 0.0
        %5813 = vmatprep.subr.mxu0 0.0
        %5814 = vmatpush1.msra.mxu0 0.0
        %5815 = vmatprep.subr.mxu0 0.0
        %5816 = vmatpush1.msra.mxu0 0.0
        %5817 = vmatprep.subr.mxu0 0.0
        %5818 = vmatpush1.msra.mxu0 0.0
        %5819 = vmatprep.subr.mxu0 0.0
        %5820 = vmatpush1.msra.mxu0 0.0
        %5821 = vmatprep.subr.mxu0 0.0
        %5822 = vmatpush1.msra.mxu0 0.0
        %5823 = vmatprep.subr.mxu0 0.0
        %5824 = vmatpush1.msra.mxu0 0.0
        %5825 = vmatprep.subr.mxu0 0.0
        %5826 = vmatpush1.msra.mxu0 0.0
        %5827 = vmatprep.subr.mxu0 0.0
        %5828 = vmatpush1.msra.mxu0 0.0
        %5829 = vmatprep.subr.mxu0 0.0
        %5830 = vmatpush1.msra.mxu0 0.0
        %5831 = vmatprep.subr.mxu0 0.0
        %5832 = vmatpush1.msra.mxu0 0.0
        %5833 = vmatprep.subr.mxu0 0.0
        %5834 = vmatpush1.msra.mxu0 0.0
        %5835 = vmatprep.subr.mxu0 0.0
        %5836 = vmatpush1.msra.mxu0 0.0
        %5837 = vmatprep.subr.mxu0 0.0
        %5838 = vmatpush1.msra.mxu0 0.0
        %5839 = vmatprep.subr.mxu0 0.0
        %5840 = vmatpush1.msra.mxu0 0.0
        %5841 = vmatprep.subr.mxu0 0.0
        %5842 = vmatpush1.msra.mxu0 0.0
        %5843 = vmatprep.subr.mxu0 0.0
        %5844 = vmatpush1.msra.mxu0 0.0
        %5845 = vmatprep.subr.mxu0 0.0
        %5846 = vmatpush1.msra.mxu0 0.0
        %5847 = vmatprep.subr.mxu0 0.0
        %5848 = vmatpush1.msra.mxu0 0.0
        %5849 = vmatprep.subr.mxu0 0.0
        %5850 = vmatpush1.msra.mxu0 0.0
        %5851 = vmatprep.subr.mxu0 0.0
        %5852 = vmatpush1.msra.mxu0 0.0
        %5853 = vmatprep.subr.mxu0 0.0
        %5854 = vmatpush1.msra.mxu0 0.0
        %5855 = vmatprep.subr.mxu0 0.0
        %5856 = vmatpush1.msra.mxu0 0.0
        %5857 = vmatprep.subr.mxu0 0.0
        %5858 = vmatpush1.msra.mxu0 0.0
        %5859 = vmatprep.subr.mxu0 0.0
        %5860 = vmatpush1.msra.mxu0 0.0
        %5861 = vmatprep.subr.mxu0 0.0
        %5862 = vmatpush1.msra.mxu0 0.0
        %5863 = vmatprep.subr.mxu0 0.0
        %5864 = vmatpush1.msra.mxu0 0.0
        %5865 = vmatprep.mubr.f32.mxu0 0.0
        %v5866 = vand.u32 %v1408, 4294901760
        %v5867 = vsub.f32 %v1408, %v5866
        %5868 = vmatmul.mubr.f32.gmra.mrb[0].mxu0 %v5867
        %v5869 = vpop.f32.mrb[0].mxu0
        %v5870 = vadd.f32 %v5796, %v5869
        %v5871 = vpop.f32.mrb[0].mxu0
        %5872 = vdwg.mxu0
        %5873 = vmatprep.subr.mxu0 0.0
        %v5874 = vand.u32 %v5645, 4294901760
        %5875 = vmatpush1.msra.mxu0 %v5874
        %5876 = vmatprep.subr.mxu0 0.0
        %5877 = vmatpush1.msra.mxu0 0.0
        %5878 = vmatprep.subr.mxu0 0.0
        %5879 = vmatpush1.msra.mxu0 0.0
        %5880 = vmatprep.subr.mxu0 0.0
        %5881 = vmatpush1.msra.mxu0 0.0
        %5882 = vmatprep.subr.mxu0 0.0
        %5883 = vmatpush1.msra.mxu0 0.0
        %5884 = vmatprep.subr.mxu0 0.0
        %5885 = vmatpush1.msra.mxu0 0.0
        %5886 = vmatprep.subr.mxu0 0.0
        %5887 = vmatpush1.msra.mxu0 0.0
        %5888 = vmatprep.subr.mxu0 0.0
        %5889 = vmatpush1.msra.mxu0 0.0
        %5890 = vmatprep.subr.mxu0 0.0
        %5891 = vmatpush1.msra.mxu0 0.0
        %5892 = vmatprep.subr.mxu0 0.0
        %5893 = vmatpush1.msra.mxu0 0.0
        %5894 = vmatprep.subr.mxu0 0.0
        %5895 = vmatpush1.msra.mxu0 0.0
        %5896 = vmatprep.subr.mxu0 0.0
        %5897 = vmatpush1.msra.mxu0 0.0
        %5898 = vmatprep.subr.mxu0 0.0
        %5899 = vmatpush1.msra.mxu0 0.0
        %5900 = vmatprep.subr.mxu0 0.0
        %5901 = vmatpush1.msra.mxu0 0.0
        %5902 = vmatprep.subr.mxu0 0.0
        %5903 = vmatpush1.msra.mxu0 0.0
        %5904 = vmatprep.subr.mxu0 0.0
        %5905 = vmatpush1.msra.mxu0 0.0
        %5906 = vmatprep.subr.mxu0 0.0
        %5907 = vmatpush1.msra.mxu0 0.0
        %5908 = vmatprep.subr.mxu0 0.0
        %5909 = vmatpush1.msra.mxu0 0.0
        %5910 = vmatprep.subr.mxu0 0.0
        %5911 = vmatpush1.msra.mxu0 0.0
        %5912 = vmatprep.subr.mxu0 0.0
        %5913 = vmatpush1.msra.mxu0 0.0
        %5914 = vmatprep.subr.mxu0 0.0
        %5915 = vmatpush1.msra.mxu0 0.0
        %5916 = vmatprep.subr.mxu0 0.0
        %5917 = vmatpush1.msra.mxu0 0.0
        %5918 = vmatprep.subr.mxu0 0.0
        %5919 = vmatpush1.msra.mxu0 0.0
        %5920 = vmatprep.subr.mxu0 0.0
        %5921 = vmatpush1.msra.mxu0 0.0
        %5922 = vmatprep.subr.mxu0 0.0
        %5923 = vmatpush1.msra.mxu0 0.0
        %5924 = vmatprep.subr.mxu0 0.0
        %5925 = vmatpush1.msra.mxu0 0.0
        %5926 = vmatprep.subr.mxu0 0.0
        %5927 = vmatpush1.msra.mxu0 0.0
        %5928 = vmatprep.subr.mxu0 0.0
        %5929 = vmatpush1.msra.mxu0 0.0
        %5930 = vmatprep.subr.mxu0 0.0
        %5931 = vmatpush1.msra.mxu0 0.0
        %5932 = vmatprep.subr.mxu0 0.0
        %5933 = vmatpush1.msra.mxu0 0.0
        %5934 = vmatprep.subr.mxu0 0.0
        %5935 = vmatpush1.msra.mxu0 0.0
        %5936 = vmatprep.subr.mxu0 0.0
        %5937 = vmatpush1.msra.mxu0 0.0
        %5938 = vmatprep.mubr.f32.mxu0 0.0
        %v5939 = vand.u32 %v1408, 4294901760
        %v5940 = vsub.f32 %v1408, %v5939
        %v5941 = vand.u32 %v5940, 4294901760
        %5942 = vmatmul.mubr.f32.gmra.mrb[0].mxu0 %v5941
        %v5943 = vpop.f32.mrb[0].mxu0
        %v5944 = vadd.f32 %v5870, %v5943
        %v5945 = vpop.f32.mrb[0].mxu0
        %5946 = vdwg.mxu0
        %5947 = vmatprep.subr.mxu0 0.0
        %v5948 = vand.u32 %v5645, 4294901760
        %v5949 = vsub.f32 %v5645, %v5948
        %v5950 = vand.u32 %v5949, 4294901760
        %5951 = vmatpush1.msra.mxu0 %v5950
        %5952 = vmatprep.subr.mxu0 0.0
        %5953 = vmatpush1.msra.mxu0 0.0
        %5954 = vmatprep.subr.mxu0 0.0
        %5955 = vmatpush1.msra.mxu0 0.0
        %5956 = vmatprep.subr.mxu0 0.0
        %5957 = vmatpush1.msra.mxu0 0.0
        %5958 = vmatprep.subr.mxu0 0.0
        %5959 = vmatpush1.msra.mxu0 0.0
        %5960 = vmatprep.subr.mxu0 0.0
        %5961 = vmatpush1.msra.mxu0 0.0
        %5962 = vmatprep.subr.mxu0 0.0
        %5963 = vmatpush1.msra.mxu0 0.0
        %5964 = vmatprep.subr.mxu0 0.0
        %5965 = vmatpush1.msra.mxu0 0.0
        %5966 = vmatprep.subr.mxu0 0.0
        %5967 = vmatpush1.msra.mxu0 0.0
        %5968 = vmatprep.subr.mxu0 0.0
        %5969 = vmatpush1.msra.mxu0 0.0
        %5970 = vmatprep.subr.mxu0 0.0
        %5971 = vmatpush1.msra.mxu0 0.0
        %5972 = vmatprep.subr.mxu0 0.0
        %5973 = vmatpush1.msra.mxu0 0.0
        %5974 = vmatprep.subr.mxu0 0.0
        %5975 = vmatpush1.msra.mxu0 0.0
        %5976 = vmatprep.subr.mxu0 0.0
        %5977 = vmatpush1.msra.mxu0 0.0
        %5978 = vmatprep.subr.mxu0 0.0
        %5979 = vmatpush1.msra.mxu0 0.0
        %5980 = vmatprep.subr.mxu0 0.0
        %5981 = vmatpush1.msra.mxu0 0.0
        %5982 = vmatprep.subr.mxu0 0.0
        %5983 = vmatpush1.msra.mxu0 0.0
        %5984 = vmatprep.subr.mxu0 0.0
        %5985 = vmatpush1.msra.mxu0 0.0
        %5986 = vmatprep.subr.mxu0 0.0
        %5987 = vmatpush1.msra.mxu0 0.0
        %5988 = vmatprep.subr.mxu0 0.0
        %5989 = vmatpush1.msra.mxu0 0.0
        %5990 = vmatprep.subr.mxu0 0.0
        %5991 = vmatpush1.msra.mxu0 0.0
        %5992 = vmatprep.subr.mxu0 0.0
        %5993 = vmatpush1.msra.mxu0 0.0
        %5994 = vmatprep.subr.mxu0 0.0
        %5995 = vmatpush1.msra.mxu0 0.0
        %5996 = vmatprep.subr.mxu0 0.0
        %5997 = vmatpush1.msra.mxu0 0.0
        %5998 = vmatprep.subr.mxu0 0.0
        %5999 = vmatpush1.msra.mxu0 0.0
        %6000 = vmatprep.subr.mxu0 0.0
        %6001 = vmatpush1.msra.mxu0 0.0
        %6002 = vmatprep.subr.mxu0 0.0
        %6003 = vmatpush1.msra.mxu0 0.0
        %6004 = vmatprep.subr.mxu0 0.0
        %6005 = vmatpush1.msra.mxu0 0.0
        %6006 = vmatprep.subr.mxu0 0.0
        %6007 = vmatpush1.msra.mxu0 0.0
        %6008 = vmatprep.subr.mxu0 0.0
        %6009 = vmatpush1.msra.mxu0 0.0
        %6010 = vmatprep.subr.mxu0 0.0
        %6011 = vmatpush1.msra.mxu0 0.0
        %6012 = vmatprep.subr.mxu0 0.0
        %6013 = vmatpush1.msra.mxu0 0.0
        %6014 = vmatprep.mubr.f32.mxu0 0.0
        %v6015 = vand.u32 %v1408, 4294901760
        %6016 = vmatmul.mubr.f32.gmra.mrb[0].mxu0 %v6015
        %v6017 = vpop.f32.mrb[0].mxu0
        %v6018 = vadd.f32 %v5944, %v6017
        %v6019 = vpop.f32.mrb[0].mxu0
        %6020 = vdwg.mxu0
        %6021 = vmatprep.subr.mxu0 0.0
        %v6022 = vand.u32 %v5645, 4294901760
        %6023 = vmatpush1.msra.mxu0 %v6022
        %6024 = vmatprep.subr.mxu0 0.0
        %6025 = vmatpush1.msra.mxu0 0.0
        %6026 = vmatprep.subr.mxu0 0.0
        %6027 = vmatpush1.msra.mxu0 0.0
        %6028 = vmatprep.subr.mxu0 0.0
        %6029 = vmatpush1.msra.mxu0 0.0
        %6030 = vmatprep.subr.mxu0 0.0
        %6031 = vmatpush1.msra.mxu0 0.0
        %6032 = vmatprep.subr.mxu0 0.0
        %6033 = vmatpush1.msra.mxu0 0.0
        %6034 = vmatprep.subr.mxu0 0.0
        %6035 = vmatpush1.msra.mxu0 0.0
        %6036 = vmatprep.subr.mxu0 0.0
        %6037 = vmatpush1.msra.mxu0 0.0
        %6038 = vmatprep.subr.mxu0 0.0
        %6039 = vmatpush1.msra.mxu0 0.0
        %6040 = vmatprep.subr.mxu0 0.0
        %6041 = vmatpush1.msra.mxu0 0.0
        %6042 = vmatprep.subr.mxu0 0.0
        %6043 = vmatpush1.msra.mxu0 0.0
        %6044 = vmatprep.subr.mxu0 0.0
        %6045 = vmatpush1.msra.mxu0 0.0
        %6046 = vmatprep.subr.mxu0 0.0
        %6047 = vmatpush1.msra.mxu0 0.0
        %6048 = vmatprep.subr.mxu0 0.0
        %6049 = vmatpush1.msra.mxu0 0.0
        %6050 = vmatprep.subr.mxu0 0.0
        %6051 = vmatpush1.msra.mxu0 0.0
        %6052 = vmatprep.subr.mxu0 0.0
        %6053 = vmatpush1.msra.mxu0 0.0
        %6054 = vmatprep.subr.mxu0 0.0
        %6055 = vmatpush1.msra.mxu0 0.0
        %6056 = vmatprep.subr.mxu0 0.0
        %6057 = vmatpush1.msra.mxu0 0.0
        %6058 = vmatprep.subr.mxu0 0.0
        %6059 = vmatpush1.msra.mxu0 0.0
        %6060 = vmatprep.subr.mxu0 0.0
        %6061 = vmatpush1.msra.mxu0 0.0
        %6062 = vmatprep.subr.mxu0 0.0
        %6063 = vmatpush1.msra.mxu0 0.0
        %6064 = vmatprep.subr.mxu0 0.0
        %6065 = vmatpush1.msra.mxu0 0.0
        %6066 = vmatprep.subr.mxu0 0.0
        %6067 = vmatpush1.msra.mxu0 0.0
        %6068 = vmatprep.subr.mxu0 0.0
        %6069 = vmatpush1.msra.mxu0 0.0
        %6070 = vmatprep.subr.mxu0 0.0
        %6071 = vmatpush1.msra.mxu0 0.0
        %6072 = vmatprep.subr.mxu0 0.0
        %6073 = vmatpush1.msra.mxu0 0.0
        %6074 = vmatprep.subr.mxu0 0.0
        %6075 = vmatpush1.msra.mxu0 0.0
        %6076 = vmatprep.subr.mxu0 0.0
        %6077 = vmatpush1.msra.mxu0 0.0
        %6078 = vmatprep.subr.mxu0 0.0
        %6079 = vmatpush1.msra.mxu0 0.0
        %6080 = vmatprep.subr.mxu0 0.0
        %6081 = vmatpush1.msra.mxu0 0.0
        %6082 = vmatprep.subr.mxu0 0.0
        %6083 = vmatpush1.msra.mxu0 0.0
        %6084 = vmatprep.subr.mxu0 0.0
        %6085 = vmatpush1.msra.mxu0 0.0
        %6086 = vmatprep.mubr.f32.mxu0 0.0
        %v6087 = vand.u32 %v1408, 4294901760
        %6088 = vmatmul.mubr.f32.gmra.mrb[0].mxu0 %v6087
        %v6089 = vpop.f32.mrb[0].mxu0
        %v6090 = vadd.f32 %v6018, %v6089
        %v6091 = vpop.f32.mrb[0].mxu0
        %6092 = vdwg.mxu0
        %v6093 = vld [vmem:[#allocation3] sm:$0xff]
        %v6095 = vsel %vm2359, %v6093, 0
        %6097 = vmatprep.subr.mxu0 0.0
        %v6098 = vand.u32 %v5189, 4294901760
        %6099 = vmatpush1.msra.mxu0 %v6098
        %6100 = vmatprep.subr.mxu0 0.0
        %6101 = vmatpush1.msra.mxu0 0.0
        %6102 = vmatprep.subr.mxu0 0.0
        %6103 = vmatpush1.msra.mxu0 0.0
        %6104 = vmatprep.subr.mxu0 0.0
        %6105 = vmatpush1.msra.mxu0 0.0
        %6106 = vmatprep.subr.mxu0 0.0
        %6107 = vmatpush1.msra.mxu0 0.0
        %6108 = vmatprep.subr.mxu0 0.0
        %6109 = vmatpush1.msra.mxu0 0.0
        %6110 = vmatprep.subr.mxu0 0.0
        %6111 = vmatpush1.msra.mxu0 0.0
        %6112 = vmatprep.subr.mxu0 0.0
        %6113 = vmatpush1.msra.mxu0 0.0
        %6114 = vmatprep.subr.mxu0 0.0
        %6115 = vmatpush1.msra.mxu0 0.0
        %6116 = vmatprep.subr.mxu0 0.0
        %6117 = vmatpush1.msra.mxu0 0.0
        %6118 = vmatprep.subr.mxu0 0.0
        %6119 = vmatpush1.msra.mxu0 0.0
        %6120 = vmatprep.subr.mxu0 0.0
        %6121 = vmatpush1.msra.mxu0 0.0
        %6122 = vmatprep.subr.mxu0 0.0
        %6123 = vmatpush1.msra.mxu0 0.0
        %6124 = vmatprep.subr.mxu0 0.0
        %6125 = vmatpush1.msra.mxu0 0.0
        %6126 = vmatprep.subr.mxu0 0.0
        %6127 = vmatpush1.msra.mxu0 0.0
        %6128 = vmatprep.subr.mxu0 0.0
        %6129 = vmatpush1.msra.mxu0 0.0
        %6130 = vmatprep.subr.mxu0 0.0
        %6131 = vmatpush1.msra.mxu0 0.0
        %6132 = vmatprep.subr.mxu0 0.0
        %6133 = vmatpush1.msra.mxu0 0.0
        %6134 = vmatprep.subr.mxu0 0.0
        %6135 = vmatpush1.msra.mxu0 0.0
        %6136 = vmatprep.subr.mxu0 0.0
        %6137 = vmatpush1.msra.mxu0 0.0
        %6138 = vmatprep.subr.mxu0 0.0
        %6139 = vmatpush1.msra.mxu0 0.0
        %6140 = vmatprep.subr.mxu0 0.0
        %6141 = vmatpush1.msra.mxu0 0.0
        %6142 = vmatprep.subr.mxu0 0.0
        %6143 = vmatpush1.msra.mxu0 0.0
        %6144 = vmatprep.subr.mxu0 0.0
        %6145 = vmatpush1.msra.mxu0 0.0
        %6146 = vmatprep.subr.mxu0 0.0
        %6147 = vmatpush1.msra.mxu0 0.0
        %6148 = vmatprep.subr.mxu0 0.0
        %6149 = vmatpush1.msra.mxu0 0.0
        %6150 = vmatprep.subr.mxu0 0.0
        %6151 = vmatpush1.msra.mxu0 0.0
        %6152 = vmatprep.subr.mxu0 0.0
        %6153 = vmatpush1.msra.mxu0 0.0
        %6154 = vmatprep.subr.mxu0 0.0
        %6155 = vmatpush1.msra.mxu0 0.0
        %6156 = vmatprep.subr.mxu0 0.0
        %6157 = vmatpush1.msra.mxu0 0.0
        %6158 = vmatprep.subr.mxu0 0.0
        %6159 = vmatpush1.msra.mxu0 0.0
        %6160 = vmatprep.subr.mxu0 0.0
        %6161 = vmatpush1.msra.mxu0 0.0
        %6162 = vmatprep.mubr.f32.mxu0 0.0
        %v6163 = vand.u32 %v6095, 4294901760
        %v6164 = vsub.f32 %v6095, %v6163
        %v6165 = vand.u32 %v6164, 4294901760
        %v6166 = vsub.f32 %v6164, %v6165
        %v6167 = vand.u32 %v6166, 4294901760
        %6168 = vmatmul.mubr.f32.gmra.mrb[0].mxu0 %v6167
        %v6169 = vpop.f32.mrb[0].mxu0
        %v6170 = vadd.f32 0.0, %v6169
        %v6171 = vpop.f32.mrb[0].mxu0
        %6172 = vdwg.mxu0
        %6173 = vmatprep.subr.mxu0 0.0
        %v6174 = vand.u32 %v5189, 4294901760
        %v6175 = vsub.f32 %v5189, %v6174
        %v6176 = vand.u32 %v6175, 4294901760
        %v6177 = vsub.f32 %v6175, %v6176
        %v6178 = vand.u32 %v6177, 4294901760
        %6179 = vmatpush1.msra.mxu0 %v6178
        %6180 = vmatprep.subr.mxu0 0.0
        %6181 = vmatpush1.msra.mxu0 0.0
        %6182 = vmatprep.subr.mxu0 0.0
        %6183 = vmatpush1.msra.mxu0 0.0
        %6184 = vmatprep.subr.mxu0 0.0
        %6185 = vmatpush1.msra.mxu0 0.0
        %6186 = vmatprep.subr.mxu0 0.0
        %6187 = vmatpush1.msra.mxu0 0.0
        %6188 = vmatprep.subr.mxu0 0.0
        %6189 = vmatpush1.msra.mxu0 0.0
        %6190 = vmatprep.subr.mxu0 0.0
        %6191 = vmatpush1.msra.mxu0 0.0
        %6192 = vmatprep.subr.mxu0 0.0
        %6193 = vmatpush1.msra.mxu0 0.0
        %6194 = vmatprep.subr.mxu0 0.0
        %6195 = vmatpush1.msra.mxu0 0.0
        %6196 = vmatprep.subr.mxu0 0.0
        %6197 = vmatpush1.msra.mxu0 0.0
        %6198 = vmatprep.subr.mxu0 0.0
        %6199 = vmatpush1.msra.mxu0 0.0
        %6200 = vmatprep.subr.mxu0 0.0
        %6201 = vmatpush1.msra.mxu0 0.0
        %6202 = vmatprep.subr.mxu0 0.0
        %6203 = vmatpush1.msra.mxu0 0.0
        %6204 = vmatprep.subr.mxu0 0.0
        %6205 = vmatpush1.msra.mxu0 0.0
        %6206 = vmatprep.subr.mxu0 0.0
        %6207 = vmatpush1.msra.mxu0 0.0
        %6208 = vmatprep.subr.mxu0 0.0
        %6209 = vmatpush1.msra.mxu0 0.0
        %6210 = vmatprep.subr.mxu0 0.0
        %6211 = vmatpush1.msra.mxu0 0.0
        %6212 = vmatprep.subr.mxu0 0.0
        %6213 = vmatpush1.msra.mxu0 0.0
        %6214 = vmatprep.subr.mxu0 0.0
        %6215 = vmatpush1.msra.mxu0 0.0
        %6216 = vmatprep.subr.mxu0 0.0
        %6217 = vmatpush1.msra.mxu0 0.0
        %6218 = vmatprep.subr.mxu0 0.0
        %6219 = vmatpush1.msra.mxu0 0.0
        %6220 = vmatprep.subr.mxu0 0.0
        %6221 = vmatpush1.msra.mxu0 0.0
        %6222 = vmatprep.subr.mxu0 0.0
        %6223 = vmatpush1.msra.mxu0 0.0
        %6224 = vmatprep.subr.mxu0 0.0
        %6225 = vmatpush1.msra.mxu0 0.0
        %6226 = vmatprep.subr.mxu0 0.0
        %6227 = vmatpush1.msra.mxu0 0.0
        %6228 = vmatprep.subr.mxu0 0.0
        %6229 = vmatpush1.msra.mxu0 0.0
        %6230 = vmatprep.subr.mxu0 0.0
        %6231 = vmatpush1.msra.mxu0 0.0
        %6232 = vmatprep.subr.mxu0 0.0
        %6233 = vmatpush1.msra.mxu0 0.0
        %6234 = vmatprep.subr.mxu0 0.0
        %6235 = vmatpush1.msra.mxu0 0.0
        %6236 = vmatprep.subr.mxu0 0.0
        %6237 = vmatpush1.msra.mxu0 0.0
        %6238 = vmatprep.subr.mxu0 0.0
        %6239 = vmatpush1.msra.mxu0 0.0
        %6240 = vmatprep.subr.mxu0 0.0
        %6241 = vmatpush1.msra.mxu0 0.0
        %6242 = vmatprep.mubr.f32.mxu0 0.0
        %v6243 = vand.u32 %v6095, 4294901760
        %6244 = vmatmul.mubr.f32.gmra.mrb[0].mxu0 %v6243
        %v6245 = vpop.f32.mrb[0].mxu0
        %v6246 = vadd.f32 %v6170, %v6245
        %v6247 = vpop.f32.mrb[0].mxu0
        %6248 = vdwg.mxu0
        %6249 = vmatprep.subr.mxu0 0.0
        %v6250 = vand.u32 %v5189, 4294901760
        %v6251 = vsub.f32 %v5189, %v6250
        %6252 = vmatpush1.msra.mxu0 %v6251
        %6253 = vmatprep.subr.mxu0 0.0
        %6254 = vmatpush1.msra.mxu0 0.0
        %6255 = vmatprep.subr.mxu0 0.0
        %6256 = vmatpush1.msra.mxu0 0.0
        %6257 = vmatprep.subr.mxu0 0.0
        %6258 = vmatpush1.msra.mxu0 0.0
        %6259 = vmatprep.subr.mxu0 0.0
        %6260 = vmatpush1.msra.mxu0 0.0
        %6261 = vmatprep.subr.mxu0 0.0
        %6262 = vmatpush1.msra.mxu0 0.0
        %6263 = vmatprep.subr.mxu0 0.0
        %6264 = vmatpush1.msra.mxu0 0.0
        %6265 = vmatprep.subr.mxu0 0.0
        %6266 = vmatpush1.msra.mxu0 0.0
        %6267 = vmatprep.subr.mxu0 0.0
        %6268 = vmatpush1.msra.mxu0 0.0
        %6269 = vmatprep.subr.mxu0 0.0
        %6270 = vmatpush1.msra.mxu0 0.0
        %6271 = vmatprep.subr.mxu0 0.0
        %6272 = vmatpush1.msra.mxu0 0.0
        %6273 = vmatprep.subr.mxu0 0.0
        %6274 = vmatpush1.msra.mxu0 0.0
        %6275 = vmatprep.subr.mxu0 0.0
        %6276 = vmatpush1.msra.mxu0 0.0
        %6277 = vmatprep.subr.mxu0 0.0
        %6278 = vmatpush1.msra.mxu0 0.0
        %6279 = vmatprep.subr.mxu0 0.0
        %6280 = vmatpush1.msra.mxu0 0.0
        %6281 = vmatprep.subr.mxu0 0.0
        %6282 = vmatpush1.msra.mxu0 0.0
        %6283 = vmatprep.subr.mxu0 0.0
        %6284 = vmatpush1.msra.mxu0 0.0
        %6285 = vmatprep.subr.mxu0 0.0
        %6286 = vmatpush1.msra.mxu0 0.0
        %6287 = vmatprep.subr.mxu0 0.0
        %6288 = vmatpush1.msra.mxu0 0.0
        %6289 = vmatprep.subr.mxu0 0.0
        %6290 = vmatpush1.msra.mxu0 0.0
        %6291 = vmatprep.subr.mxu0 0.0
        %6292 = vmatpush1.msra.mxu0 0.0
        %6293 = vmatprep.subr.mxu0 0.0
        %6294 = vmatpush1.msra.mxu0 0.0
        %6295 = vmatprep.subr.mxu0 0.0
        %6296 = vmatpush1.msra.mxu0 0.0
        %6297 = vmatprep.subr.mxu0 0.0
        %6298 = vmatpush1.msra.mxu0 0.0
        %6299 = vmatprep.subr.mxu0 0.0
        %6300 = vmatpush1.msra.mxu0 0.0
        %6301 = vmatprep.subr.mxu0 0.0
        %6302 = vmatpush1.msra.mxu0 0.0
        %6303 = vmatprep.subr.mxu0 0.0
        %6304 = vmatpush1.msra.mxu0 0.0
        %6305 = vmatprep.subr.mxu0 0.0
        %6306 = vmatpush1.msra.mxu0 0.0
        %6307 = vmatprep.subr.mxu0 0.0
        %6308 = vmatpush1.msra.mxu0 0.0
        %6309 = vmatprep.subr.mxu0 0.0
        %6310 = vmatpush1.msra.mxu0 0.0
        %6311 = vmatprep.subr.mxu0 0.0
        %6312 = vmatpush1.msra.mxu0 0.0
        %6313 = vmatprep.subr.mxu0 0.0
        %6314 = vmatpush1.msra.mxu0 0.0
        %6315 = vmatprep.mubr.f32.mxu0 0.0
        %v6316 = vand.u32 %v6095, 4294901760
        %v6317 = vsub.f32 %v6095, %v6316
        %6318 = vmatmul.mubr.f32.gmra.mrb[0].mxu0 %v6317
        %v6319 = vpop.f32.mrb[0].mxu0
        %v6320 = vadd.f32 %v6246, %v6319
        %v6321 = vpop.f32.mrb[0].mxu0
        %6322 = vdwg.mxu0
        %6323 = vmatprep.subr.mxu0 0.0
        %v6324 = vand.u32 %v5189, 4294901760
        %6325 = vmatpush1.msra.mxu0 %v6324
        %6326 = vmatprep.subr.mxu0 0.0
        %6327 = vmatpush1.msra.mxu0 0.0
        %6328 = vmatprep.subr.mxu0 0.0
        %6329 = vmatpush1.msra.mxu0 0.0
        %6330 = vmatprep.subr.mxu0 0.0
        %6331 = vmatpush1.msra.mxu0 0.0
        %6332 = vmatprep.subr.mxu0 0.0
        %6333 = vmatpush1.msra.mxu0 0.0
        %6334 = vmatprep.subr.mxu0 0.0
        %6335 = vmatpush1.msra.mxu0 0.0
        %6336 = vmatprep.subr.mxu0 0.0
        %6337 = vmatpush1.msra.mxu0 0.0
        %6338 = vmatprep.subr.mxu0 0.0
        %6339 = vmatpush1.msra.mxu0 0.0
        %6340 = vmatprep.subr.mxu0 0.0
        %6341 = vmatpush1.msra.mxu0 0.0
        %6342 = vmatprep.subr.mxu0 0.0
        %6343 = vmatpush1.msra.mxu0 0.0
        %6344 = vmatprep.subr.mxu0 0.0
        %6345 = vmatpush1.msra.mxu0 0.0
        %6346 = vmatprep.subr.mxu0 0.0
        %6347 = vmatpush1.msra.mxu0 0.0
        %6348 = vmatprep.subr.mxu0 0.0
        %6349 = vmatpush1.msra.mxu0 0.0
        %6350 = vmatprep.subr.mxu0 0.0
        %6351 = vmatpush1.msra.mxu0 0.0
        %6352 = vmatprep.subr.mxu0 0.0
        %6353 = vmatpush1.msra.mxu0 0.0
        %6354 = vmatprep.subr.mxu0 0.0
        %6355 = vmatpush1.msra.mxu0 0.0
        %6356 = vmatprep.subr.mxu0 0.0
        %6357 = vmatpush1.msra.mxu0 0.0
        %6358 = vmatprep.subr.mxu0 0.0
        %6359 = vmatpush1.msra.mxu0 0.0
        %6360 = vmatprep.subr.mxu0 0.0
        %6361 = vmatpush1.msra.mxu0 0.0
        %6362 = vmatprep.subr.mxu0 0.0
        %6363 = vmatpush1.msra.mxu0 0.0
        %6364 = vmatprep.subr.mxu0 0.0
        %6365 = vmatpush1.msra.mxu0 0.0
        %6366 = vmatprep.subr.mxu0 0.0
        %6367 = vmatpush1.msra.mxu0 0.0
        %6368 = vmatprep.subr.mxu0 0.0
        %6369 = vmatpush1.msra.mxu0 0.0
        %6370 = vmatprep.subr.mxu0 0.0
        %6371 = vmatpush1.msra.mxu0 0.0
        %6372 = vmatprep.subr.mxu0 0.0
        %6373 = vmatpush1.msra.mxu0 0.0
        %6374 = vmatprep.subr.mxu0 0.0
        %6375 = vmatpush1.msra.mxu0 0.0
        %6376 = vmatprep.subr.mxu0 0.0
        %6377 = vmatpush1.msra.mxu0 0.0
        %6378 = vmatprep.subr.mxu0 0.0
        %6379 = vmatpush1.msra.mxu0 0.0
        %6380 = vmatprep.subr.mxu0 0.0
        %6381 = vmatpush1.msra.mxu0 0.0
        %6382 = vmatprep.subr.mxu0 0.0
        %6383 = vmatpush1.msra.mxu0 0.0
        %6384 = vmatprep.subr.mxu0 0.0
        %6385 = vmatpush1.msra.mxu0 0.0
        %6386 = vmatprep.subr.mxu0 0.0
        %6387 = vmatpush1.msra.mxu0 0.0
        %6388 = vmatprep.mubr.f32.mxu0 0.0
        %v6389 = vand.u32 %v6095, 4294901760
        %v6390 = vsub.f32 %v6095, %v6389
        %v6391 = vand.u32 %v6390, 4294901760
        %6392 = vmatmul.mubr.f32.gmra.mrb[0].mxu0 %v6391
        %v6393 = vpop.f32.mrb[0].mxu0
        %v6394 = vadd.f32 %v6320, %v6393
        %v6395 = vpop.f32.mrb[0].mxu0
        %6396 = vdwg.mxu0
        %6397 = vmatprep.subr.mxu0 0.0
        %v6398 = vand.u32 %v5189, 4294901760
        %v6399 = vsub.f32 %v5189, %v6398
        %v6400 = vand.u32 %v6399, 4294901760
        %6401 = vmatpush1.msra.mxu0 %v6400
        %6402 = vmatprep.subr.mxu0 0.0
        %6403 = vmatpush1.msra.mxu0 0.0
        %6404 = vmatprep.subr.mxu0 0.0
        %6405 = vmatpush1.msra.mxu0 0.0
        %6406 = vmatprep.subr.mxu0 0.0
        %6407 = vmatpush1.msra.mxu0 0.0
        %6408 = vmatprep.subr.mxu0 0.0
        %6409 = vmatpush1.msra.mxu0 0.0
        %6410 = vmatprep.subr.mxu0 0.0
        %6411 = vmatpush1.msra.mxu0 0.0
        %6412 = vmatprep.subr.mxu0 0.0
        %6413 = vmatpush1.msra.mxu0 0.0
        %6414 = vmatprep.subr.mxu0 0.0
        %6415 = vmatpush1.msra.mxu0 0.0
        %6416 = vmatprep.subr.mxu0 0.0
        %6417 = vmatpush1.msra.mxu0 0.0
        %6418 = vmatprep.subr.mxu0 0.0
        %6419 = vmatpush1.msra.mxu0 0.0
        %6420 = vmatprep.subr.mxu0 0.0
        %6421 = vmatpush1.msra.mxu0 0.0
        %6422 = vmatprep.subr.mxu0 0.0
        %6423 = vmatpush1.msra.mxu0 0.0
        %6424 = vmatprep.subr.mxu0 0.0
        %6425 = vmatpush1.msra.mxu0 0.0
        %6426 = vmatprep.subr.mxu0 0.0
        %6427 = vmatpush1.msra.mxu0 0.0
        %6428 = vmatprep.subr.mxu0 0.0
        %6429 = vmatpush1.msra.mxu0 0.0
        %6430 = vmatprep.subr.mxu0 0.0
        %6431 = vmatpush1.msra.mxu0 0.0
        %6432 = vmatprep.subr.mxu0 0.0
        %6433 = vmatpush1.msra.mxu0 0.0
        %6434 = vmatprep.subr.mxu0 0.0
        %6435 = vmatpush1.msra.mxu0 0.0
        %6436 = vmatprep.subr.mxu0 0.0
        %6437 = vmatpush1.msra.mxu0 0.0
        %6438 = vmatprep.subr.mxu0 0.0
        %6439 = vmatpush1.msra.mxu0 0.0
        %6440 = vmatprep.subr.mxu0 0.0
        %6441 = vmatpush1.msra.mxu0 0.0
        %6442 = vmatprep.subr.mxu0 0.0
        %6443 = vmatpush1.msra.mxu0 0.0
        %6444 = vmatprep.subr.mxu0 0.0
        %6445 = vmatpush1.msra.mxu0 0.0
        %6446 = vmatprep.subr.mxu0 0.0
        %6447 = vmatpush1.msra.mxu0 0.0
        %6448 = vmatprep.subr.mxu0 0.0
        %6449 = vmatpush1.msra.mxu0 0.0
        %6450 = vmatprep.subr.mxu0 0.0
        %6451 = vmatpush1.msra.mxu0 0.0
        %6452 = vmatprep.subr.mxu0 0.0
        %6453 = vmatpush1.msra.mxu0 0.0
        %6454 = vmatprep.subr.mxu0 0.0
        %6455 = vmatpush1.msra.mxu0 0.0
        %6456 = vmatprep.subr.mxu0 0.0
        %6457 = vmatpush1.msra.mxu0 0.0
        %6458 = vmatprep.subr.mxu0 0.0
        %6459 = vmatpush1.msra.mxu0 0.0
        %6460 = vmatprep.subr.mxu0 0.0
        %6461 = vmatpush1.msra.mxu0 0.0
        %6462 = vmatprep.subr.mxu0 0.0
        %6463 = vmatpush1.msra.mxu0 0.0
        %6464 = vmatprep.mubr.f32.mxu0 0.0
        %v6465 = vand.u32 %v6095, 4294901760
        %6466 = vmatmul.mubr.f32.gmra.mrb[0].mxu0 %v6465
        %v6467 = vpop.f32.mrb[0].mxu0
        %v6468 = vadd.f32 %v6394, %v6467
        %v6469 = vpop.f32.mrb[0].mxu0
        %6470 = vdwg.mxu0
        %6471 = vmatprep.subr.mxu0 0.0
        %v6472 = vand.u32 %v5189, 4294901760
        %6473 = vmatpush1.msra.mxu0 %v6472
        %6474 = vmatprep.subr.mxu0 0.0
        %6475 = vmatpush1.msra.mxu0 0.0
        %6476 = vmatprep.subr.mxu0 0.0
        %6477 = vmatpush1.msra.mxu0 0.0
        %6478 = vmatprep.subr.mxu0 0.0
        %6479 = vmatpush1.msra.mxu0 0.0
        %6480 = vmatprep.subr.mxu0 0.0
        %6481 = vmatpush1.msra.mxu0 0.0
        %6482 = vmatprep.subr.mxu0 0.0
        %6483 = vmatpush1.msra.mxu0 0.0
        %6484 = vmatprep.subr.mxu0 0.0
        %6485 = vmatpush1.msra.mxu0 0.0
        %6486 = vmatprep.subr.mxu0 0.0
        %6487 = vmatpush1.msra.mxu0 0.0
        %6488 = vmatprep.subr.mxu0 0.0
        %6489 = vmatpush1.msra.mxu0 0.0
        %6490 = vmatprep.subr.mxu0 0.0
        %6491 = vmatpush1.msra.mxu0 0.0
        %6492 = vmatprep.subr.mxu0 0.0
        %6493 = vmatpush1.msra.mxu0 0.0
        %6494 = vmatprep.subr.mxu0 0.0
        %6495 = vmatpush1.msra.mxu0 0.0
        %6496 = vmatprep.subr.mxu0 0.0
        %6497 = vmatpush1.msra.mxu0 0.0
        %6498 = vmatprep.subr.mxu0 0.0
        %6499 = vmatpush1.msra.mxu0 0.0
        %6500 = vmatprep.subr.mxu0 0.0
        %6501 = vmatpush1.msra.mxu0 0.0
        %6502 = vmatprep.subr.mxu0 0.0
        %6503 = vmatpush1.msra.mxu0 0.0
        %6504 = vmatprep.subr.mxu0 0.0
        %6505 = vmatpush1.msra.mxu0 0.0
        %6506 = vmatprep.subr.mxu0 0.0
        %6507 = vmatpush1.msra.mxu0 0.0
        %6508 = vmatprep.subr.mxu0 0.0
        %6509 = vmatpush1.msra.mxu0 0.0
        %6510 = vmatprep.subr.mxu0 0.0
        %6511 = vmatpush1.msra.mxu0 0.0
        %6512 = vmatprep.subr.mxu0 0.0
        %6513 = vmatpush1.msra.mxu0 0.0
        %6514 = vmatprep.subr.mxu0 0.0
        %6515 = vmatpush1.msra.mxu0 0.0
        %6516 = vmatprep.subr.mxu0 0.0
        %6517 = vmatpush1.msra.mxu0 0.0
        %6518 = vmatprep.subr.mxu0 0.0
        %6519 = vmatpush1.msra.mxu0 0.0
        %6520 = vmatprep.subr.mxu0 0.0
        %6521 = vmatpush1.msra.mxu0 0.0
        %6522 = vmatprep.subr.mxu0 0.0
        %6523 = vmatpush1.msra.mxu0 0.0
        %6524 = vmatprep.subr.mxu0 0.0
        %6525 = vmatpush1.msra.mxu0 0.0
        %6526 = vmatprep.subr.mxu0 0.0
        %6527 = vmatpush1.msra.mxu0 0.0
        %6528 = vmatprep.subr.mxu0 0.0
        %6529 = vmatpush1.msra.mxu0 0.0
        %6530 = vmatprep.subr.mxu0 0.0
        %6531 = vmatpush1.msra.mxu0 0.0
        %6532 = vmatprep.subr.mxu0 0.0
        %6533 = vmatpush1.msra.mxu0 0.0
        %6534 = vmatprep.subr.mxu0 0.0
        %6535 = vmatpush1.msra.mxu0 0.0
        %6536 = vmatprep.mubr.f32.mxu0 0.0
        %v6537 = vand.u32 %v6095, 4294901760
        %6538 = vmatmul.mubr.f32.gmra.mrb[0].mxu0 %v6537
        %v6539 = vpop.f32.mrb[0].mxu0
        %v6540 = vadd.f32 %v6468, %v6539
        %v6541 = vpop.f32.mrb[0].mxu0
        %6542 = vdwg.mxu0
        %v6543 = vadd.f32 %v6090, %v6540
        %v6545 = vlaneseq
        %v6546 = vshrl.u32 %v6545, 7
        %v6547 = vsub.s32 0, %v6546
        %v6548 = vrot.slane %v5190, %v6547
        %v6550 = vadd.f32 %v6543, %v6548
        %vm6551 = vcmp.gt.f32.partialorder %v6550, 0.0
        %v6552 = vmul.f32 %v6550, 0.01
        %v6553 = vsel %vm6551, %v6550, %v6552
        %v6554 = vld [vmem:[%s26] sm:$0xff]
        %v6555 = vld [vmem:[#allocation4] sm:$0x1]
        %v6557 = vlaneseq
        %v6558 = vshrl.u32 %v6557, 7
        %v6559 = vsub.s32 0, %v6558
        %v6560 = vrot.slane %v6555, %v6559
        %v6563 = vsel %vm2359, %v6553, 0
        %6565 = vmatprep.subr.mxu0 0.0
        %v6566 = vand.u32 %v6554, 4294901760
        %6567 = vmatpush1.msra.mxu0 %v6566
        %6568 = vmatprep.subr.mxu0 0.0
        %6569 = vmatpush1.msra.mxu0 0.0
        %6570 = vmatprep.subr.mxu0 0.0
        %6571 = vmatpush1.msra.mxu0 0.0
        %6572 = vmatprep.subr.mxu0 0.0
        %6573 = vmatpush1.msra.mxu0 0.0
        %6574 = vmatprep.subr.mxu0 0.0
        %6575 = vmatpush1.msra.mxu0 0.0
        %6576 = vmatprep.subr.mxu0 0.0
        %6577 = vmatpush1.msra.mxu0 0.0
        %6578 = vmatprep.subr.mxu0 0.0
        %6579 = vmatpush1.msra.mxu0 0.0
        %6580 = vmatprep.subr.mxu0 0.0
        %6581 = vmatpush1.msra.mxu0 0.0
        %6582 = vmatprep.subr.mxu0 0.0
        %6583 = vmatpush1.msra.mxu0 0.0
        %6584 = vmatprep.subr.mxu0 0.0
        %6585 = vmatpush1.msra.mxu0 0.0
        %6586 = vmatprep.subr.mxu0 0.0
        %6587 = vmatpush1.msra.mxu0 0.0
        %6588 = vmatprep.subr.mxu0 0.0
        %6589 = vmatpush1.msra.mxu0 0.0
        %6590 = vmatprep.subr.mxu0 0.0
        %6591 = vmatpush1.msra.mxu0 0.0
        %6592 = vmatprep.subr.mxu0 0.0
        %6593 = vmatpush1.msra.mxu0 0.0
        %6594 = vmatprep.subr.mxu0 0.0
        %6595 = vmatpush1.msra.mxu0 0.0
        %6596 = vmatprep.subr.mxu0 0.0
        %6597 = vmatpush1.msra.mxu0 0.0
        %6598 = vmatprep.subr.mxu0 0.0
        %6599 = vmatpush1.msra.mxu0 0.0
        %6600 = vmatprep.subr.mxu0 0.0
        %6601 = vmatpush1.msra.mxu0 0.0
        %6602 = vmatprep.subr.mxu0 0.0
        %6603 = vmatpush1.msra.mxu0 0.0
        %6604 = vmatprep.subr.mxu0 0.0
        %6605 = vmatpush1.msra.mxu0 0.0
        %6606 = vmatprep.subr.mxu0 0.0
        %6607 = vmatpush1.msra.mxu0 0.0
        %6608 = vmatprep.subr.mxu0 0.0
        %6609 = vmatpush1.msra.mxu0 0.0
        %6610 = vmatprep.subr.mxu0 0.0
        %6611 = vmatpush1.msra.mxu0 0.0
        %6612 = vmatprep.subr.mxu0 0.0
        %6613 = vmatpush1.msra.mxu0 0.0
        %6614 = vmatprep.subr.mxu0 0.0
        %6615 = vmatpush1.msra.mxu0 0.0
        %6616 = vmatprep.subr.mxu0 0.0
        %6617 = vmatpush1.msra.mxu0 0.0
        %6618 = vmatprep.subr.mxu0 0.0
        %6619 = vmatpush1.msra.mxu0 0.0
        %6620 = vmatprep.subr.mxu0 0.0
        %6621 = vmatpush1.msra.mxu0 0.0
        %6622 = vmatprep.subr.mxu0 0.0
        %6623 = vmatpush1.msra.mxu0 0.0
        %6624 = vmatprep.subr.mxu0 0.0
        %6625 = vmatpush1.msra.mxu0 0.0
        %6626 = vmatprep.subr.mxu0 0.0
        %6627 = vmatpush1.msra.mxu0 0.0
        %6628 = vmatprep.subr.mxu0 0.0
        %6629 = vmatpush1.msra.mxu0 0.0
        %6630 = vmatprep.mubr.f32.mxu0 0.0
        %v6631 = vand.u32 %v6563, 4294901760
        %v6632 = vsub.f32 %v6563, %v6631
        %v6633 = vand.u32 %v6632, 4294901760
        %v6634 = vsub.f32 %v6632, %v6633
        %v6635 = vand.u32 %v6634, 4294901760
        %6636 = vmatmul.mubr.f32.gmra.mrb[0].mxu0 %v6635
        %v6637 = vpop.f32.mrb[0].mxu0
        %v6638 = vadd.f32 %v6560, %v6637
        %v6639 = vpop.f32.mrb[0].mxu0
        %6640 = vdwg.mxu0
        %6641 = vmatprep.subr.mxu0 0.0
        %v6642 = vand.u32 %v6554, 4294901760
        %v6643 = vsub.f32 %v6554, %v6642
        %v6644 = vand.u32 %v6643, 4294901760
        %v6645 = vsub.f32 %v6643, %v6644
        %v6646 = vand.u32 %v6645, 4294901760
        %6647 = vmatpush1.msra.mxu0 %v6646
        %6648 = vmatprep.subr.mxu0 0.0
        %6649 = vmatpush1.msra.mxu0 0.0
        %6650 = vmatprep.subr.mxu0 0.0
        %6651 = vmatpush1.msra.mxu0 0.0
        %6652 = vmatprep.subr.mxu0 0.0
        %6653 = vmatpush1.msra.mxu0 0.0
        %6654 = vmatprep.subr.mxu0 0.0
        %6655 = vmatpush1.msra.mxu0 0.0
        %6656 = vmatprep.subr.mxu0 0.0
        %6657 = vmatpush1.msra.mxu0 0.0
        %6658 = vmatprep.subr.mxu0 0.0
        %6659 = vmatpush1.msra.mxu0 0.0
        %6660 = vmatprep.subr.mxu0 0.0
        %6661 = vmatpush1.msra.mxu0 0.0
        %6662 = vmatprep.subr.mxu0 0.0
        %6663 = vmatpush1.msra.mxu0 0.0
        %6664 = vmatprep.subr.mxu0 0.0
        %6665 = vmatpush1.msra.mxu0 0.0
        %6666 = vmatprep.subr.mxu0 0.0
        %6667 = vmatpush1.msra.mxu0 0.0
        %6668 = vmatprep.subr.mxu0 0.0
        %6669 = vmatpush1.msra.mxu0 0.0
        %6670 = vmatprep.subr.mxu0 0.0
        %6671 = vmatpush1.msra.mxu0 0.0
        %6672 = vmatprep.subr.mxu0 0.0
        %6673 = vmatpush1.msra.mxu0 0.0
        %6674 = vmatprep.subr.mxu0 0.0
        %6675 = vmatpush1.msra.mxu0 0.0
        %6676 = vmatprep.subr.mxu0 0.0
        %6677 = vmatpush1.msra.mxu0 0.0
        %6678 = vmatprep.subr.mxu0 0.0
        %6679 = vmatpush1.msra.mxu0 0.0
        %6680 = vmatprep.subr.mxu0 0.0
        %6681 = vmatpush1.msra.mxu0 0.0
        %6682 = vmatprep.subr.mxu0 0.0
        %6683 = vmatpush1.msra.mxu0 0.0
        %6684 = vmatprep.subr.mxu0 0.0
        %6685 = vmatpush1.msra.mxu0 0.0
        %6686 = vmatprep.subr.mxu0 0.0
        %6687 = vmatpush1.msra.mxu0 0.0
        %6688 = vmatprep.subr.mxu0 0.0
        %6689 = vmatpush1.msra.mxu0 0.0
        %6690 = vmatprep.subr.mxu0 0.0
        %6691 = vmatpush1.msra.mxu0 0.0
        %6692 = vmatprep.subr.mxu0 0.0
        %6693 = vmatpush1.msra.mxu0 0.0
        %6694 = vmatprep.subr.mxu0 0.0
        %6695 = vmatpush1.msra.mxu0 0.0
        %6696 = vmatprep.subr.mxu0 0.0
        %6697 = vmatpush1.msra.mxu0 0.0
        %6698 = vmatprep.subr.mxu0 0.0
        %6699 = vmatpush1.msra.mxu0 0.0
        %6700 = vmatprep.subr.mxu0 0.0
        %6701 = vmatpush1.msra.mxu0 0.0
        %6702 = vmatprep.subr.mxu0 0.0
        %6703 = vmatpush1.msra.mxu0 0.0
        %6704 = vmatprep.subr.mxu0 0.0
        %6705 = vmatpush1.msra.mxu0 0.0
        %6706 = vmatprep.subr.mxu0 0.0
        %6707 = vmatpush1.msra.mxu0 0.0
        %6708 = vmatprep.subr.mxu0 0.0
        %6709 = vmatpush1.msra.mxu0 0.0
        %6710 = vmatprep.mubr.f32.mxu0 0.0
        %v6711 = vand.u32 %v6563, 4294901760
        %6712 = vmatmul.mubr.f32.gmra.mrb[0].mxu0 %v6711
        %v6713 = vpop.f32.mrb[0].mxu0
        %v6714 = vadd.f32 %v6638, %v6713
        %v6715 = vpop.f32.mrb[0].mxu0
        %6716 = vdwg.mxu0
        %6717 = vmatprep.subr.mxu0 0.0
        %v6718 = vand.u32 %v6554, 4294901760
        %v6719 = vsub.f32 %v6554, %v6718
        %6720 = vmatpush1.msra.mxu0 %v6719
        %6721 = vmatprep.subr.mxu0 0.0
        %6722 = vmatpush1.msra.mxu0 0.0
        %6723 = vmatprep.subr.mxu0 0.0
        %6724 = vmatpush1.msra.mxu0 0.0
        %6725 = vmatprep.subr.mxu0 0.0
        %6726 = vmatpush1.msra.mxu0 0.0
        %6727 = vmatprep.subr.mxu0 0.0
        %6728 = vmatpush1.msra.mxu0 0.0
        %6729 = vmatprep.subr.mxu0 0.0
        %6730 = vmatpush1.msra.mxu0 0.0
        %6731 = vmatprep.subr.mxu0 0.0
        %6732 = vmatpush1.msra.mxu0 0.0
        %6733 = vmatprep.subr.mxu0 0.0
        %6734 = vmatpush1.msra.mxu0 0.0
        %6735 = vmatprep.subr.mxu0 0.0
        %6736 = vmatpush1.msra.mxu0 0.0
        %6737 = vmatprep.subr.mxu0 0.0
        %6738 = vmatpush1.msra.mxu0 0.0
        %6739 = vmatprep.subr.mxu0 0.0
        %6740 = vmatpush1.msra.mxu0 0.0
        %6741 = vmatprep.subr.mxu0 0.0
        %6742 = vmatpush1.msra.mxu0 0.0
        %6743 = vmatprep.subr.mxu0 0.0
        %6744 = vmatpush1.msra.mxu0 0.0
        %6745 = vmatprep.subr.mxu0 0.0
        %6746 = vmatpush1.msra.mxu0 0.0
        %6747 = vmatprep.subr.mxu0 0.0
        %6748 = vmatpush1.msra.mxu0 0.0
        %6749 = vmatprep.subr.mxu0 0.0
        %6750 = vmatpush1.msra.mxu0 0.0
        %6751 = vmatprep.subr.mxu0 0.0
        %6752 = vmatpush1.msra.mxu0 0.0
        %6753 = vmatprep.subr.mxu0 0.0
        %6754 = vmatpush1.msra.mxu0 0.0
        %6755 = vmatprep.subr.mxu0 0.0
        %6756 = vmatpush1.msra.mxu0 0.0
        %6757 = vmatprep.subr.mxu0 0.0
        %6758 = vmatpush1.msra.mxu0 0.0
        %6759 = vmatprep.subr.mxu0 0.0
        %6760 = vmatpush1.msra.mxu0 0.0
        %6761 = vmatprep.subr.mxu0 0.0
        %6762 = vmatpush1.msra.mxu0 0.0
        %6763 = vmatprep.subr.mxu0 0.0
        %6764 = vmatpush1.msra.mxu0 0.0
        %6765 = vmatprep.subr.mxu0 0.0
        %6766 = vmatpush1.msra.mxu0 0.0
        %6767 = vmatprep.subr.mxu0 0.0
        %6768 = vmatpush1.msra.mxu0 0.0
        %6769 = vmatprep.subr.mxu0 0.0
        %6770 = vmatpush1.msra.mxu0 0.0
        %6771 = vmatprep.subr.mxu0 0.0
        %6772 = vmatpush1.msra.mxu0 0.0
        %6773 = vmatprep.subr.mxu0 0.0
        %6774 = vmatpush1.msra.mxu0 0.0
        %6775 = vmatprep.subr.mxu0 0.0
        %6776 = vmatpush1.msra.mxu0 0.0
        %6777 = vmatprep.subr.mxu0 0.0
        %6778 = vmatpush1.msra.mxu0 0.0
        %6779 = vmatprep.subr.mxu0 0.0
        %6780 = vmatpush1.msra.mxu0 0.0
        %6781 = vmatprep.subr.mxu0 0.0
        %6782 = vmatpush1.msra.mxu0 0.0
        %6783 = vmatprep.mubr.f32.mxu0 0.0
        %v6784 = vand.u32 %v6563, 4294901760
        %v6785 = vsub.f32 %v6563, %v6784
        %6786 = vmatmul.mubr.f32.gmra.mrb[0].mxu0 %v6785
        %v6787 = vpop.f32.mrb[0].mxu0
        %v6788 = vadd.f32 %v6714, %v6787
        %v6789 = vpop.f32.mrb[0].mxu0
        %6790 = vdwg.mxu0
        %6791 = vmatprep.subr.mxu0 0.0
        %v6792 = vand.u32 %v6554, 4294901760
        %6793 = vmatpush1.msra.mxu0 %v6792
        %6794 = vmatprep.subr.mxu0 0.0
        %6795 = vmatpush1.msra.mxu0 0.0
        %6796 = vmatprep.subr.mxu0 0.0
        %6797 = vmatpush1.msra.mxu0 0.0
        %6798 = vmatprep.subr.mxu0 0.0
        %6799 = vmatpush1.msra.mxu0 0.0
        %6800 = vmatprep.subr.mxu0 0.0
        %6801 = vmatpush1.msra.mxu0 0.0
        %6802 = vmatprep.subr.mxu0 0.0
        %6803 = vmatpush1.msra.mxu0 0.0
        %6804 = vmatprep.subr.mxu0 0.0
        %6805 = vmatpush1.msra.mxu0 0.0
        %6806 = vmatprep.subr.mxu0 0.0
        %6807 = vmatpush1.msra.mxu0 0.0
        %6808 = vmatprep.subr.mxu0 0.0
        %6809 = vmatpush1.msra.mxu0 0.0
        %6810 = vmatprep.subr.mxu0 0.0
        %6811 = vmatpush1.msra.mxu0 0.0
        %6812 = vmatprep.subr.mxu0 0.0
        %6813 = vmatpush1.msra.mxu0 0.0
        %6814 = vmatprep.subr.mxu0 0.0
        %6815 = vmatpush1.msra.mxu0 0.0
        %6816 = vmatprep.subr.mxu0 0.0
        %6817 = vmatpush1.msra.mxu0 0.0
        %6818 = vmatprep.subr.mxu0 0.0
        %6819 = vmatpush1.msra.mxu0 0.0
        %6820 = vmatprep.subr.mxu0 0.0
        %6821 = vmatpush1.msra.mxu0 0.0
        %6822 = vmatprep.subr.mxu0 0.0
        %6823 = vmatpush1.msra.mxu0 0.0
        %6824 = vmatprep.subr.mxu0 0.0
        %6825 = vmatpush1.msra.mxu0 0.0
        %6826 = vmatprep.subr.mxu0 0.0
        %6827 = vmatpush1.msra.mxu0 0.0
        %6828 = vmatprep.subr.mxu0 0.0
        %6829 = vmatpush1.msra.mxu0 0.0
        %6830 = vmatprep.subr.mxu0 0.0
        %6831 = vmatpush1.msra.mxu0 0.0
        %6832 = vmatprep.subr.mxu0 0.0
        %6833 = vmatpush1.msra.mxu0 0.0
        %6834 = vmatprep.subr.mxu0 0.0
        %6835 = vmatpush1.msra.mxu0 0.0
        %6836 = vmatprep.subr.mxu0 0.0
        %6837 = vmatpush1.msra.mxu0 0.0
        %6838 = vmatprep.subr.mxu0 0.0
        %6839 = vmatpush1.msra.mxu0 0.0
        %6840 = vmatprep.subr.mxu0 0.0
        %6841 = vmatpush1.msra.mxu0 0.0
        %6842 = vmatprep.subr.mxu0 0.0
        %6843 = vmatpush1.msra.mxu0 0.0
        %6844 = vmatprep.subr.mxu0 0.0
        %6845 = vmatpush1.msra.mxu0 0.0
        %6846 = vmatprep.subr.mxu0 0.0
        %6847 = vmatpush1.msra.mxu0 0.0
        %6848 = vmatprep.subr.mxu0 0.0
        %6849 = vmatpush1.msra.mxu0 0.0
        %6850 = vmatprep.subr.mxu0 0.0
        %6851 = vmatpush1.msra.mxu0 0.0
        %6852 = vmatprep.subr.mxu0 0.0
        %6853 = vmatpush1.msra.mxu0 0.0
        %6854 = vmatprep.subr.mxu0 0.0
        %6855 = vmatpush1.msra.mxu0 0.0
        %6856 = vmatprep.mubr.f32.mxu0 0.0
        %v6857 = vand.u32 %v6563, 4294901760
        %v6858 = vsub.f32 %v6563, %v6857
        %v6859 = vand.u32 %v6858, 4294901760
        %6860 = vmatmul.mubr.f32.gmra.mrb[0].mxu0 %v6859
        %v6861 = vpop.f32.mrb[0].mxu0
        %v6862 = vadd.f32 %v6788, %v6861
        %v6863 = vpop.f32.mrb[0].mxu0
        %6864 = vdwg.mxu0
        %6865 = vmatprep.subr.mxu0 0.0
        %v6866 = vand.u32 %v6554, 4294901760
        %v6867 = vsub.f32 %v6554, %v6866
        %v6868 = vand.u32 %v6867, 4294901760
        %6869 = vmatpush1.msra.mxu0 %v6868
        %6870 = vmatprep.subr.mxu0 0.0
        %6871 = vmatpush1.msra.mxu0 0.0
        %6872 = vmatprep.subr.mxu0 0.0
        %6873 = vmatpush1.msra.mxu0 0.0
        %6874 = vmatprep.subr.mxu0 0.0
        %6875 = vmatpush1.msra.mxu0 0.0
        %6876 = vmatprep.subr.mxu0 0.0
        %6877 = vmatpush1.msra.mxu0 0.0
        %6878 = vmatprep.subr.mxu0 0.0
        %6879 = vmatpush1.msra.mxu0 0.0
        %6880 = vmatprep.subr.mxu0 0.0
        %6881 = vmatpush1.msra.mxu0 0.0
        %6882 = vmatprep.subr.mxu0 0.0
        %6883 = vmatpush1.msra.mxu0 0.0
        %6884 = vmatprep.subr.mxu0 0.0
        %6885 = vmatpush1.msra.mxu0 0.0
        %6886 = vmatprep.subr.mxu0 0.0
        %6887 = vmatpush1.msra.mxu0 0.0
        %6888 = vmatprep.subr.mxu0 0.0
        %6889 = vmatpush1.msra.mxu0 0.0
        %6890 = vmatprep.subr.mxu0 0.0
        %6891 = vmatpush1.msra.mxu0 0.0
        %6892 = vmatprep.subr.mxu0 0.0
        %6893 = vmatpush1.msra.mxu0 0.0
        %6894 = vmatprep.subr.mxu0 0.0
        %6895 = vmatpush1.msra.mxu0 0.0
        %6896 = vmatprep.subr.mxu0 0.0
        %6897 = vmatpush1.msra.mxu0 0.0
        %6898 = vmatprep.subr.mxu0 0.0
        %6899 = vmatpush1.msra.mxu0 0.0
        %6900 = vmatprep.subr.mxu0 0.0
        %6901 = vmatpush1.msra.mxu0 0.0
        %6902 = vmatprep.subr.mxu0 0.0
        %6903 = vmatpush1.msra.mxu0 0.0
        %6904 = vmatprep.subr.mxu0 0.0
        %6905 = vmatpush1.msra.mxu0 0.0
        %6906 = vmatprep.subr.mxu0 0.0
        %6907 = vmatpush1.msra.mxu0 0.0
        %6908 = vmatprep.subr.mxu0 0.0
        %6909 = vmatpush1.msra.mxu0 0.0
        %6910 = vmatprep.subr.mxu0 0.0
        %6911 = vmatpush1.msra.mxu0 0.0
        %6912 = vmatprep.subr.mxu0 0.0
        %6913 = vmatpush1.msra.mxu0 0.0
        %6914 = vmatprep.subr.mxu0 0.0
        %6915 = vmatpush1.msra.mxu0 0.0
        %6916 = vmatprep.subr.mxu0 0.0
        %6917 = vmatpush1.msra.mxu0 0.0
        %6918 = vmatprep.subr.mxu0 0.0
        %6919 = vmatpush1.msra.mxu0 0.0
        %6920 = vmatprep.subr.mxu0 0.0
        %6921 = vmatpush1.msra.mxu0 0.0
        %6922 = vmatprep.subr.mxu0 0.0
        %6923 = vmatpush1.msra.mxu0 0.0
        %6924 = vmatprep.subr.mxu0 0.0
        %6925 = vmatpush1.msra.mxu0 0.0
        %6926 = vmatprep.subr.mxu0 0.0
        %6927 = vmatpush1.msra.mxu0 0.0
        %6928 = vmatprep.subr.mxu0 0.0
        %6929 = vmatpush1.msra.mxu0 0.0
        %6930 = vmatprep.subr.mxu0 0.0
        %6931 = vmatpush1.msra.mxu0 0.0
        %6932 = vmatprep.mubr.f32.mxu0 0.0
        %v6933 = vand.u32 %v6563, 4294901760
        %6934 = vmatmul.mubr.f32.gmra.mrb[0].mxu0 %v6933
        %v6935 = vpop.f32.mrb[0].mxu0
        %v6936 = vadd.f32 %v6862, %v6935
        %v6937 = vpop.f32.mrb[0].mxu0
        %6938 = vdwg.mxu0
        %6939 = vmatprep.subr.mxu0 0.0
        %v6940 = vand.u32 %v6554, 4294901760
        %6941 = vmatpush1.msra.mxu0 %v6940
        %6942 = vmatprep.subr.mxu0 0.0
        %6943 = vmatpush1.msra.mxu0 0.0
        %6944 = vmatprep.subr.mxu0 0.0
        %6945 = vmatpush1.msra.mxu0 0.0
        %6946 = vmatprep.subr.mxu0 0.0
        %6947 = vmatpush1.msra.mxu0 0.0
        %6948 = vmatprep.subr.mxu0 0.0
        %6949 = vmatpush1.msra.mxu0 0.0
        %6950 = vmatprep.subr.mxu0 0.0
        %6951 = vmatpush1.msra.mxu0 0.0
        %6952 = vmatprep.subr.mxu0 0.0
        %6953 = vmatpush1.msra.mxu0 0.0
        %6954 = vmatprep.subr.mxu0 0.0
        %6955 = vmatpush1.msra.mxu0 0.0
        %6956 = vmatprep.subr.mxu0 0.0
        %6957 = vmatpush1.msra.mxu0 0.0
        %6958 = vmatprep.subr.mxu0 0.0
        %6959 = vmatpush1.msra.mxu0 0.0
        %6960 = vmatprep.subr.mxu0 0.0
        %6961 = vmatpush1.msra.mxu0 0.0
        %6962 = vmatprep.subr.mxu0 0.0
        %6963 = vmatpush1.msra.mxu0 0.0
        %6964 = vmatprep.subr.mxu0 0.0
        %6965 = vmatpush1.msra.mxu0 0.0
        %6966 = vmatprep.subr.mxu0 0.0
        %6967 = vmatpush1.msra.mxu0 0.0
        %6968 = vmatprep.subr.mxu0 0.0
        %6969 = vmatpush1.msra.mxu0 0.0
        %6970 = vmatprep.subr.mxu0 0.0
        %6971 = vmatpush1.msra.mxu0 0.0
        %6972 = vmatprep.subr.mxu0 0.0
        %6973 = vmatpush1.msra.mxu0 0.0
        %6974 = vmatprep.subr.mxu0 0.0
        %6975 = vmatpush1.msra.mxu0 0.0
        %6976 = vmatprep.subr.mxu0 0.0
        %6977 = vmatpush1.msra.mxu0 0.0
        %6978 = vmatprep.subr.mxu0 0.0
        %6979 = vmatpush1.msra.mxu0 0.0
        %6980 = vmatprep.subr.mxu0 0.0
        %6981 = vmatpush1.msra.mxu0 0.0
        %6982 = vmatprep.subr.mxu0 0.0
        %6983 = vmatpush1.msra.mxu0 0.0
        %6984 = vmatprep.subr.mxu0 0.0
        %6985 = vmatpush1.msra.mxu0 0.0
        %6986 = vmatprep.subr.mxu0 0.0
        %6987 = vmatpush1.msra.mxu0 0.0
        %6988 = vmatprep.subr.mxu0 0.0
        %6989 = vmatpush1.msra.mxu0 0.0
        %6990 = vmatprep.subr.mxu0 0.0
        %6991 = vmatpush1.msra.mxu0 0.0
        %6992 = vmatprep.subr.mxu0 0.0
        %6993 = vmatpush1.msra.mxu0 0.0
        %6994 = vmatprep.subr.mxu0 0.0
        %6995 = vmatpush1.msra.mxu0 0.0
        %6996 = vmatprep.subr.mxu0 0.0
        %6997 = vmatpush1.msra.mxu0 0.0
        %6998 = vmatprep.subr.mxu0 0.0
        %6999 = vmatpush1.msra.mxu0 0.0
        %7000 = vmatprep.subr.mxu0 0.0
        %7001 = vmatpush1.msra.mxu0 0.0
        %7002 = vmatprep.subr.mxu0 0.0
        %7003 = vmatpush1.msra.mxu0 0.0
        %7004 = vmatprep.mubr.f32.mxu0 0.0
        %v7005 = vand.u32 %v6563, 4294901760
        %7006 = vmatmul.mubr.f32.gmra.mrb[0].mxu0 %v7005
        %v7007 = vpop.f32.mrb[0].mxu0
        %v7008 = vadd.f32 %v6936, %v7007
        %v7009 = vpop.f32.mrb[0].mxu0
        %7010 = vdwg.mxu0
        %vm7011 = vcmask 7168
        %7012 = vst.msk [vmem:[%s944] sm:$0xff] %vm7011, %v7008
      $region136: #{tpu_custom_call.1} parent=131 // pred_fallthru
        _
      %p7013 = scmp.lt.s32.totalorder %s45, 1
      %s7014 = scalar_select %p7013, %s45, 1
      %s7015 = smul.addr %s7014, 8
      %s7016 = scalar_lea.vmem %s28, %s7015
      // Predicated region
      $region137: #{tpu_custom_call.1} parent=131 // pred_check
        %p7017 = pneg %p685
      $region138: #{tpu_custom_call.1} parent=131 // pred_check_branch
        %7019 = sbr.rel (%p7017) target = $region140
      $region139: #{tpu_custom_call.1} parent=131 // pred_region
        _
      $region140: #{tpu_custom_call.1} parent=131 // pred_fallthru
        _
    $region132: #{tpu_custom_call.1} parent=5 // pred_fallthru
      _
    %p7020 = scmp.le.s32.totalorder 2, %s36
    // Predicated region
    $region141: #{tpu_custom_call.1} parent=5 // pred_check
      %p7021 = pneg %p7020
    $region142: #{tpu_custom_call.1} parent=5 // pred_check_branch
      %7023 = sbr.rel (%p7021) target = $region144
    $region143: #{tpu_custom_call.1} parent=5 // pred_region
      %s7024 = ssub.s32 %s36, 2
      // Predicated region
      $region145: #{tpu_custom_call.1} parent=143 // pred_check
        %p7025 = pneg %p691
      $region146: #{tpu_custom_call.1} parent=143 // pred_check_branch
        %7027 = sbr.rel (%p7025) target = $region148
      $region147: #{tpu_custom_call.1} parent=143 // pred_region
        %p7028 = scmp.lt.s32.totalorder %s47, 1
        %s7029 = scalar_select %p7028, %s47, 1
        %s7030 = smul.addr %s7029, 8
        %s7031 = scalar_lea.vmem %s28, %s7030
      $region148: #{tpu_custom_call.1} parent=143 // pred_fallthru
        _
    $region144: #{tpu_custom_call.1} parent=5 // pred_fallthru
      _
  $region6: #{tpu_custom_call.1} parent=0 // loop_footer
    %s40 = sadd.s32 1, %s36
  $region7: #{tpu_custom_call.1} parent=0 // loop_footer_branch
    %35 = sbr.rel target = $region3
  $region8: #{tpu_custom_call.1} parent=0 // loop_exit
    _

</llo_original>
